<compile_context>
chip_gen: v5e
topology: v5e:2x2
jax: 0.10.0
libtpu: 0.0.40
codegen_flags: <defaults>
</compile_context>

<pallas_src>
import math

import jax
import jax.numpy as jnp
from jax import lax
from jax.experimental import pallas as pl
from jax.experimental.pallas import tpu as pltpu

TILE_B = 64          # batch tile per grid step (batch is zero-padded up to a multiple)
BN_EPS = 1e-3        # matches BatchNorm(..., eps=0.001)


# ---------------------------------------------------------------------------
# Fused kernel: conv1+BN1+ReLU+pool1+conv2+BN2+ReLU+pool2+flatten+fc1+BN3+ReLU
#               +fc2+BN4+ReLU for one batch tile.
# ---------------------------------------------------------------------------
def _conv_nn_kernel(p1_ref, w1_ref, s1_ref, t1_ref, w2_ref, s2_ref, t2_ref,
                    w3_ref, s3_ref, t3_ref, w4_ref, s4_ref, t4_ref, o_ref):
    """p1_ref : (16*T, 256) bf16 conv1 patches.
       Row  = (ef*4 + uv)*T + img  where the conv2 output pixel is (2u+e, 2v+f)
              and (u, v) is the final (post-maxpool2) spatial position.
       Lane = dd*64 + ab*16 + k    where dd = maxpool1 window pos (dh*2+dw),
              ab = conv2 patch pos (a*2+b), k = kh*3+kw (padded 9 -> 16).
       w1_ref : (256, 1024) bf16 block-diagonal conv1 weight (16 blocks of (16, 64)).
       o_ref  : (T, 128) f32 lane-dense output; only columns [:7] are meaningful."""
    T = o_ref.shape[0]
    q = 4 * T

    # conv1: one block-diagonal K=256 dot -> lanes (dd, ab, c) = 1024
    h1 = jnp.dot(p1_ref[...], w1_ref[...], preferred_element_type=jnp.float32)
    a1 = jnp.maximum(h1 * s1_ref[...] + t1_ref[...], 0.0)                 # BN1 + ReLU

    # maxpool1: max over dd = max over 4 aligned 256-lane groups -> lanes (ab, c)
    pool1 = jnp.maximum(jnp.maximum(a1[:, 0:256], a1[:, 256:512]),
                        jnp.maximum(a1[:, 512:768], a1[:, 768:1024]))     # (16T, 256)

    # conv2: one K=256 dot
    h2 = jnp.dot(pool1, w2_ref[...], preferred_element_type=jnp.float32)  # (16T, 128)
    a2 = jnp.maximum(h2 * s2_ref[...] + t2_ref[...], 0.0)                 # BN2 + ReLU

    # maxpool2: max over ef = max over 4 aligned row slabs -> rows (uv, img)
    pool2 = jnp.maximum(jnp.maximum(a2[0:q], a2[q:2 * q]),
                        jnp.maximum(a2[2 * q:3 * q], a2[3 * q:4 * q]))    # (4T, 128)

    # flatten: per image, lanes = (uv, c); PyTorch order c*4+uv is folded into w3
    flat = jnp.concatenate([pool2[0:T], pool2[T:2 * T],
                            pool2[2 * T:3 * T], pool2[3 * T:4 * T]],
                           axis=-1)                                       # (T, 512)

    # fc1: one K=512 dot
    h3 = jnp.dot(flat, w3_ref[...], preferred_element_type=jnp.float32)   # (T, 256)
    a3 = jnp.maximum(h3 * s3_ref[...] + t3_ref[...], 0.0)                 # BN3 + ReLU

    # fc2 (output lane-padded to 128)
    h4 = jnp.dot(a3, w4_ref[...], preferred_element_type=jnp.float32)     # (T, 128)
    o_ref[...] = jnp.maximum(h4 * s4_ref[...] + t4_ref[...], 0.0)         # BN4 + ReLU


# ---------------------------------------------------------------------------
# Wrapper-side layout plumbing
# ---------------------------------------------------------------------------
def _extract_patches(x, tile_b):
    """(B_pad, 1, 48, 48) f32 -> (B_pad*16, 256) bf16 conv1-patch rows.

    Row  = (tile*16 + ef*4 + uv) * tile_b + img_in_tile
    Lane = dd*64 + ab*16 + k  (k = kh*3+kw, zero-padded 9 -> 16)
    using input row = 24u + 12e + 6a + 3dh + kh, col = 24v + 12f + 6b + 3dw + kw.
    """
    b_pad = x.shape[0]
    nt = b_pad // tile_b
    x = x.reshape(nt, tile_b, 2, 2, 2, 2, 3, 2, 2, 2, 2, 3)
    #             0   1      2  3  4  5  6  7  8  9 10 11
    #           tile img     u  e  a dh kh  v  f  b dw kw
    x = x.transpose(0, 3, 8, 2, 7, 1, 5, 10, 4, 9, 6, 11)
    #           tile  e  f  u  v img dh dw  a  b kh kw
    x = x.reshape(nt * 16 * tile_b, 16, 9)          # rows, (dd, ab), k
    x = jnp.pad(x, ((0, 0), (0, 0), (0, 7)))        # k: 9 -> 16 (lane-dense 256 total)
    return x.reshape(nt * 16 * tile_b, 256).astype(jnp.bfloat16)


@jax.jit
def conv_nn_forward(x, kp):
    """x: (B, 1, 48, 48) f32 -> (B, 7) f32 (inference-mode BatchNorm)."""
    (w1, s1, t1, w2, s2, t2, w3, s3, t3, w4, s4, t4) = kp
    B = x.shape[0]
    b_pad = ((B + TILE_B - 1) // TILE_B) * TILE_B
    if b_pad != B:
        x = jnp.pad(x, ((0, b_pad - B), (0, 0), (0, 0), (0, 0)))
    grid = (b_pad // TILE_B,)
    rows = 16 * TILE_B

    p1 = _extract_patches(x, TILE_B)                # (b_pad*16, 256) bf16

    def res(a):                                      # VMEM-resident (constant index_map)
        return pl.BlockSpec(a.shape, lambda i: (0, 0))

    params = (w1, s1, t1, w2, s2, t2, w3, s3, t3, w4, s4, t4)
    flops = int(2 * b_pad * 16 * (256 * 1024 + 256 * 128)
                + 2 * b_pad * (512 * 256 + 256 * 128))
    bytes_accessed = int(p1.size * p1.dtype.itemsize + b_pad * 128 * 4
                         + sum(int(a.size) * a.dtype.itemsize for a in params))

    out = pl.pallas_call(
        _conv_nn_kernel,
        out_shape=jax.ShapeDtypeStruct((b_pad, 128), jnp.float32),
        grid=grid,
        in_specs=[pl.BlockSpec((rows, 256), lambda i: (i, 0)),
                  res(w1), res(s1), res(t1),
                  res(w2), res(s2), res(t2),
                  res(w3), res(s3), res(t3),
                  res(w4), res(s4), res(t4)],
        out_specs=pl.BlockSpec((TILE_B, 128), lambda i: (i, 0)),
        compiler_params=pltpu.CompilerParams(
            dimension_semantics=("parallel",),
            vmem_limit_bytes=48 * 1024 * 1024),
        cost_estimate=pl.CostEstimate(flops=flops, transcendentals=0,
                                      bytes_accessed=bytes_accessed),
    )(p1, *params)

    return out[:B, :7]


# ---------------------------------------------------------------------------
# Parameters (PyTorch layout), folding to kernel layout, and pure-JAX reference
# ---------------------------------------------------------------------------
def init_params(key):
    """Deterministic PyTorch-layout parameters; BN uses running stats (eval mode)."""
    ks = jax.random.split(key, 12)

    def unif(k, shape, bound):
        return jax.random.uniform(k, shape, jnp.float32, -bound, bound)

    def bn(k, n):
        k1, k2, k3, k4 = jax.random.split(k, 4)
        gamma = jax.random.uniform(k1, (n,), jnp.float32, 0.5, 1.5)
        beta = 0.1 * jax.random.normal(k2, (n,), jnp.float32)
        mean = 0.1 * jax.random.normal(k3, (n,), jnp.float32)
        var = jax.random.uniform(k4, (n,), jnp.float32, 0.5, 1.5)
        return gamma, beta, mean, var

    p = {}
    p["conv1_w"] = unif(ks[0], (64, 1, 3, 3), 1.0 / 3.0)
    p["conv1_b"] = unif(ks[1], (64,), 1.0 / 3.0)
    p["bn1"] = bn(ks[2], 64)
    p["conv2_w"] = unif(ks[3], (128, 64, 2, 2), 1.0 / 16.0)
    p["conv2_b"] = unif(ks[4], (128,), 1.0 / 16.0)
    p["bn2"] = bn(ks[5], 128)
    p["fc1_w"] = unif(ks[6], (256, 512), 1.0 / math.sqrt(512.0))
    p["fc1_b"] = unif(ks[7], (256,), 1.0 / math.sqrt(512.0))
    p["bn3"] = bn(ks[8], 256)
    p["fc2_w"] = unif(ks[9], (7, 256), 1.0 / 16.0)
    p["fc2_b"] = unif(ks[10], (7,), 1.0 / 16.0)
    p["bn4"] = bn(ks[11], 7)
    return p


def _fold_bn(gamma, beta, mean, var, bias):
    s = gamma / jnp.sqrt(var + BN_EPS)
    t = (bias - mean) * s + beta
    return s, t


def fold_params(p):
    """Convert PyTorch-layout params to the matmul layouts used by the kernel."""
    f32 = jnp.float32
    # conv1 -> block-diagonal (256, 1024): 16 diagonal blocks of (16, 64), bf16.
    w1 = jnp.zeros((16, 64), f32).at[:9].set(p["conv1_w"].reshape(64, 9).T)
    w1bd = jnp.einsum("pq,kc->pkqc", jnp.eye(16, dtype=f32), w1).reshape(256, 1024)
    s1, t1 = _fold_bn(*p["bn1"], p["conv1_b"])
    s1bd, t1bd = jnp.tile(s1, 16), jnp.tile(t1, 16)        # lane = (dd, ab, c)
    # conv2 -> (256, 128): contraction order (ab, in_c)
    w2 = p["conv2_w"].transpose(2, 3, 1, 0).reshape(256, 128)
    s2, t2 = _fold_bn(*p["bn2"], p["conv2_b"])
    # fc1 -> (512, 256): contraction order (uv, c); PyTorch flatten order is c*4+uv
    w3 = p["fc1_w"].T.reshape(128, 4, 256).transpose(1, 0, 2).reshape(512, 256)
    s3, t3 = _fold_bn(*p["bn3"], p["fc1_b"])
    # fc2 padded to a lane-dense 128-wide output (cols 7..127 stay exactly zero)
    w4 = jnp.zeros((256, 128), f32).at[:, :7].set(p["fc2_w"].T)
    s4r, t4r = _fold_bn(*p["bn4"], p["fc2_b"])
    s4 = jnp.zeros((128,), f32).at[:7].set(s4r)
    t4 = jnp.zeros((128,), f32).at[:7].set(t4r)
    r = lambda v: v.reshape(1, -1)
    return (w1bd.astype(jnp.bfloat16), r(s1bd), r(t1bd),
            w2, r(s2), r(t2), w3, r(s3), r(t3), w4, r(s4), r(t4))


def reference_forward(x, p):
    """Pure-JAX reference mirroring the PyTorch module (eval-mode BatchNorm)."""
    def bn(z, stats, axis=1):
        gamma, beta, mean, var = stats
        shp = [1] * z.ndim
        shp[axis] = -1
        return ((z - mean.reshape(shp)) / jnp.sqrt(var.reshape(shp) + BN_EPS)
                * gamma.reshape(shp) + beta.reshape(shp))

    dn = ("NCHW", "OIHW", "NCHW")
    y = lax.conv_general_dilated(x, p["conv1_w"], (3, 3), "VALID",
                                 dimension_numbers=dn)
    y = y + p["conv1_b"].reshape(1, -1, 1, 1)
    y = jnp.maximum(bn(y, p["bn1"]), 0.0)
    y = lax.reduce_window(y, -jnp.inf, lax.max, (1, 1, 2, 2), (1, 1, 2, 2), "VALID")
    y = lax.conv_general_dilated(y, p["conv2_w"], (2, 2), "VALID",
                                 dimension_numbers=dn)
    y = y + p["conv2_b"].reshape(1, -1, 1, 1)
    y = jnp.maximum(bn(y, p["bn2"]), 0.0)
    y = lax.reduce_window(y, -jnp.inf, lax.max, (1, 1, 2, 2), (1, 1, 2, 2), "VALID")
    y = y.reshape(y.shape[0], 512)                       # PyTorch .view(B, 512) order
    y = y @ p["fc1_w"].T + p["fc1_b"]
    y = jnp.maximum(bn(y, p["bn3"]), 0.0)
    y = y @ p["fc2_w"].T + p["fc2_b"]
    y = jnp.maximum(bn(y, p["bn4"]), 0.0)
    return y


if __name__ == "__main__":
    key = jax.random.PRNGKey(0)
    kx, kparam = jax.random.split(key)

    B = 8
    x = jax.random.normal(kx, (B, 1, 48, 48), jnp.float32)
    params = init_params(kparam)
    kernel_params = fold_params(params)

    out = conv_nn_forward(x, kernel_params)
    out = jax.block_until_ready(out)
    assert out.shape == (B, 7)

    ref = reference_forward(x, params)
    err = float(jnp.max(jnp.abs(out - ref)))
    # Tolerance sized for the bf16 conv1 patches/weights (f32 accumulation and
    # f32 everywhere downstream); observed error is well below this bound.
    assert jnp.allclose(out, ref, atol=2e-2, rtol=2e-2), f"max abs err {err}"

    print("KERNEL_OK")
</pallas_src>

<mosaic_0001>
module attributes {stable_mosaic.version = 11 : i64} {
  func.func @_conv_nn_kernel(%arg0: i32, %arg1: memref<1024x256xbf16, #tpu.memory_space<vmem>>, %arg2: memref<256x1024xbf16, #tpu.memory_space<vmem>>, %arg3: memref<1x1024xf32, #tpu.memory_space<vmem>>, %arg4: memref<1x1024xf32, #tpu.memory_space<vmem>>, %arg5: memref<256x128xf32, #tpu.memory_space<vmem>>, %arg6: memref<1x128xf32, #tpu.memory_space<vmem>>, %arg7: memref<1x128xf32, #tpu.memory_space<vmem>>, %arg8: memref<512x256xf32, #tpu.memory_space<vmem>>, %arg9: memref<1x256xf32, #tpu.memory_space<vmem>>, %arg10: memref<1x256xf32, #tpu.memory_space<vmem>>, %arg11: memref<256x128xf32, #tpu.memory_space<vmem>>, %arg12: memref<1x128xf32, #tpu.memory_space<vmem>>, %arg13: memref<1x128xf32, #tpu.memory_space<vmem>>, %arg14: memref<64x128xf32, #tpu.memory_space<vmem>>) attributes {dimension_semantics = [#tpu.dimension_semantics<parallel>], iteration_bounds = array<i64: 1>, scalar_prefetch = 0 : i64, scratch_operands = 0 : i64, tpu.core_type = #tpu.core_type<tc>, window_params = [{transform_indices = @transform_0, window_bounds = array<i64: 1024, 256>}, {pipeline_mode = #tpu.pipeline_mode<synchronous>, transform_indices = @transform_1, window_bounds = array<i64: 256, 1024>}, {pipeline_mode = #tpu.pipeline_mode<synchronous>, transform_indices = @transform_2, window_bounds = array<i64: 1, 1024>}, {pipeline_mode = #tpu.pipeline_mode<synchronous>, transform_indices = @transform_3, window_bounds = array<i64: 1, 1024>}, {pipeline_mode = #tpu.pipeline_mode<synchronous>, transform_indices = @transform_4, window_bounds = array<i64: 256, 128>}, {pipeline_mode = #tpu.pipeline_mode<synchronous>, transform_indices = @transform_5, window_bounds = array<i64: 1, 128>}, {pipeline_mode = #tpu.pipeline_mode<synchronous>, transform_indices = @transform_6, window_bounds = array<i64: 1, 128>}, {pipeline_mode = #tpu.pipeline_mode<synchronous>, transform_indices = @transform_7, window_bounds = array<i64: 512, 256>}, {pipeline_mode = #tpu.pipeline_mode<synchronous>, transform_indices = @transform_8, window_bounds = array<i64: 1, 256>}, {pipeline_mode = #tpu.pipeline_mode<synchronous>, transform_indices = @transform_9, window_bounds = array<i64: 1, 256>}, {pipeline_mode = #tpu.pipeline_mode<synchronous>, transform_indices = @transform_10, window_bounds = array<i64: 256, 128>}, {pipeline_mode = #tpu.pipeline_mode<synchronous>, transform_indices = @transform_11, window_bounds = array<i64: 1, 128>}, {pipeline_mode = #tpu.pipeline_mode<synchronous>, transform_indices = @transform_12, window_bounds = array<i64: 1, 128>}, {transform_indices = @transform_13, window_bounds = array<i64: 64, 128>}]} {
    %c0 = arith.constant 0 : index
    %c0_0 = arith.constant 0 : index
    %0 = vector.load %arg1[%c0, %c0_0] : memref<1024x256xbf16, #tpu.memory_space<vmem>>, vector<1024x256xbf16>
    %c0_1 = arith.constant 0 : index
    %c0_2 = arith.constant 0 : index
    %1 = vector.load %arg2[%c0_1, %c0_2] : memref<256x1024xbf16, #tpu.memory_space<vmem>>, vector<256x1024xbf16>
    %cst = arith.constant dense<0.000000e+00> : vector<1024x1024xf32>
    %2 = tpu.matmul %0, %1, %cst {dimension_numbers = #tpu.dot_dimension_numbers<[1], [0], [0], [1], [0, 0, 1, 1], [], []>} : vector<1024x256xbf16>, vector<256x1024xbf16>, vector<1024x1024xf32> -> vector<1024x1024xf32>
    %c0_3 = arith.constant 0 : index
    %c0_4 = arith.constant 0 : index
    %3 = vector.load %arg3[%c0_3, %c0_4] : memref<1x1024xf32, #tpu.memory_space<vmem>>, vector<1x1024xf32>
    %4 = vector.broadcast %3 : vector<1x1024xf32> to vector<1024x1024xf32>
    %5 = arith.mulf %2, %4 : vector<1024x1024xf32>
    %c0_5 = arith.constant 0 : index
    %c0_6 = arith.constant 0 : index
    %6 = vector.load %arg4[%c0_5, %c0_6] : memref<1x1024xf32, #tpu.memory_space<vmem>>, vector<1x1024xf32>
    %7 = vector.broadcast %6 : vector<1x1024xf32> to vector<1024x1024xf32>
    %8 = arith.addf %5, %7 : vector<1024x1024xf32>
    %cst_7 = arith.constant 0.000000e+00 : f32
    %9 = vector.broadcast %cst_7 : f32 to vector<1024x1024xf32>
    %10 = arith.maximumf %8, %9 : vector<1024x1024xf32>
    %11 = vector.extract_strided_slice %10 {offsets = [0, 0], sizes = [1024, 256], strides = [1, 1]} : vector<1024x1024xf32> to vector<1024x256xf32>
    %12 = vector.extract_strided_slice %10 {offsets = [0, 256], sizes = [1024, 256], strides = [1, 1]} : vector<1024x1024xf32> to vector<1024x256xf32>
    %13 = arith.maximumf %11, %12 : vector<1024x256xf32>
    %14 = vector.extract_strided_slice %10 {offsets = [0, 512], sizes = [1024, 256], strides = [1, 1]} : vector<1024x1024xf32> to vector<1024x256xf32>
    %15 = vector.extract_strided_slice %10 {offsets = [0, 768], sizes = [1024, 256], strides = [1, 1]} : vector<1024x1024xf32> to vector<1024x256xf32>
    %16 = arith.maximumf %14, %15 : vector<1024x256xf32>
    %17 = arith.maximumf %13, %16 : vector<1024x256xf32>
    %c0_8 = arith.constant 0 : index
    %c0_9 = arith.constant 0 : index
    %18 = vector.load %arg5[%c0_8, %c0_9] : memref<256x128xf32, #tpu.memory_space<vmem>>, vector<256x128xf32>
    %cst_10 = arith.constant dense<0.000000e+00> : vector<1024x128xf32>
    %19 = tpu.matmul %17, %18, %cst_10 {dimension_numbers = #tpu.dot_dimension_numbers<[1], [0], [0], [1], [0, 0, 1, 1], [], []>} : vector<1024x256xf32>, vector<256x128xf32>, vector<1024x128xf32> -> vector<1024x128xf32>
    %c0_11 = arith.constant 0 : index
    %c0_12 = arith.constant 0 : index
    %20 = vector.load %arg6[%c0_11, %c0_12] : memref<1x128xf32, #tpu.memory_space<vmem>>, vector<1x128xf32>
    %21 = vector.broadcast %20 : vector<1x128xf32> to vector<1024x128xf32>
    %22 = arith.mulf %19, %21 : vector<1024x128xf32>
    %c0_13 = arith.constant 0 : index
    %c0_14 = arith.constant 0 : index
    %23 = vector.load %arg7[%c0_13, %c0_14] : memref<1x128xf32, #tpu.memory_space<vmem>>, vector<1x128xf32>
    %24 = vector.broadcast %23 : vector<1x128xf32> to vector<1024x128xf32>
    %25 = arith.addf %22, %24 : vector<1024x128xf32>
    %cst_15 = arith.constant 0.000000e+00 : f32
    %26 = vector.broadcast %cst_15 : f32 to vector<1024x128xf32>
    %27 = arith.maximumf %25, %26 : vector<1024x128xf32>
    %28 = vector.extract_strided_slice %27 {offsets = [0, 0], sizes = [256, 128], strides = [1, 1]} : vector<1024x128xf32> to vector<256x128xf32>
    %29 = vector.extract_strided_slice %27 {offsets = [256, 0], sizes = [256, 128], strides = [1, 1]} : vector<1024x128xf32> to vector<256x128xf32>
    %30 = arith.maximumf %28, %29 : vector<256x128xf32>
    %31 = vector.extract_strided_slice %27 {offsets = [512, 0], sizes = [256, 128], strides = [1, 1]} : vector<1024x128xf32> to vector<256x128xf32>
    %32 = vector.extract_strided_slice %27 {offsets = [768, 0], sizes = [256, 128], strides = [1, 1]} : vector<1024x128xf32> to vector<256x128xf32>
    %33 = arith.maximumf %31, %32 : vector<256x128xf32>
    %34 = arith.maximumf %30, %33 : vector<256x128xf32>
    %35 = vector.extract_strided_slice %34 {offsets = [0, 0], sizes = [64, 128], strides = [1, 1]} : vector<256x128xf32> to vector<64x128xf32>
    %36 = vector.extract_strided_slice %34 {offsets = [64, 0], sizes = [64, 128], strides = [1, 1]} : vector<256x128xf32> to vector<64x128xf32>
    %37 = vector.extract_strided_slice %34 {offsets = [128, 0], sizes = [64, 128], strides = [1, 1]} : vector<256x128xf32> to vector<64x128xf32>
    %38 = vector.extract_strided_slice %34 {offsets = [192, 0], sizes = [64, 128], strides = [1, 1]} : vector<256x128xf32> to vector<64x128xf32>
    %39 = tpu.concatenate %35, %36, %37, %38 in 1 : vector<64x128xf32>, vector<64x128xf32>, vector<64x128xf32>, vector<64x128xf32> -> vector<64x512xf32>
    %c0_16 = arith.constant 0 : index
    %c0_17 = arith.constant 0 : index
    %40 = vector.load %arg8[%c0_16, %c0_17] : memref<512x256xf32, #tpu.memory_space<vmem>>, vector<512x256xf32>
    %cst_18 = arith.constant dense<0.000000e+00> : vector<64x256xf32>
    %41 = tpu.matmul %39, %40, %cst_18 {dimension_numbers = #tpu.dot_dimension_numbers<[1], [0], [0], [1], [0, 0, 1, 1], [], []>} : vector<64x512xf32>, vector<512x256xf32>, vector<64x256xf32> -> vector<64x256xf32>
    %c0_19 = arith.constant 0 : index
    %c0_20 = arith.constant 0 : index
    %42 = vector.load %arg9[%c0_19, %c0_20] : memref<1x256xf32, #tpu.memory_space<vmem>>, vector<1x256xf32>
    %43 = vector.broadcast %42 : vector<1x256xf32> to vector<64x256xf32>
    %44 = arith.mulf %41, %43 : vector<64x256xf32>
    %c0_21 = arith.constant 0 : index
    %c0_22 = arith.constant 0 : index
    %45 = vector.load %arg10[%c0_21, %c0_22] : memref<1x256xf32, #tpu.memory_space<vmem>>, vector<1x256xf32>
    %46 = vector.broadcast %45 : vector<1x256xf32> to vector<64x256xf32>
    %47 = arith.addf %44, %46 : vector<64x256xf32>
    %cst_23 = arith.constant 0.000000e+00 : f32
    %48 = vector.broadcast %cst_23 : f32 to vector<64x256xf32>
    %49 = arith.maximumf %47, %48 : vector<64x256xf32>
    %c0_24 = arith.constant 0 : index
    %c0_25 = arith.constant 0 : index
    %50 = vector.load %arg11[%c0_24, %c0_25] : memref<256x128xf32, #tpu.memory_space<vmem>>, vector<256x128xf32>
    %cst_26 = arith.constant dense<0.000000e+00> : vector<64x128xf32>
    %51 = tpu.matmul %49, %50, %cst_26 {dimension_numbers = #tpu.dot_dimension_numbers<[1], [0], [0], [1], [0, 0, 1, 1], [], []>} : vector<64x256xf32>, vector<256x128xf32>, vector<64x128xf32> -> vector<64x128xf32>
    %c0_27 = arith.constant 0 : index
    %c0_28 = arith.constant 0 : index
    %52 = vector.load %arg12[%c0_27, %c0_28] : memref<1x128xf32, #tpu.memory_space<vmem>>, vector<1x128xf32>
    %53 = vector.broadcast %52 : vector<1x128xf32> to vector<64x128xf32>
    %54 = arith.mulf %51, %53 : vector<64x128xf32>
    %c0_29 = arith.constant 0 : index
    %c0_30 = arith.constant 0 : index
    %55 = vector.load %arg13[%c0_29, %c0_30] : memref<1x128xf32, #tpu.memory_space<vmem>>, vector<1x128xf32>
    %56 = vector.broadcast %55 : vector<1x128xf32> to vector<64x128xf32>
    %57 = arith.addf %54, %56 : vector<64x128xf32>
    %cst_31 = arith.constant 0.000000e+00 : f32
    %58 = vector.broadcast %cst_31 : f32 to vector<64x128xf32>
    %59 = arith.maximumf %57, %58 : vector<64x128xf32>
    %c0_32 = arith.constant 0 : index
    %c0_33 = arith.constant 0 : index
    %60 = vector.load %arg14[%c0_32, %c0_33] : memref<64x128xf32, #tpu.memory_space<vmem>>, vector<64x128xf32>
    tpu.vector_store %arg14[%c0_32, %c0_33], %59 {strides = array<i32>} : memref<64x128xf32, #tpu.memory_space<vmem>>, vector<64x128xf32>,
    return
  }
  func.func @transform_0(%arg0: i32) -> (i32, i32) {
    %c0_i32 = arith.constant 0 : i32
    %c0_i32_0 = arith.constant 0 : i32
    return %arg0, %c0_i32 : i32, i32
  }
  func.func @transform_1(%arg0: i32) -> (i32, i32) {
    %c0_i32 = arith.constant 0 : i32
    %c0_i32_0 = arith.constant 0 : i32
    %c0_i32_1 = arith.constant 0 : i32
    return %c0_i32, %c0_i32_0 : i32, i32
  }
  func.func @transform_2(%arg0: i32) -> (i32, i32) {
    %c0_i32 = arith.constant 0 : i32
    %c0_i32_0 = arith.constant 0 : i32
    %c0_i32_1 = arith.constant 0 : i32
    return %c0_i32, %c0_i32_0 : i32, i32
  }
  func.func @transform_3(%arg0: i32) -> (i32, i32) {
    %c0_i32 = arith.constant 0 : i32
    %c0_i32_0 = arith.constant 0 : i32
    %c0_i32_1 = arith.constant 0 : i32
    return %c0_i32, %c0_i32_0 : i32, i32
  }
  func.func @transform_4(%arg0: i32) -> (i32, i32) {
    %c0_i32 = arith.constant 0 : i32
    %c0_i32_0 = arith.constant 0 : i32
    %c0_i32_1 = arith.constant 0 : i32
    return %c0_i32, %c0_i32_0 : i32, i32
  }
  func.func @transform_5(%arg0: i32) -> (i32, i32) {
    %c0_i32 = arith.constant 0 : i32
    %c0_i32_0 = arith.constant 0 : i32
    %c0_i32_1 = arith.constant 0 : i32
    return %c0_i32, %c0_i32_0 : i32, i32
  }
  func.func @transform_6(%arg0: i32) -> (i32, i32) {
    %c0_i32 = arith.constant 0 : i32
    %c0_i32_0 = arith.constant 0 : i32
    %c0_i32_1 = arith.constant 0 : i32
    return %c0_i32, %c0_i32_0 : i32, i32
  }
  func.func @transform_7(%arg0: i32) -> (i32, i32) {
    %c0_i32 = arith.constant 0 : i32
    %c0_i32_0 = arith.constant 0 : i32
    %c0_i32_1 = arith.constant 0 : i32
    return %c0_i32, %c0_i32_0 : i32, i32
  }
  func.func @transform_8(%arg0: i32) -> (i32, i32) {
    %c0_i32 = arith.constant 0 : i32
    %c0_i32_0 = arith.constant 0 : i32
    %c0_i32_1 = arith.constant 0 : i32
    return %c0_i32, %c0_i32_0 : i32, i32
  }
  func.func @transform_9(%arg0: i32) -> (i32, i32) {
    %c0_i32 = arith.constant 0 : i32
    %c0_i32_0 = arith.constant 0 : i32
    %c0_i32_1 = arith.constant 0 : i32
    return %c0_i32, %c0_i32_0 : i32, i32
  }
  func.func @transform_10(%arg0: i32) -> (i32, i32) {
    %c0_i32 = arith.constant 0 : i32
    %c0_i32_0 = arith.constant 0 : i32
    %c0_i32_1 = arith.constant 0 : i32
    return %c0_i32, %c0_i32_0 : i32, i32
  }
  func.func @transform_11(%arg0: i32) -> (i32, i32) {
    %c0_i32 = arith.constant 0 : i32
    %c0_i32_0 = arith.constant 0 : i32
    %c0_i32_1 = arith.constant 0 : i32
    return %c0_i32, %c0_i32_0 : i32, i32
  }
  func.func @transform_12(%arg0: i32) -> (i32, i32) {
    %c0_i32 = arith.constant 0 : i32
    %c0_i32_0 = arith.constant 0 : i32
    %c0_i32_1 = arith.constant 0 : i32
    return %c0_i32, %c0_i32_0 : i32, i32
  }
  func.func @transform_13(%arg0: i32) -> (i32, i32) {
    %c0_i32 = arith.constant 0 : i32
    %c0_i32_0 = arith.constant 0 : i32
    return %arg0, %c0_i32 : i32, i32
  }
}

</mosaic_0001>

<llo_original>
// kernel: conv_nn_forward.1
$region0: #{conv_nn_forward.1}
  #allocation0 [shape = 'u32[]', space=smem, size = 0x4, offset = 0x4, fixed_abs, tag = 'smem constant byte address 0x4 - core index']
  #allocation1 [shape = 'u32[72,128]{1,0:T(1,128)}', space=vmem, size = 0x9000, scoped, tag = 'internal scratch']
  %s0 = inlined_call_operand.vmem [shape: bf16[1024,256], index: 0, kind: input, shape index: {}]
  %s1 = inlined_call_operand.vmem [shape: bf16[256,1024], index: 1, kind: input, shape index: {}]
  %s2 = inlined_call_operand.vmem [shape: f32[1,1024], index: 2, kind: input, shape index: {}]
  %s3 = inlined_call_operand.vmem [shape: f32[1,1024], index: 3, kind: input, shape index: {}]
  %s4 = inlined_call_operand.vmem [shape: f32[256,128], index: 4, kind: input, shape index: {}]
  %s5 = inlined_call_operand.vmem [shape: f32[1,128], index: 5, kind: input, shape index: {}]
  %s6 = inlined_call_operand.vmem [shape: f32[1,128], index: 6, kind: input, shape index: {}]
  %s7 = inlined_call_operand.vmem [shape: f32[512,256], index: 7, kind: input, shape index: {}]
  %s8 = inlined_call_operand.vmem [shape: f32[1,256], index: 8, kind: input, shape index: {}]
  %s9 = inlined_call_operand.vmem [shape: f32[1,256], index: 9, kind: input, shape index: {}]
  %s10 = inlined_call_operand.vmem [shape: f32[256,128], index: 10, kind: input, shape index: {}]
  %s11 = inlined_call_operand.vmem [shape: f32[1,128], index: 11, kind: input, shape index: {}]
  %s12 = inlined_call_operand.vmem [shape: f32[1,128], index: 12, kind: input, shape index: {}]
  %s13 = inlined_call_operand.vmem [shape: f32[64,128], index: 13, kind: output, shape index: {}]
  %s14 = sld [smem:[#allocation0]]
  $region62: #{conv_nn_forward.1} parent=0
    _
  %s16 = ssub.s32 1, %s14
  %s17 = scalar_select 0, %s16, %s14
  // Predicated region
  $region2: #{conv_nn_forward.1} parent=0 // pred_check
    _
  $region3: #{conv_nn_forward.1} parent=0 // pred_check_branch
    %19 = sbr.rel (0) target = $region5
  $region4: #{conv_nn_forward.1} parent=0 // pred_region
    _
  $region5: #{conv_nn_forward.1} parent=0 // pred_fallthru
    _
  // Predicated region
  $region6: #{conv_nn_forward.1} parent=0 // pred_check
    _
  $region7: #{conv_nn_forward.1} parent=0 // pred_check_branch
    %21 = sbr.rel (0) target = $region9
  $region8: #{conv_nn_forward.1} parent=0 // pred_region
    _
  $region9: #{conv_nn_forward.1} parent=0 // pred_fallthru
    _
  // Predicated region
  $region10: #{conv_nn_forward.1} parent=0 // pred_check
    _
  $region11: #{conv_nn_forward.1} parent=0 // pred_check_branch
    %23 = sbr.rel (0) target = $region13
  $region12: #{conv_nn_forward.1} parent=0 // pred_region
    _
  $region13: #{conv_nn_forward.1} parent=0 // pred_fallthru
    _
  // Predicated region
  $region14: #{conv_nn_forward.1} parent=0 // pred_check
    _
  $region15: #{conv_nn_forward.1} parent=0 // pred_check_branch
    %25 = sbr.rel (0) target = $region17
  $region16: #{conv_nn_forward.1} parent=0 // pred_region
    _
  $region17: #{conv_nn_forward.1} parent=0 // pred_fallthru
    _
  // Predicated region
  $region18: #{conv_nn_forward.1} parent=0 // pred_check
    _
  $region19: #{conv_nn_forward.1} parent=0 // pred_check_branch
    %27 = sbr.rel (0) target = $region21
  $region20: #{conv_nn_forward.1} parent=0 // pred_region
    _
  $region21: #{conv_nn_forward.1} parent=0 // pred_fallthru
    _
  // Predicated region
  $region22: #{conv_nn_forward.1} parent=0 // pred_check
    _
  $region23: #{conv_nn_forward.1} parent=0 // pred_check_branch
    %29 = sbr.rel (0) target = $region25
  $region24: #{conv_nn_forward.1} parent=0 // pred_region
    _
  $region25: #{conv_nn_forward.1} parent=0 // pred_fallthru
    _
  // Predicated region
  $region26: #{conv_nn_forward.1} parent=0 // pred_check
    _
  $region27: #{conv_nn_forward.1} parent=0 // pred_check_branch
    %31 = sbr.rel (0) target = $region29
  $region28: #{conv_nn_forward.1} parent=0 // pred_region
    _
  $region29: #{conv_nn_forward.1} parent=0 // pred_fallthru
    _
  // Predicated region
  $region30: #{conv_nn_forward.1} parent=0 // pred_check
    _
  $region31: #{conv_nn_forward.1} parent=0 // pred_check_branch
    %33 = sbr.rel (0) target = $region33
  $region32: #{conv_nn_forward.1} parent=0 // pred_region
    _
  $region33: #{conv_nn_forward.1} parent=0 // pred_fallthru
    _
  // Predicated region
  $region34: #{conv_nn_forward.1} parent=0 // pred_check
    _
  $region35: #{conv_nn_forward.1} parent=0 // pred_check_branch
    %35 = sbr.rel (0) target = $region37
  $region36: #{conv_nn_forward.1} parent=0 // pred_region
    _
  $region37: #{conv_nn_forward.1} parent=0 // pred_fallthru
    _
  // Predicated region
  $region38: #{conv_nn_forward.1} parent=0 // pred_check
    _
  $region39: #{conv_nn_forward.1} parent=0 // pred_check_branch
    %37 = sbr.rel (0) target = $region41
  $region40: #{conv_nn_forward.1} parent=0 // pred_region
    _
  $region41: #{conv_nn_forward.1} parent=0 // pred_fallthru
    _
  // Predicated region
  $region42: #{conv_nn_forward.1} parent=0 // pred_check
    _
  $region43: #{conv_nn_forward.1} parent=0 // pred_check_branch
    %39 = sbr.rel (0) target = $region45
  $region44: #{conv_nn_forward.1} parent=0 // pred_region
    _
  $region45: #{conv_nn_forward.1} parent=0 // pred_fallthru
    _
  // Predicated region
  $region46: #{conv_nn_forward.1} parent=0 // pred_check
    _
  $region47: #{conv_nn_forward.1} parent=0 // pred_check_branch
    %41 = sbr.rel (0) target = $region49
  $region48: #{conv_nn_forward.1} parent=0 // pred_region
    _
  $region49: #{conv_nn_forward.1} parent=0 // pred_fallthru
    _
  // Predicated region
  $region50: #{conv_nn_forward.1} parent=0 // pred_check
    _
  $region51: #{conv_nn_forward.1} parent=0 // pred_check_branch
    %43 = sbr.rel (0) target = $region53
  $region52: #{conv_nn_forward.1} parent=0 // pred_region
    _
  $region53: #{conv_nn_forward.1} parent=0 // pred_fallthru
    _
  %v44 = vld [vmem:[%s0] sm:$0xff]
  %v45 = vld [vmem:[%s0 + $0x8] sm:$0xff]
  %v46 = vld [vmem:[%s0 + $0x10] sm:$0xff]
  %v47 = vld [vmem:[%s0 + $0x18] sm:$0xff]
  %v48 = vld [vmem:[%s0 + $0x20] sm:$0xff]
  %v49 = vld [vmem:[%s0 + $0x28] sm:$0xff]
  %v50 = vld [vmem:[%s0 + $0x30] sm:$0xff]
  %v51 = vld [vmem:[%s0 + $0x38] sm:$0xff]
  %v52 = vld [vmem:[%s0 + $0x40] sm:$0xff]
  %v53 = vld [vmem:[%s0 + $0x48] sm:$0xff]
  %v54 = vld [vmem:[%s0 + $0x50] sm:$0xff]
  %v55 = vld [vmem:[%s0 + $0x58] sm:$0xff]
  %v56 = vld [vmem:[%s0 + $0x60] sm:$0xff]
  %v57 = vld [vmem:[%s0 + $0x68] sm:$0xff]
  %v58 = vld [vmem:[%s0 + $0x70] sm:$0xff]
  %v59 = vld [vmem:[%s0 + $0x78] sm:$0xff]
  %v60 = vld [vmem:[%s0 + $0x80] sm:$0xff]
  %v61 = vld [vmem:[%s0 + $0x88] sm:$0xff]
  %v62 = vld [vmem:[%s0 + $0x90] sm:$0xff]
  %v63 = vld [vmem:[%s0 + $0x98] sm:$0xff]
  %v64 = vld [vmem:[%s0 + $0xa0] sm:$0xff]
  %v65 = vld [vmem:[%s0 + $0xa8] sm:$0xff]
  %v66 = vld [vmem:[%s0 + $0xb0] sm:$0xff]
  %v67 = vld [vmem:[%s0 + $0xb8] sm:$0xff]
  %v68 = vld [vmem:[%s0 + $0xc0] sm:$0xff]
  %v69 = vld [vmem:[%s0 + $0xc8] sm:$0xff]
  %v70 = vld [vmem:[%s0 + $0xd0] sm:$0xff]
  %v71 = vld [vmem:[%s0 + $0xd8] sm:$0xff]
  %v72 = vld [vmem:[%s0 + $0xe0] sm:$0xff]
  %v73 = vld [vmem:[%s0 + $0xe8] sm:$0xff]
  %v74 = vld [vmem:[%s0 + $0xf0] sm:$0xff]
  %v75 = vld [vmem:[%s0 + $0xf8] sm:$0xff]
  %v76 = vld [vmem:[%s0 + $0x100] sm:$0xff]
  %v77 = vld [vmem:[%s0 + $0x108] sm:$0xff]
  %v78 = vld [vmem:[%s0 + $0x110] sm:$0xff]
  %v79 = vld [vmem:[%s0 + $0x118] sm:$0xff]
  %v80 = vld [vmem:[%s0 + $0x120] sm:$0xff]
  %v81 = vld [vmem:[%s0 + $0x128] sm:$0xff]
  %v82 = vld [vmem:[%s0 + $0x130] sm:$0xff]
  %v83 = vld [vmem:[%s0 + $0x138] sm:$0xff]
  %v84 = vld [vmem:[%s0 + $0x140] sm:$0xff]
  %v85 = vld [vmem:[%s0 + $0x148] sm:$0xff]
  %v86 = vld [vmem:[%s0 + $0x150] sm:$0xff]
  %v87 = vld [vmem:[%s0 + $0x158] sm:$0xff]
  %v88 = vld [vmem:[%s0 + $0x160] sm:$0xff]
  %v89 = vld [vmem:[%s0 + $0x168] sm:$0xff]
  %v90 = vld [vmem:[%s0 + $0x170] sm:$0xff]
  %v91 = vld [vmem:[%s0 + $0x178] sm:$0xff]
  %v92 = vld [vmem:[%s0 + $0x180] sm:$0xff]
  %v93 = vld [vmem:[%s0 + $0x188] sm:$0xff]
  %v94 = vld [vmem:[%s0 + $0x190] sm:$0xff]
  %v95 = vld [vmem:[%s0 + $0x198] sm:$0xff]
  %v96 = vld [vmem:[%s0 + $0x1a0] sm:$0xff]
  %v97 = vld [vmem:[%s0 + $0x1a8] sm:$0xff]
  %v98 = vld [vmem:[%s0 + $0x1b0] sm:$0xff]
  %v99 = vld [vmem:[%s0 + $0x1b8] sm:$0xff]
  %v100 = vld [vmem:[%s0 + $0x1c0] sm:$0xff]
  %v101 = vld [vmem:[%s0 + $0x1c8] sm:$0xff]
  %v102 = vld [vmem:[%s0 + $0x1d0] sm:$0xff]
  %v103 = vld [vmem:[%s0 + $0x1d8] sm:$0xff]
  %v104 = vld [vmem:[%s0 + $0x1e0] sm:$0xff]
  %v105 = vld [vmem:[%s0 + $0x1e8] sm:$0xff]
  %v106 = vld [vmem:[%s0 + $0x1f0] sm:$0xff]
  %v107 = vld [vmem:[%s0 + $0x1f8] sm:$0xff]
  %v108 = vld [vmem:[%s0 + $0x200] sm:$0xff]
  %v109 = vld [vmem:[%s0 + $0x208] sm:$0xff]
  %v110 = vld [vmem:[%s0 + $0x210] sm:$0xff]
  %v111 = vld [vmem:[%s0 + $0x218] sm:$0xff]
  %v112 = vld [vmem:[%s0 + $0x220] sm:$0xff]
  %v113 = vld [vmem:[%s0 + $0x228] sm:$0xff]
  %v114 = vld [vmem:[%s0 + $0x230] sm:$0xff]
  %v115 = vld [vmem:[%s0 + $0x238] sm:$0xff]
  %v116 = vld [vmem:[%s0 + $0x240] sm:$0xff]
  %v117 = vld [vmem:[%s0 + $0x248] sm:$0xff]
  %v118 = vld [vmem:[%s0 + $0x250] sm:$0xff]
  %v119 = vld [vmem:[%s0 + $0x258] sm:$0xff]
  %v120 = vld [vmem:[%s0 + $0x260] sm:$0xff]
  %v121 = vld [vmem:[%s0 + $0x268] sm:$0xff]
  %v122 = vld [vmem:[%s0 + $0x270] sm:$0xff]
  %v123 = vld [vmem:[%s0 + $0x278] sm:$0xff]
  %v124 = vld [vmem:[%s0 + $0x280] sm:$0xff]
  %v125 = vld [vmem:[%s0 + $0x288] sm:$0xff]
  %v126 = vld [vmem:[%s0 + $0x290] sm:$0xff]
  %v127 = vld [vmem:[%s0 + $0x298] sm:$0xff]
  %v128 = vld [vmem:[%s0 + $0x2a0] sm:$0xff]
  %v129 = vld [vmem:[%s0 + $0x2a8] sm:$0xff]
  %v130 = vld [vmem:[%s0 + $0x2b0] sm:$0xff]
  %v131 = vld [vmem:[%s0 + $0x2b8] sm:$0xff]
  %v132 = vld [vmem:[%s0 + $0x2c0] sm:$0xff]
  %v133 = vld [vmem:[%s0 + $0x2c8] sm:$0xff]
  %v134 = vld [vmem:[%s0 + $0x2d0] sm:$0xff]
  %v135 = vld [vmem:[%s0 + $0x2d8] sm:$0xff]
  %v136 = vld [vmem:[%s0 + $0x2e0] sm:$0xff]
  %v137 = vld [vmem:[%s0 + $0x2e8] sm:$0xff]
  %v138 = vld [vmem:[%s0 + $0x2f0] sm:$0xff]
  %v139 = vld [vmem:[%s0 + $0x2f8] sm:$0xff]
  %v140 = vld [vmem:[%s0 + $0x300] sm:$0xff]
  %v141 = vld [vmem:[%s0 + $0x308] sm:$0xff]
  %v142 = vld [vmem:[%s0 + $0x310] sm:$0xff]
  %v143 = vld [vmem:[%s0 + $0x318] sm:$0xff]
  %v144 = vld [vmem:[%s0 + $0x320] sm:$0xff]
  %v145 = vld [vmem:[%s0 + $0x328] sm:$0xff]
  %v146 = vld [vmem:[%s0 + $0x330] sm:$0xff]
  %v147 = vld [vmem:[%s0 + $0x338] sm:$0xff]
  %v148 = vld [vmem:[%s0 + $0x340] sm:$0xff]
  %v149 = vld [vmem:[%s0 + $0x348] sm:$0xff]
  %v150 = vld [vmem:[%s0 + $0x350] sm:$0xff]
  %v151 = vld [vmem:[%s0 + $0x358] sm:$0xff]
  %v152 = vld [vmem:[%s0 + $0x360] sm:$0xff]
  %v153 = vld [vmem:[%s0 + $0x368] sm:$0xff]
  %v154 = vld [vmem:[%s0 + $0x370] sm:$0xff]
  %v155 = vld [vmem:[%s0 + $0x378] sm:$0xff]
  %v156 = vld [vmem:[%s0 + $0x380] sm:$0xff]
  %v157 = vld [vmem:[%s0 + $0x388] sm:$0xff]
  %v158 = vld [vmem:[%s0 + $0x390] sm:$0xff]
  %v159 = vld [vmem:[%s0 + $0x398] sm:$0xff]
  %v160 = vld [vmem:[%s0 + $0x3a0] sm:$0xff]
  %v161 = vld [vmem:[%s0 + $0x3a8] sm:$0xff]
  %v162 = vld [vmem:[%s0 + $0x3b0] sm:$0xff]
  %v163 = vld [vmem:[%s0 + $0x3b8] sm:$0xff]
  %v164 = vld [vmem:[%s0 + $0x3c0] sm:$0xff]
  %v165 = vld [vmem:[%s0 + $0x3c8] sm:$0xff]
  %v166 = vld [vmem:[%s0 + $0x3d0] sm:$0xff]
  %v167 = vld [vmem:[%s0 + $0x3d8] sm:$0xff]
  %v168 = vld [vmem:[%s0 + $0x3e0] sm:$0xff]
  %v169 = vld [vmem:[%s0 + $0x3e8] sm:$0xff]
  %v170 = vld [vmem:[%s0 + $0x3f0] sm:$0xff]
  %v171 = vld [vmem:[%s0 + $0x3f8] sm:$0xff]
  %v172 = vld [vmem:[%s1] sm:$0xff]
  %v173 = vld [vmem:[%s1 + $0x8] sm:$0xff]
  %v174 = vld [vmem:[%s1 + $0x10] sm:$0xff]
  %v175 = vld [vmem:[%s1 + $0x18] sm:$0xff]
  %v176 = vld [vmem:[%s1 + $0x20] sm:$0xff]
  %v177 = vld [vmem:[%s1 + $0x28] sm:$0xff]
  %v178 = vld [vmem:[%s1 + $0x30] sm:$0xff]
  %v179 = vld [vmem:[%s1 + $0x38] sm:$0xff]
  %v180 = vld [vmem:[%s1 + $0x40] sm:$0xff]
  %v181 = vld [vmem:[%s1 + $0x48] sm:$0xff]
  %v182 = vld [vmem:[%s1 + $0x50] sm:$0xff]
  %v183 = vld [vmem:[%s1 + $0x58] sm:$0xff]
  %v184 = vld [vmem:[%s1 + $0x60] sm:$0xff]
  %v185 = vld [vmem:[%s1 + $0x68] sm:$0xff]
  %v186 = vld [vmem:[%s1 + $0x70] sm:$0xff]
  %v187 = vld [vmem:[%s1 + $0x78] sm:$0xff]
  %v188 = vld [vmem:[%s1 + $0x80] sm:$0xff]
  %v189 = vld [vmem:[%s1 + $0x88] sm:$0xff]
  %v190 = vld [vmem:[%s1 + $0x90] sm:$0xff]
  %v191 = vld [vmem:[%s1 + $0x98] sm:$0xff]
  %v192 = vld [vmem:[%s1 + $0xa0] sm:$0xff]
  %v193 = vld [vmem:[%s1 + $0xa8] sm:$0xff]
  %v194 = vld [vmem:[%s1 + $0xb0] sm:$0xff]
  %v195 = vld [vmem:[%s1 + $0xb8] sm:$0xff]
  %v196 = vld [vmem:[%s1 + $0xc0] sm:$0xff]
  %v197 = vld [vmem:[%s1 + $0xc8] sm:$0xff]
  %v198 = vld [vmem:[%s1 + $0xd0] sm:$0xff]
  %v199 = vld [vmem:[%s1 + $0xd8] sm:$0xff]
  %v200 = vld [vmem:[%s1 + $0xe0] sm:$0xff]
  %v201 = vld [vmem:[%s1 + $0xe8] sm:$0xff]
  %v202 = vld [vmem:[%s1 + $0xf0] sm:$0xff]
  %v203 = vld [vmem:[%s1 + $0xf8] sm:$0xff]
  %v204 = vld [vmem:[%s1 + $0x100] sm:$0xff]
  %v205 = vld [vmem:[%s1 + $0x108] sm:$0xff]
  %v206 = vld [vmem:[%s1 + $0x110] sm:$0xff]
  %v207 = vld [vmem:[%s1 + $0x118] sm:$0xff]
  %v208 = vld [vmem:[%s1 + $0x120] sm:$0xff]
  %v209 = vld [vmem:[%s1 + $0x128] sm:$0xff]
  %v210 = vld [vmem:[%s1 + $0x130] sm:$0xff]
  %v211 = vld [vmem:[%s1 + $0x138] sm:$0xff]
  %v212 = vld [vmem:[%s1 + $0x140] sm:$0xff]
  %v213 = vld [vmem:[%s1 + $0x148] sm:$0xff]
  %v214 = vld [vmem:[%s1 + $0x150] sm:$0xff]
  %v215 = vld [vmem:[%s1 + $0x158] sm:$0xff]
  %v216 = vld [vmem:[%s1 + $0x160] sm:$0xff]
  %v217 = vld [vmem:[%s1 + $0x168] sm:$0xff]
  %v218 = vld [vmem:[%s1 + $0x170] sm:$0xff]
  %v219 = vld [vmem:[%s1 + $0x178] sm:$0xff]
  %v220 = vld [vmem:[%s1 + $0x180] sm:$0xff]
  %v221 = vld [vmem:[%s1 + $0x188] sm:$0xff]
  %v222 = vld [vmem:[%s1 + $0x190] sm:$0xff]
  %v223 = vld [vmem:[%s1 + $0x198] sm:$0xff]
  %v224 = vld [vmem:[%s1 + $0x1a0] sm:$0xff]
  %v225 = vld [vmem:[%s1 + $0x1a8] sm:$0xff]
  %v226 = vld [vmem:[%s1 + $0x1b0] sm:$0xff]
  %v227 = vld [vmem:[%s1 + $0x1b8] sm:$0xff]
  %v228 = vld [vmem:[%s1 + $0x1c0] sm:$0xff]
  %v229 = vld [vmem:[%s1 + $0x1c8] sm:$0xff]
  %v230 = vld [vmem:[%s1 + $0x1d0] sm:$0xff]
  %v231 = vld [vmem:[%s1 + $0x1d8] sm:$0xff]
  %v232 = vld [vmem:[%s1 + $0x1e0] sm:$0xff]
  %v233 = vld [vmem:[%s1 + $0x1e8] sm:$0xff]
  %v234 = vld [vmem:[%s1 + $0x1f0] sm:$0xff]
  %v235 = vld [vmem:[%s1 + $0x1f8] sm:$0xff]
  %v236 = vld [vmem:[%s1 + $0x200] sm:$0xff]
  %v237 = vld [vmem:[%s1 + $0x208] sm:$0xff]
  %v238 = vld [vmem:[%s1 + $0x210] sm:$0xff]
  %v239 = vld [vmem:[%s1 + $0x218] sm:$0xff]
  %v240 = vld [vmem:[%s1 + $0x220] sm:$0xff]
  %v241 = vld [vmem:[%s1 + $0x228] sm:$0xff]
  %v242 = vld [vmem:[%s1 + $0x230] sm:$0xff]
  %v243 = vld [vmem:[%s1 + $0x238] sm:$0xff]
  %v244 = vld [vmem:[%s1 + $0x240] sm:$0xff]
  %v245 = vld [vmem:[%s1 + $0x248] sm:$0xff]
  %v246 = vld [vmem:[%s1 + $0x250] sm:$0xff]
  %v247 = vld [vmem:[%s1 + $0x258] sm:$0xff]
  %v248 = vld [vmem:[%s1 + $0x260] sm:$0xff]
  %v249 = vld [vmem:[%s1 + $0x268] sm:$0xff]
  %v250 = vld [vmem:[%s1 + $0x270] sm:$0xff]
  %v251 = vld [vmem:[%s1 + $0x278] sm:$0xff]
  %v252 = vld [vmem:[%s1 + $0x280] sm:$0xff]
  %v253 = vld [vmem:[%s1 + $0x288] sm:$0xff]
  %v254 = vld [vmem:[%s1 + $0x290] sm:$0xff]
  %v255 = vld [vmem:[%s1 + $0x298] sm:$0xff]
  %v256 = vld [vmem:[%s1 + $0x2a0] sm:$0xff]
  %v257 = vld [vmem:[%s1 + $0x2a8] sm:$0xff]
  %v258 = vld [vmem:[%s1 + $0x2b0] sm:$0xff]
  %v259 = vld [vmem:[%s1 + $0x2b8] sm:$0xff]
  %v260 = vld [vmem:[%s1 + $0x2c0] sm:$0xff]
  %v261 = vld [vmem:[%s1 + $0x2c8] sm:$0xff]
  %v262 = vld [vmem:[%s1 + $0x2d0] sm:$0xff]
  %v263 = vld [vmem:[%s1 + $0x2d8] sm:$0xff]
  %v264 = vld [vmem:[%s1 + $0x2e0] sm:$0xff]
  %v265 = vld [vmem:[%s1 + $0x2e8] sm:$0xff]
  %v266 = vld [vmem:[%s1 + $0x2f0] sm:$0xff]
  %v267 = vld [vmem:[%s1 + $0x2f8] sm:$0xff]
  %v268 = vld [vmem:[%s1 + $0x300] sm:$0xff]
  %v269 = vld [vmem:[%s1 + $0x308] sm:$0xff]
  %v270 = vld [vmem:[%s1 + $0x310] sm:$0xff]
  %v271 = vld [vmem:[%s1 + $0x318] sm:$0xff]
  %v272 = vld [vmem:[%s1 + $0x320] sm:$0xff]
  %v273 = vld [vmem:[%s1 + $0x328] sm:$0xff]
  %v274 = vld [vmem:[%s1 + $0x330] sm:$0xff]
  %v275 = vld [vmem:[%s1 + $0x338] sm:$0xff]
  %v276 = vld [vmem:[%s1 + $0x340] sm:$0xff]
  %v277 = vld [vmem:[%s1 + $0x348] sm:$0xff]
  %v278 = vld [vmem:[%s1 + $0x350] sm:$0xff]
  %v279 = vld [vmem:[%s1 + $0x358] sm:$0xff]
  %v280 = vld [vmem:[%s1 + $0x360] sm:$0xff]
  %v281 = vld [vmem:[%s1 + $0x368] sm:$0xff]
  %v282 = vld [vmem:[%s1 + $0x370] sm:$0xff]
  %v283 = vld [vmem:[%s1 + $0x378] sm:$0xff]
  %v284 = vld [vmem:[%s1 + $0x380] sm:$0xff]
  %v285 = vld [vmem:[%s1 + $0x388] sm:$0xff]
  %v286 = vld [vmem:[%s1 + $0x390] sm:$0xff]
  %v287 = vld [vmem:[%s1 + $0x398] sm:$0xff]
  %v288 = vld [vmem:[%s1 + $0x3a0] sm:$0xff]
  %v289 = vld [vmem:[%s1 + $0x3a8] sm:$0xff]
  %v290 = vld [vmem:[%s1 + $0x3b0] sm:$0xff]
  %v291 = vld [vmem:[%s1 + $0x3b8] sm:$0xff]
  %v292 = vld [vmem:[%s1 + $0x3c0] sm:$0xff]
  %v293 = vld [vmem:[%s1 + $0x3c8] sm:$0xff]
  %v294 = vld [vmem:[%s1 + $0x3d0] sm:$0xff]
  %v295 = vld [vmem:[%s1 + $0x3d8] sm:$0xff]
  %v296 = vld [vmem:[%s1 + $0x3e0] sm:$0xff]
  %v297 = vld [vmem:[%s1 + $0x3e8] sm:$0xff]
  %v298 = vld [vmem:[%s1 + $0x3f0] sm:$0xff]
  %v299 = vld [vmem:[%s1 + $0x3f8] sm:$0xff]
  %v428 = vunpack.c.l.b16 %v44
  %v429 = vunpack.c.h.b16 %v44
  %v430 = vunpack.c.l.b16 %v45
  %v431 = vunpack.c.h.b16 %v45
  %v432 = vunpack.c.l.b16 %v46
  %v433 = vunpack.c.h.b16 %v46
  %v434 = vunpack.c.l.b16 %v47
  %v435 = vunpack.c.h.b16 %v47
  %v436 = vunpack.c.l.b16 %v48
  %v437 = vunpack.c.h.b16 %v48
  %v438 = vunpack.c.l.b16 %v49
  %v439 = vunpack.c.h.b16 %v49
  %v440 = vunpack.c.l.b16 %v50
  %v441 = vunpack.c.h.b16 %v50
  %v442 = vunpack.c.l.b16 %v51
  %v443 = vunpack.c.h.b16 %v51
  %v444 = vunpack.c.l.b16 %v52
  %v445 = vunpack.c.h.b16 %v52
  %v446 = vunpack.c.l.b16 %v53
  %v447 = vunpack.c.h.b16 %v53
  %v448 = vunpack.c.l.b16 %v54
  %v449 = vunpack.c.h.b16 %v54
  %v450 = vunpack.c.l.b16 %v55
  %v451 = vunpack.c.h.b16 %v55
  %v452 = vunpack.c.l.b16 %v56
  %v453 = vunpack.c.h.b16 %v56
  %v454 = vunpack.c.l.b16 %v57
  %v455 = vunpack.c.h.b16 %v57
  %v456 = vunpack.c.l.b16 %v58
  %v457 = vunpack.c.h.b16 %v58
  %v458 = vunpack.c.l.b16 %v59
  %v459 = vunpack.c.h.b16 %v59
  %v460 = vunpack.c.l.b16 %v60
  %v461 = vunpack.c.h.b16 %v60
  %v462 = vunpack.c.l.b16 %v61
  %v463 = vunpack.c.h.b16 %v61
  %v464 = vunpack.c.l.b16 %v62
  %v465 = vunpack.c.h.b16 %v62
  %v466 = vunpack.c.l.b16 %v63
  %v467 = vunpack.c.h.b16 %v63
  %v468 = vunpack.c.l.b16 %v64
  %v469 = vunpack.c.h.b16 %v64
  %v470 = vunpack.c.l.b16 %v65
  %v471 = vunpack.c.h.b16 %v65
  %v472 = vunpack.c.l.b16 %v66
  %v473 = vunpack.c.h.b16 %v66
  %v474 = vunpack.c.l.b16 %v67
  %v475 = vunpack.c.h.b16 %v67
  %v476 = vunpack.c.l.b16 %v68
  %v477 = vunpack.c.h.b16 %v68
  %v478 = vunpack.c.l.b16 %v69
  %v479 = vunpack.c.h.b16 %v69
  %v480 = vunpack.c.l.b16 %v70
  %v481 = vunpack.c.h.b16 %v70
  %v482 = vunpack.c.l.b16 %v71
  %v483 = vunpack.c.h.b16 %v71
  %v484 = vunpack.c.l.b16 %v72
  %v485 = vunpack.c.h.b16 %v72
  %v486 = vunpack.c.l.b16 %v73
  %v487 = vunpack.c.h.b16 %v73
  %v488 = vunpack.c.l.b16 %v74
  %v489 = vunpack.c.h.b16 %v74
  %v490 = vunpack.c.l.b16 %v75
  %v491 = vunpack.c.h.b16 %v75
  %v492 = vunpack.c.l.b16 %v76
  %v493 = vunpack.c.h.b16 %v76
  %v494 = vunpack.c.l.b16 %v77
  %v495 = vunpack.c.h.b16 %v77
  %v496 = vunpack.c.l.b16 %v78
  %v497 = vunpack.c.h.b16 %v78
  %v498 = vunpack.c.l.b16 %v79
  %v499 = vunpack.c.h.b16 %v79
  %v500 = vunpack.c.l.b16 %v80
  %v501 = vunpack.c.h.b16 %v80
  %v502 = vunpack.c.l.b16 %v81
  %v503 = vunpack.c.h.b16 %v81
  %v504 = vunpack.c.l.b16 %v82
  %v505 = vunpack.c.h.b16 %v82
  %v506 = vunpack.c.l.b16 %v83
  %v507 = vunpack.c.h.b16 %v83
  %v508 = vunpack.c.l.b16 %v84
  %v509 = vunpack.c.h.b16 %v84
  %v510 = vunpack.c.l.b16 %v85
  %v511 = vunpack.c.h.b16 %v85
  %v512 = vunpack.c.l.b16 %v86
  %v513 = vunpack.c.h.b16 %v86
  %v514 = vunpack.c.l.b16 %v87
  %v515 = vunpack.c.h.b16 %v87
  %v516 = vunpack.c.l.b16 %v88
  %v517 = vunpack.c.h.b16 %v88
  %v518 = vunpack.c.l.b16 %v89
  %v519 = vunpack.c.h.b16 %v89
  %v520 = vunpack.c.l.b16 %v90
  %v521 = vunpack.c.h.b16 %v90
  %v522 = vunpack.c.l.b16 %v91
  %v523 = vunpack.c.h.b16 %v91
  %v524 = vunpack.c.l.b16 %v92
  %v525 = vunpack.c.h.b16 %v92
  %v526 = vunpack.c.l.b16 %v93
  %v527 = vunpack.c.h.b16 %v93
  %v528 = vunpack.c.l.b16 %v94
  %v529 = vunpack.c.h.b16 %v94
  %v530 = vunpack.c.l.b16 %v95
  %v531 = vunpack.c.h.b16 %v95
  %v532 = vunpack.c.l.b16 %v96
  %v533 = vunpack.c.h.b16 %v96
  %v534 = vunpack.c.l.b16 %v97
  %v535 = vunpack.c.h.b16 %v97
  %v536 = vunpack.c.l.b16 %v98
  %v537 = vunpack.c.h.b16 %v98
  %v538 = vunpack.c.l.b16 %v99
  %v539 = vunpack.c.h.b16 %v99
  %v540 = vunpack.c.l.b16 %v100
  %v541 = vunpack.c.h.b16 %v100
  %v542 = vunpack.c.l.b16 %v101
  %v543 = vunpack.c.h.b16 %v101
  %v544 = vunpack.c.l.b16 %v102
  %v545 = vunpack.c.h.b16 %v102
  %v546 = vunpack.c.l.b16 %v103
  %v547 = vunpack.c.h.b16 %v103
  %v548 = vunpack.c.l.b16 %v104
  %v549 = vunpack.c.h.b16 %v104
  %v550 = vunpack.c.l.b16 %v105
  %v551 = vunpack.c.h.b16 %v105
  %v552 = vunpack.c.l.b16 %v106
  %v553 = vunpack.c.h.b16 %v106
  %v554 = vunpack.c.l.b16 %v107
  %v555 = vunpack.c.h.b16 %v107
  %v556 = vunpack.c.l.b16 %v108
  %v557 = vunpack.c.h.b16 %v108
  %v558 = vunpack.c.l.b16 %v109
  %v559 = vunpack.c.h.b16 %v109
  %v560 = vunpack.c.l.b16 %v110
  %v561 = vunpack.c.h.b16 %v110
  %v562 = vunpack.c.l.b16 %v111
  %v563 = vunpack.c.h.b16 %v111
  %v564 = vunpack.c.l.b16 %v112
  %v565 = vunpack.c.h.b16 %v112
  %v566 = vunpack.c.l.b16 %v113
  %v567 = vunpack.c.h.b16 %v113
  %v568 = vunpack.c.l.b16 %v114
  %v569 = vunpack.c.h.b16 %v114
  %v570 = vunpack.c.l.b16 %v115
  %v571 = vunpack.c.h.b16 %v115
  %v572 = vunpack.c.l.b16 %v116
  %v573 = vunpack.c.h.b16 %v116
  %v574 = vunpack.c.l.b16 %v117
  %v575 = vunpack.c.h.b16 %v117
  %v576 = vunpack.c.l.b16 %v118
  %v577 = vunpack.c.h.b16 %v118
  %v578 = vunpack.c.l.b16 %v119
  %v579 = vunpack.c.h.b16 %v119
  %v580 = vunpack.c.l.b16 %v120
  %v581 = vunpack.c.h.b16 %v120
  %v582 = vunpack.c.l.b16 %v121
  %v583 = vunpack.c.h.b16 %v121
  %v584 = vunpack.c.l.b16 %v122
  %v585 = vunpack.c.h.b16 %v122
  %v586 = vunpack.c.l.b16 %v123
  %v587 = vunpack.c.h.b16 %v123
  %v588 = vunpack.c.l.b16 %v124
  %v589 = vunpack.c.h.b16 %v124
  %v590 = vunpack.c.l.b16 %v125
  %v591 = vunpack.c.h.b16 %v125
  %v592 = vunpack.c.l.b16 %v126
  %v593 = vunpack.c.h.b16 %v126
  %v594 = vunpack.c.l.b16 %v127
  %v595 = vunpack.c.h.b16 %v127
  %v596 = vunpack.c.l.b16 %v128
  %v597 = vunpack.c.h.b16 %v128
  %v598 = vunpack.c.l.b16 %v129
  %v599 = vunpack.c.h.b16 %v129
  %v600 = vunpack.c.l.b16 %v130
  %v601 = vunpack.c.h.b16 %v130
  %v602 = vunpack.c.l.b16 %v131
  %v603 = vunpack.c.h.b16 %v131
  %v604 = vunpack.c.l.b16 %v132
  %v605 = vunpack.c.h.b16 %v132
  %v606 = vunpack.c.l.b16 %v133
  %v607 = vunpack.c.h.b16 %v133
  %v608 = vunpack.c.l.b16 %v134
  %v609 = vunpack.c.h.b16 %v134
  %v610 = vunpack.c.l.b16 %v135
  %v611 = vunpack.c.h.b16 %v135
  %v612 = vunpack.c.l.b16 %v136
  %v613 = vunpack.c.h.b16 %v136
  %v614 = vunpack.c.l.b16 %v137
  %v615 = vunpack.c.h.b16 %v137
  %v616 = vunpack.c.l.b16 %v138
  %v617 = vunpack.c.h.b16 %v138
  %v618 = vunpack.c.l.b16 %v139
  %v619 = vunpack.c.h.b16 %v139
  %v620 = vunpack.c.l.b16 %v140
  %v621 = vunpack.c.h.b16 %v140
  %v622 = vunpack.c.l.b16 %v141
  %v623 = vunpack.c.h.b16 %v141
  %v624 = vunpack.c.l.b16 %v142
  %v625 = vunpack.c.h.b16 %v142
  %v626 = vunpack.c.l.b16 %v143
  %v627 = vunpack.c.h.b16 %v143
  %v628 = vunpack.c.l.b16 %v144
  %v629 = vunpack.c.h.b16 %v144
  %v630 = vunpack.c.l.b16 %v145
  %v631 = vunpack.c.h.b16 %v145
  %v632 = vunpack.c.l.b16 %v146
  %v633 = vunpack.c.h.b16 %v146
  %v634 = vunpack.c.l.b16 %v147
  %v635 = vunpack.c.h.b16 %v147
  %v636 = vunpack.c.l.b16 %v148
  %v637 = vunpack.c.h.b16 %v148
  %v638 = vunpack.c.l.b16 %v149
  %v639 = vunpack.c.h.b16 %v149
  %v640 = vunpack.c.l.b16 %v150
  %v641 = vunpack.c.h.b16 %v150
  %v642 = vunpack.c.l.b16 %v151
  %v643 = vunpack.c.h.b16 %v151
  %v644 = vunpack.c.l.b16 %v152
  %v645 = vunpack.c.h.b16 %v152
  %v646 = vunpack.c.l.b16 %v153
  %v647 = vunpack.c.h.b16 %v153
  %v648 = vunpack.c.l.b16 %v154
  %v649 = vunpack.c.h.b16 %v154
  %v650 = vunpack.c.l.b16 %v155
  %v651 = vunpack.c.h.b16 %v155
  %v652 = vunpack.c.l.b16 %v156
  %v653 = vunpack.c.h.b16 %v156
  %v654 = vunpack.c.l.b16 %v157
  %v655 = vunpack.c.h.b16 %v157
  %v656 = vunpack.c.l.b16 %v158
  %v657 = vunpack.c.h.b16 %v158
  %v658 = vunpack.c.l.b16 %v159
  %v659 = vunpack.c.h.b16 %v159
  %v660 = vunpack.c.l.b16 %v160
  %v661 = vunpack.c.h.b16 %v160
  %v662 = vunpack.c.l.b16 %v161
  %v663 = vunpack.c.h.b16 %v161
  %v664 = vunpack.c.l.b16 %v162
  %v665 = vunpack.c.h.b16 %v162
  %v666 = vunpack.c.l.b16 %v163
  %v667 = vunpack.c.h.b16 %v163
  %v668 = vunpack.c.l.b16 %v164
  %v669 = vunpack.c.h.b16 %v164
  %v670 = vunpack.c.l.b16 %v165
  %v671 = vunpack.c.h.b16 %v165
  %v672 = vunpack.c.l.b16 %v166
  %v673 = vunpack.c.h.b16 %v166
  %v674 = vunpack.c.l.b16 %v167
  %v675 = vunpack.c.h.b16 %v167
  %v676 = vunpack.c.l.b16 %v168
  %v677 = vunpack.c.h.b16 %v168
  %v678 = vunpack.c.l.b16 %v169
  %v679 = vunpack.c.h.b16 %v169
  %v680 = vunpack.c.l.b16 %v170
  %v681 = vunpack.c.h.b16 %v170
  %v682 = vunpack.c.l.b16 %v171
  %v683 = vunpack.c.h.b16 %v171
  %v684 = vpack.c.b16 %v430, %v428
  %v685 = vpack.c.b16 %v431, %v429
  %v686 = vpack.c.b16 %v434, %v432
  %v687 = vpack.c.b16 %v435, %v433
  %v688 = vpack.c.b16 %v438, %v436
  %v689 = vpack.c.b16 %v439, %v437
  %v690 = vpack.c.b16 %v442, %v440
  %v691 = vpack.c.b16 %v443, %v441
  %v692 = vpack.c.b16 %v446, %v444
  %v693 = vpack.c.b16 %v447, %v445
  %v694 = vpack.c.b16 %v450, %v448
  %v695 = vpack.c.b16 %v451, %v449
  %v696 = vpack.c.b16 %v454, %v452
  %v697 = vpack.c.b16 %v455, %v453
  %v698 = vpack.c.b16 %v458, %v456
  %v699 = vpack.c.b16 %v459, %v457
  %v700 = vpack.c.b16 %v462, %v460
  %v701 = vpack.c.b16 %v463, %v461
  %v702 = vpack.c.b16 %v466, %v464
  %v703 = vpack.c.b16 %v467, %v465
  %v704 = vpack.c.b16 %v470, %v468
  %v705 = vpack.c.b16 %v471, %v469
  %v706 = vpack.c.b16 %v474, %v472
  %v707 = vpack.c.b16 %v475, %v473
  %v708 = vpack.c.b16 %v478, %v476
  %v709 = vpack.c.b16 %v479, %v477
  %v710 = vpack.c.b16 %v482, %v480
  %v711 = vpack.c.b16 %v483, %v481
  %v712 = vpack.c.b16 %v486, %v484
  %v713 = vpack.c.b16 %v487, %v485
  %v714 = vpack.c.b16 %v490, %v488
  %v715 = vpack.c.b16 %v491, %v489
  %v716 = vpack.c.b16 %v494, %v492
  %v717 = vpack.c.b16 %v495, %v493
  %v718 = vpack.c.b16 %v498, %v496
  %v719 = vpack.c.b16 %v499, %v497
  %v720 = vpack.c.b16 %v502, %v500
  %v721 = vpack.c.b16 %v503, %v501
  %v722 = vpack.c.b16 %v506, %v504
  %v723 = vpack.c.b16 %v507, %v505
  %v724 = vpack.c.b16 %v510, %v508
  %v725 = vpack.c.b16 %v511, %v509
  %v726 = vpack.c.b16 %v514, %v512
  %v727 = vpack.c.b16 %v515, %v513
  %v728 = vpack.c.b16 %v518, %v516
  %v729 = vpack.c.b16 %v519, %v517
  %v730 = vpack.c.b16 %v522, %v520
  %v731 = vpack.c.b16 %v523, %v521
  %v732 = vpack.c.b16 %v526, %v524
  %v733 = vpack.c.b16 %v527, %v525
  %v734 = vpack.c.b16 %v530, %v528
  %v735 = vpack.c.b16 %v531, %v529
  %v736 = vpack.c.b16 %v534, %v532
  %v737 = vpack.c.b16 %v535, %v533
  %v738 = vpack.c.b16 %v538, %v536
  %v739 = vpack.c.b16 %v539, %v537
  %v740 = vpack.c.b16 %v542, %v540
  %v741 = vpack.c.b16 %v543, %v541
  %v742 = vpack.c.b16 %v546, %v544
  %v743 = vpack.c.b16 %v547, %v545
  %v744 = vpack.c.b16 %v550, %v548
  %v745 = vpack.c.b16 %v551, %v549
  %v746 = vpack.c.b16 %v554, %v552
  %v747 = vpack.c.b16 %v555, %v553
  %v748 = vpack.c.b16 %v558, %v556
  %v749 = vpack.c.b16 %v559, %v557
  %v750 = vpack.c.b16 %v562, %v560
  %v751 = vpack.c.b16 %v563, %v561
  %v752 = vpack.c.b16 %v566, %v564
  %v753 = vpack.c.b16 %v567, %v565
  %v754 = vpack.c.b16 %v570, %v568
  %v755 = vpack.c.b16 %v571, %v569
  %v756 = vpack.c.b16 %v574, %v572
  %v757 = vpack.c.b16 %v575, %v573
  %v758 = vpack.c.b16 %v578, %v576
  %v759 = vpack.c.b16 %v579, %v577
  %v760 = vpack.c.b16 %v582, %v580
  %v761 = vpack.c.b16 %v583, %v581
  %v762 = vpack.c.b16 %v586, %v584
  %v763 = vpack.c.b16 %v587, %v585
  %v764 = vpack.c.b16 %v590, %v588
  %v765 = vpack.c.b16 %v591, %v589
  %v766 = vpack.c.b16 %v594, %v592
  %v767 = vpack.c.b16 %v595, %v593
  %v768 = vpack.c.b16 %v598, %v596
  %v769 = vpack.c.b16 %v599, %v597
  %v770 = vpack.c.b16 %v602, %v600
  %v771 = vpack.c.b16 %v603, %v601
  %v772 = vpack.c.b16 %v606, %v604
  %v773 = vpack.c.b16 %v607, %v605
  %v774 = vpack.c.b16 %v610, %v608
  %v775 = vpack.c.b16 %v611, %v609
  %v776 = vpack.c.b16 %v614, %v612
  %v777 = vpack.c.b16 %v615, %v613
  %v778 = vpack.c.b16 %v618, %v616
  %v779 = vpack.c.b16 %v619, %v617
  %v780 = vpack.c.b16 %v622, %v620
  %v781 = vpack.c.b16 %v623, %v621
  %v782 = vpack.c.b16 %v626, %v624
  %v783 = vpack.c.b16 %v627, %v625
  %v784 = vpack.c.b16 %v630, %v628
  %v785 = vpack.c.b16 %v631, %v629
  %v786 = vpack.c.b16 %v634, %v632
  %v787 = vpack.c.b16 %v635, %v633
  %v788 = vpack.c.b16 %v638, %v636
  %v789 = vpack.c.b16 %v639, %v637
  %v790 = vpack.c.b16 %v642, %v640
  %v791 = vpack.c.b16 %v643, %v641
  %v792 = vpack.c.b16 %v646, %v644
  %v793 = vpack.c.b16 %v647, %v645
  %v794 = vpack.c.b16 %v650, %v648
  %v795 = vpack.c.b16 %v651, %v649
  %v796 = vpack.c.b16 %v654, %v652
  %v797 = vpack.c.b16 %v655, %v653
  %v798 = vpack.c.b16 %v658, %v656
  %v799 = vpack.c.b16 %v659, %v657
  %v800 = vpack.c.b16 %v662, %v660
  %v801 = vpack.c.b16 %v663, %v661
  %v802 = vpack.c.b16 %v666, %v664
  %v803 = vpack.c.b16 %v667, %v665
  %v804 = vpack.c.b16 %v670, %v668
  %v805 = vpack.c.b16 %v671, %v669
  %v806 = vpack.c.b16 %v674, %v672
  %v807 = vpack.c.b16 %v675, %v673
  %v808 = vpack.c.b16 %v678, %v676
  %v809 = vpack.c.b16 %v679, %v677
  %v810 = vpack.c.b16 %v682, %v680
  %v811 = vpack.c.b16 %v683, %v681
  %v1068 = vunpack.c.l.b16 %v172
  %v1069 = vunpack.c.h.b16 %v172
  %v1070 = vunpack.c.l.b16 %v173
  %v1071 = vunpack.c.h.b16 %v173
  %v1072 = vunpack.c.l.b16 %v174
  %v1073 = vunpack.c.h.b16 %v174
  %v1074 = vunpack.c.l.b16 %v175
  %v1075 = vunpack.c.h.b16 %v175
  %v1076 = vunpack.c.l.b16 %v176
  %v1077 = vunpack.c.h.b16 %v176
  %v1078 = vunpack.c.l.b16 %v177
  %v1079 = vunpack.c.h.b16 %v177
  %v1080 = vunpack.c.l.b16 %v178
  %v1081 = vunpack.c.h.b16 %v178
  %v1082 = vunpack.c.l.b16 %v179
  %v1083 = vunpack.c.h.b16 %v179
  %v1084 = vunpack.c.l.b16 %v180
  %v1085 = vunpack.c.h.b16 %v180
  %v1086 = vunpack.c.l.b16 %v181
  %v1087 = vunpack.c.h.b16 %v181
  %v1088 = vunpack.c.l.b16 %v182
  %v1089 = vunpack.c.h.b16 %v182
  %v1090 = vunpack.c.l.b16 %v183
  %v1091 = vunpack.c.h.b16 %v183
  %v1092 = vunpack.c.l.b16 %v184
  %v1093 = vunpack.c.h.b16 %v184
  %v1094 = vunpack.c.l.b16 %v185
  %v1095 = vunpack.c.h.b16 %v185
  %v1096 = vunpack.c.l.b16 %v186
  %v1097 = vunpack.c.h.b16 %v186
  %v1098 = vunpack.c.l.b16 %v187
  %v1099 = vunpack.c.h.b16 %v187
  %v1100 = vunpack.c.l.b16 %v188
  %v1101 = vunpack.c.h.b16 %v188
  %v1102 = vunpack.c.l.b16 %v189
  %v1103 = vunpack.c.h.b16 %v189
  %v1104 = vunpack.c.l.b16 %v190
  %v1105 = vunpack.c.h.b16 %v190
  %v1106 = vunpack.c.l.b16 %v191
  %v1107 = vunpack.c.h.b16 %v191
  %v1108 = vunpack.c.l.b16 %v192
  %v1109 = vunpack.c.h.b16 %v192
  %v1110 = vunpack.c.l.b16 %v193
  %v1111 = vunpack.c.h.b16 %v193
  %v1112 = vunpack.c.l.b16 %v194
  %v1113 = vunpack.c.h.b16 %v194
  %v1114 = vunpack.c.l.b16 %v195
  %v1115 = vunpack.c.h.b16 %v195
  %v1116 = vunpack.c.l.b16 %v196
  %v1117 = vunpack.c.h.b16 %v196
  %v1118 = vunpack.c.l.b16 %v197
  %v1119 = vunpack.c.h.b16 %v197
  %v1120 = vunpack.c.l.b16 %v198
  %v1121 = vunpack.c.h.b16 %v198
  %v1122 = vunpack.c.l.b16 %v199
  %v1123 = vunpack.c.h.b16 %v199
  %v1124 = vunpack.c.l.b16 %v200
  %v1125 = vunpack.c.h.b16 %v200
  %v1126 = vunpack.c.l.b16 %v201
  %v1127 = vunpack.c.h.b16 %v201
  %v1128 = vunpack.c.l.b16 %v202
  %v1129 = vunpack.c.h.b16 %v202
  %v1130 = vunpack.c.l.b16 %v203
  %v1131 = vunpack.c.h.b16 %v203
  %v1132 = vunpack.c.l.b16 %v204
  %v1133 = vunpack.c.h.b16 %v204
  %v1134 = vunpack.c.l.b16 %v205
  %v1135 = vunpack.c.h.b16 %v205
  %v1136 = vunpack.c.l.b16 %v206
  %v1137 = vunpack.c.h.b16 %v206
  %v1138 = vunpack.c.l.b16 %v207
  %v1139 = vunpack.c.h.b16 %v207
  %v1140 = vunpack.c.l.b16 %v208
  %v1141 = vunpack.c.h.b16 %v208
  %v1142 = vunpack.c.l.b16 %v209
  %v1143 = vunpack.c.h.b16 %v209
  %v1144 = vunpack.c.l.b16 %v210
  %v1145 = vunpack.c.h.b16 %v210
  %v1146 = vunpack.c.l.b16 %v211
  %v1147 = vunpack.c.h.b16 %v211
  %v1148 = vunpack.c.l.b16 %v212
  %v1149 = vunpack.c.h.b16 %v212
  %v1150 = vunpack.c.l.b16 %v213
  %v1151 = vunpack.c.h.b16 %v213
  %v1152 = vunpack.c.l.b16 %v214
  %v1153 = vunpack.c.h.b16 %v214
  %v1154 = vunpack.c.l.b16 %v215
  %v1155 = vunpack.c.h.b16 %v215
  %v1156 = vunpack.c.l.b16 %v216
  %v1157 = vunpack.c.h.b16 %v216
  %v1158 = vunpack.c.l.b16 %v217
  %v1159 = vunpack.c.h.b16 %v217
  %v1160 = vunpack.c.l.b16 %v218
  %v1161 = vunpack.c.h.b16 %v218
  %v1162 = vunpack.c.l.b16 %v219
  %v1163 = vunpack.c.h.b16 %v219
  %v1164 = vunpack.c.l.b16 %v220
  %v1165 = vunpack.c.h.b16 %v220
  %v1166 = vunpack.c.l.b16 %v221
  %v1167 = vunpack.c.h.b16 %v221
  %v1168 = vunpack.c.l.b16 %v222
  %v1169 = vunpack.c.h.b16 %v222
  %v1170 = vunpack.c.l.b16 %v223
  %v1171 = vunpack.c.h.b16 %v223
  %v1172 = vunpack.c.l.b16 %v224
  %v1173 = vunpack.c.h.b16 %v224
  %v1174 = vunpack.c.l.b16 %v225
  %v1175 = vunpack.c.h.b16 %v225
  %v1176 = vunpack.c.l.b16 %v226
  %v1177 = vunpack.c.h.b16 %v226
  %v1178 = vunpack.c.l.b16 %v227
  %v1179 = vunpack.c.h.b16 %v227
  %v1180 = vunpack.c.l.b16 %v228
  %v1181 = vunpack.c.h.b16 %v228
  %v1182 = vunpack.c.l.b16 %v229
  %v1183 = vunpack.c.h.b16 %v229
  %v1184 = vunpack.c.l.b16 %v230
  %v1185 = vunpack.c.h.b16 %v230
  %v1186 = vunpack.c.l.b16 %v231
  %v1187 = vunpack.c.h.b16 %v231
  %v1188 = vunpack.c.l.b16 %v232
  %v1189 = vunpack.c.h.b16 %v232
  %v1190 = vunpack.c.l.b16 %v233
  %v1191 = vunpack.c.h.b16 %v233
  %v1192 = vunpack.c.l.b16 %v234
  %v1193 = vunpack.c.h.b16 %v234
  %v1194 = vunpack.c.l.b16 %v235
  %v1195 = vunpack.c.h.b16 %v235
  %v1196 = vunpack.c.l.b16 %v236
  %v1197 = vunpack.c.h.b16 %v236
  %v1198 = vunpack.c.l.b16 %v237
  %v1199 = vunpack.c.h.b16 %v237
  %v1200 = vunpack.c.l.b16 %v238
  %v1201 = vunpack.c.h.b16 %v238
  %v1202 = vunpack.c.l.b16 %v239
  %v1203 = vunpack.c.h.b16 %v239
  %v1204 = vunpack.c.l.b16 %v240
  %v1205 = vunpack.c.h.b16 %v240
  %v1206 = vunpack.c.l.b16 %v241
  %v1207 = vunpack.c.h.b16 %v241
  %v1208 = vunpack.c.l.b16 %v242
  %v1209 = vunpack.c.h.b16 %v242
  %v1210 = vunpack.c.l.b16 %v243
  %v1211 = vunpack.c.h.b16 %v243
  %v1212 = vunpack.c.l.b16 %v244
  %v1213 = vunpack.c.h.b16 %v244
  %v1214 = vunpack.c.l.b16 %v245
  %v1215 = vunpack.c.h.b16 %v245
  %v1216 = vunpack.c.l.b16 %v246
  %v1217 = vunpack.c.h.b16 %v246
  %v1218 = vunpack.c.l.b16 %v247
  %v1219 = vunpack.c.h.b16 %v247
  %v1220 = vunpack.c.l.b16 %v248
  %v1221 = vunpack.c.h.b16 %v248
  %v1222 = vunpack.c.l.b16 %v249
  %v1223 = vunpack.c.h.b16 %v249
  %v1224 = vunpack.c.l.b16 %v250
  %v1225 = vunpack.c.h.b16 %v250
  %v1226 = vunpack.c.l.b16 %v251
  %v1227 = vunpack.c.h.b16 %v251
  %v1228 = vunpack.c.l.b16 %v252
  %v1229 = vunpack.c.h.b16 %v252
  %v1230 = vunpack.c.l.b16 %v253
  %v1231 = vunpack.c.h.b16 %v253
  %v1232 = vunpack.c.l.b16 %v254
  %v1233 = vunpack.c.h.b16 %v254
  %v1234 = vunpack.c.l.b16 %v255
  %v1235 = vunpack.c.h.b16 %v255
  %v1236 = vunpack.c.l.b16 %v256
  %v1237 = vunpack.c.h.b16 %v256
  %v1238 = vunpack.c.l.b16 %v257
  %v1239 = vunpack.c.h.b16 %v257
  %v1240 = vunpack.c.l.b16 %v258
  %v1241 = vunpack.c.h.b16 %v258
  %v1242 = vunpack.c.l.b16 %v259
  %v1243 = vunpack.c.h.b16 %v259
  %v1244 = vunpack.c.l.b16 %v260
  %v1245 = vunpack.c.h.b16 %v260
  %v1246 = vunpack.c.l.b16 %v261
  %v1247 = vunpack.c.h.b16 %v261
  %v1248 = vunpack.c.l.b16 %v262
  %v1249 = vunpack.c.h.b16 %v262
  %v1250 = vunpack.c.l.b16 %v263
  %v1251 = vunpack.c.h.b16 %v263
  %v1252 = vunpack.c.l.b16 %v264
  %v1253 = vunpack.c.h.b16 %v264
  %v1254 = vunpack.c.l.b16 %v265
  %v1255 = vunpack.c.h.b16 %v265
  %v1256 = vunpack.c.l.b16 %v266
  %v1257 = vunpack.c.h.b16 %v266
  %v1258 = vunpack.c.l.b16 %v267
  %v1259 = vunpack.c.h.b16 %v267
  %v1260 = vunpack.c.l.b16 %v268
  %v1261 = vunpack.c.h.b16 %v268
  %v1262 = vunpack.c.l.b16 %v269
  %v1263 = vunpack.c.h.b16 %v269
  %v1264 = vunpack.c.l.b16 %v270
  %v1265 = vunpack.c.h.b16 %v270
  %v1266 = vunpack.c.l.b16 %v271
  %v1267 = vunpack.c.h.b16 %v271
  %v1268 = vunpack.c.l.b16 %v272
  %v1269 = vunpack.c.h.b16 %v272
  %v1270 = vunpack.c.l.b16 %v273
  %v1271 = vunpack.c.h.b16 %v273
  %v1272 = vunpack.c.l.b16 %v274
  %v1273 = vunpack.c.h.b16 %v274
  %v1274 = vunpack.c.l.b16 %v275
  %v1275 = vunpack.c.h.b16 %v275
  %v1276 = vunpack.c.l.b16 %v276
  %v1277 = vunpack.c.h.b16 %v276
  %v1278 = vunpack.c.l.b16 %v277
  %v1279 = vunpack.c.h.b16 %v277
  %v1280 = vunpack.c.l.b16 %v278
  %v1281 = vunpack.c.h.b16 %v278
  %v1282 = vunpack.c.l.b16 %v279
  %v1283 = vunpack.c.h.b16 %v279
  %v1284 = vunpack.c.l.b16 %v280
  %v1285 = vunpack.c.h.b16 %v280
  %v1286 = vunpack.c.l.b16 %v281
  %v1287 = vunpack.c.h.b16 %v281
  %v1288 = vunpack.c.l.b16 %v282
  %v1289 = vunpack.c.h.b16 %v282
  %v1290 = vunpack.c.l.b16 %v283
  %v1291 = vunpack.c.h.b16 %v283
  %v1292 = vunpack.c.l.b16 %v284
  %v1293 = vunpack.c.h.b16 %v284
  %v1294 = vunpack.c.l.b16 %v285
  %v1295 = vunpack.c.h.b16 %v285
  %v1296 = vunpack.c.l.b16 %v286
  %v1297 = vunpack.c.h.b16 %v286
  %v1298 = vunpack.c.l.b16 %v287
  %v1299 = vunpack.c.h.b16 %v287
  %v1300 = vunpack.c.l.b16 %v288
  %v1301 = vunpack.c.h.b16 %v288
  %v1302 = vunpack.c.l.b16 %v289
  %v1303 = vunpack.c.h.b16 %v289
  %v1304 = vunpack.c.l.b16 %v290
  %v1305 = vunpack.c.h.b16 %v290
  %v1306 = vunpack.c.l.b16 %v291
  %v1307 = vunpack.c.h.b16 %v291
  %v1308 = vunpack.c.l.b16 %v292
  %v1309 = vunpack.c.h.b16 %v292
  %v1310 = vunpack.c.l.b16 %v293
  %v1311 = vunpack.c.h.b16 %v293
  %v1312 = vunpack.c.l.b16 %v294
  %v1313 = vunpack.c.h.b16 %v294
  %v1314 = vunpack.c.l.b16 %v295
  %v1315 = vunpack.c.h.b16 %v295
  %v1316 = vunpack.c.l.b16 %v296
  %v1317 = vunpack.c.h.b16 %v296
  %v1318 = vunpack.c.l.b16 %v297
  %v1319 = vunpack.c.h.b16 %v297
  %v1320 = vunpack.c.l.b16 %v298
  %v1321 = vunpack.c.h.b16 %v298
  %v1322 = vunpack.c.l.b16 %v299
  %v1323 = vunpack.c.h.b16 %v299
  %v1324 = vpack.c.b16 %v1076, %v1068
  %v1325 = vpack.c.b16 %v1077, %v1069
  %v1326 = vpack.c.b16 %v1078, %v1070
  %v1327 = vpack.c.b16 %v1079, %v1071
  %v1328 = vpack.c.b16 %v1080, %v1072
  %v1329 = vpack.c.b16 %v1081, %v1073
  %v1330 = vpack.c.b16 %v1082, %v1074
  %v1331 = vpack.c.b16 %v1083, %v1075
  %v1332 = vpack.c.b16 %v1092, %v1084
  %v1333 = vpack.c.b16 %v1093, %v1085
  %v1334 = vpack.c.b16 %v1094, %v1086
  %v1335 = vpack.c.b16 %v1095, %v1087
  %v1336 = vpack.c.b16 %v1096, %v1088
  %v1337 = vpack.c.b16 %v1097, %v1089
  %v1338 = vpack.c.b16 %v1098, %v1090
  %v1339 = vpack.c.b16 %v1099, %v1091
  %v1340 = vpack.c.b16 %v1108, %v1100
  %v1341 = vpack.c.b16 %v1109, %v1101
  %v1342 = vpack.c.b16 %v1110, %v1102
  %v1343 = vpack.c.b16 %v1111, %v1103
  %v1344 = vpack.c.b16 %v1112, %v1104
  %v1345 = vpack.c.b16 %v1113, %v1105
  %v1346 = vpack.c.b16 %v1114, %v1106
  %v1347 = vpack.c.b16 %v1115, %v1107
  %v1348 = vpack.c.b16 %v1124, %v1116
  %v1349 = vpack.c.b16 %v1125, %v1117
  %v1350 = vpack.c.b16 %v1126, %v1118
  %v1351 = vpack.c.b16 %v1127, %v1119
  %v1352 = vpack.c.b16 %v1128, %v1120
  %v1353 = vpack.c.b16 %v1129, %v1121
  %v1354 = vpack.c.b16 %v1130, %v1122
  %v1355 = vpack.c.b16 %v1131, %v1123
  %v1356 = vpack.c.b16 %v1140, %v1132
  %v1357 = vpack.c.b16 %v1141, %v1133
  %v1358 = vpack.c.b16 %v1142, %v1134
  %v1359 = vpack.c.b16 %v1143, %v1135
  %v1360 = vpack.c.b16 %v1144, %v1136
  %v1361 = vpack.c.b16 %v1145, %v1137
  %v1362 = vpack.c.b16 %v1146, %v1138
  %v1363 = vpack.c.b16 %v1147, %v1139
  %v1364 = vpack.c.b16 %v1156, %v1148
  %v1365 = vpack.c.b16 %v1157, %v1149
  %v1366 = vpack.c.b16 %v1158, %v1150
  %v1367 = vpack.c.b16 %v1159, %v1151
  %v1368 = vpack.c.b16 %v1160, %v1152
  %v1369 = vpack.c.b16 %v1161, %v1153
  %v1370 = vpack.c.b16 %v1162, %v1154
  %v1371 = vpack.c.b16 %v1163, %v1155
  %v1372 = vpack.c.b16 %v1172, %v1164
  %v1373 = vpack.c.b16 %v1173, %v1165
  %v1374 = vpack.c.b16 %v1174, %v1166
  %v1375 = vpack.c.b16 %v1175, %v1167
  %v1376 = vpack.c.b16 %v1176, %v1168
  %v1377 = vpack.c.b16 %v1177, %v1169
  %v1378 = vpack.c.b16 %v1178, %v1170
  %v1379 = vpack.c.b16 %v1179, %v1171
  %v1380 = vpack.c.b16 %v1188, %v1180
  %v1381 = vpack.c.b16 %v1189, %v1181
  %v1382 = vpack.c.b16 %v1190, %v1182
  %v1383 = vpack.c.b16 %v1191, %v1183
  %v1384 = vpack.c.b16 %v1192, %v1184
  %v1385 = vpack.c.b16 %v1193, %v1185
  %v1386 = vpack.c.b16 %v1194, %v1186
  %v1387 = vpack.c.b16 %v1195, %v1187
  %v1388 = vpack.c.b16 %v1204, %v1196
  %v1389 = vpack.c.b16 %v1205, %v1197
  %v1390 = vpack.c.b16 %v1206, %v1198
  %v1391 = vpack.c.b16 %v1207, %v1199
  %v1392 = vpack.c.b16 %v1208, %v1200
  %v1393 = vpack.c.b16 %v1209, %v1201
  %v1394 = vpack.c.b16 %v1210, %v1202
  %v1395 = vpack.c.b16 %v1211, %v1203
  %v1396 = vpack.c.b16 %v1220, %v1212
  %v1397 = vpack.c.b16 %v1221, %v1213
  %v1398 = vpack.c.b16 %v1222, %v1214
  %v1399 = vpack.c.b16 %v1223, %v1215
  %v1400 = vpack.c.b16 %v1224, %v1216
  %v1401 = vpack.c.b16 %v1225, %v1217
  %v1402 = vpack.c.b16 %v1226, %v1218
  %v1403 = vpack.c.b16 %v1227, %v1219
  %v1404 = vpack.c.b16 %v1236, %v1228
  %v1405 = vpack.c.b16 %v1237, %v1229
  %v1406 = vpack.c.b16 %v1238, %v1230
  %v1407 = vpack.c.b16 %v1239, %v1231
  %v1408 = vpack.c.b16 %v1240, %v1232
  %v1409 = vpack.c.b16 %v1241, %v1233
  %v1410 = vpack.c.b16 %v1242, %v1234
  %v1411 = vpack.c.b16 %v1243, %v1235
  %v1412 = vpack.c.b16 %v1252, %v1244
  %v1413 = vpack.c.b16 %v1253, %v1245
  %v1414 = vpack.c.b16 %v1254, %v1246
  %v1415 = vpack.c.b16 %v1255, %v1247
  %v1416 = vpack.c.b16 %v1256, %v1248
  %v1417 = vpack.c.b16 %v1257, %v1249
  %v1418 = vpack.c.b16 %v1258, %v1250
  %v1419 = vpack.c.b16 %v1259, %v1251
  %v1420 = vpack.c.b16 %v1268, %v1260
  %v1421 = vpack.c.b16 %v1269, %v1261
  %v1422 = vpack.c.b16 %v1270, %v1262
  %v1423 = vpack.c.b16 %v1271, %v1263
  %v1424 = vpack.c.b16 %v1272, %v1264
  %v1425 = vpack.c.b16 %v1273, %v1265
  %v1426 = vpack.c.b16 %v1274, %v1266
  %v1427 = vpack.c.b16 %v1275, %v1267
  %v1428 = vpack.c.b16 %v1284, %v1276
  %v1429 = vpack.c.b16 %v1285, %v1277
  %v1430 = vpack.c.b16 %v1286, %v1278
  %v1431 = vpack.c.b16 %v1287, %v1279
  %v1432 = vpack.c.b16 %v1288, %v1280
  %v1433 = vpack.c.b16 %v1289, %v1281
  %v1434 = vpack.c.b16 %v1290, %v1282
  %v1435 = vpack.c.b16 %v1291, %v1283
  %v1436 = vpack.c.b16 %v1300, %v1292
  %v1437 = vpack.c.b16 %v1301, %v1293
  %v1438 = vpack.c.b16 %v1302, %v1294
  %v1439 = vpack.c.b16 %v1303, %v1295
  %v1440 = vpack.c.b16 %v1304, %v1296
  %v1441 = vpack.c.b16 %v1305, %v1297
  %v1442 = vpack.c.b16 %v1306, %v1298
  %v1443 = vpack.c.b16 %v1307, %v1299
  %v1444 = vpack.c.b16 %v1316, %v1308
  %v1445 = vpack.c.b16 %v1317, %v1309
  %v1446 = vpack.c.b16 %v1318, %v1310
  %v1447 = vpack.c.b16 %v1319, %v1311
  %v1448 = vpack.c.b16 %v1320, %v1312
  %v1449 = vpack.c.b16 %v1321, %v1313
  %v1450 = vpack.c.b16 %v1322, %v1314
  %v1451 = vpack.c.b16 %v1323, %v1315
  %1580 = vmatpush.bf16.msra.mxu0 %v1380
  %1581 = vmatpush.bf16.msra.mxu0 %v1372
  %1582 = vmatpush.bf16.msra.mxu0 %v1364
  %1583 = vmatpush.bf16.msra.mxu0 %v1356
  %1584 = vmatpush.bf16.msra.mxu0 %v1348
  %1585 = vmatpush.bf16.msra.mxu0 %v1340
  %1586 = vmatpush.bf16.msra.mxu0 %v1332
  %1587 = vmatpush.bf16.msra.mxu0 %v1324
  %1588 = vmatmul.bf16.gmra.mxu0 %v684
  %v1589 = vpop.f32.mrf.mxu0
  %v1590 = vadd.f32 0.0, %v1589
  %v1591 = vpop.f32.mrf.mxu0
  %v1592 = vadd.f32 0.0, %v1591
  %1593 = vmatmul.bf16.gmra.mxu0 %v686
  %v1594 = vpop.f32.mrf.mxu0
  %v1595 = vadd.f32 0.0, %v1594
  %v1596 = vpop.f32.mrf.mxu0
  %v1597 = vadd.f32 0.0, %v1596
  %1598 = vmatmul.bf16.gmra.mxu0 %v688
  %v1599 = vpop.f32.mrf.mxu0
  %v1600 = vadd.f32 0.0, %v1599
  %v1601 = vpop.f32.mrf.mxu0
  %v1602 = vadd.f32 0.0, %v1601
  %1603 = vmatmul.bf16.gmra.mxu0 %v690
  %v1604 = vpop.f32.mrf.mxu0
  %v1605 = vadd.f32 0.0, %v1604
  %v1606 = vpop.f32.mrf.mxu0
  %v1607 = vadd.f32 0.0, %v1606
  %1608 = vmatmul.bf16.gmra.mxu0 %v692
  %v1609 = vpop.f32.mrf.mxu0
  %v1610 = vadd.f32 0.0, %v1609
  %v1611 = vpop.f32.mrf.mxu0
  %v1612 = vadd.f32 0.0, %v1611
  %1613 = vmatmul.bf16.gmra.mxu0 %v694
  %v1614 = vpop.f32.mrf.mxu0
  %v1615 = vadd.f32 0.0, %v1614
  %v1616 = vpop.f32.mrf.mxu0
  %v1617 = vadd.f32 0.0, %v1616
  %1618 = vmatmul.bf16.gmra.mxu0 %v696
  %v1619 = vpop.f32.mrf.mxu0
  %v1620 = vadd.f32 0.0, %v1619
  %v1621 = vpop.f32.mrf.mxu0
  %v1622 = vadd.f32 0.0, %v1621
  %1623 = vmatmul.bf16.gmra.mxu0 %v698
  %v1624 = vpop.f32.mrf.mxu0
  %v1625 = vadd.f32 0.0, %v1624
  %v1626 = vpop.f32.mrf.mxu0
  %v1627 = vadd.f32 0.0, %v1626
  %1628 = vmatmul.bf16.gmra.mxu0 %v700
  %v1629 = vpop.f32.mrf.mxu0
  %v1630 = vadd.f32 0.0, %v1629
  %v1631 = vpop.f32.mrf.mxu0
  %v1632 = vadd.f32 0.0, %v1631
  %1633 = vmatmul.bf16.gmra.mxu0 %v702
  %v1634 = vpop.f32.mrf.mxu0
  %v1635 = vadd.f32 0.0, %v1634
  %v1636 = vpop.f32.mrf.mxu0
  %v1637 = vadd.f32 0.0, %v1636
  %1638 = vmatmul.bf16.gmra.mxu0 %v704
  %v1639 = vpop.f32.mrf.mxu0
  %v1640 = vadd.f32 0.0, %v1639
  %v1641 = vpop.f32.mrf.mxu0
  %v1642 = vadd.f32 0.0, %v1641
  %1643 = vmatmul.bf16.gmra.mxu0 %v706
  %v1644 = vpop.f32.mrf.mxu0
  %v1645 = vadd.f32 0.0, %v1644
  %v1646 = vpop.f32.mrf.mxu0
  %v1647 = vadd.f32 0.0, %v1646
  %1648 = vmatmul.bf16.gmra.mxu0 %v708
  %v1649 = vpop.f32.mrf.mxu0
  %v1650 = vadd.f32 0.0, %v1649
  %v1651 = vpop.f32.mrf.mxu0
  %v1652 = vadd.f32 0.0, %v1651
  %1653 = vmatmul.bf16.gmra.mxu0 %v710
  %v1654 = vpop.f32.mrf.mxu0
  %v1655 = vadd.f32 0.0, %v1654
  %v1656 = vpop.f32.mrf.mxu0
  %v1657 = vadd.f32 0.0, %v1656
  %1658 = vmatmul.bf16.gmra.mxu0 %v712
  %v1659 = vpop.f32.mrf.mxu0
  %v1660 = vadd.f32 0.0, %v1659
  %v1661 = vpop.f32.mrf.mxu0
  %v1662 = vadd.f32 0.0, %v1661
  %1663 = vmatmul.bf16.gmra.mxu0 %v714
  %v1664 = vpop.f32.mrf.mxu0
  %v1665 = vadd.f32 0.0, %v1664
  %v1666 = vpop.f32.mrf.mxu0
  %v1667 = vadd.f32 0.0, %v1666
  %1668 = vmatmul.bf16.gmra.mxu0 %v716
  %v1669 = vpop.f32.mrf.mxu0
  %v1670 = vadd.f32 0.0, %v1669
  %v1671 = vpop.f32.mrf.mxu0
  %v1672 = vadd.f32 0.0, %v1671
  %1673 = vmatmul.bf16.gmra.mxu0 %v718
  %v1674 = vpop.f32.mrf.mxu0
  %v1675 = vadd.f32 0.0, %v1674
  %v1676 = vpop.f32.mrf.mxu0
  %v1677 = vadd.f32 0.0, %v1676
  %1678 = vmatmul.bf16.gmra.mxu0 %v720
  %v1679 = vpop.f32.mrf.mxu0
  %v1680 = vadd.f32 0.0, %v1679
  %v1681 = vpop.f32.mrf.mxu0
  %v1682 = vadd.f32 0.0, %v1681
  %1683 = vmatmul.bf16.gmra.mxu0 %v722
  %v1684 = vpop.f32.mrf.mxu0
  %v1685 = vadd.f32 0.0, %v1684
  %v1686 = vpop.f32.mrf.mxu0
  %v1687 = vadd.f32 0.0, %v1686
  %1688 = vmatmul.bf16.gmra.mxu0 %v724
  %v1689 = vpop.f32.mrf.mxu0
  %v1690 = vadd.f32 0.0, %v1689
  %v1691 = vpop.f32.mrf.mxu0
  %v1692 = vadd.f32 0.0, %v1691
  %1693 = vmatmul.bf16.gmra.mxu0 %v726
  %v1694 = vpop.f32.mrf.mxu0
  %v1695 = vadd.f32 0.0, %v1694
  %v1696 = vpop.f32.mrf.mxu0
  %v1697 = vadd.f32 0.0, %v1696
  %1698 = vmatmul.bf16.gmra.mxu0 %v728
  %v1699 = vpop.f32.mrf.mxu0
  %v1700 = vadd.f32 0.0, %v1699
  %v1701 = vpop.f32.mrf.mxu0
  %v1702 = vadd.f32 0.0, %v1701
  %1703 = vmatmul.bf16.gmra.mxu0 %v730
  %v1704 = vpop.f32.mrf.mxu0
  %v1705 = vadd.f32 0.0, %v1704
  %v1706 = vpop.f32.mrf.mxu0
  %v1707 = vadd.f32 0.0, %v1706
  %1708 = vmatmul.bf16.gmra.mxu0 %v732
  %v1709 = vpop.f32.mrf.mxu0
  %v1710 = vadd.f32 0.0, %v1709
  %v1711 = vpop.f32.mrf.mxu0
  %v1712 = vadd.f32 0.0, %v1711
  %1713 = vmatmul.bf16.gmra.mxu0 %v734
  %v1714 = vpop.f32.mrf.mxu0
  %v1715 = vadd.f32 0.0, %v1714
  %v1716 = vpop.f32.mrf.mxu0
  %v1717 = vadd.f32 0.0, %v1716
  %1718 = vmatmul.bf16.gmra.mxu0 %v736
  %v1719 = vpop.f32.mrf.mxu0
  %v1720 = vadd.f32 0.0, %v1719
  %v1721 = vpop.f32.mrf.mxu0
  %v1722 = vadd.f32 0.0, %v1721
  %1723 = vmatmul.bf16.gmra.mxu0 %v738
  %v1724 = vpop.f32.mrf.mxu0
  %v1725 = vadd.f32 0.0, %v1724
  %v1726 = vpop.f32.mrf.mxu0
  %v1727 = vadd.f32 0.0, %v1726
  %1728 = vmatmul.bf16.gmra.mxu0 %v740
  %v1729 = vpop.f32.mrf.mxu0
  %v1730 = vadd.f32 0.0, %v1729
  %v1731 = vpop.f32.mrf.mxu0
  %v1732 = vadd.f32 0.0, %v1731
  %1733 = vmatmul.bf16.gmra.mxu0 %v742
  %v1734 = vpop.f32.mrf.mxu0
  %v1735 = vadd.f32 0.0, %v1734
  %v1736 = vpop.f32.mrf.mxu0
  %v1737 = vadd.f32 0.0, %v1736
  %1738 = vmatmul.bf16.gmra.mxu0 %v744
  %v1739 = vpop.f32.mrf.mxu0
  %v1740 = vadd.f32 0.0, %v1739
  %v1741 = vpop.f32.mrf.mxu0
  %v1742 = vadd.f32 0.0, %v1741
  %1743 = vmatmul.bf16.gmra.mxu0 %v746
  %v1744 = vpop.f32.mrf.mxu0
  %v1745 = vadd.f32 0.0, %v1744
  %v1746 = vpop.f32.mrf.mxu0
  %v1747 = vadd.f32 0.0, %v1746
  %1748 = vmatmul.bf16.gmra.mxu0 %v748
  %v1749 = vpop.f32.mrf.mxu0
  %v1750 = vadd.f32 0.0, %v1749
  %v1751 = vpop.f32.mrf.mxu0
  %v1752 = vadd.f32 0.0, %v1751
  %1753 = vmatmul.bf16.gmra.mxu0 %v750
  %v1754 = vpop.f32.mrf.mxu0
  %v1755 = vadd.f32 0.0, %v1754
  %v1756 = vpop.f32.mrf.mxu0
  %v1757 = vadd.f32 0.0, %v1756
  %1758 = vmatmul.bf16.gmra.mxu0 %v752
  %v1759 = vpop.f32.mrf.mxu0
  %v1760 = vadd.f32 0.0, %v1759
  %v1761 = vpop.f32.mrf.mxu0
  %v1762 = vadd.f32 0.0, %v1761
  %1763 = vmatmul.bf16.gmra.mxu0 %v754
  %v1764 = vpop.f32.mrf.mxu0
  %v1765 = vadd.f32 0.0, %v1764
  %v1766 = vpop.f32.mrf.mxu0
  %v1767 = vadd.f32 0.0, %v1766
  %1768 = vmatmul.bf16.gmra.mxu0 %v756
  %v1769 = vpop.f32.mrf.mxu0
  %v1770 = vadd.f32 0.0, %v1769
  %v1771 = vpop.f32.mrf.mxu0
  %v1772 = vadd.f32 0.0, %v1771
  %1773 = vmatmul.bf16.gmra.mxu0 %v758
  %v1774 = vpop.f32.mrf.mxu0
  %v1775 = vadd.f32 0.0, %v1774
  %v1776 = vpop.f32.mrf.mxu0
  %v1777 = vadd.f32 0.0, %v1776
  %1778 = vmatmul.bf16.gmra.mxu0 %v760
  %v1779 = vpop.f32.mrf.mxu0
  %v1780 = vadd.f32 0.0, %v1779
  %v1781 = vpop.f32.mrf.mxu0
  %v1782 = vadd.f32 0.0, %v1781
  %1783 = vmatmul.bf16.gmra.mxu0 %v762
  %v1784 = vpop.f32.mrf.mxu0
  %v1785 = vadd.f32 0.0, %v1784
  %v1786 = vpop.f32.mrf.mxu0
  %v1787 = vadd.f32 0.0, %v1786
  %1788 = vmatmul.bf16.gmra.mxu0 %v764
  %v1789 = vpop.f32.mrf.mxu0
  %v1790 = vadd.f32 0.0, %v1789
  %v1791 = vpop.f32.mrf.mxu0
  %v1792 = vadd.f32 0.0, %v1791
  %1793 = vmatmul.bf16.gmra.mxu0 %v766
  %v1794 = vpop.f32.mrf.mxu0
  %v1795 = vadd.f32 0.0, %v1794
  %v1796 = vpop.f32.mrf.mxu0
  %v1797 = vadd.f32 0.0, %v1796
  %1798 = vmatmul.bf16.gmra.mxu0 %v768
  %v1799 = vpop.f32.mrf.mxu0
  %v1800 = vadd.f32 0.0, %v1799
  %v1801 = vpop.f32.mrf.mxu0
  %v1802 = vadd.f32 0.0, %v1801
  %1803 = vmatmul.bf16.gmra.mxu0 %v770
  %v1804 = vpop.f32.mrf.mxu0
  %v1805 = vadd.f32 0.0, %v1804
  %v1806 = vpop.f32.mrf.mxu0
  %v1807 = vadd.f32 0.0, %v1806
  %1808 = vmatmul.bf16.gmra.mxu0 %v772
  %v1809 = vpop.f32.mrf.mxu0
  %v1810 = vadd.f32 0.0, %v1809
  %v1811 = vpop.f32.mrf.mxu0
  %v1812 = vadd.f32 0.0, %v1811
  %1813 = vmatmul.bf16.gmra.mxu0 %v774
  %v1814 = vpop.f32.mrf.mxu0
  %v1815 = vadd.f32 0.0, %v1814
  %v1816 = vpop.f32.mrf.mxu0
  %v1817 = vadd.f32 0.0, %v1816
  %1818 = vmatmul.bf16.gmra.mxu0 %v776
  %v1819 = vpop.f32.mrf.mxu0
  %v1820 = vadd.f32 0.0, %v1819
  %v1821 = vpop.f32.mrf.mxu0
  %v1822 = vadd.f32 0.0, %v1821
  %1823 = vmatmul.bf16.gmra.mxu0 %v778
  %v1824 = vpop.f32.mrf.mxu0
  %v1825 = vadd.f32 0.0, %v1824
  %v1826 = vpop.f32.mrf.mxu0
  %v1827 = vadd.f32 0.0, %v1826
  %1828 = vmatmul.bf16.gmra.mxu0 %v780
  %v1829 = vpop.f32.mrf.mxu0
  %v1830 = vadd.f32 0.0, %v1829
  %v1831 = vpop.f32.mrf.mxu0
  %v1832 = vadd.f32 0.0, %v1831
  %1833 = vmatmul.bf16.gmra.mxu0 %v782
  %v1834 = vpop.f32.mrf.mxu0
  %v1835 = vadd.f32 0.0, %v1834
  %v1836 = vpop.f32.mrf.mxu0
  %v1837 = vadd.f32 0.0, %v1836
  %1838 = vmatmul.bf16.gmra.mxu0 %v784
  %v1839 = vpop.f32.mrf.mxu0
  %v1840 = vadd.f32 0.0, %v1839
  %v1841 = vpop.f32.mrf.mxu0
  %v1842 = vadd.f32 0.0, %v1841
  %1843 = vmatmul.bf16.gmra.mxu0 %v786
  %v1844 = vpop.f32.mrf.mxu0
  %v1845 = vadd.f32 0.0, %v1844
  %v1846 = vpop.f32.mrf.mxu0
  %v1847 = vadd.f32 0.0, %v1846
  %1848 = vmatmul.bf16.gmra.mxu0 %v788
  %v1849 = vpop.f32.mrf.mxu0
  %v1850 = vadd.f32 0.0, %v1849
  %v1851 = vpop.f32.mrf.mxu0
  %v1852 = vadd.f32 0.0, %v1851
  %1853 = vmatmul.bf16.gmra.mxu0 %v790
  %v1854 = vpop.f32.mrf.mxu0
  %v1855 = vadd.f32 0.0, %v1854
  %v1856 = vpop.f32.mrf.mxu0
  %v1857 = vadd.f32 0.0, %v1856
  %1858 = vmatmul.bf16.gmra.mxu0 %v792
  %v1859 = vpop.f32.mrf.mxu0
  %v1860 = vadd.f32 0.0, %v1859
  %v1861 = vpop.f32.mrf.mxu0
  %v1862 = vadd.f32 0.0, %v1861
  %1863 = vmatmul.bf16.gmra.mxu0 %v794
  %v1864 = vpop.f32.mrf.mxu0
  %v1865 = vadd.f32 0.0, %v1864
  %v1866 = vpop.f32.mrf.mxu0
  %v1867 = vadd.f32 0.0, %v1866
  %1868 = vmatmul.bf16.gmra.mxu0 %v796
  %v1869 = vpop.f32.mrf.mxu0
  %v1870 = vadd.f32 0.0, %v1869
  %v1871 = vpop.f32.mrf.mxu0
  %v1872 = vadd.f32 0.0, %v1871
  %1873 = vmatmul.bf16.gmra.mxu0 %v798
  %v1874 = vpop.f32.mrf.mxu0
  %v1875 = vadd.f32 0.0, %v1874
  %v1876 = vpop.f32.mrf.mxu0
  %v1877 = vadd.f32 0.0, %v1876
  %1878 = vmatmul.bf16.gmra.mxu0 %v800
  %v1879 = vpop.f32.mrf.mxu0
  %v1880 = vadd.f32 0.0, %v1879
  %v1881 = vpop.f32.mrf.mxu0
  %v1882 = vadd.f32 0.0, %v1881
  %1883 = vmatmul.bf16.gmra.mxu0 %v802
  %v1884 = vpop.f32.mrf.mxu0
  %v1885 = vadd.f32 0.0, %v1884
  %v1886 = vpop.f32.mrf.mxu0
  %v1887 = vadd.f32 0.0, %v1886
  %1888 = vmatmul.bf16.gmra.mxu0 %v804
  %v1889 = vpop.f32.mrf.mxu0
  %v1890 = vadd.f32 0.0, %v1889
  %v1891 = vpop.f32.mrf.mxu0
  %v1892 = vadd.f32 0.0, %v1891
  %1893 = vmatmul.bf16.gmra.mxu0 %v806
  %v1894 = vpop.f32.mrf.mxu0
  %v1895 = vadd.f32 0.0, %v1894
  %v1896 = vpop.f32.mrf.mxu0
  %v1897 = vadd.f32 0.0, %v1896
  %1898 = vmatmul.bf16.gmra.mxu0 %v808
  %v1899 = vpop.f32.mrf.mxu0
  %v1900 = vadd.f32 0.0, %v1899
  %v1901 = vpop.f32.mrf.mxu0
  %v1902 = vadd.f32 0.0, %v1901
  %1903 = vmatmul.bf16.gmra.mxu0 %v810
  %v1904 = vpop.f32.mrf.mxu0
  %v1905 = vadd.f32 0.0, %v1904
  %v1906 = vpop.f32.mrf.mxu0
  %v1907 = vadd.f32 0.0, %v1906
  %1908 = vdwg.mxu0
  %1909 = vmatpush.bf16.msra.mxu0 %v1444
  %1910 = vmatpush.bf16.msra.mxu0 %v1436
  %1911 = vmatpush.bf16.msra.mxu0 %v1428
  %1912 = vmatpush.bf16.msra.mxu0 %v1420
  %1913 = vmatpush.bf16.msra.mxu0 %v1412
  %1914 = vmatpush.bf16.msra.mxu0 %v1404
  %1915 = vmatpush.bf16.msra.mxu0 %v1396
  %1916 = vmatpush.bf16.msra.mxu0 %v1388
  %1917 = vmatmul.bf16.gmra.mxu0 %v685
  %v1918 = vpop.f32.mrf.mxu0
  %v1919 = vadd.f32 %v1590, %v1918
  %v1920 = vpop.f32.mrf.mxu0
  %v1921 = vadd.f32 %v1592, %v1920
  %1922 = vmatmul.bf16.gmra.mxu0 %v687
  %v1923 = vpop.f32.mrf.mxu0
  %v1924 = vadd.f32 %v1595, %v1923
  %v1925 = vpop.f32.mrf.mxu0
  %v1926 = vadd.f32 %v1597, %v1925
  %1927 = vmatmul.bf16.gmra.mxu0 %v689
  %v1928 = vpop.f32.mrf.mxu0
  %v1929 = vadd.f32 %v1600, %v1928
  %v1930 = vpop.f32.mrf.mxu0
  %v1931 = vadd.f32 %v1602, %v1930
  %1932 = vmatmul.bf16.gmra.mxu0 %v691
  %v1933 = vpop.f32.mrf.mxu0
  %v1934 = vadd.f32 %v1605, %v1933
  %v1935 = vpop.f32.mrf.mxu0
  %v1936 = vadd.f32 %v1607, %v1935
  %1937 = vmatmul.bf16.gmra.mxu0 %v693
  %v1938 = vpop.f32.mrf.mxu0
  %v1939 = vadd.f32 %v1610, %v1938
  %v1940 = vpop.f32.mrf.mxu0
  %v1941 = vadd.f32 %v1612, %v1940
  %1942 = vmatmul.bf16.gmra.mxu0 %v695
  %v1943 = vpop.f32.mrf.mxu0
  %v1944 = vadd.f32 %v1615, %v1943
  %v1945 = vpop.f32.mrf.mxu0
  %v1946 = vadd.f32 %v1617, %v1945
  %1947 = vmatmul.bf16.gmra.mxu0 %v697
  %v1948 = vpop.f32.mrf.mxu0
  %v1949 = vadd.f32 %v1620, %v1948
  %v1950 = vpop.f32.mrf.mxu0
  %v1951 = vadd.f32 %v1622, %v1950
  %1952 = vmatmul.bf16.gmra.mxu0 %v699
  %v1953 = vpop.f32.mrf.mxu0
  %v1954 = vadd.f32 %v1625, %v1953
  %v1955 = vpop.f32.mrf.mxu0
  %v1956 = vadd.f32 %v1627, %v1955
  %1957 = vmatmul.bf16.gmra.mxu0 %v701
  %v1958 = vpop.f32.mrf.mxu0
  %v1959 = vadd.f32 %v1630, %v1958
  %v1960 = vpop.f32.mrf.mxu0
  %v1961 = vadd.f32 %v1632, %v1960
  %1962 = vmatmul.bf16.gmra.mxu0 %v703
  %v1963 = vpop.f32.mrf.mxu0
  %v1964 = vadd.f32 %v1635, %v1963
  %v1965 = vpop.f32.mrf.mxu0
  %v1966 = vadd.f32 %v1637, %v1965
  %1967 = vmatmul.bf16.gmra.mxu0 %v705
  %v1968 = vpop.f32.mrf.mxu0
  %v1969 = vadd.f32 %v1640, %v1968
  %v1970 = vpop.f32.mrf.mxu0
  %v1971 = vadd.f32 %v1642, %v1970
  %1972 = vmatmul.bf16.gmra.mxu0 %v707
  %v1973 = vpop.f32.mrf.mxu0
  %v1974 = vadd.f32 %v1645, %v1973
  %v1975 = vpop.f32.mrf.mxu0
  %v1976 = vadd.f32 %v1647, %v1975
  %1977 = vmatmul.bf16.gmra.mxu0 %v709
  %v1978 = vpop.f32.mrf.mxu0
  %v1979 = vadd.f32 %v1650, %v1978
  %v1980 = vpop.f32.mrf.mxu0
  %v1981 = vadd.f32 %v1652, %v1980
  %1982 = vmatmul.bf16.gmra.mxu0 %v711
  %v1983 = vpop.f32.mrf.mxu0
  %v1984 = vadd.f32 %v1655, %v1983
  %v1985 = vpop.f32.mrf.mxu0
  %v1986 = vadd.f32 %v1657, %v1985
  %1987 = vmatmul.bf16.gmra.mxu0 %v713
  %v1988 = vpop.f32.mrf.mxu0
  %v1989 = vadd.f32 %v1660, %v1988
  %v1990 = vpop.f32.mrf.mxu0
  %v1991 = vadd.f32 %v1662, %v1990
  %1992 = vmatmul.bf16.gmra.mxu0 %v715
  %v1993 = vpop.f32.mrf.mxu0
  %v1994 = vadd.f32 %v1665, %v1993
  %v1995 = vpop.f32.mrf.mxu0
  %v1996 = vadd.f32 %v1667, %v1995
  %1997 = vmatmul.bf16.gmra.mxu0 %v717
  %v1998 = vpop.f32.mrf.mxu0
  %v1999 = vadd.f32 %v1670, %v1998
  %v2000 = vpop.f32.mrf.mxu0
  %v2001 = vadd.f32 %v1672, %v2000
  %2002 = vmatmul.bf16.gmra.mxu0 %v719
  %v2003 = vpop.f32.mrf.mxu0
  %v2004 = vadd.f32 %v1675, %v2003
  %v2005 = vpop.f32.mrf.mxu0
  %v2006 = vadd.f32 %v1677, %v2005
  %2007 = vmatmul.bf16.gmra.mxu0 %v721
  %v2008 = vpop.f32.mrf.mxu0
  %v2009 = vadd.f32 %v1680, %v2008
  %v2010 = vpop.f32.mrf.mxu0
  %v2011 = vadd.f32 %v1682, %v2010
  %2012 = vmatmul.bf16.gmra.mxu0 %v723
  %v2013 = vpop.f32.mrf.mxu0
  %v2014 = vadd.f32 %v1685, %v2013
  %v2015 = vpop.f32.mrf.mxu0
  %v2016 = vadd.f32 %v1687, %v2015
  %2017 = vmatmul.bf16.gmra.mxu0 %v725
  %v2018 = vpop.f32.mrf.mxu0
  %v2019 = vadd.f32 %v1690, %v2018
  %v2020 = vpop.f32.mrf.mxu0
  %v2021 = vadd.f32 %v1692, %v2020
  %2022 = vmatmul.bf16.gmra.mxu0 %v727
  %v2023 = vpop.f32.mrf.mxu0
  %v2024 = vadd.f32 %v1695, %v2023
  %v2025 = vpop.f32.mrf.mxu0
  %v2026 = vadd.f32 %v1697, %v2025
  %2027 = vmatmul.bf16.gmra.mxu0 %v729
  %v2028 = vpop.f32.mrf.mxu0
  %v2029 = vadd.f32 %v1700, %v2028
  %v2030 = vpop.f32.mrf.mxu0
  %v2031 = vadd.f32 %v1702, %v2030
  %2032 = vmatmul.bf16.gmra.mxu0 %v731
  %v2033 = vpop.f32.mrf.mxu0
  %v2034 = vadd.f32 %v1705, %v2033
  %v2035 = vpop.f32.mrf.mxu0
  %v2036 = vadd.f32 %v1707, %v2035
  %2037 = vmatmul.bf16.gmra.mxu0 %v733
  %v2038 = vpop.f32.mrf.mxu0
  %v2039 = vadd.f32 %v1710, %v2038
  %v2040 = vpop.f32.mrf.mxu0
  %v2041 = vadd.f32 %v1712, %v2040
  %2042 = vmatmul.bf16.gmra.mxu0 %v735
  %v2043 = vpop.f32.mrf.mxu0
  %v2044 = vadd.f32 %v1715, %v2043
  %v2045 = vpop.f32.mrf.mxu0
  %v2046 = vadd.f32 %v1717, %v2045
  %2047 = vmatmul.bf16.gmra.mxu0 %v737
  %v2048 = vpop.f32.mrf.mxu0
  %v2049 = vadd.f32 %v1720, %v2048
  %v2050 = vpop.f32.mrf.mxu0
  %v2051 = vadd.f32 %v1722, %v2050
  %2052 = vmatmul.bf16.gmra.mxu0 %v739
  %v2053 = vpop.f32.mrf.mxu0
  %v2054 = vadd.f32 %v1725, %v2053
  %v2055 = vpop.f32.mrf.mxu0
  %v2056 = vadd.f32 %v1727, %v2055
  %2057 = vmatmul.bf16.gmra.mxu0 %v741
  %v2058 = vpop.f32.mrf.mxu0
  %v2059 = vadd.f32 %v1730, %v2058
  %v2060 = vpop.f32.mrf.mxu0
  %v2061 = vadd.f32 %v1732, %v2060
  %2062 = vmatmul.bf16.gmra.mxu0 %v743
  %v2063 = vpop.f32.mrf.mxu0
  %v2064 = vadd.f32 %v1735, %v2063
  %v2065 = vpop.f32.mrf.mxu0
  %v2066 = vadd.f32 %v1737, %v2065
  %2067 = vmatmul.bf16.gmra.mxu0 %v745
  %v2068 = vpop.f32.mrf.mxu0
  %v2069 = vadd.f32 %v1740, %v2068
  %v2070 = vpop.f32.mrf.mxu0
  %v2071 = vadd.f32 %v1742, %v2070
  %2072 = vmatmul.bf16.gmra.mxu0 %v747
  %v2073 = vpop.f32.mrf.mxu0
  %v2074 = vadd.f32 %v1745, %v2073
  %v2075 = vpop.f32.mrf.mxu0
  %v2076 = vadd.f32 %v1747, %v2075
  %2077 = vmatmul.bf16.gmra.mxu0 %v749
  %v2078 = vpop.f32.mrf.mxu0
  %v2079 = vadd.f32 %v1750, %v2078
  %v2080 = vpop.f32.mrf.mxu0
  %v2081 = vadd.f32 %v1752, %v2080
  %2082 = vmatmul.bf16.gmra.mxu0 %v751
  %v2083 = vpop.f32.mrf.mxu0
  %v2084 = vadd.f32 %v1755, %v2083
  %v2085 = vpop.f32.mrf.mxu0
  %v2086 = vadd.f32 %v1757, %v2085
  %2087 = vmatmul.bf16.gmra.mxu0 %v753
  %v2088 = vpop.f32.mrf.mxu0
  %v2089 = vadd.f32 %v1760, %v2088
  %v2090 = vpop.f32.mrf.mxu0
  %v2091 = vadd.f32 %v1762, %v2090
  %2092 = vmatmul.bf16.gmra.mxu0 %v755
  %v2093 = vpop.f32.mrf.mxu0
  %v2094 = vadd.f32 %v1765, %v2093
  %v2095 = vpop.f32.mrf.mxu0
  %v2096 = vadd.f32 %v1767, %v2095
  %2097 = vmatmul.bf16.gmra.mxu0 %v757
  %v2098 = vpop.f32.mrf.mxu0
  %v2099 = vadd.f32 %v1770, %v2098
  %v2100 = vpop.f32.mrf.mxu0
  %v2101 = vadd.f32 %v1772, %v2100
  %2102 = vmatmul.bf16.gmra.mxu0 %v759
  %v2103 = vpop.f32.mrf.mxu0
  %v2104 = vadd.f32 %v1775, %v2103
  %v2105 = vpop.f32.mrf.mxu0
  %v2106 = vadd.f32 %v1777, %v2105
  %2107 = vmatmul.bf16.gmra.mxu0 %v761
  %v2108 = vpop.f32.mrf.mxu0
  %v2109 = vadd.f32 %v1780, %v2108
  %v2110 = vpop.f32.mrf.mxu0
  %v2111 = vadd.f32 %v1782, %v2110
  %2112 = vmatmul.bf16.gmra.mxu0 %v763
  %v2113 = vpop.f32.mrf.mxu0
  %v2114 = vadd.f32 %v1785, %v2113
  %v2115 = vpop.f32.mrf.mxu0
  %v2116 = vadd.f32 %v1787, %v2115
  %2117 = vmatmul.bf16.gmra.mxu0 %v765
  %v2118 = vpop.f32.mrf.mxu0
  %v2119 = vadd.f32 %v1790, %v2118
  %v2120 = vpop.f32.mrf.mxu0
  %v2121 = vadd.f32 %v1792, %v2120
  %2122 = vmatmul.bf16.gmra.mxu0 %v767
  %v2123 = vpop.f32.mrf.mxu0
  %v2124 = vadd.f32 %v1795, %v2123
  %v2125 = vpop.f32.mrf.mxu0
  %v2126 = vadd.f32 %v1797, %v2125
  %2127 = vmatmul.bf16.gmra.mxu0 %v769
  %v2128 = vpop.f32.mrf.mxu0
  %v2129 = vadd.f32 %v1800, %v2128
  %v2130 = vpop.f32.mrf.mxu0
  %v2131 = vadd.f32 %v1802, %v2130
  %2132 = vmatmul.bf16.gmra.mxu0 %v771
  %v2133 = vpop.f32.mrf.mxu0
  %v2134 = vadd.f32 %v1805, %v2133
  %v2135 = vpop.f32.mrf.mxu0
  %v2136 = vadd.f32 %v1807, %v2135
  %2137 = vmatmul.bf16.gmra.mxu0 %v773
  %v2138 = vpop.f32.mrf.mxu0
  %v2139 = vadd.f32 %v1810, %v2138
  %v2140 = vpop.f32.mrf.mxu0
  %v2141 = vadd.f32 %v1812, %v2140
  %2142 = vmatmul.bf16.gmra.mxu0 %v775
  %v2143 = vpop.f32.mrf.mxu0
  %v2144 = vadd.f32 %v1815, %v2143
  %v2145 = vpop.f32.mrf.mxu0
  %v2146 = vadd.f32 %v1817, %v2145
  %2147 = vmatmul.bf16.gmra.mxu0 %v777
  %v2148 = vpop.f32.mrf.mxu0
  %v2149 = vadd.f32 %v1820, %v2148
  %v2150 = vpop.f32.mrf.mxu0
  %v2151 = vadd.f32 %v1822, %v2150
  %2152 = vmatmul.bf16.gmra.mxu0 %v779
  %v2153 = vpop.f32.mrf.mxu0
  %v2154 = vadd.f32 %v1825, %v2153
  %v2155 = vpop.f32.mrf.mxu0
  %v2156 = vadd.f32 %v1827, %v2155
  %2157 = vmatmul.bf16.gmra.mxu0 %v781
  %v2158 = vpop.f32.mrf.mxu0
  %v2159 = vadd.f32 %v1830, %v2158
  %v2160 = vpop.f32.mrf.mxu0
  %v2161 = vadd.f32 %v1832, %v2160
  %2162 = vmatmul.bf16.gmra.mxu0 %v783
  %v2163 = vpop.f32.mrf.mxu0
  %v2164 = vadd.f32 %v1835, %v2163
  %v2165 = vpop.f32.mrf.mxu0
  %v2166 = vadd.f32 %v1837, %v2165
  %2167 = vmatmul.bf16.gmra.mxu0 %v785
  %v2168 = vpop.f32.mrf.mxu0
  %v2169 = vadd.f32 %v1840, %v2168
  %v2170 = vpop.f32.mrf.mxu0
  %v2171 = vadd.f32 %v1842, %v2170
  %2172 = vmatmul.bf16.gmra.mxu0 %v787
  %v2173 = vpop.f32.mrf.mxu0
  %v2174 = vadd.f32 %v1845, %v2173
  %v2175 = vpop.f32.mrf.mxu0
  %v2176 = vadd.f32 %v1847, %v2175
  %2177 = vmatmul.bf16.gmra.mxu0 %v789
  %v2178 = vpop.f32.mrf.mxu0
  %v2179 = vadd.f32 %v1850, %v2178
  %v2180 = vpop.f32.mrf.mxu0
  %v2181 = vadd.f32 %v1852, %v2180
  %2182 = vmatmul.bf16.gmra.mxu0 %v791
  %v2183 = vpop.f32.mrf.mxu0
  %v2184 = vadd.f32 %v1855, %v2183
  %v2185 = vpop.f32.mrf.mxu0
  %v2186 = vadd.f32 %v1857, %v2185
  %2187 = vmatmul.bf16.gmra.mxu0 %v793
  %v2188 = vpop.f32.mrf.mxu0
  %v2189 = vadd.f32 %v1860, %v2188
  %v2190 = vpop.f32.mrf.mxu0
  %v2191 = vadd.f32 %v1862, %v2190
  %2192 = vmatmul.bf16.gmra.mxu0 %v795
  %v2193 = vpop.f32.mrf.mxu0
  %v2194 = vadd.f32 %v1865, %v2193
  %v2195 = vpop.f32.mrf.mxu0
  %v2196 = vadd.f32 %v1867, %v2195
  %2197 = vmatmul.bf16.gmra.mxu0 %v797
  %v2198 = vpop.f32.mrf.mxu0
  %v2199 = vadd.f32 %v1870, %v2198
  %v2200 = vpop.f32.mrf.mxu0
  %v2201 = vadd.f32 %v1872, %v2200
  %2202 = vmatmul.bf16.gmra.mxu0 %v799
  %v2203 = vpop.f32.mrf.mxu0
  %v2204 = vadd.f32 %v1875, %v2203
  %v2205 = vpop.f32.mrf.mxu0
  %v2206 = vadd.f32 %v1877, %v2205
  %2207 = vmatmul.bf16.gmra.mxu0 %v801
  %v2208 = vpop.f32.mrf.mxu0
  %v2209 = vadd.f32 %v1880, %v2208
  %v2210 = vpop.f32.mrf.mxu0
  %v2211 = vadd.f32 %v1882, %v2210
  %2212 = vmatmul.bf16.gmra.mxu0 %v803
  %v2213 = vpop.f32.mrf.mxu0
  %v2214 = vadd.f32 %v1885, %v2213
  %v2215 = vpop.f32.mrf.mxu0
  %v2216 = vadd.f32 %v1887, %v2215
  %2217 = vmatmul.bf16.gmra.mxu0 %v805
  %v2218 = vpop.f32.mrf.mxu0
  %v2219 = vadd.f32 %v1890, %v2218
  %v2220 = vpop.f32.mrf.mxu0
  %v2221 = vadd.f32 %v1892, %v2220
  %2222 = vmatmul.bf16.gmra.mxu0 %v807
  %v2223 = vpop.f32.mrf.mxu0
  %v2224 = vadd.f32 %v1895, %v2223
  %v2225 = vpop.f32.mrf.mxu0
  %v2226 = vadd.f32 %v1897, %v2225
  %2227 = vmatmul.bf16.gmra.mxu0 %v809
  %v2228 = vpop.f32.mrf.mxu0
  %v2229 = vadd.f32 %v1900, %v2228
  %v2230 = vpop.f32.mrf.mxu0
  %v2231 = vadd.f32 %v1902, %v2230
  %2232 = vmatmul.bf16.gmra.mxu0 %v811
  %v2233 = vpop.f32.mrf.mxu0
  %v2234 = vadd.f32 %v1905, %v2233
  %v2235 = vpop.f32.mrf.mxu0
  %v2236 = vadd.f32 %v1907, %v2235
  %2237 = vdwg.mxu0
  %2238 = vmatpush.bf16.msra.mxu0 %v1381
  %2239 = vmatpush.bf16.msra.mxu0 %v1373
  %2240 = vmatpush.bf16.msra.mxu0 %v1365
  %2241 = vmatpush.bf16.msra.mxu0 %v1357
  %2242 = vmatpush.bf16.msra.mxu0 %v1349
  %2243 = vmatpush.bf16.msra.mxu0 %v1341
  %2244 = vmatpush.bf16.msra.mxu0 %v1333
  %2245 = vmatpush.bf16.msra.mxu0 %v1325
  %2246 = vmatmul.bf16.gmra.mxu0 %v684
  %v2247 = vpop.f32.mrf.mxu0
  %v2248 = vadd.f32 0.0, %v2247
  %v2249 = vpop.f32.mrf.mxu0
  %v2250 = vadd.f32 0.0, %v2249
  %2251 = vmatmul.bf16.gmra.mxu0 %v686
  %v2252 = vpop.f32.mrf.mxu0
  %v2253 = vadd.f32 0.0, %v2252
  %v2254 = vpop.f32.mrf.mxu0
  %v2255 = vadd.f32 0.0, %v2254
  %2256 = vmatmul.bf16.gmra.mxu0 %v688
  %v2257 = vpop.f32.mrf.mxu0
  %v2258 = vadd.f32 0.0, %v2257
  %v2259 = vpop.f32.mrf.mxu0
  %v2260 = vadd.f32 0.0, %v2259
  %2261 = vmatmul.bf16.gmra.mxu0 %v690
  %v2262 = vpop.f32.mrf.mxu0
  %v2263 = vadd.f32 0.0, %v2262
  %v2264 = vpop.f32.mrf.mxu0
  %v2265 = vadd.f32 0.0, %v2264
  %2266 = vmatmul.bf16.gmra.mxu0 %v692
  %v2267 = vpop.f32.mrf.mxu0
  %v2268 = vadd.f32 0.0, %v2267
  %v2269 = vpop.f32.mrf.mxu0
  %v2270 = vadd.f32 0.0, %v2269
  %2271 = vmatmul.bf16.gmra.mxu0 %v694
  %v2272 = vpop.f32.mrf.mxu0
  %v2273 = vadd.f32 0.0, %v2272
  %v2274 = vpop.f32.mrf.mxu0
  %v2275 = vadd.f32 0.0, %v2274
  %2276 = vmatmul.bf16.gmra.mxu0 %v696
  %v2277 = vpop.f32.mrf.mxu0
  %v2278 = vadd.f32 0.0, %v2277
  %v2279 = vpop.f32.mrf.mxu0
  %v2280 = vadd.f32 0.0, %v2279
  %2281 = vmatmul.bf16.gmra.mxu0 %v698
  %v2282 = vpop.f32.mrf.mxu0
  %v2283 = vadd.f32 0.0, %v2282
  %v2284 = vpop.f32.mrf.mxu0
  %v2285 = vadd.f32 0.0, %v2284
  %2286 = vmatmul.bf16.gmra.mxu0 %v700
  %v2287 = vpop.f32.mrf.mxu0
  %v2288 = vadd.f32 0.0, %v2287
  %v2289 = vpop.f32.mrf.mxu0
  %v2290 = vadd.f32 0.0, %v2289
  %2291 = vmatmul.bf16.gmra.mxu0 %v702
  %v2292 = vpop.f32.mrf.mxu0
  %v2293 = vadd.f32 0.0, %v2292
  %v2294 = vpop.f32.mrf.mxu0
  %v2295 = vadd.f32 0.0, %v2294
  %2296 = vmatmul.bf16.gmra.mxu0 %v704
  %v2297 = vpop.f32.mrf.mxu0
  %v2298 = vadd.f32 0.0, %v2297
  %v2299 = vpop.f32.mrf.mxu0
  %v2300 = vadd.f32 0.0, %v2299
  %2301 = vmatmul.bf16.gmra.mxu0 %v706
  %v2302 = vpop.f32.mrf.mxu0
  %v2303 = vadd.f32 0.0, %v2302
  %v2304 = vpop.f32.mrf.mxu0
  %v2305 = vadd.f32 0.0, %v2304
  %2306 = vmatmul.bf16.gmra.mxu0 %v708
  %v2307 = vpop.f32.mrf.mxu0
  %v2308 = vadd.f32 0.0, %v2307
  %v2309 = vpop.f32.mrf.mxu0
  %v2310 = vadd.f32 0.0, %v2309
  %2311 = vmatmul.bf16.gmra.mxu0 %v710
  %v2312 = vpop.f32.mrf.mxu0
  %v2313 = vadd.f32 0.0, %v2312
  %v2314 = vpop.f32.mrf.mxu0
  %v2315 = vadd.f32 0.0, %v2314
  %2316 = vmatmul.bf16.gmra.mxu0 %v712
  %v2317 = vpop.f32.mrf.mxu0
  %v2318 = vadd.f32 0.0, %v2317
  %v2319 = vpop.f32.mrf.mxu0
  %v2320 = vadd.f32 0.0, %v2319
  %2321 = vmatmul.bf16.gmra.mxu0 %v714
  %v2322 = vpop.f32.mrf.mxu0
  %v2323 = vadd.f32 0.0, %v2322
  %v2324 = vpop.f32.mrf.mxu0
  %v2325 = vadd.f32 0.0, %v2324
  %2326 = vmatmul.bf16.gmra.mxu0 %v716
  %v2327 = vpop.f32.mrf.mxu0
  %v2328 = vadd.f32 0.0, %v2327
  %v2329 = vpop.f32.mrf.mxu0
  %v2330 = vadd.f32 0.0, %v2329
  %2331 = vmatmul.bf16.gmra.mxu0 %v718
  %v2332 = vpop.f32.mrf.mxu0
  %v2333 = vadd.f32 0.0, %v2332
  %v2334 = vpop.f32.mrf.mxu0
  %v2335 = vadd.f32 0.0, %v2334
  %2336 = vmatmul.bf16.gmra.mxu0 %v720
  %v2337 = vpop.f32.mrf.mxu0
  %v2338 = vadd.f32 0.0, %v2337
  %v2339 = vpop.f32.mrf.mxu0
  %v2340 = vadd.f32 0.0, %v2339
  %2341 = vmatmul.bf16.gmra.mxu0 %v722
  %v2342 = vpop.f32.mrf.mxu0
  %v2343 = vadd.f32 0.0, %v2342
  %v2344 = vpop.f32.mrf.mxu0
  %v2345 = vadd.f32 0.0, %v2344
  %2346 = vmatmul.bf16.gmra.mxu0 %v724
  %v2347 = vpop.f32.mrf.mxu0
  %v2348 = vadd.f32 0.0, %v2347
  %v2349 = vpop.f32.mrf.mxu0
  %v2350 = vadd.f32 0.0, %v2349
  %2351 = vmatmul.bf16.gmra.mxu0 %v726
  %v2352 = vpop.f32.mrf.mxu0
  %v2353 = vadd.f32 0.0, %v2352
  %v2354 = vpop.f32.mrf.mxu0
  %v2355 = vadd.f32 0.0, %v2354
  %2356 = vmatmul.bf16.gmra.mxu0 %v728
  %v2357 = vpop.f32.mrf.mxu0
  %v2358 = vadd.f32 0.0, %v2357
  %v2359 = vpop.f32.mrf.mxu0
  %v2360 = vadd.f32 0.0, %v2359
  %2361 = vmatmul.bf16.gmra.mxu0 %v730
  %v2362 = vpop.f32.mrf.mxu0
  %v2363 = vadd.f32 0.0, %v2362
  %v2364 = vpop.f32.mrf.mxu0
  %v2365 = vadd.f32 0.0, %v2364
  %2366 = vmatmul.bf16.gmra.mxu0 %v732
  %v2367 = vpop.f32.mrf.mxu0
  %v2368 = vadd.f32 0.0, %v2367
  %v2369 = vpop.f32.mrf.mxu0
  %v2370 = vadd.f32 0.0, %v2369
  %2371 = vmatmul.bf16.gmra.mxu0 %v734
  %v2372 = vpop.f32.mrf.mxu0
  %v2373 = vadd.f32 0.0, %v2372
  %v2374 = vpop.f32.mrf.mxu0
  %v2375 = vadd.f32 0.0, %v2374
  %2376 = vmatmul.bf16.gmra.mxu0 %v736
  %v2377 = vpop.f32.mrf.mxu0
  %v2378 = vadd.f32 0.0, %v2377
  %v2379 = vpop.f32.mrf.mxu0
  %v2380 = vadd.f32 0.0, %v2379
  %2381 = vmatmul.bf16.gmra.mxu0 %v738
  %v2382 = vpop.f32.mrf.mxu0
  %v2383 = vadd.f32 0.0, %v2382
  %v2384 = vpop.f32.mrf.mxu0
  %v2385 = vadd.f32 0.0, %v2384
  %2386 = vmatmul.bf16.gmra.mxu0 %v740
  %v2387 = vpop.f32.mrf.mxu0
  %v2388 = vadd.f32 0.0, %v2387
  %v2389 = vpop.f32.mrf.mxu0
  %v2390 = vadd.f32 0.0, %v2389
  %2391 = vmatmul.bf16.gmra.mxu0 %v742
  %v2392 = vpop.f32.mrf.mxu0
  %v2393 = vadd.f32 0.0, %v2392
  %v2394 = vpop.f32.mrf.mxu0
  %v2395 = vadd.f32 0.0, %v2394
  %2396 = vmatmul.bf16.gmra.mxu0 %v744
  %v2397 = vpop.f32.mrf.mxu0
  %v2398 = vadd.f32 0.0, %v2397
  %v2399 = vpop.f32.mrf.mxu0
  %v2400 = vadd.f32 0.0, %v2399
  %2401 = vmatmul.bf16.gmra.mxu0 %v746
  %v2402 = vpop.f32.mrf.mxu0
  %v2403 = vadd.f32 0.0, %v2402
  %v2404 = vpop.f32.mrf.mxu0
  %v2405 = vadd.f32 0.0, %v2404
  %2406 = vmatmul.bf16.gmra.mxu0 %v748
  %v2407 = vpop.f32.mrf.mxu0
  %v2408 = vadd.f32 0.0, %v2407
  %v2409 = vpop.f32.mrf.mxu0
  %v2410 = vadd.f32 0.0, %v2409
  %2411 = vmatmul.bf16.gmra.mxu0 %v750
  %v2412 = vpop.f32.mrf.mxu0
  %v2413 = vadd.f32 0.0, %v2412
  %v2414 = vpop.f32.mrf.mxu0
  %v2415 = vadd.f32 0.0, %v2414
  %2416 = vmatmul.bf16.gmra.mxu0 %v752
  %v2417 = vpop.f32.mrf.mxu0
  %v2418 = vadd.f32 0.0, %v2417
  %v2419 = vpop.f32.mrf.mxu0
  %v2420 = vadd.f32 0.0, %v2419
  %2421 = vmatmul.bf16.gmra.mxu0 %v754
  %v2422 = vpop.f32.mrf.mxu0
  %v2423 = vadd.f32 0.0, %v2422
  %v2424 = vpop.f32.mrf.mxu0
  %v2425 = vadd.f32 0.0, %v2424
  %2426 = vmatmul.bf16.gmra.mxu0 %v756
  %v2427 = vpop.f32.mrf.mxu0
  %v2428 = vadd.f32 0.0, %v2427
  %v2429 = vpop.f32.mrf.mxu0
  %v2430 = vadd.f32 0.0, %v2429
  %2431 = vmatmul.bf16.gmra.mxu0 %v758
  %v2432 = vpop.f32.mrf.mxu0
  %v2433 = vadd.f32 0.0, %v2432
  %v2434 = vpop.f32.mrf.mxu0
  %v2435 = vadd.f32 0.0, %v2434
  %2436 = vmatmul.bf16.gmra.mxu0 %v760
  %v2437 = vpop.f32.mrf.mxu0
  %v2438 = vadd.f32 0.0, %v2437
  %v2439 = vpop.f32.mrf.mxu0
  %v2440 = vadd.f32 0.0, %v2439
  %2441 = vmatmul.bf16.gmra.mxu0 %v762
  %v2442 = vpop.f32.mrf.mxu0
  %v2443 = vadd.f32 0.0, %v2442
  %v2444 = vpop.f32.mrf.mxu0
  %v2445 = vadd.f32 0.0, %v2444
  %2446 = vmatmul.bf16.gmra.mxu0 %v764
  %v2447 = vpop.f32.mrf.mxu0
  %v2448 = vadd.f32 0.0, %v2447
  %v2449 = vpop.f32.mrf.mxu0
  %v2450 = vadd.f32 0.0, %v2449
  %2451 = vmatmul.bf16.gmra.mxu0 %v766
  %v2452 = vpop.f32.mrf.mxu0
  %v2453 = vadd.f32 0.0, %v2452
  %v2454 = vpop.f32.mrf.mxu0
  %v2455 = vadd.f32 0.0, %v2454
  %2456 = vmatmul.bf16.gmra.mxu0 %v768
  %v2457 = vpop.f32.mrf.mxu0
  %v2458 = vadd.f32 0.0, %v2457
  %v2459 = vpop.f32.mrf.mxu0
  %v2460 = vadd.f32 0.0, %v2459
  %2461 = vmatmul.bf16.gmra.mxu0 %v770
  %v2462 = vpop.f32.mrf.mxu0
  %v2463 = vadd.f32 0.0, %v2462
  %v2464 = vpop.f32.mrf.mxu0
  %v2465 = vadd.f32 0.0, %v2464
  %2466 = vmatmul.bf16.gmra.mxu0 %v772
  %v2467 = vpop.f32.mrf.mxu0
  %v2468 = vadd.f32 0.0, %v2467
  %v2469 = vpop.f32.mrf.mxu0
  %v2470 = vadd.f32 0.0, %v2469
  %2471 = vmatmul.bf16.gmra.mxu0 %v774
  %v2472 = vpop.f32.mrf.mxu0
  %v2473 = vadd.f32 0.0, %v2472
  %v2474 = vpop.f32.mrf.mxu0
  %v2475 = vadd.f32 0.0, %v2474
  %2476 = vmatmul.bf16.gmra.mxu0 %v776
  %v2477 = vpop.f32.mrf.mxu0
  %v2478 = vadd.f32 0.0, %v2477
  %v2479 = vpop.f32.mrf.mxu0
  %v2480 = vadd.f32 0.0, %v2479
  %2481 = vmatmul.bf16.gmra.mxu0 %v778
  %v2482 = vpop.f32.mrf.mxu0
  %v2483 = vadd.f32 0.0, %v2482
  %v2484 = vpop.f32.mrf.mxu0
  %v2485 = vadd.f32 0.0, %v2484
  %2486 = vmatmul.bf16.gmra.mxu0 %v780
  %v2487 = vpop.f32.mrf.mxu0
  %v2488 = vadd.f32 0.0, %v2487
  %v2489 = vpop.f32.mrf.mxu0
  %v2490 = vadd.f32 0.0, %v2489
  %2491 = vmatmul.bf16.gmra.mxu0 %v782
  %v2492 = vpop.f32.mrf.mxu0
  %v2493 = vadd.f32 0.0, %v2492
  %v2494 = vpop.f32.mrf.mxu0
  %v2495 = vadd.f32 0.0, %v2494
  %2496 = vmatmul.bf16.gmra.mxu0 %v784
  %v2497 = vpop.f32.mrf.mxu0
  %v2498 = vadd.f32 0.0, %v2497
  %v2499 = vpop.f32.mrf.mxu0
  %v2500 = vadd.f32 0.0, %v2499
  %2501 = vmatmul.bf16.gmra.mxu0 %v786
  %v2502 = vpop.f32.mrf.mxu0
  %v2503 = vadd.f32 0.0, %v2502
  %v2504 = vpop.f32.mrf.mxu0
  %v2505 = vadd.f32 0.0, %v2504
  %2506 = vmatmul.bf16.gmra.mxu0 %v788
  %v2507 = vpop.f32.mrf.mxu0
  %v2508 = vadd.f32 0.0, %v2507
  %v2509 = vpop.f32.mrf.mxu0
  %v2510 = vadd.f32 0.0, %v2509
  %2511 = vmatmul.bf16.gmra.mxu0 %v790
  %v2512 = vpop.f32.mrf.mxu0
  %v2513 = vadd.f32 0.0, %v2512
  %v2514 = vpop.f32.mrf.mxu0
  %v2515 = vadd.f32 0.0, %v2514
  %2516 = vmatmul.bf16.gmra.mxu0 %v792
  %v2517 = vpop.f32.mrf.mxu0
  %v2518 = vadd.f32 0.0, %v2517
  %v2519 = vpop.f32.mrf.mxu0
  %v2520 = vadd.f32 0.0, %v2519
  %2521 = vmatmul.bf16.gmra.mxu0 %v794
  %v2522 = vpop.f32.mrf.mxu0
  %v2523 = vadd.f32 0.0, %v2522
  %v2524 = vpop.f32.mrf.mxu0
  %v2525 = vadd.f32 0.0, %v2524
  %2526 = vmatmul.bf16.gmra.mxu0 %v796
  %v2527 = vpop.f32.mrf.mxu0
  %v2528 = vadd.f32 0.0, %v2527
  %v2529 = vpop.f32.mrf.mxu0
  %v2530 = vadd.f32 0.0, %v2529
  %2531 = vmatmul.bf16.gmra.mxu0 %v798
  %v2532 = vpop.f32.mrf.mxu0
  %v2533 = vadd.f32 0.0, %v2532
  %v2534 = vpop.f32.mrf.mxu0
  %v2535 = vadd.f32 0.0, %v2534
  %2536 = vmatmul.bf16.gmra.mxu0 %v800
  %v2537 = vpop.f32.mrf.mxu0
  %v2538 = vadd.f32 0.0, %v2537
  %v2539 = vpop.f32.mrf.mxu0
  %v2540 = vadd.f32 0.0, %v2539
  %2541 = vmatmul.bf16.gmra.mxu0 %v802
  %v2542 = vpop.f32.mrf.mxu0
  %v2543 = vadd.f32 0.0, %v2542
  %v2544 = vpop.f32.mrf.mxu0
  %v2545 = vadd.f32 0.0, %v2544
  %2546 = vmatmul.bf16.gmra.mxu0 %v804
  %v2547 = vpop.f32.mrf.mxu0
  %v2548 = vadd.f32 0.0, %v2547
  %v2549 = vpop.f32.mrf.mxu0
  %v2550 = vadd.f32 0.0, %v2549
  %2551 = vmatmul.bf16.gmra.mxu0 %v806
  %v2552 = vpop.f32.mrf.mxu0
  %v2553 = vadd.f32 0.0, %v2552
  %v2554 = vpop.f32.mrf.mxu0
  %v2555 = vadd.f32 0.0, %v2554
  %2556 = vmatmul.bf16.gmra.mxu0 %v808
  %v2557 = vpop.f32.mrf.mxu0
  %v2558 = vadd.f32 0.0, %v2557
  %v2559 = vpop.f32.mrf.mxu0
  %v2560 = vadd.f32 0.0, %v2559
  %2561 = vmatmul.bf16.gmra.mxu0 %v810
  %v2562 = vpop.f32.mrf.mxu0
  %v2563 = vadd.f32 0.0, %v2562
  %v2564 = vpop.f32.mrf.mxu0
  %v2565 = vadd.f32 0.0, %v2564
  %2566 = vdwg.mxu0
  %2567 = vmatpush.bf16.msra.mxu0 %v1445
  %2568 = vmatpush.bf16.msra.mxu0 %v1437
  %2569 = vmatpush.bf16.msra.mxu0 %v1429
  %2570 = vmatpush.bf16.msra.mxu0 %v1421
  %2571 = vmatpush.bf16.msra.mxu0 %v1413
  %2572 = vmatpush.bf16.msra.mxu0 %v1405
  %2573 = vmatpush.bf16.msra.mxu0 %v1397
  %2574 = vmatpush.bf16.msra.mxu0 %v1389
  %2575 = vmatmul.bf16.gmra.mxu0 %v685
  %v2576 = vpop.f32.mrf.mxu0
  %v2577 = vadd.f32 %v2248, %v2576
  %v2578 = vpop.f32.mrf.mxu0
  %v2579 = vadd.f32 %v2250, %v2578
  %2580 = vmatmul.bf16.gmra.mxu0 %v687
  %v2581 = vpop.f32.mrf.mxu0
  %v2582 = vadd.f32 %v2253, %v2581
  %v2583 = vpop.f32.mrf.mxu0
  %v2584 = vadd.f32 %v2255, %v2583
  %2585 = vmatmul.bf16.gmra.mxu0 %v689
  %v2586 = vpop.f32.mrf.mxu0
  %v2587 = vadd.f32 %v2258, %v2586
  %v2588 = vpop.f32.mrf.mxu0
  %v2589 = vadd.f32 %v2260, %v2588
  %2590 = vmatmul.bf16.gmra.mxu0 %v691
  %v2591 = vpop.f32.mrf.mxu0
  %v2592 = vadd.f32 %v2263, %v2591
  %v2593 = vpop.f32.mrf.mxu0
  %v2594 = vadd.f32 %v2265, %v2593
  %2595 = vmatmul.bf16.gmra.mxu0 %v693
  %v2596 = vpop.f32.mrf.mxu0
  %v2597 = vadd.f32 %v2268, %v2596
  %v2598 = vpop.f32.mrf.mxu0
  %v2599 = vadd.f32 %v2270, %v2598
  %2600 = vmatmul.bf16.gmra.mxu0 %v695
  %v2601 = vpop.f32.mrf.mxu0
  %v2602 = vadd.f32 %v2273, %v2601
  %v2603 = vpop.f32.mrf.mxu0
  %v2604 = vadd.f32 %v2275, %v2603
  %2605 = vmatmul.bf16.gmra.mxu0 %v697
  %v2606 = vpop.f32.mrf.mxu0
  %v2607 = vadd.f32 %v2278, %v2606
  %v2608 = vpop.f32.mrf.mxu0
  %v2609 = vadd.f32 %v2280, %v2608
  %2610 = vmatmul.bf16.gmra.mxu0 %v699
  %v2611 = vpop.f32.mrf.mxu0
  %v2612 = vadd.f32 %v2283, %v2611
  %v2613 = vpop.f32.mrf.mxu0
  %v2614 = vadd.f32 %v2285, %v2613
  %2615 = vmatmul.bf16.gmra.mxu0 %v701
  %v2616 = vpop.f32.mrf.mxu0
  %v2617 = vadd.f32 %v2288, %v2616
  %v2618 = vpop.f32.mrf.mxu0
  %v2619 = vadd.f32 %v2290, %v2618
  %2620 = vmatmul.bf16.gmra.mxu0 %v703
  %v2621 = vpop.f32.mrf.mxu0
  %v2622 = vadd.f32 %v2293, %v2621
  %v2623 = vpop.f32.mrf.mxu0
  %v2624 = vadd.f32 %v2295, %v2623
  %2625 = vmatmul.bf16.gmra.mxu0 %v705
  %v2626 = vpop.f32.mrf.mxu0
  %v2627 = vadd.f32 %v2298, %v2626
  %v2628 = vpop.f32.mrf.mxu0
  %v2629 = vadd.f32 %v2300, %v2628
  %2630 = vmatmul.bf16.gmra.mxu0 %v707
  %v2631 = vpop.f32.mrf.mxu0
  %v2632 = vadd.f32 %v2303, %v2631
  %v2633 = vpop.f32.mrf.mxu0
  %v2634 = vadd.f32 %v2305, %v2633
  %2635 = vmatmul.bf16.gmra.mxu0 %v709
  %v2636 = vpop.f32.mrf.mxu0
  %v2637 = vadd.f32 %v2308, %v2636
  %v2638 = vpop.f32.mrf.mxu0
  %v2639 = vadd.f32 %v2310, %v2638
  %2640 = vmatmul.bf16.gmra.mxu0 %v711
  %v2641 = vpop.f32.mrf.mxu0
  %v2642 = vadd.f32 %v2313, %v2641
  %v2643 = vpop.f32.mrf.mxu0
  %v2644 = vadd.f32 %v2315, %v2643
  %2645 = vmatmul.bf16.gmra.mxu0 %v713
  %v2646 = vpop.f32.mrf.mxu0
  %v2647 = vadd.f32 %v2318, %v2646
  %v2648 = vpop.f32.mrf.mxu0
  %v2649 = vadd.f32 %v2320, %v2648
  %2650 = vmatmul.bf16.gmra.mxu0 %v715
  %v2651 = vpop.f32.mrf.mxu0
  %v2652 = vadd.f32 %v2323, %v2651
  %v2653 = vpop.f32.mrf.mxu0
  %v2654 = vadd.f32 %v2325, %v2653
  %2655 = vmatmul.bf16.gmra.mxu0 %v717
  %v2656 = vpop.f32.mrf.mxu0
  %v2657 = vadd.f32 %v2328, %v2656
  %v2658 = vpop.f32.mrf.mxu0
  %v2659 = vadd.f32 %v2330, %v2658
  %2660 = vmatmul.bf16.gmra.mxu0 %v719
  %v2661 = vpop.f32.mrf.mxu0
  %v2662 = vadd.f32 %v2333, %v2661
  %v2663 = vpop.f32.mrf.mxu0
  %v2664 = vadd.f32 %v2335, %v2663
  %2665 = vmatmul.bf16.gmra.mxu0 %v721
  %v2666 = vpop.f32.mrf.mxu0
  %v2667 = vadd.f32 %v2338, %v2666
  %v2668 = vpop.f32.mrf.mxu0
  %v2669 = vadd.f32 %v2340, %v2668
  %2670 = vmatmul.bf16.gmra.mxu0 %v723
  %v2671 = vpop.f32.mrf.mxu0
  %v2672 = vadd.f32 %v2343, %v2671
  %v2673 = vpop.f32.mrf.mxu0
  %v2674 = vadd.f32 %v2345, %v2673
  %2675 = vmatmul.bf16.gmra.mxu0 %v725
  %v2676 = vpop.f32.mrf.mxu0
  %v2677 = vadd.f32 %v2348, %v2676
  %v2678 = vpop.f32.mrf.mxu0
  %v2679 = vadd.f32 %v2350, %v2678
  %2680 = vmatmul.bf16.gmra.mxu0 %v727
  %v2681 = vpop.f32.mrf.mxu0
  %v2682 = vadd.f32 %v2353, %v2681
  %v2683 = vpop.f32.mrf.mxu0
  %v2684 = vadd.f32 %v2355, %v2683
  %2685 = vmatmul.bf16.gmra.mxu0 %v729
  %v2686 = vpop.f32.mrf.mxu0
  %v2687 = vadd.f32 %v2358, %v2686
  %v2688 = vpop.f32.mrf.mxu0
  %v2689 = vadd.f32 %v2360, %v2688
  %2690 = vmatmul.bf16.gmra.mxu0 %v731
  %v2691 = vpop.f32.mrf.mxu0
  %v2692 = vadd.f32 %v2363, %v2691
  %v2693 = vpop.f32.mrf.mxu0
  %v2694 = vadd.f32 %v2365, %v2693
  %2695 = vmatmul.bf16.gmra.mxu0 %v733
  %v2696 = vpop.f32.mrf.mxu0
  %v2697 = vadd.f32 %v2368, %v2696
  %v2698 = vpop.f32.mrf.mxu0
  %v2699 = vadd.f32 %v2370, %v2698
  %2700 = vmatmul.bf16.gmra.mxu0 %v735
  %v2701 = vpop.f32.mrf.mxu0
  %v2702 = vadd.f32 %v2373, %v2701
  %v2703 = vpop.f32.mrf.mxu0
  %v2704 = vadd.f32 %v2375, %v2703
  %2705 = vmatmul.bf16.gmra.mxu0 %v737
  %v2706 = vpop.f32.mrf.mxu0
  %v2707 = vadd.f32 %v2378, %v2706
  %v2708 = vpop.f32.mrf.mxu0
  %v2709 = vadd.f32 %v2380, %v2708
  %2710 = vmatmul.bf16.gmra.mxu0 %v739
  %v2711 = vpop.f32.mrf.mxu0
  %v2712 = vadd.f32 %v2383, %v2711
  %v2713 = vpop.f32.mrf.mxu0
  %v2714 = vadd.f32 %v2385, %v2713
  %2715 = vmatmul.bf16.gmra.mxu0 %v741
  %v2716 = vpop.f32.mrf.mxu0
  %v2717 = vadd.f32 %v2388, %v2716
  %v2718 = vpop.f32.mrf.mxu0
  %v2719 = vadd.f32 %v2390, %v2718
  %2720 = vmatmul.bf16.gmra.mxu0 %v743
  %v2721 = vpop.f32.mrf.mxu0
  %v2722 = vadd.f32 %v2393, %v2721
  %v2723 = vpop.f32.mrf.mxu0
  %v2724 = vadd.f32 %v2395, %v2723
  %2725 = vmatmul.bf16.gmra.mxu0 %v745
  %v2726 = vpop.f32.mrf.mxu0
  %v2727 = vadd.f32 %v2398, %v2726
  %v2728 = vpop.f32.mrf.mxu0
  %v2729 = vadd.f32 %v2400, %v2728
  %2730 = vmatmul.bf16.gmra.mxu0 %v747
  %v2731 = vpop.f32.mrf.mxu0
  %v2732 = vadd.f32 %v2403, %v2731
  %v2733 = vpop.f32.mrf.mxu0
  %v2734 = vadd.f32 %v2405, %v2733
  %2735 = vmatmul.bf16.gmra.mxu0 %v749
  %v2736 = vpop.f32.mrf.mxu0
  %v2737 = vadd.f32 %v2408, %v2736
  %v2738 = vpop.f32.mrf.mxu0
  %v2739 = vadd.f32 %v2410, %v2738
  %2740 = vmatmul.bf16.gmra.mxu0 %v751
  %v2741 = vpop.f32.mrf.mxu0
  %v2742 = vadd.f32 %v2413, %v2741
  %v2743 = vpop.f32.mrf.mxu0
  %v2744 = vadd.f32 %v2415, %v2743
  %2745 = vmatmul.bf16.gmra.mxu0 %v753
  %v2746 = vpop.f32.mrf.mxu0
  %v2747 = vadd.f32 %v2418, %v2746
  %v2748 = vpop.f32.mrf.mxu0
  %v2749 = vadd.f32 %v2420, %v2748
  %2750 = vmatmul.bf16.gmra.mxu0 %v755
  %v2751 = vpop.f32.mrf.mxu0
  %v2752 = vadd.f32 %v2423, %v2751
  %v2753 = vpop.f32.mrf.mxu0
  %v2754 = vadd.f32 %v2425, %v2753
  %2755 = vmatmul.bf16.gmra.mxu0 %v757
  %v2756 = vpop.f32.mrf.mxu0
  %v2757 = vadd.f32 %v2428, %v2756
  %v2758 = vpop.f32.mrf.mxu0
  %v2759 = vadd.f32 %v2430, %v2758
  %2760 = vmatmul.bf16.gmra.mxu0 %v759
  %v2761 = vpop.f32.mrf.mxu0
  %v2762 = vadd.f32 %v2433, %v2761
  %v2763 = vpop.f32.mrf.mxu0
  %v2764 = vadd.f32 %v2435, %v2763
  %2765 = vmatmul.bf16.gmra.mxu0 %v761
  %v2766 = vpop.f32.mrf.mxu0
  %v2767 = vadd.f32 %v2438, %v2766
  %v2768 = vpop.f32.mrf.mxu0
  %v2769 = vadd.f32 %v2440, %v2768
  %2770 = vmatmul.bf16.gmra.mxu0 %v763
  %v2771 = vpop.f32.mrf.mxu0
  %v2772 = vadd.f32 %v2443, %v2771
  %v2773 = vpop.f32.mrf.mxu0
  %v2774 = vadd.f32 %v2445, %v2773
  %2775 = vmatmul.bf16.gmra.mxu0 %v765
  %v2776 = vpop.f32.mrf.mxu0
  %v2777 = vadd.f32 %v2448, %v2776
  %v2778 = vpop.f32.mrf.mxu0
  %v2779 = vadd.f32 %v2450, %v2778
  %2780 = vmatmul.bf16.gmra.mxu0 %v767
  %v2781 = vpop.f32.mrf.mxu0
  %v2782 = vadd.f32 %v2453, %v2781
  %v2783 = vpop.f32.mrf.mxu0
  %v2784 = vadd.f32 %v2455, %v2783
  %2785 = vmatmul.bf16.gmra.mxu0 %v769
  %v2786 = vpop.f32.mrf.mxu0
  %v2787 = vadd.f32 %v2458, %v2786
  %v2788 = vpop.f32.mrf.mxu0
  %v2789 = vadd.f32 %v2460, %v2788
  %2790 = vmatmul.bf16.gmra.mxu0 %v771
  %v2791 = vpop.f32.mrf.mxu0
  %v2792 = vadd.f32 %v2463, %v2791
  %v2793 = vpop.f32.mrf.mxu0
  %v2794 = vadd.f32 %v2465, %v2793
  %2795 = vmatmul.bf16.gmra.mxu0 %v773
  %v2796 = vpop.f32.mrf.mxu0
  %v2797 = vadd.f32 %v2468, %v2796
  %v2798 = vpop.f32.mrf.mxu0
  %v2799 = vadd.f32 %v2470, %v2798
  %2800 = vmatmul.bf16.gmra.mxu0 %v775
  %v2801 = vpop.f32.mrf.mxu0
  %v2802 = vadd.f32 %v2473, %v2801
  %v2803 = vpop.f32.mrf.mxu0
  %v2804 = vadd.f32 %v2475, %v2803
  %2805 = vmatmul.bf16.gmra.mxu0 %v777
  %v2806 = vpop.f32.mrf.mxu0
  %v2807 = vadd.f32 %v2478, %v2806
  %v2808 = vpop.f32.mrf.mxu0
  %v2809 = vadd.f32 %v2480, %v2808
  %2810 = vmatmul.bf16.gmra.mxu0 %v779
  %v2811 = vpop.f32.mrf.mxu0
  %v2812 = vadd.f32 %v2483, %v2811
  %v2813 = vpop.f32.mrf.mxu0
  %v2814 = vadd.f32 %v2485, %v2813
  %2815 = vmatmul.bf16.gmra.mxu0 %v781
  %v2816 = vpop.f32.mrf.mxu0
  %v2817 = vadd.f32 %v2488, %v2816
  %v2818 = vpop.f32.mrf.mxu0
  %v2819 = vadd.f32 %v2490, %v2818
  %2820 = vmatmul.bf16.gmra.mxu0 %v783
  %v2821 = vpop.f32.mrf.mxu0
  %v2822 = vadd.f32 %v2493, %v2821
  %v2823 = vpop.f32.mrf.mxu0
  %v2824 = vadd.f32 %v2495, %v2823
  %2825 = vmatmul.bf16.gmra.mxu0 %v785
  %v2826 = vpop.f32.mrf.mxu0
  %v2827 = vadd.f32 %v2498, %v2826
  %v2828 = vpop.f32.mrf.mxu0
  %v2829 = vadd.f32 %v2500, %v2828
  %2830 = vmatmul.bf16.gmra.mxu0 %v787
  %v2831 = vpop.f32.mrf.mxu0
  %v2832 = vadd.f32 %v2503, %v2831
  %v2833 = vpop.f32.mrf.mxu0
  %v2834 = vadd.f32 %v2505, %v2833
  %2835 = vmatmul.bf16.gmra.mxu0 %v789
  %v2836 = vpop.f32.mrf.mxu0
  %v2837 = vadd.f32 %v2508, %v2836
  %v2838 = vpop.f32.mrf.mxu0
  %v2839 = vadd.f32 %v2510, %v2838
  %2840 = vmatmul.bf16.gmra.mxu0 %v791
  %v2841 = vpop.f32.mrf.mxu0
  %v2842 = vadd.f32 %v2513, %v2841
  %v2843 = vpop.f32.mrf.mxu0
  %v2844 = vadd.f32 %v2515, %v2843
  %2845 = vmatmul.bf16.gmra.mxu0 %v793
  %v2846 = vpop.f32.mrf.mxu0
  %v2847 = vadd.f32 %v2518, %v2846
  %v2848 = vpop.f32.mrf.mxu0
  %v2849 = vadd.f32 %v2520, %v2848
  %2850 = vmatmul.bf16.gmra.mxu0 %v795
  %v2851 = vpop.f32.mrf.mxu0
  %v2852 = vadd.f32 %v2523, %v2851
  %v2853 = vpop.f32.mrf.mxu0
  %v2854 = vadd.f32 %v2525, %v2853
  %2855 = vmatmul.bf16.gmra.mxu0 %v797
  %v2856 = vpop.f32.mrf.mxu0
  %v2857 = vadd.f32 %v2528, %v2856
  %v2858 = vpop.f32.mrf.mxu0
  %v2859 = vadd.f32 %v2530, %v2858
  %2860 = vmatmul.bf16.gmra.mxu0 %v799
  %v2861 = vpop.f32.mrf.mxu0
  %v2862 = vadd.f32 %v2533, %v2861
  %v2863 = vpop.f32.mrf.mxu0
  %v2864 = vadd.f32 %v2535, %v2863
  %2865 = vmatmul.bf16.gmra.mxu0 %v801
  %v2866 = vpop.f32.mrf.mxu0
  %v2867 = vadd.f32 %v2538, %v2866
  %v2868 = vpop.f32.mrf.mxu0
  %v2869 = vadd.f32 %v2540, %v2868
  %2870 = vmatmul.bf16.gmra.mxu0 %v803
  %v2871 = vpop.f32.mrf.mxu0
  %v2872 = vadd.f32 %v2543, %v2871
  %v2873 = vpop.f32.mrf.mxu0
  %v2874 = vadd.f32 %v2545, %v2873
  %2875 = vmatmul.bf16.gmra.mxu0 %v805
  %v2876 = vpop.f32.mrf.mxu0
  %v2877 = vadd.f32 %v2548, %v2876
  %v2878 = vpop.f32.mrf.mxu0
  %v2879 = vadd.f32 %v2550, %v2878
  %2880 = vmatmul.bf16.gmra.mxu0 %v807
  %v2881 = vpop.f32.mrf.mxu0
  %v2882 = vadd.f32 %v2553, %v2881
  %v2883 = vpop.f32.mrf.mxu0
  %v2884 = vadd.f32 %v2555, %v2883
  %2885 = vmatmul.bf16.gmra.mxu0 %v809
  %v2886 = vpop.f32.mrf.mxu0
  %v2887 = vadd.f32 %v2558, %v2886
  %v2888 = vpop.f32.mrf.mxu0
  %v2889 = vadd.f32 %v2560, %v2888
  %2890 = vmatmul.bf16.gmra.mxu0 %v811
  %v2891 = vpop.f32.mrf.mxu0
  %v2892 = vadd.f32 %v2563, %v2891
  %v2893 = vpop.f32.mrf.mxu0
  %v2894 = vadd.f32 %v2565, %v2893
  %2895 = vdwg.mxu0
  %2896 = vmatpush.bf16.msra.mxu0 %v1382
  %2897 = vmatpush.bf16.msra.mxu0 %v1374
  %2898 = vmatpush.bf16.msra.mxu0 %v1366
  %2899 = vmatpush.bf16.msra.mxu0 %v1358
  %2900 = vmatpush.bf16.msra.mxu0 %v1350
  %2901 = vmatpush.bf16.msra.mxu0 %v1342
  %2902 = vmatpush.bf16.msra.mxu0 %v1334
  %2903 = vmatpush.bf16.msra.mxu0 %v1326
  %2904 = vmatmul.bf16.gmra.mxu0 %v684
  %v2905 = vpop.f32.mrf.mxu0
  %v2906 = vadd.f32 0.0, %v2905
  %v2907 = vpop.f32.mrf.mxu0
  %v2908 = vadd.f32 0.0, %v2907
  %2909 = vmatmul.bf16.gmra.mxu0 %v686
  %v2910 = vpop.f32.mrf.mxu0
  %v2911 = vadd.f32 0.0, %v2910
  %v2912 = vpop.f32.mrf.mxu0
  %v2913 = vadd.f32 0.0, %v2912
  %2914 = vmatmul.bf16.gmra.mxu0 %v688
  %v2915 = vpop.f32.mrf.mxu0
  %v2916 = vadd.f32 0.0, %v2915
  %v2917 = vpop.f32.mrf.mxu0
  %v2918 = vadd.f32 0.0, %v2917
  %2919 = vmatmul.bf16.gmra.mxu0 %v690
  %v2920 = vpop.f32.mrf.mxu0
  %v2921 = vadd.f32 0.0, %v2920
  %v2922 = vpop.f32.mrf.mxu0
  %v2923 = vadd.f32 0.0, %v2922
  %2924 = vmatmul.bf16.gmra.mxu0 %v692
  %v2925 = vpop.f32.mrf.mxu0
  %v2926 = vadd.f32 0.0, %v2925
  %v2927 = vpop.f32.mrf.mxu0
  %v2928 = vadd.f32 0.0, %v2927
  %2929 = vmatmul.bf16.gmra.mxu0 %v694
  %v2930 = vpop.f32.mrf.mxu0
  %v2931 = vadd.f32 0.0, %v2930
  %v2932 = vpop.f32.mrf.mxu0
  %v2933 = vadd.f32 0.0, %v2932
  %2934 = vmatmul.bf16.gmra.mxu0 %v696
  %v2935 = vpop.f32.mrf.mxu0
  %v2936 = vadd.f32 0.0, %v2935
  %v2937 = vpop.f32.mrf.mxu0
  %v2938 = vadd.f32 0.0, %v2937
  %2939 = vmatmul.bf16.gmra.mxu0 %v698
  %v2940 = vpop.f32.mrf.mxu0
  %v2941 = vadd.f32 0.0, %v2940
  %v2942 = vpop.f32.mrf.mxu0
  %v2943 = vadd.f32 0.0, %v2942
  %2944 = vmatmul.bf16.gmra.mxu0 %v700
  %v2945 = vpop.f32.mrf.mxu0
  %v2946 = vadd.f32 0.0, %v2945
  %v2947 = vpop.f32.mrf.mxu0
  %v2948 = vadd.f32 0.0, %v2947
  %2949 = vmatmul.bf16.gmra.mxu0 %v702
  %v2950 = vpop.f32.mrf.mxu0
  %v2951 = vadd.f32 0.0, %v2950
  %v2952 = vpop.f32.mrf.mxu0
  %v2953 = vadd.f32 0.0, %v2952
  %2954 = vmatmul.bf16.gmra.mxu0 %v704
  %v2955 = vpop.f32.mrf.mxu0
  %v2956 = vadd.f32 0.0, %v2955
  %v2957 = vpop.f32.mrf.mxu0
  %v2958 = vadd.f32 0.0, %v2957
  %2959 = vmatmul.bf16.gmra.mxu0 %v706
  %v2960 = vpop.f32.mrf.mxu0
  %v2961 = vadd.f32 0.0, %v2960
  %v2962 = vpop.f32.mrf.mxu0
  %v2963 = vadd.f32 0.0, %v2962
  %2964 = vmatmul.bf16.gmra.mxu0 %v708
  %v2965 = vpop.f32.mrf.mxu0
  %v2966 = vadd.f32 0.0, %v2965
  %v2967 = vpop.f32.mrf.mxu0
  %v2968 = vadd.f32 0.0, %v2967
  %2969 = vmatmul.bf16.gmra.mxu0 %v710
  %v2970 = vpop.f32.mrf.mxu0
  %v2971 = vadd.f32 0.0, %v2970
  %v2972 = vpop.f32.mrf.mxu0
  %v2973 = vadd.f32 0.0, %v2972
  %2974 = vmatmul.bf16.gmra.mxu0 %v712
  %v2975 = vpop.f32.mrf.mxu0
  %v2976 = vadd.f32 0.0, %v2975
  %v2977 = vpop.f32.mrf.mxu0
  %v2978 = vadd.f32 0.0, %v2977
  %2979 = vmatmul.bf16.gmra.mxu0 %v714
  %v2980 = vpop.f32.mrf.mxu0
  %v2981 = vadd.f32 0.0, %v2980
  %v2982 = vpop.f32.mrf.mxu0
  %v2983 = vadd.f32 0.0, %v2982
  %2984 = vmatmul.bf16.gmra.mxu0 %v716
  %v2985 = vpop.f32.mrf.mxu0
  %v2986 = vadd.f32 0.0, %v2985
  %v2987 = vpop.f32.mrf.mxu0
  %v2988 = vadd.f32 0.0, %v2987
  %2989 = vmatmul.bf16.gmra.mxu0 %v718
  %v2990 = vpop.f32.mrf.mxu0
  %v2991 = vadd.f32 0.0, %v2990
  %v2992 = vpop.f32.mrf.mxu0
  %v2993 = vadd.f32 0.0, %v2992
  %2994 = vmatmul.bf16.gmra.mxu0 %v720
  %v2995 = vpop.f32.mrf.mxu0
  %v2996 = vadd.f32 0.0, %v2995
  %v2997 = vpop.f32.mrf.mxu0
  %v2998 = vadd.f32 0.0, %v2997
  %2999 = vmatmul.bf16.gmra.mxu0 %v722
  %v3000 = vpop.f32.mrf.mxu0
  %v3001 = vadd.f32 0.0, %v3000
  %v3002 = vpop.f32.mrf.mxu0
  %v3003 = vadd.f32 0.0, %v3002
  %3004 = vmatmul.bf16.gmra.mxu0 %v724
  %v3005 = vpop.f32.mrf.mxu0
  %v3006 = vadd.f32 0.0, %v3005
  %v3007 = vpop.f32.mrf.mxu0
  %v3008 = vadd.f32 0.0, %v3007
  %3009 = vmatmul.bf16.gmra.mxu0 %v726
  %v3010 = vpop.f32.mrf.mxu0
  %v3011 = vadd.f32 0.0, %v3010
  %v3012 = vpop.f32.mrf.mxu0
  %v3013 = vadd.f32 0.0, %v3012
  %3014 = vmatmul.bf16.gmra.mxu0 %v728
  %v3015 = vpop.f32.mrf.mxu0
  %v3016 = vadd.f32 0.0, %v3015
  %v3017 = vpop.f32.mrf.mxu0
  %v3018 = vadd.f32 0.0, %v3017
  %3019 = vmatmul.bf16.gmra.mxu0 %v730
  %v3020 = vpop.f32.mrf.mxu0
  %v3021 = vadd.f32 0.0, %v3020
  %v3022 = vpop.f32.mrf.mxu0
  %v3023 = vadd.f32 0.0, %v3022
  %3024 = vmatmul.bf16.gmra.mxu0 %v732
  %v3025 = vpop.f32.mrf.mxu0
  %v3026 = vadd.f32 0.0, %v3025
  %v3027 = vpop.f32.mrf.mxu0
  %v3028 = vadd.f32 0.0, %v3027
  %3029 = vmatmul.bf16.gmra.mxu0 %v734
  %v3030 = vpop.f32.mrf.mxu0
  %v3031 = vadd.f32 0.0, %v3030
  %v3032 = vpop.f32.mrf.mxu0
  %v3033 = vadd.f32 0.0, %v3032
  %3034 = vmatmul.bf16.gmra.mxu0 %v736
  %v3035 = vpop.f32.mrf.mxu0
  %v3036 = vadd.f32 0.0, %v3035
  %v3037 = vpop.f32.mrf.mxu0
  %v3038 = vadd.f32 0.0, %v3037
  %3039 = vmatmul.bf16.gmra.mxu0 %v738
  %v3040 = vpop.f32.mrf.mxu0
  %v3041 = vadd.f32 0.0, %v3040
  %v3042 = vpop.f32.mrf.mxu0
  %v3043 = vadd.f32 0.0, %v3042
  %3044 = vmatmul.bf16.gmra.mxu0 %v740
  %v3045 = vpop.f32.mrf.mxu0
  %v3046 = vadd.f32 0.0, %v3045
  %v3047 = vpop.f32.mrf.mxu0
  %v3048 = vadd.f32 0.0, %v3047
  %3049 = vmatmul.bf16.gmra.mxu0 %v742
  %v3050 = vpop.f32.mrf.mxu0
  %v3051 = vadd.f32 0.0, %v3050
  %v3052 = vpop.f32.mrf.mxu0
  %v3053 = vadd.f32 0.0, %v3052
  %3054 = vmatmul.bf16.gmra.mxu0 %v744
  %v3055 = vpop.f32.mrf.mxu0
  %v3056 = vadd.f32 0.0, %v3055
  %v3057 = vpop.f32.mrf.mxu0
  %v3058 = vadd.f32 0.0, %v3057
  %3059 = vmatmul.bf16.gmra.mxu0 %v746
  %v3060 = vpop.f32.mrf.mxu0
  %v3061 = vadd.f32 0.0, %v3060
  %v3062 = vpop.f32.mrf.mxu0
  %v3063 = vadd.f32 0.0, %v3062
  %3064 = vmatmul.bf16.gmra.mxu0 %v748
  %v3065 = vpop.f32.mrf.mxu0
  %v3066 = vadd.f32 0.0, %v3065
  %v3067 = vpop.f32.mrf.mxu0
  %v3068 = vadd.f32 0.0, %v3067
  %3069 = vmatmul.bf16.gmra.mxu0 %v750
  %v3070 = vpop.f32.mrf.mxu0
  %v3071 = vadd.f32 0.0, %v3070
  %v3072 = vpop.f32.mrf.mxu0
  %v3073 = vadd.f32 0.0, %v3072
  %3074 = vmatmul.bf16.gmra.mxu0 %v752
  %v3075 = vpop.f32.mrf.mxu0
  %v3076 = vadd.f32 0.0, %v3075
  %v3077 = vpop.f32.mrf.mxu0
  %v3078 = vadd.f32 0.0, %v3077
  %3079 = vmatmul.bf16.gmra.mxu0 %v754
  %v3080 = vpop.f32.mrf.mxu0
  %v3081 = vadd.f32 0.0, %v3080
  %v3082 = vpop.f32.mrf.mxu0
  %v3083 = vadd.f32 0.0, %v3082
  %3084 = vmatmul.bf16.gmra.mxu0 %v756
  %v3085 = vpop.f32.mrf.mxu0
  %v3086 = vadd.f32 0.0, %v3085
  %v3087 = vpop.f32.mrf.mxu0
  %v3088 = vadd.f32 0.0, %v3087
  %3089 = vmatmul.bf16.gmra.mxu0 %v758
  %v3090 = vpop.f32.mrf.mxu0
  %v3091 = vadd.f32 0.0, %v3090
  %v3092 = vpop.f32.mrf.mxu0
  %v3093 = vadd.f32 0.0, %v3092
  %3094 = vmatmul.bf16.gmra.mxu0 %v760
  %v3095 = vpop.f32.mrf.mxu0
  %v3096 = vadd.f32 0.0, %v3095
  %v3097 = vpop.f32.mrf.mxu0
  %v3098 = vadd.f32 0.0, %v3097
  %3099 = vmatmul.bf16.gmra.mxu0 %v762
  %v3100 = vpop.f32.mrf.mxu0
  %v3101 = vadd.f32 0.0, %v3100
  %v3102 = vpop.f32.mrf.mxu0
  %v3103 = vadd.f32 0.0, %v3102
  %3104 = vmatmul.bf16.gmra.mxu0 %v764
  %v3105 = vpop.f32.mrf.mxu0
  %v3106 = vadd.f32 0.0, %v3105
  %v3107 = vpop.f32.mrf.mxu0
  %v3108 = vadd.f32 0.0, %v3107
  %3109 = vmatmul.bf16.gmra.mxu0 %v766
  %v3110 = vpop.f32.mrf.mxu0
  %v3111 = vadd.f32 0.0, %v3110
  %v3112 = vpop.f32.mrf.mxu0
  %v3113 = vadd.f32 0.0, %v3112
  %3114 = vmatmul.bf16.gmra.mxu0 %v768
  %v3115 = vpop.f32.mrf.mxu0
  %v3116 = vadd.f32 0.0, %v3115
  %v3117 = vpop.f32.mrf.mxu0
  %v3118 = vadd.f32 0.0, %v3117
  %3119 = vmatmul.bf16.gmra.mxu0 %v770
  %v3120 = vpop.f32.mrf.mxu0
  %v3121 = vadd.f32 0.0, %v3120
  %v3122 = vpop.f32.mrf.mxu0
  %v3123 = vadd.f32 0.0, %v3122
  %3124 = vmatmul.bf16.gmra.mxu0 %v772
  %v3125 = vpop.f32.mrf.mxu0
  %v3126 = vadd.f32 0.0, %v3125
  %v3127 = vpop.f32.mrf.mxu0
  %v3128 = vadd.f32 0.0, %v3127
  %3129 = vmatmul.bf16.gmra.mxu0 %v774
  %v3130 = vpop.f32.mrf.mxu0
  %v3131 = vadd.f32 0.0, %v3130
  %v3132 = vpop.f32.mrf.mxu0
  %v3133 = vadd.f32 0.0, %v3132
  %3134 = vmatmul.bf16.gmra.mxu0 %v776
  %v3135 = vpop.f32.mrf.mxu0
  %v3136 = vadd.f32 0.0, %v3135
  %v3137 = vpop.f32.mrf.mxu0
  %v3138 = vadd.f32 0.0, %v3137
  %3139 = vmatmul.bf16.gmra.mxu0 %v778
  %v3140 = vpop.f32.mrf.mxu0
  %v3141 = vadd.f32 0.0, %v3140
  %v3142 = vpop.f32.mrf.mxu0
  %v3143 = vadd.f32 0.0, %v3142
  %3144 = vmatmul.bf16.gmra.mxu0 %v780
  %v3145 = vpop.f32.mrf.mxu0
  %v3146 = vadd.f32 0.0, %v3145
  %v3147 = vpop.f32.mrf.mxu0
  %v3148 = vadd.f32 0.0, %v3147
  %3149 = vmatmul.bf16.gmra.mxu0 %v782
  %v3150 = vpop.f32.mrf.mxu0
  %v3151 = vadd.f32 0.0, %v3150
  %v3152 = vpop.f32.mrf.mxu0
  %v3153 = vadd.f32 0.0, %v3152
  %3154 = vmatmul.bf16.gmra.mxu0 %v784
  %v3155 = vpop.f32.mrf.mxu0
  %v3156 = vadd.f32 0.0, %v3155
  %v3157 = vpop.f32.mrf.mxu0
  %v3158 = vadd.f32 0.0, %v3157
  %3159 = vmatmul.bf16.gmra.mxu0 %v786
  %v3160 = vpop.f32.mrf.mxu0
  %v3161 = vadd.f32 0.0, %v3160
  %v3162 = vpop.f32.mrf.mxu0
  %v3163 = vadd.f32 0.0, %v3162
  %3164 = vmatmul.bf16.gmra.mxu0 %v788
  %v3165 = vpop.f32.mrf.mxu0
  %v3166 = vadd.f32 0.0, %v3165
  %v3167 = vpop.f32.mrf.mxu0
  %v3168 = vadd.f32 0.0, %v3167
  %3169 = vmatmul.bf16.gmra.mxu0 %v790
  %v3170 = vpop.f32.mrf.mxu0
  %v3171 = vadd.f32 0.0, %v3170
  %v3172 = vpop.f32.mrf.mxu0
  %v3173 = vadd.f32 0.0, %v3172
  %3174 = vmatmul.bf16.gmra.mxu0 %v792
  %v3175 = vpop.f32.mrf.mxu0
  %v3176 = vadd.f32 0.0, %v3175
  %v3177 = vpop.f32.mrf.mxu0
  %v3178 = vadd.f32 0.0, %v3177
  %3179 = vmatmul.bf16.gmra.mxu0 %v794
  %v3180 = vpop.f32.mrf.mxu0
  %v3181 = vadd.f32 0.0, %v3180
  %v3182 = vpop.f32.mrf.mxu0
  %v3183 = vadd.f32 0.0, %v3182
  %3184 = vmatmul.bf16.gmra.mxu0 %v796
  %v3185 = vpop.f32.mrf.mxu0
  %v3186 = vadd.f32 0.0, %v3185
  %v3187 = vpop.f32.mrf.mxu0
  %v3188 = vadd.f32 0.0, %v3187
  %3189 = vmatmul.bf16.gmra.mxu0 %v798
  %v3190 = vpop.f32.mrf.mxu0
  %v3191 = vadd.f32 0.0, %v3190
  %v3192 = vpop.f32.mrf.mxu0
  %v3193 = vadd.f32 0.0, %v3192
  %3194 = vmatmul.bf16.gmra.mxu0 %v800
  %v3195 = vpop.f32.mrf.mxu0
  %v3196 = vadd.f32 0.0, %v3195
  %v3197 = vpop.f32.mrf.mxu0
  %v3198 = vadd.f32 0.0, %v3197
  %3199 = vmatmul.bf16.gmra.mxu0 %v802
  %v3200 = vpop.f32.mrf.mxu0
  %v3201 = vadd.f32 0.0, %v3200
  %v3202 = vpop.f32.mrf.mxu0
  %v3203 = vadd.f32 0.0, %v3202
  %3204 = vmatmul.bf16.gmra.mxu0 %v804
  %v3205 = vpop.f32.mrf.mxu0
  %v3206 = vadd.f32 0.0, %v3205
  %v3207 = vpop.f32.mrf.mxu0
  %v3208 = vadd.f32 0.0, %v3207
  %3209 = vmatmul.bf16.gmra.mxu0 %v806
  %v3210 = vpop.f32.mrf.mxu0
  %v3211 = vadd.f32 0.0, %v3210
  %v3212 = vpop.f32.mrf.mxu0
  %v3213 = vadd.f32 0.0, %v3212
  %3214 = vmatmul.bf16.gmra.mxu0 %v808
  %v3215 = vpop.f32.mrf.mxu0
  %v3216 = vadd.f32 0.0, %v3215
  %v3217 = vpop.f32.mrf.mxu0
  %v3218 = vadd.f32 0.0, %v3217
  %3219 = vmatmul.bf16.gmra.mxu0 %v810
  %v3220 = vpop.f32.mrf.mxu0
  %v3221 = vadd.f32 0.0, %v3220
  %v3222 = vpop.f32.mrf.mxu0
  %v3223 = vadd.f32 0.0, %v3222
  %3224 = vdwg.mxu0
  %3225 = vmatpush.bf16.msra.mxu0 %v1446
  %3226 = vmatpush.bf16.msra.mxu0 %v1438
  %3227 = vmatpush.bf16.msra.mxu0 %v1430
  %3228 = vmatpush.bf16.msra.mxu0 %v1422
  %3229 = vmatpush.bf16.msra.mxu0 %v1414
  %3230 = vmatpush.bf16.msra.mxu0 %v1406
  %3231 = vmatpush.bf16.msra.mxu0 %v1398
  %3232 = vmatpush.bf16.msra.mxu0 %v1390
  %3233 = vmatmul.bf16.gmra.mxu0 %v685
  %v3234 = vpop.f32.mrf.mxu0
  %v3235 = vadd.f32 %v2906, %v3234
  %v3236 = vpop.f32.mrf.mxu0
  %v3237 = vadd.f32 %v2908, %v3236
  %3238 = vmatmul.bf16.gmra.mxu0 %v687
  %v3239 = vpop.f32.mrf.mxu0
  %v3240 = vadd.f32 %v2911, %v3239
  %v3241 = vpop.f32.mrf.mxu0
  %v3242 = vadd.f32 %v2913, %v3241
  %3243 = vmatmul.bf16.gmra.mxu0 %v689
  %v3244 = vpop.f32.mrf.mxu0
  %v3245 = vadd.f32 %v2916, %v3244
  %v3246 = vpop.f32.mrf.mxu0
  %v3247 = vadd.f32 %v2918, %v3246
  %3248 = vmatmul.bf16.gmra.mxu0 %v691
  %v3249 = vpop.f32.mrf.mxu0
  %v3250 = vadd.f32 %v2921, %v3249
  %v3251 = vpop.f32.mrf.mxu0
  %v3252 = vadd.f32 %v2923, %v3251
  %3253 = vmatmul.bf16.gmra.mxu0 %v693
  %v3254 = vpop.f32.mrf.mxu0
  %v3255 = vadd.f32 %v2926, %v3254
  %v3256 = vpop.f32.mrf.mxu0
  %v3257 = vadd.f32 %v2928, %v3256
  %3258 = vmatmul.bf16.gmra.mxu0 %v695
  %v3259 = vpop.f32.mrf.mxu0
  %v3260 = vadd.f32 %v2931, %v3259
  %v3261 = vpop.f32.mrf.mxu0
  %v3262 = vadd.f32 %v2933, %v3261
  %3263 = vmatmul.bf16.gmra.mxu0 %v697
  %v3264 = vpop.f32.mrf.mxu0
  %v3265 = vadd.f32 %v2936, %v3264
  %v3266 = vpop.f32.mrf.mxu0
  %v3267 = vadd.f32 %v2938, %v3266
  %3268 = vmatmul.bf16.gmra.mxu0 %v699
  %v3269 = vpop.f32.mrf.mxu0
  %v3270 = vadd.f32 %v2941, %v3269
  %v3271 = vpop.f32.mrf.mxu0
  %v3272 = vadd.f32 %v2943, %v3271
  %3273 = vmatmul.bf16.gmra.mxu0 %v701
  %v3274 = vpop.f32.mrf.mxu0
  %v3275 = vadd.f32 %v2946, %v3274
  %v3276 = vpop.f32.mrf.mxu0
  %v3277 = vadd.f32 %v2948, %v3276
  %3278 = vmatmul.bf16.gmra.mxu0 %v703
  %v3279 = vpop.f32.mrf.mxu0
  %v3280 = vadd.f32 %v2951, %v3279
  %v3281 = vpop.f32.mrf.mxu0
  %v3282 = vadd.f32 %v2953, %v3281
  %3283 = vmatmul.bf16.gmra.mxu0 %v705
  %v3284 = vpop.f32.mrf.mxu0
  %v3285 = vadd.f32 %v2956, %v3284
  %v3286 = vpop.f32.mrf.mxu0
  %v3287 = vadd.f32 %v2958, %v3286
  %3288 = vmatmul.bf16.gmra.mxu0 %v707
  %v3289 = vpop.f32.mrf.mxu0
  %v3290 = vadd.f32 %v2961, %v3289
  %v3291 = vpop.f32.mrf.mxu0
  %v3292 = vadd.f32 %v2963, %v3291
  %3293 = vmatmul.bf16.gmra.mxu0 %v709
  %v3294 = vpop.f32.mrf.mxu0
  %v3295 = vadd.f32 %v2966, %v3294
  %v3296 = vpop.f32.mrf.mxu0
  %v3297 = vadd.f32 %v2968, %v3296
  %3298 = vmatmul.bf16.gmra.mxu0 %v711
  %v3299 = vpop.f32.mrf.mxu0
  %v3300 = vadd.f32 %v2971, %v3299
  %v3301 = vpop.f32.mrf.mxu0
  %v3302 = vadd.f32 %v2973, %v3301
  %3303 = vmatmul.bf16.gmra.mxu0 %v713
  %v3304 = vpop.f32.mrf.mxu0
  %v3305 = vadd.f32 %v2976, %v3304
  %v3306 = vpop.f32.mrf.mxu0
  %v3307 = vadd.f32 %v2978, %v3306
  %3308 = vmatmul.bf16.gmra.mxu0 %v715
  %v3309 = vpop.f32.mrf.mxu0
  %v3310 = vadd.f32 %v2981, %v3309
  %v3311 = vpop.f32.mrf.mxu0
  %v3312 = vadd.f32 %v2983, %v3311
  %3313 = vmatmul.bf16.gmra.mxu0 %v717
  %v3314 = vpop.f32.mrf.mxu0
  %v3315 = vadd.f32 %v2986, %v3314
  %v3316 = vpop.f32.mrf.mxu0
  %v3317 = vadd.f32 %v2988, %v3316
  %3318 = vmatmul.bf16.gmra.mxu0 %v719
  %v3319 = vpop.f32.mrf.mxu0
  %v3320 = vadd.f32 %v2991, %v3319
  %v3321 = vpop.f32.mrf.mxu0
  %v3322 = vadd.f32 %v2993, %v3321
  %3323 = vmatmul.bf16.gmra.mxu0 %v721
  %v3324 = vpop.f32.mrf.mxu0
  %v3325 = vadd.f32 %v2996, %v3324
  %v3326 = vpop.f32.mrf.mxu0
  %v3327 = vadd.f32 %v2998, %v3326
  %3328 = vmatmul.bf16.gmra.mxu0 %v723
  %v3329 = vpop.f32.mrf.mxu0
  %v3330 = vadd.f32 %v3001, %v3329
  %v3331 = vpop.f32.mrf.mxu0
  %v3332 = vadd.f32 %v3003, %v3331
  %3333 = vmatmul.bf16.gmra.mxu0 %v725
  %v3334 = vpop.f32.mrf.mxu0
  %v3335 = vadd.f32 %v3006, %v3334
  %v3336 = vpop.f32.mrf.mxu0
  %v3337 = vadd.f32 %v3008, %v3336
  %3338 = vmatmul.bf16.gmra.mxu0 %v727
  %v3339 = vpop.f32.mrf.mxu0
  %v3340 = vadd.f32 %v3011, %v3339
  %v3341 = vpop.f32.mrf.mxu0
  %v3342 = vadd.f32 %v3013, %v3341
  %3343 = vmatmul.bf16.gmra.mxu0 %v729
  %v3344 = vpop.f32.mrf.mxu0
  %v3345 = vadd.f32 %v3016, %v3344
  %v3346 = vpop.f32.mrf.mxu0
  %v3347 = vadd.f32 %v3018, %v3346
  %3348 = vmatmul.bf16.gmra.mxu0 %v731
  %v3349 = vpop.f32.mrf.mxu0
  %v3350 = vadd.f32 %v3021, %v3349
  %v3351 = vpop.f32.mrf.mxu0
  %v3352 = vadd.f32 %v3023, %v3351
  %3353 = vmatmul.bf16.gmra.mxu0 %v733
  %v3354 = vpop.f32.mrf.mxu0
  %v3355 = vadd.f32 %v3026, %v3354
  %v3356 = vpop.f32.mrf.mxu0
  %v3357 = vadd.f32 %v3028, %v3356
  %3358 = vmatmul.bf16.gmra.mxu0 %v735
  %v3359 = vpop.f32.mrf.mxu0
  %v3360 = vadd.f32 %v3031, %v3359
  %v3361 = vpop.f32.mrf.mxu0
  %v3362 = vadd.f32 %v3033, %v3361
  %3363 = vmatmul.bf16.gmra.mxu0 %v737
  %v3364 = vpop.f32.mrf.mxu0
  %v3365 = vadd.f32 %v3036, %v3364
  %v3366 = vpop.f32.mrf.mxu0
  %v3367 = vadd.f32 %v3038, %v3366
  %3368 = vmatmul.bf16.gmra.mxu0 %v739
  %v3369 = vpop.f32.mrf.mxu0
  %v3370 = vadd.f32 %v3041, %v3369
  %v3371 = vpop.f32.mrf.mxu0
  %v3372 = vadd.f32 %v3043, %v3371
  %3373 = vmatmul.bf16.gmra.mxu0 %v741
  %v3374 = vpop.f32.mrf.mxu0
  %v3375 = vadd.f32 %v3046, %v3374
  %v3376 = vpop.f32.mrf.mxu0
  %v3377 = vadd.f32 %v3048, %v3376
  %3378 = vmatmul.bf16.gmra.mxu0 %v743
  %v3379 = vpop.f32.mrf.mxu0
  %v3380 = vadd.f32 %v3051, %v3379
  %v3381 = vpop.f32.mrf.mxu0
  %v3382 = vadd.f32 %v3053, %v3381
  %3383 = vmatmul.bf16.gmra.mxu0 %v745
  %v3384 = vpop.f32.mrf.mxu0
  %v3385 = vadd.f32 %v3056, %v3384
  %v3386 = vpop.f32.mrf.mxu0
  %v3387 = vadd.f32 %v3058, %v3386
  %3388 = vmatmul.bf16.gmra.mxu0 %v747
  %v3389 = vpop.f32.mrf.mxu0
  %v3390 = vadd.f32 %v3061, %v3389
  %v3391 = vpop.f32.mrf.mxu0
  %v3392 = vadd.f32 %v3063, %v3391
  %3393 = vmatmul.bf16.gmra.mxu0 %v749
  %v3394 = vpop.f32.mrf.mxu0
  %v3395 = vadd.f32 %v3066, %v3394
  %v3396 = vpop.f32.mrf.mxu0
  %v3397 = vadd.f32 %v3068, %v3396
  %3398 = vmatmul.bf16.gmra.mxu0 %v751
  %v3399 = vpop.f32.mrf.mxu0
  %v3400 = vadd.f32 %v3071, %v3399
  %v3401 = vpop.f32.mrf.mxu0
  %v3402 = vadd.f32 %v3073, %v3401
  %3403 = vmatmul.bf16.gmra.mxu0 %v753
  %v3404 = vpop.f32.mrf.mxu0
  %v3405 = vadd.f32 %v3076, %v3404
  %v3406 = vpop.f32.mrf.mxu0
  %v3407 = vadd.f32 %v3078, %v3406
  %3408 = vmatmul.bf16.gmra.mxu0 %v755
  %v3409 = vpop.f32.mrf.mxu0
  %v3410 = vadd.f32 %v3081, %v3409
  %v3411 = vpop.f32.mrf.mxu0
  %v3412 = vadd.f32 %v3083, %v3411
  %3413 = vmatmul.bf16.gmra.mxu0 %v757
  %v3414 = vpop.f32.mrf.mxu0
  %v3415 = vadd.f32 %v3086, %v3414
  %v3416 = vpop.f32.mrf.mxu0
  %v3417 = vadd.f32 %v3088, %v3416
  %3418 = vmatmul.bf16.gmra.mxu0 %v759
  %v3419 = vpop.f32.mrf.mxu0
  %v3420 = vadd.f32 %v3091, %v3419
  %v3421 = vpop.f32.mrf.mxu0
  %v3422 = vadd.f32 %v3093, %v3421
  %3423 = vmatmul.bf16.gmra.mxu0 %v761
  %v3424 = vpop.f32.mrf.mxu0
  %v3425 = vadd.f32 %v3096, %v3424
  %v3426 = vpop.f32.mrf.mxu0
  %v3427 = vadd.f32 %v3098, %v3426
  %3428 = vmatmul.bf16.gmra.mxu0 %v763
  %v3429 = vpop.f32.mrf.mxu0
  %v3430 = vadd.f32 %v3101, %v3429
  %v3431 = vpop.f32.mrf.mxu0
  %v3432 = vadd.f32 %v3103, %v3431
  %3433 = vmatmul.bf16.gmra.mxu0 %v765
  %v3434 = vpop.f32.mrf.mxu0
  %v3435 = vadd.f32 %v3106, %v3434
  %v3436 = vpop.f32.mrf.mxu0
  %v3437 = vadd.f32 %v3108, %v3436
  %3438 = vmatmul.bf16.gmra.mxu0 %v767
  %v3439 = vpop.f32.mrf.mxu0
  %v3440 = vadd.f32 %v3111, %v3439
  %v3441 = vpop.f32.mrf.mxu0
  %v3442 = vadd.f32 %v3113, %v3441
  %3443 = vmatmul.bf16.gmra.mxu0 %v769
  %v3444 = vpop.f32.mrf.mxu0
  %v3445 = vadd.f32 %v3116, %v3444
  %v3446 = vpop.f32.mrf.mxu0
  %v3447 = vadd.f32 %v3118, %v3446
  %3448 = vmatmul.bf16.gmra.mxu0 %v771
  %v3449 = vpop.f32.mrf.mxu0
  %v3450 = vadd.f32 %v3121, %v3449
  %v3451 = vpop.f32.mrf.mxu0
  %v3452 = vadd.f32 %v3123, %v3451
  %3453 = vmatmul.bf16.gmra.mxu0 %v773
  %v3454 = vpop.f32.mrf.mxu0
  %v3455 = vadd.f32 %v3126, %v3454
  %v3456 = vpop.f32.mrf.mxu0
  %v3457 = vadd.f32 %v3128, %v3456
  %3458 = vmatmul.bf16.gmra.mxu0 %v775
  %v3459 = vpop.f32.mrf.mxu0
  %v3460 = vadd.f32 %v3131, %v3459
  %v3461 = vpop.f32.mrf.mxu0
  %v3462 = vadd.f32 %v3133, %v3461
  %3463 = vmatmul.bf16.gmra.mxu0 %v777
  %v3464 = vpop.f32.mrf.mxu0
  %v3465 = vadd.f32 %v3136, %v3464
  %v3466 = vpop.f32.mrf.mxu0
  %v3467 = vadd.f32 %v3138, %v3466
  %3468 = vmatmul.bf16.gmra.mxu0 %v779
  %v3469 = vpop.f32.mrf.mxu0
  %v3470 = vadd.f32 %v3141, %v3469
  %v3471 = vpop.f32.mrf.mxu0
  %v3472 = vadd.f32 %v3143, %v3471
  %3473 = vmatmul.bf16.gmra.mxu0 %v781
  %v3474 = vpop.f32.mrf.mxu0
  %v3475 = vadd.f32 %v3146, %v3474
  %v3476 = vpop.f32.mrf.mxu0
  %v3477 = vadd.f32 %v3148, %v3476
  %3478 = vmatmul.bf16.gmra.mxu0 %v783
  %v3479 = vpop.f32.mrf.mxu0
  %v3480 = vadd.f32 %v3151, %v3479
  %v3481 = vpop.f32.mrf.mxu0
  %v3482 = vadd.f32 %v3153, %v3481
  %3483 = vmatmul.bf16.gmra.mxu0 %v785
  %v3484 = vpop.f32.mrf.mxu0
  %v3485 = vadd.f32 %v3156, %v3484
  %v3486 = vpop.f32.mrf.mxu0
  %v3487 = vadd.f32 %v3158, %v3486
  %3488 = vmatmul.bf16.gmra.mxu0 %v787
  %v3489 = vpop.f32.mrf.mxu0
  %v3490 = vadd.f32 %v3161, %v3489
  %v3491 = vpop.f32.mrf.mxu0
  %v3492 = vadd.f32 %v3163, %v3491
  %3493 = vmatmul.bf16.gmra.mxu0 %v789
  %v3494 = vpop.f32.mrf.mxu0
  %v3495 = vadd.f32 %v3166, %v3494
  %v3496 = vpop.f32.mrf.mxu0
  %v3497 = vadd.f32 %v3168, %v3496
  %3498 = vmatmul.bf16.gmra.mxu0 %v791
  %v3499 = vpop.f32.mrf.mxu0
  %v3500 = vadd.f32 %v3171, %v3499
  %v3501 = vpop.f32.mrf.mxu0
  %v3502 = vadd.f32 %v3173, %v3501
  %3503 = vmatmul.bf16.gmra.mxu0 %v793
  %v3504 = vpop.f32.mrf.mxu0
  %v3505 = vadd.f32 %v3176, %v3504
  %v3506 = vpop.f32.mrf.mxu0
  %v3507 = vadd.f32 %v3178, %v3506
  %3508 = vmatmul.bf16.gmra.mxu0 %v795
  %v3509 = vpop.f32.mrf.mxu0
  %v3510 = vadd.f32 %v3181, %v3509
  %v3511 = vpop.f32.mrf.mxu0
  %v3512 = vadd.f32 %v3183, %v3511
  %3513 = vmatmul.bf16.gmra.mxu0 %v797
  %v3514 = vpop.f32.mrf.mxu0
  %v3515 = vadd.f32 %v3186, %v3514
  %v3516 = vpop.f32.mrf.mxu0
  %v3517 = vadd.f32 %v3188, %v3516
  %3518 = vmatmul.bf16.gmra.mxu0 %v799
  %v3519 = vpop.f32.mrf.mxu0
  %v3520 = vadd.f32 %v3191, %v3519
  %v3521 = vpop.f32.mrf.mxu0
  %v3522 = vadd.f32 %v3193, %v3521
  %3523 = vmatmul.bf16.gmra.mxu0 %v801
  %v3524 = vpop.f32.mrf.mxu0
  %v3525 = vadd.f32 %v3196, %v3524
  %v3526 = vpop.f32.mrf.mxu0
  %v3527 = vadd.f32 %v3198, %v3526
  %3528 = vmatmul.bf16.gmra.mxu0 %v803
  %v3529 = vpop.f32.mrf.mxu0
  %v3530 = vadd.f32 %v3201, %v3529
  %v3531 = vpop.f32.mrf.mxu0
  %v3532 = vadd.f32 %v3203, %v3531
  %3533 = vmatmul.bf16.gmra.mxu0 %v805
  %v3534 = vpop.f32.mrf.mxu0
  %v3535 = vadd.f32 %v3206, %v3534
  %v3536 = vpop.f32.mrf.mxu0
  %v3537 = vadd.f32 %v3208, %v3536
  %3538 = vmatmul.bf16.gmra.mxu0 %v807
  %v3539 = vpop.f32.mrf.mxu0
  %v3540 = vadd.f32 %v3211, %v3539
  %v3541 = vpop.f32.mrf.mxu0
  %v3542 = vadd.f32 %v3213, %v3541
  %3543 = vmatmul.bf16.gmra.mxu0 %v809
  %v3544 = vpop.f32.mrf.mxu0
  %v3545 = vadd.f32 %v3216, %v3544
  %v3546 = vpop.f32.mrf.mxu0
  %v3547 = vadd.f32 %v3218, %v3546
  %3548 = vmatmul.bf16.gmra.mxu0 %v811
  %v3549 = vpop.f32.mrf.mxu0
  %v3550 = vadd.f32 %v3221, %v3549
  %v3551 = vpop.f32.mrf.mxu0
  %v3552 = vadd.f32 %v3223, %v3551
  %3553 = vdwg.mxu0
  %3554 = vmatpush.bf16.msra.mxu0 %v1383
  %3555 = vmatpush.bf16.msra.mxu0 %v1375
  %3556 = vmatpush.bf16.msra.mxu0 %v1367
  %3557 = vmatpush.bf16.msra.mxu0 %v1359
  %3558 = vmatpush.bf16.msra.mxu0 %v1351
  %3559 = vmatpush.bf16.msra.mxu0 %v1343
  %3560 = vmatpush.bf16.msra.mxu0 %v1335
  %3561 = vmatpush.bf16.msra.mxu0 %v1327
  %3562 = vmatmul.bf16.gmra.mxu0 %v684
  %v3563 = vpop.f32.mrf.mxu0
  %v3564 = vadd.f32 0.0, %v3563
  %v3565 = vpop.f32.mrf.mxu0
  %v3566 = vadd.f32 0.0, %v3565
  %3567 = vmatmul.bf16.gmra.mxu0 %v686
  %v3568 = vpop.f32.mrf.mxu0
  %v3569 = vadd.f32 0.0, %v3568
  %v3570 = vpop.f32.mrf.mxu0
  %v3571 = vadd.f32 0.0, %v3570
  %3572 = vmatmul.bf16.gmra.mxu0 %v688
  %v3573 = vpop.f32.mrf.mxu0
  %v3574 = vadd.f32 0.0, %v3573
  %v3575 = vpop.f32.mrf.mxu0
  %v3576 = vadd.f32 0.0, %v3575
  %3577 = vmatmul.bf16.gmra.mxu0 %v690
  %v3578 = vpop.f32.mrf.mxu0
  %v3579 = vadd.f32 0.0, %v3578
  %v3580 = vpop.f32.mrf.mxu0
  %v3581 = vadd.f32 0.0, %v3580
  %3582 = vmatmul.bf16.gmra.mxu0 %v692
  %v3583 = vpop.f32.mrf.mxu0
  %v3584 = vadd.f32 0.0, %v3583
  %v3585 = vpop.f32.mrf.mxu0
  %v3586 = vadd.f32 0.0, %v3585
  %3587 = vmatmul.bf16.gmra.mxu0 %v694
  %v3588 = vpop.f32.mrf.mxu0
  %v3589 = vadd.f32 0.0, %v3588
  %v3590 = vpop.f32.mrf.mxu0
  %v3591 = vadd.f32 0.0, %v3590
  %3592 = vmatmul.bf16.gmra.mxu0 %v696
  %v3593 = vpop.f32.mrf.mxu0
  %v3594 = vadd.f32 0.0, %v3593
  %v3595 = vpop.f32.mrf.mxu0
  %v3596 = vadd.f32 0.0, %v3595
  %3597 = vmatmul.bf16.gmra.mxu0 %v698
  %v3598 = vpop.f32.mrf.mxu0
  %v3599 = vadd.f32 0.0, %v3598
  %v3600 = vpop.f32.mrf.mxu0
  %v3601 = vadd.f32 0.0, %v3600
  %3602 = vmatmul.bf16.gmra.mxu0 %v700
  %v3603 = vpop.f32.mrf.mxu0
  %v3604 = vadd.f32 0.0, %v3603
  %v3605 = vpop.f32.mrf.mxu0
  %v3606 = vadd.f32 0.0, %v3605
  %3607 = vmatmul.bf16.gmra.mxu0 %v702
  %v3608 = vpop.f32.mrf.mxu0
  %v3609 = vadd.f32 0.0, %v3608
  %v3610 = vpop.f32.mrf.mxu0
  %v3611 = vadd.f32 0.0, %v3610
  %3612 = vmatmul.bf16.gmra.mxu0 %v704
  %v3613 = vpop.f32.mrf.mxu0
  %v3614 = vadd.f32 0.0, %v3613
  %v3615 = vpop.f32.mrf.mxu0
  %v3616 = vadd.f32 0.0, %v3615
  %3617 = vmatmul.bf16.gmra.mxu0 %v706
  %v3618 = vpop.f32.mrf.mxu0
  %v3619 = vadd.f32 0.0, %v3618
  %v3620 = vpop.f32.mrf.mxu0
  %v3621 = vadd.f32 0.0, %v3620
  %3622 = vmatmul.bf16.gmra.mxu0 %v708
  %v3623 = vpop.f32.mrf.mxu0
  %v3624 = vadd.f32 0.0, %v3623
  %v3625 = vpop.f32.mrf.mxu0
  %v3626 = vadd.f32 0.0, %v3625
  %3627 = vmatmul.bf16.gmra.mxu0 %v710
  %v3628 = vpop.f32.mrf.mxu0
  %v3629 = vadd.f32 0.0, %v3628
  %v3630 = vpop.f32.mrf.mxu0
  %v3631 = vadd.f32 0.0, %v3630
  %3632 = vmatmul.bf16.gmra.mxu0 %v712
  %v3633 = vpop.f32.mrf.mxu0
  %v3634 = vadd.f32 0.0, %v3633
  %v3635 = vpop.f32.mrf.mxu0
  %v3636 = vadd.f32 0.0, %v3635
  %3637 = vmatmul.bf16.gmra.mxu0 %v714
  %v3638 = vpop.f32.mrf.mxu0
  %v3639 = vadd.f32 0.0, %v3638
  %v3640 = vpop.f32.mrf.mxu0
  %v3641 = vadd.f32 0.0, %v3640
  %3642 = vmatmul.bf16.gmra.mxu0 %v716
  %v3643 = vpop.f32.mrf.mxu0
  %v3644 = vadd.f32 0.0, %v3643
  %v3645 = vpop.f32.mrf.mxu0
  %v3646 = vadd.f32 0.0, %v3645
  %3647 = vmatmul.bf16.gmra.mxu0 %v718
  %v3648 = vpop.f32.mrf.mxu0
  %v3649 = vadd.f32 0.0, %v3648
  %v3650 = vpop.f32.mrf.mxu0
  %v3651 = vadd.f32 0.0, %v3650
  %3652 = vmatmul.bf16.gmra.mxu0 %v720
  %v3653 = vpop.f32.mrf.mxu0
  %v3654 = vadd.f32 0.0, %v3653
  %v3655 = vpop.f32.mrf.mxu0
  %v3656 = vadd.f32 0.0, %v3655
  %3657 = vmatmul.bf16.gmra.mxu0 %v722
  %v3658 = vpop.f32.mrf.mxu0
  %v3659 = vadd.f32 0.0, %v3658
  %v3660 = vpop.f32.mrf.mxu0
  %v3661 = vadd.f32 0.0, %v3660
  %3662 = vmatmul.bf16.gmra.mxu0 %v724
  %v3663 = vpop.f32.mrf.mxu0
  %v3664 = vadd.f32 0.0, %v3663
  %v3665 = vpop.f32.mrf.mxu0
  %v3666 = vadd.f32 0.0, %v3665
  %3667 = vmatmul.bf16.gmra.mxu0 %v726
  %v3668 = vpop.f32.mrf.mxu0
  %v3669 = vadd.f32 0.0, %v3668
  %v3670 = vpop.f32.mrf.mxu0
  %v3671 = vadd.f32 0.0, %v3670
  %3672 = vmatmul.bf16.gmra.mxu0 %v728
  %v3673 = vpop.f32.mrf.mxu0
  %v3674 = vadd.f32 0.0, %v3673
  %v3675 = vpop.f32.mrf.mxu0
  %v3676 = vadd.f32 0.0, %v3675
  %3677 = vmatmul.bf16.gmra.mxu0 %v730
  %v3678 = vpop.f32.mrf.mxu0
  %v3679 = vadd.f32 0.0, %v3678
  %v3680 = vpop.f32.mrf.mxu0
  %v3681 = vadd.f32 0.0, %v3680
  %3682 = vmatmul.bf16.gmra.mxu0 %v732
  %v3683 = vpop.f32.mrf.mxu0
  %v3684 = vadd.f32 0.0, %v3683
  %v3685 = vpop.f32.mrf.mxu0
  %v3686 = vadd.f32 0.0, %v3685
  %3687 = vmatmul.bf16.gmra.mxu0 %v734
  %v3688 = vpop.f32.mrf.mxu0
  %v3689 = vadd.f32 0.0, %v3688
  %v3690 = vpop.f32.mrf.mxu0
  %v3691 = vadd.f32 0.0, %v3690
  %3692 = vmatmul.bf16.gmra.mxu0 %v736
  %v3693 = vpop.f32.mrf.mxu0
  %v3694 = vadd.f32 0.0, %v3693
  %v3695 = vpop.f32.mrf.mxu0
  %v3696 = vadd.f32 0.0, %v3695
  %3697 = vmatmul.bf16.gmra.mxu0 %v738
  %v3698 = vpop.f32.mrf.mxu0
  %v3699 = vadd.f32 0.0, %v3698
  %v3700 = vpop.f32.mrf.mxu0
  %v3701 = vadd.f32 0.0, %v3700
  %3702 = vmatmul.bf16.gmra.mxu0 %v740
  %v3703 = vpop.f32.mrf.mxu0
  %v3704 = vadd.f32 0.0, %v3703
  %v3705 = vpop.f32.mrf.mxu0
  %v3706 = vadd.f32 0.0, %v3705
  %3707 = vmatmul.bf16.gmra.mxu0 %v742
  %v3708 = vpop.f32.mrf.mxu0
  %v3709 = vadd.f32 0.0, %v3708
  %v3710 = vpop.f32.mrf.mxu0
  %v3711 = vadd.f32 0.0, %v3710
  %3712 = vmatmul.bf16.gmra.mxu0 %v744
  %v3713 = vpop.f32.mrf.mxu0
  %v3714 = vadd.f32 0.0, %v3713
  %v3715 = vpop.f32.mrf.mxu0
  %v3716 = vadd.f32 0.0, %v3715
  %3717 = vmatmul.bf16.gmra.mxu0 %v746
  %v3718 = vpop.f32.mrf.mxu0
  %v3719 = vadd.f32 0.0, %v3718
  %v3720 = vpop.f32.mrf.mxu0
  %v3721 = vadd.f32 0.0, %v3720
  %3722 = vmatmul.bf16.gmra.mxu0 %v748
  %v3723 = vpop.f32.mrf.mxu0
  %v3724 = vadd.f32 0.0, %v3723
  %v3725 = vpop.f32.mrf.mxu0
  %v3726 = vadd.f32 0.0, %v3725
  %3727 = vmatmul.bf16.gmra.mxu0 %v750
  %v3728 = vpop.f32.mrf.mxu0
  %v3729 = vadd.f32 0.0, %v3728
  %v3730 = vpop.f32.mrf.mxu0
  %v3731 = vadd.f32 0.0, %v3730
  %3732 = vmatmul.bf16.gmra.mxu0 %v752
  %v3733 = vpop.f32.mrf.mxu0
  %v3734 = vadd.f32 0.0, %v3733
  %v3735 = vpop.f32.mrf.mxu0
  %v3736 = vadd.f32 0.0, %v3735
  %3737 = vmatmul.bf16.gmra.mxu0 %v754
  %v3738 = vpop.f32.mrf.mxu0
  %v3739 = vadd.f32 0.0, %v3738
  %v3740 = vpop.f32.mrf.mxu0
  %v3741 = vadd.f32 0.0, %v3740
  %3742 = vmatmul.bf16.gmra.mxu0 %v756
  %v3743 = vpop.f32.mrf.mxu0
  %v3744 = vadd.f32 0.0, %v3743
  %v3745 = vpop.f32.mrf.mxu0
  %v3746 = vadd.f32 0.0, %v3745
  %3747 = vmatmul.bf16.gmra.mxu0 %v758
  %v3748 = vpop.f32.mrf.mxu0
  %v3749 = vadd.f32 0.0, %v3748
  %v3750 = vpop.f32.mrf.mxu0
  %v3751 = vadd.f32 0.0, %v3750
  %3752 = vmatmul.bf16.gmra.mxu0 %v760
  %v3753 = vpop.f32.mrf.mxu0
  %v3754 = vadd.f32 0.0, %v3753
  %v3755 = vpop.f32.mrf.mxu0
  %v3756 = vadd.f32 0.0, %v3755
  %3757 = vmatmul.bf16.gmra.mxu0 %v762
  %v3758 = vpop.f32.mrf.mxu0
  %v3759 = vadd.f32 0.0, %v3758
  %v3760 = vpop.f32.mrf.mxu0
  %v3761 = vadd.f32 0.0, %v3760
  %3762 = vmatmul.bf16.gmra.mxu0 %v764
  %v3763 = vpop.f32.mrf.mxu0
  %v3764 = vadd.f32 0.0, %v3763
  %v3765 = vpop.f32.mrf.mxu0
  %v3766 = vadd.f32 0.0, %v3765
  %3767 = vmatmul.bf16.gmra.mxu0 %v766
  %v3768 = vpop.f32.mrf.mxu0
  %v3769 = vadd.f32 0.0, %v3768
  %v3770 = vpop.f32.mrf.mxu0
  %v3771 = vadd.f32 0.0, %v3770
  %3772 = vmatmul.bf16.gmra.mxu0 %v768
  %v3773 = vpop.f32.mrf.mxu0
  %v3774 = vadd.f32 0.0, %v3773
  %v3775 = vpop.f32.mrf.mxu0
  %v3776 = vadd.f32 0.0, %v3775
  %3777 = vmatmul.bf16.gmra.mxu0 %v770
  %v3778 = vpop.f32.mrf.mxu0
  %v3779 = vadd.f32 0.0, %v3778
  %v3780 = vpop.f32.mrf.mxu0
  %v3781 = vadd.f32 0.0, %v3780
  %3782 = vmatmul.bf16.gmra.mxu0 %v772
  %v3783 = vpop.f32.mrf.mxu0
  %v3784 = vadd.f32 0.0, %v3783
  %v3785 = vpop.f32.mrf.mxu0
  %v3786 = vadd.f32 0.0, %v3785
  %3787 = vmatmul.bf16.gmra.mxu0 %v774
  %v3788 = vpop.f32.mrf.mxu0
  %v3789 = vadd.f32 0.0, %v3788
  %v3790 = vpop.f32.mrf.mxu0
  %v3791 = vadd.f32 0.0, %v3790
  %3792 = vmatmul.bf16.gmra.mxu0 %v776
  %v3793 = vpop.f32.mrf.mxu0
  %v3794 = vadd.f32 0.0, %v3793
  %v3795 = vpop.f32.mrf.mxu0
  %v3796 = vadd.f32 0.0, %v3795
  %3797 = vmatmul.bf16.gmra.mxu0 %v778
  %v3798 = vpop.f32.mrf.mxu0
  %v3799 = vadd.f32 0.0, %v3798
  %v3800 = vpop.f32.mrf.mxu0
  %v3801 = vadd.f32 0.0, %v3800
  %3802 = vmatmul.bf16.gmra.mxu0 %v780
  %v3803 = vpop.f32.mrf.mxu0
  %v3804 = vadd.f32 0.0, %v3803
  %v3805 = vpop.f32.mrf.mxu0
  %v3806 = vadd.f32 0.0, %v3805
  %3807 = vmatmul.bf16.gmra.mxu0 %v782
  %v3808 = vpop.f32.mrf.mxu0
  %v3809 = vadd.f32 0.0, %v3808
  %v3810 = vpop.f32.mrf.mxu0
  %v3811 = vadd.f32 0.0, %v3810
  %3812 = vmatmul.bf16.gmra.mxu0 %v784
  %v3813 = vpop.f32.mrf.mxu0
  %v3814 = vadd.f32 0.0, %v3813
  %v3815 = vpop.f32.mrf.mxu0
  %v3816 = vadd.f32 0.0, %v3815
  %3817 = vmatmul.bf16.gmra.mxu0 %v786
  %v3818 = vpop.f32.mrf.mxu0
  %v3819 = vadd.f32 0.0, %v3818
  %v3820 = vpop.f32.mrf.mxu0
  %v3821 = vadd.f32 0.0, %v3820
  %3822 = vmatmul.bf16.gmra.mxu0 %v788
  %v3823 = vpop.f32.mrf.mxu0
  %v3824 = vadd.f32 0.0, %v3823
  %v3825 = vpop.f32.mrf.mxu0
  %v3826 = vadd.f32 0.0, %v3825
  %3827 = vmatmul.bf16.gmra.mxu0 %v790
  %v3828 = vpop.f32.mrf.mxu0
  %v3829 = vadd.f32 0.0, %v3828
  %v3830 = vpop.f32.mrf.mxu0
  %v3831 = vadd.f32 0.0, %v3830
  %3832 = vmatmul.bf16.gmra.mxu0 %v792
  %v3833 = vpop.f32.mrf.mxu0
  %v3834 = vadd.f32 0.0, %v3833
  %v3835 = vpop.f32.mrf.mxu0
  %v3836 = vadd.f32 0.0, %v3835
  %3837 = vmatmul.bf16.gmra.mxu0 %v794
  %v3838 = vpop.f32.mrf.mxu0
  %v3839 = vadd.f32 0.0, %v3838
  %v3840 = vpop.f32.mrf.mxu0
  %v3841 = vadd.f32 0.0, %v3840
  %3842 = vmatmul.bf16.gmra.mxu0 %v796
  %v3843 = vpop.f32.mrf.mxu0
  %v3844 = vadd.f32 0.0, %v3843
  %v3845 = vpop.f32.mrf.mxu0
  %v3846 = vadd.f32 0.0, %v3845
  %3847 = vmatmul.bf16.gmra.mxu0 %v798
  %v3848 = vpop.f32.mrf.mxu0
  %v3849 = vadd.f32 0.0, %v3848
  %v3850 = vpop.f32.mrf.mxu0
  %v3851 = vadd.f32 0.0, %v3850
  %3852 = vmatmul.bf16.gmra.mxu0 %v800
  %v3853 = vpop.f32.mrf.mxu0
  %v3854 = vadd.f32 0.0, %v3853
  %v3855 = vpop.f32.mrf.mxu0
  %v3856 = vadd.f32 0.0, %v3855
  %3857 = vmatmul.bf16.gmra.mxu0 %v802
  %v3858 = vpop.f32.mrf.mxu0
  %v3859 = vadd.f32 0.0, %v3858
  %v3860 = vpop.f32.mrf.mxu0
  %v3861 = vadd.f32 0.0, %v3860
  %3862 = vmatmul.bf16.gmra.mxu0 %v804
  %v3863 = vpop.f32.mrf.mxu0
  %v3864 = vadd.f32 0.0, %v3863
  %v3865 = vpop.f32.mrf.mxu0
  %v3866 = vadd.f32 0.0, %v3865
  %3867 = vmatmul.bf16.gmra.mxu0 %v806
  %v3868 = vpop.f32.mrf.mxu0
  %v3869 = vadd.f32 0.0, %v3868
  %v3870 = vpop.f32.mrf.mxu0
  %v3871 = vadd.f32 0.0, %v3870
  %3872 = vmatmul.bf16.gmra.mxu0 %v808
  %v3873 = vpop.f32.mrf.mxu0
  %v3874 = vadd.f32 0.0, %v3873
  %v3875 = vpop.f32.mrf.mxu0
  %v3876 = vadd.f32 0.0, %v3875
  %3877 = vmatmul.bf16.gmra.mxu0 %v810
  %v3878 = vpop.f32.mrf.mxu0
  %v3879 = vadd.f32 0.0, %v3878
  %v3880 = vpop.f32.mrf.mxu0
  %v3881 = vadd.f32 0.0, %v3880
  %3882 = vdwg.mxu0
  %3883 = vmatpush.bf16.msra.mxu0 %v1447
  %3884 = vmatpush.bf16.msra.mxu0 %v1439
  %3885 = vmatpush.bf16.msra.mxu0 %v1431
  %3886 = vmatpush.bf16.msra.mxu0 %v1423
  %3887 = vmatpush.bf16.msra.mxu0 %v1415
  %3888 = vmatpush.bf16.msra.mxu0 %v1407
  %3889 = vmatpush.bf16.msra.mxu0 %v1399
  %3890 = vmatpush.bf16.msra.mxu0 %v1391
  %3891 = vmatmul.bf16.gmra.mxu0 %v685
  %v3892 = vpop.f32.mrf.mxu0
  %v3893 = vadd.f32 %v3564, %v3892
  %v3894 = vpop.f32.mrf.mxu0
  %v3895 = vadd.f32 %v3566, %v3894
  %3896 = vmatmul.bf16.gmra.mxu0 %v687
  %v3897 = vpop.f32.mrf.mxu0
  %v3898 = vadd.f32 %v3569, %v3897
  %v3899 = vpop.f32.mrf.mxu0
  %v3900 = vadd.f32 %v3571, %v3899
  %3901 = vmatmul.bf16.gmra.mxu0 %v689
  %v3902 = vpop.f32.mrf.mxu0
  %v3903 = vadd.f32 %v3574, %v3902
  %v3904 = vpop.f32.mrf.mxu0
  %v3905 = vadd.f32 %v3576, %v3904
  %3906 = vmatmul.bf16.gmra.mxu0 %v691
  %v3907 = vpop.f32.mrf.mxu0
  %v3908 = vadd.f32 %v3579, %v3907
  %v3909 = vpop.f32.mrf.mxu0
  %v3910 = vadd.f32 %v3581, %v3909
  %3911 = vmatmul.bf16.gmra.mxu0 %v693
  %v3912 = vpop.f32.mrf.mxu0
  %v3913 = vadd.f32 %v3584, %v3912
  %v3914 = vpop.f32.mrf.mxu0
  %v3915 = vadd.f32 %v3586, %v3914
  %3916 = vmatmul.bf16.gmra.mxu0 %v695
  %v3917 = vpop.f32.mrf.mxu0
  %v3918 = vadd.f32 %v3589, %v3917
  %v3919 = vpop.f32.mrf.mxu0
  %v3920 = vadd.f32 %v3591, %v3919
  %3921 = vmatmul.bf16.gmra.mxu0 %v697
  %v3922 = vpop.f32.mrf.mxu0
  %v3923 = vadd.f32 %v3594, %v3922
  %v3924 = vpop.f32.mrf.mxu0
  %v3925 = vadd.f32 %v3596, %v3924
  %3926 = vmatmul.bf16.gmra.mxu0 %v699
  %v3927 = vpop.f32.mrf.mxu0
  %v3928 = vadd.f32 %v3599, %v3927
  %v3929 = vpop.f32.mrf.mxu0
  %v3930 = vadd.f32 %v3601, %v3929
  %3931 = vmatmul.bf16.gmra.mxu0 %v701
  %v3932 = vpop.f32.mrf.mxu0
  %v3933 = vadd.f32 %v3604, %v3932
  %v3934 = vpop.f32.mrf.mxu0
  %v3935 = vadd.f32 %v3606, %v3934
  %3936 = vmatmul.bf16.gmra.mxu0 %v703
  %v3937 = vpop.f32.mrf.mxu0
  %v3938 = vadd.f32 %v3609, %v3937
  %v3939 = vpop.f32.mrf.mxu0
  %v3940 = vadd.f32 %v3611, %v3939
  %3941 = vmatmul.bf16.gmra.mxu0 %v705
  %v3942 = vpop.f32.mrf.mxu0
  %v3943 = vadd.f32 %v3614, %v3942
  %v3944 = vpop.f32.mrf.mxu0
  %v3945 = vadd.f32 %v3616, %v3944
  %3946 = vmatmul.bf16.gmra.mxu0 %v707
  %v3947 = vpop.f32.mrf.mxu0
  %v3948 = vadd.f32 %v3619, %v3947
  %v3949 = vpop.f32.mrf.mxu0
  %v3950 = vadd.f32 %v3621, %v3949
  %3951 = vmatmul.bf16.gmra.mxu0 %v709
  %v3952 = vpop.f32.mrf.mxu0
  %v3953 = vadd.f32 %v3624, %v3952
  %v3954 = vpop.f32.mrf.mxu0
  %v3955 = vadd.f32 %v3626, %v3954
  %3956 = vmatmul.bf16.gmra.mxu0 %v711
  %v3957 = vpop.f32.mrf.mxu0
  %v3958 = vadd.f32 %v3629, %v3957
  %v3959 = vpop.f32.mrf.mxu0
  %v3960 = vadd.f32 %v3631, %v3959
  %3961 = vmatmul.bf16.gmra.mxu0 %v713
  %v3962 = vpop.f32.mrf.mxu0
  %v3963 = vadd.f32 %v3634, %v3962
  %v3964 = vpop.f32.mrf.mxu0
  %v3965 = vadd.f32 %v3636, %v3964
  %3966 = vmatmul.bf16.gmra.mxu0 %v715
  %v3967 = vpop.f32.mrf.mxu0
  %v3968 = vadd.f32 %v3639, %v3967
  %v3969 = vpop.f32.mrf.mxu0
  %v3970 = vadd.f32 %v3641, %v3969
  %3971 = vmatmul.bf16.gmra.mxu0 %v717
  %v3972 = vpop.f32.mrf.mxu0
  %v3973 = vadd.f32 %v3644, %v3972
  %v3974 = vpop.f32.mrf.mxu0
  %v3975 = vadd.f32 %v3646, %v3974
  %3976 = vmatmul.bf16.gmra.mxu0 %v719
  %v3977 = vpop.f32.mrf.mxu0
  %v3978 = vadd.f32 %v3649, %v3977
  %v3979 = vpop.f32.mrf.mxu0
  %v3980 = vadd.f32 %v3651, %v3979
  %3981 = vmatmul.bf16.gmra.mxu0 %v721
  %v3982 = vpop.f32.mrf.mxu0
  %v3983 = vadd.f32 %v3654, %v3982
  %v3984 = vpop.f32.mrf.mxu0
  %v3985 = vadd.f32 %v3656, %v3984
  %3986 = vmatmul.bf16.gmra.mxu0 %v723
  %v3987 = vpop.f32.mrf.mxu0
  %v3988 = vadd.f32 %v3659, %v3987
  %v3989 = vpop.f32.mrf.mxu0
  %v3990 = vadd.f32 %v3661, %v3989
  %3991 = vmatmul.bf16.gmra.mxu0 %v725
  %v3992 = vpop.f32.mrf.mxu0
  %v3993 = vadd.f32 %v3664, %v3992
  %v3994 = vpop.f32.mrf.mxu0
  %v3995 = vadd.f32 %v3666, %v3994
  %3996 = vmatmul.bf16.gmra.mxu0 %v727
  %v3997 = vpop.f32.mrf.mxu0
  %v3998 = vadd.f32 %v3669, %v3997
  %v3999 = vpop.f32.mrf.mxu0
  %v4000 = vadd.f32 %v3671, %v3999
  %4001 = vmatmul.bf16.gmra.mxu0 %v729
  %v4002 = vpop.f32.mrf.mxu0
  %v4003 = vadd.f32 %v3674, %v4002
  %v4004 = vpop.f32.mrf.mxu0
  %v4005 = vadd.f32 %v3676, %v4004
  %4006 = vmatmul.bf16.gmra.mxu0 %v731
  %v4007 = vpop.f32.mrf.mxu0
  %v4008 = vadd.f32 %v3679, %v4007
  %v4009 = vpop.f32.mrf.mxu0
  %v4010 = vadd.f32 %v3681, %v4009
  %4011 = vmatmul.bf16.gmra.mxu0 %v733
  %v4012 = vpop.f32.mrf.mxu0
  %v4013 = vadd.f32 %v3684, %v4012
  %v4014 = vpop.f32.mrf.mxu0
  %v4015 = vadd.f32 %v3686, %v4014
  %4016 = vmatmul.bf16.gmra.mxu0 %v735
  %v4017 = vpop.f32.mrf.mxu0
  %v4018 = vadd.f32 %v3689, %v4017
  %v4019 = vpop.f32.mrf.mxu0
  %v4020 = vadd.f32 %v3691, %v4019
  %4021 = vmatmul.bf16.gmra.mxu0 %v737
  %v4022 = vpop.f32.mrf.mxu0
  %v4023 = vadd.f32 %v3694, %v4022
  %v4024 = vpop.f32.mrf.mxu0
  %v4025 = vadd.f32 %v3696, %v4024
  %4026 = vmatmul.bf16.gmra.mxu0 %v739
  %v4027 = vpop.f32.mrf.mxu0
  %v4028 = vadd.f32 %v3699, %v4027
  %v4029 = vpop.f32.mrf.mxu0
  %v4030 = vadd.f32 %v3701, %v4029
  %4031 = vmatmul.bf16.gmra.mxu0 %v741
  %v4032 = vpop.f32.mrf.mxu0
  %v4033 = vadd.f32 %v3704, %v4032
  %v4034 = vpop.f32.mrf.mxu0
  %v4035 = vadd.f32 %v3706, %v4034
  %4036 = vmatmul.bf16.gmra.mxu0 %v743
  %v4037 = vpop.f32.mrf.mxu0
  %v4038 = vadd.f32 %v3709, %v4037
  %v4039 = vpop.f32.mrf.mxu0
  %v4040 = vadd.f32 %v3711, %v4039
  %4041 = vmatmul.bf16.gmra.mxu0 %v745
  %v4042 = vpop.f32.mrf.mxu0
  %v4043 = vadd.f32 %v3714, %v4042
  %v4044 = vpop.f32.mrf.mxu0
  %v4045 = vadd.f32 %v3716, %v4044
  %4046 = vmatmul.bf16.gmra.mxu0 %v747
  %v4047 = vpop.f32.mrf.mxu0
  %v4048 = vadd.f32 %v3719, %v4047
  %v4049 = vpop.f32.mrf.mxu0
  %v4050 = vadd.f32 %v3721, %v4049
  %4051 = vmatmul.bf16.gmra.mxu0 %v749
  %v4052 = vpop.f32.mrf.mxu0
  %v4053 = vadd.f32 %v3724, %v4052
  %v4054 = vpop.f32.mrf.mxu0
  %v4055 = vadd.f32 %v3726, %v4054
  %4056 = vmatmul.bf16.gmra.mxu0 %v751
  %v4057 = vpop.f32.mrf.mxu0
  %v4058 = vadd.f32 %v3729, %v4057
  %v4059 = vpop.f32.mrf.mxu0
  %v4060 = vadd.f32 %v3731, %v4059
  %4061 = vmatmul.bf16.gmra.mxu0 %v753
  %v4062 = vpop.f32.mrf.mxu0
  %v4063 = vadd.f32 %v3734, %v4062
  %v4064 = vpop.f32.mrf.mxu0
  %v4065 = vadd.f32 %v3736, %v4064
  %4066 = vmatmul.bf16.gmra.mxu0 %v755
  %v4067 = vpop.f32.mrf.mxu0
  %v4068 = vadd.f32 %v3739, %v4067
  %v4069 = vpop.f32.mrf.mxu0
  %v4070 = vadd.f32 %v3741, %v4069
  %4071 = vmatmul.bf16.gmra.mxu0 %v757
  %v4072 = vpop.f32.mrf.mxu0
  %v4073 = vadd.f32 %v3744, %v4072
  %v4074 = vpop.f32.mrf.mxu0
  %v4075 = vadd.f32 %v3746, %v4074
  %4076 = vmatmul.bf16.gmra.mxu0 %v759
  %v4077 = vpop.f32.mrf.mxu0
  %v4078 = vadd.f32 %v3749, %v4077
  %v4079 = vpop.f32.mrf.mxu0
  %v4080 = vadd.f32 %v3751, %v4079
  %4081 = vmatmul.bf16.gmra.mxu0 %v761
  %v4082 = vpop.f32.mrf.mxu0
  %v4083 = vadd.f32 %v3754, %v4082
  %v4084 = vpop.f32.mrf.mxu0
  %v4085 = vadd.f32 %v3756, %v4084
  %4086 = vmatmul.bf16.gmra.mxu0 %v763
  %v4087 = vpop.f32.mrf.mxu0
  %v4088 = vadd.f32 %v3759, %v4087
  %v4089 = vpop.f32.mrf.mxu0
  %v4090 = vadd.f32 %v3761, %v4089
  %4091 = vmatmul.bf16.gmra.mxu0 %v765
  %v4092 = vpop.f32.mrf.mxu0
  %v4093 = vadd.f32 %v3764, %v4092
  %v4094 = vpop.f32.mrf.mxu0
  %v4095 = vadd.f32 %v3766, %v4094
  %4096 = vmatmul.bf16.gmra.mxu0 %v767
  %v4097 = vpop.f32.mrf.mxu0
  %v4098 = vadd.f32 %v3769, %v4097
  %v4099 = vpop.f32.mrf.mxu0
  %v4100 = vadd.f32 %v3771, %v4099
  %4101 = vmatmul.bf16.gmra.mxu0 %v769
  %v4102 = vpop.f32.mrf.mxu0
  %v4103 = vadd.f32 %v3774, %v4102
  %v4104 = vpop.f32.mrf.mxu0
  %v4105 = vadd.f32 %v3776, %v4104
  %4106 = vmatmul.bf16.gmra.mxu0 %v771
  %v4107 = vpop.f32.mrf.mxu0
  %v4108 = vadd.f32 %v3779, %v4107
  %v4109 = vpop.f32.mrf.mxu0
  %v4110 = vadd.f32 %v3781, %v4109
  %4111 = vmatmul.bf16.gmra.mxu0 %v773
  %v4112 = vpop.f32.mrf.mxu0
  %v4113 = vadd.f32 %v3784, %v4112
  %v4114 = vpop.f32.mrf.mxu0
  %v4115 = vadd.f32 %v3786, %v4114
  %4116 = vmatmul.bf16.gmra.mxu0 %v775
  %v4117 = vpop.f32.mrf.mxu0
  %v4118 = vadd.f32 %v3789, %v4117
  %v4119 = vpop.f32.mrf.mxu0
  %v4120 = vadd.f32 %v3791, %v4119
  %4121 = vmatmul.bf16.gmra.mxu0 %v777
  %v4122 = vpop.f32.mrf.mxu0
  %v4123 = vadd.f32 %v3794, %v4122
  %v4124 = vpop.f32.mrf.mxu0
  %v4125 = vadd.f32 %v3796, %v4124
  %4126 = vmatmul.bf16.gmra.mxu0 %v779
  %v4127 = vpop.f32.mrf.mxu0
  %v4128 = vadd.f32 %v3799, %v4127
  %v4129 = vpop.f32.mrf.mxu0
  %v4130 = vadd.f32 %v3801, %v4129
  %4131 = vmatmul.bf16.gmra.mxu0 %v781
  %v4132 = vpop.f32.mrf.mxu0
  %v4133 = vadd.f32 %v3804, %v4132
  %v4134 = vpop.f32.mrf.mxu0
  %v4135 = vadd.f32 %v3806, %v4134
  %4136 = vmatmul.bf16.gmra.mxu0 %v783
  %v4137 = vpop.f32.mrf.mxu0
  %v4138 = vadd.f32 %v3809, %v4137
  %v4139 = vpop.f32.mrf.mxu0
  %v4140 = vadd.f32 %v3811, %v4139
  %4141 = vmatmul.bf16.gmra.mxu0 %v785
  %v4142 = vpop.f32.mrf.mxu0
  %v4143 = vadd.f32 %v3814, %v4142
  %v4144 = vpop.f32.mrf.mxu0
  %v4145 = vadd.f32 %v3816, %v4144
  %4146 = vmatmul.bf16.gmra.mxu0 %v787
  %v4147 = vpop.f32.mrf.mxu0
  %v4148 = vadd.f32 %v3819, %v4147
  %v4149 = vpop.f32.mrf.mxu0
  %v4150 = vadd.f32 %v3821, %v4149
  %4151 = vmatmul.bf16.gmra.mxu0 %v789
  %v4152 = vpop.f32.mrf.mxu0
  %v4153 = vadd.f32 %v3824, %v4152
  %v4154 = vpop.f32.mrf.mxu0
  %v4155 = vadd.f32 %v3826, %v4154
  %4156 = vmatmul.bf16.gmra.mxu0 %v791
  %v4157 = vpop.f32.mrf.mxu0
  %v4158 = vadd.f32 %v3829, %v4157
  %v4159 = vpop.f32.mrf.mxu0
  %v4160 = vadd.f32 %v3831, %v4159
  %4161 = vmatmul.bf16.gmra.mxu0 %v793
  %v4162 = vpop.f32.mrf.mxu0
  %v4163 = vadd.f32 %v3834, %v4162
  %v4164 = vpop.f32.mrf.mxu0
  %v4165 = vadd.f32 %v3836, %v4164
  %4166 = vmatmul.bf16.gmra.mxu0 %v795
  %v4167 = vpop.f32.mrf.mxu0
  %v4168 = vadd.f32 %v3839, %v4167
  %v4169 = vpop.f32.mrf.mxu0
  %v4170 = vadd.f32 %v3841, %v4169
  %4171 = vmatmul.bf16.gmra.mxu0 %v797
  %v4172 = vpop.f32.mrf.mxu0
  %v4173 = vadd.f32 %v3844, %v4172
  %v4174 = vpop.f32.mrf.mxu0
  %v4175 = vadd.f32 %v3846, %v4174
  %4176 = vmatmul.bf16.gmra.mxu0 %v799
  %v4177 = vpop.f32.mrf.mxu0
  %v4178 = vadd.f32 %v3849, %v4177
  %v4179 = vpop.f32.mrf.mxu0
  %v4180 = vadd.f32 %v3851, %v4179
  %4181 = vmatmul.bf16.gmra.mxu0 %v801
  %v4182 = vpop.f32.mrf.mxu0
  %v4183 = vadd.f32 %v3854, %v4182
  %v4184 = vpop.f32.mrf.mxu0
  %v4185 = vadd.f32 %v3856, %v4184
  %4186 = vmatmul.bf16.gmra.mxu0 %v803
  %v4187 = vpop.f32.mrf.mxu0
  %v4188 = vadd.f32 %v3859, %v4187
  %v4189 = vpop.f32.mrf.mxu0
  %v4190 = vadd.f32 %v3861, %v4189
  %4191 = vmatmul.bf16.gmra.mxu0 %v805
  %v4192 = vpop.f32.mrf.mxu0
  %v4193 = vadd.f32 %v3864, %v4192
  %v4194 = vpop.f32.mrf.mxu0
  %v4195 = vadd.f32 %v3866, %v4194
  %4196 = vmatmul.bf16.gmra.mxu0 %v807
  %v4197 = vpop.f32.mrf.mxu0
  %v4198 = vadd.f32 %v3869, %v4197
  %v4199 = vpop.f32.mrf.mxu0
  %v4200 = vadd.f32 %v3871, %v4199
  %4201 = vmatmul.bf16.gmra.mxu0 %v809
  %v4202 = vpop.f32.mrf.mxu0
  %v4203 = vadd.f32 %v3874, %v4202
  %v4204 = vpop.f32.mrf.mxu0
  %v4205 = vadd.f32 %v3876, %v4204
  %4206 = vmatmul.bf16.gmra.mxu0 %v811
  %v4207 = vpop.f32.mrf.mxu0
  %v4208 = vadd.f32 %v3879, %v4207
  %v4209 = vpop.f32.mrf.mxu0
  %v4210 = vadd.f32 %v3881, %v4209
  %4211 = vdwg.mxu0
  %4212 = vmatpush.bf16.msra.mxu0 %v1384
  %4213 = vmatpush.bf16.msra.mxu0 %v1376
  %4214 = vmatpush.bf16.msra.mxu0 %v1368
  %4215 = vmatpush.bf16.msra.mxu0 %v1360
  %4216 = vmatpush.bf16.msra.mxu0 %v1352
  %4217 = vmatpush.bf16.msra.mxu0 %v1344
  %4218 = vmatpush.bf16.msra.mxu0 %v1336
  %4219 = vmatpush.bf16.msra.mxu0 %v1328
  %4220 = vmatmul.bf16.gmra.mxu0 %v684
  %v4221 = vpop.f32.mrf.mxu0
  %v4222 = vadd.f32 0.0, %v4221
  %v4223 = vpop.f32.mrf.mxu0
  %v4224 = vadd.f32 0.0, %v4223
  %4225 = vmatmul.bf16.gmra.mxu0 %v686
  %v4226 = vpop.f32.mrf.mxu0
  %v4227 = vadd.f32 0.0, %v4226
  %v4228 = vpop.f32.mrf.mxu0
  %v4229 = vadd.f32 0.0, %v4228
  %4230 = vmatmul.bf16.gmra.mxu0 %v688
  %v4231 = vpop.f32.mrf.mxu0
  %v4232 = vadd.f32 0.0, %v4231
  %v4233 = vpop.f32.mrf.mxu0
  %v4234 = vadd.f32 0.0, %v4233
  %4235 = vmatmul.bf16.gmra.mxu0 %v690
  %v4236 = vpop.f32.mrf.mxu0
  %v4237 = vadd.f32 0.0, %v4236
  %v4238 = vpop.f32.mrf.mxu0
  %v4239 = vadd.f32 0.0, %v4238
  %4240 = vmatmul.bf16.gmra.mxu0 %v692
  %v4241 = vpop.f32.mrf.mxu0
  %v4242 = vadd.f32 0.0, %v4241
  %v4243 = vpop.f32.mrf.mxu0
  %v4244 = vadd.f32 0.0, %v4243
  %4245 = vmatmul.bf16.gmra.mxu0 %v694
  %v4246 = vpop.f32.mrf.mxu0
  %v4247 = vadd.f32 0.0, %v4246
  %v4248 = vpop.f32.mrf.mxu0
  %v4249 = vadd.f32 0.0, %v4248
  %4250 = vmatmul.bf16.gmra.mxu0 %v696
  %v4251 = vpop.f32.mrf.mxu0
  %v4252 = vadd.f32 0.0, %v4251
  %v4253 = vpop.f32.mrf.mxu0
  %v4254 = vadd.f32 0.0, %v4253
  %4255 = vmatmul.bf16.gmra.mxu0 %v698
  %v4256 = vpop.f32.mrf.mxu0
  %v4257 = vadd.f32 0.0, %v4256
  %v4258 = vpop.f32.mrf.mxu0
  %v4259 = vadd.f32 0.0, %v4258
  %4260 = vmatmul.bf16.gmra.mxu0 %v700
  %v4261 = vpop.f32.mrf.mxu0
  %v4262 = vadd.f32 0.0, %v4261
  %v4263 = vpop.f32.mrf.mxu0
  %v4264 = vadd.f32 0.0, %v4263
  %4265 = vmatmul.bf16.gmra.mxu0 %v702
  %v4266 = vpop.f32.mrf.mxu0
  %v4267 = vadd.f32 0.0, %v4266
  %v4268 = vpop.f32.mrf.mxu0
  %v4269 = vadd.f32 0.0, %v4268
  %4270 = vmatmul.bf16.gmra.mxu0 %v704
  %v4271 = vpop.f32.mrf.mxu0
  %v4272 = vadd.f32 0.0, %v4271
  %v4273 = vpop.f32.mrf.mxu0
  %v4274 = vadd.f32 0.0, %v4273
  %4275 = vmatmul.bf16.gmra.mxu0 %v706
  %v4276 = vpop.f32.mrf.mxu0
  %v4277 = vadd.f32 0.0, %v4276
  %v4278 = vpop.f32.mrf.mxu0
  %v4279 = vadd.f32 0.0, %v4278
  %4280 = vmatmul.bf16.gmra.mxu0 %v708
  %v4281 = vpop.f32.mrf.mxu0
  %v4282 = vadd.f32 0.0, %v4281
  %v4283 = vpop.f32.mrf.mxu0
  %v4284 = vadd.f32 0.0, %v4283
  %4285 = vmatmul.bf16.gmra.mxu0 %v710
  %v4286 = vpop.f32.mrf.mxu0
  %v4287 = vadd.f32 0.0, %v4286
  %v4288 = vpop.f32.mrf.mxu0
  %v4289 = vadd.f32 0.0, %v4288
  %4290 = vmatmul.bf16.gmra.mxu0 %v712
  %v4291 = vpop.f32.mrf.mxu0
  %v4292 = vadd.f32 0.0, %v4291
  %v4293 = vpop.f32.mrf.mxu0
  %v4294 = vadd.f32 0.0, %v4293
  %4295 = vmatmul.bf16.gmra.mxu0 %v714
  %v4296 = vpop.f32.mrf.mxu0
  %v4297 = vadd.f32 0.0, %v4296
  %v4298 = vpop.f32.mrf.mxu0
  %v4299 = vadd.f32 0.0, %v4298
  %4300 = vmatmul.bf16.gmra.mxu0 %v716
  %v4301 = vpop.f32.mrf.mxu0
  %v4302 = vadd.f32 0.0, %v4301
  %v4303 = vpop.f32.mrf.mxu0
  %v4304 = vadd.f32 0.0, %v4303
  %4305 = vmatmul.bf16.gmra.mxu0 %v718
  %v4306 = vpop.f32.mrf.mxu0
  %v4307 = vadd.f32 0.0, %v4306
  %v4308 = vpop.f32.mrf.mxu0
  %v4309 = vadd.f32 0.0, %v4308
  %4310 = vmatmul.bf16.gmra.mxu0 %v720
  %v4311 = vpop.f32.mrf.mxu0
  %v4312 = vadd.f32 0.0, %v4311
  %v4313 = vpop.f32.mrf.mxu0
  %v4314 = vadd.f32 0.0, %v4313
  %4315 = vmatmul.bf16.gmra.mxu0 %v722
  %v4316 = vpop.f32.mrf.mxu0
  %v4317 = vadd.f32 0.0, %v4316
  %v4318 = vpop.f32.mrf.mxu0
  %v4319 = vadd.f32 0.0, %v4318
  %4320 = vmatmul.bf16.gmra.mxu0 %v724
  %v4321 = vpop.f32.mrf.mxu0
  %v4322 = vadd.f32 0.0, %v4321
  %v4323 = vpop.f32.mrf.mxu0
  %v4324 = vadd.f32 0.0, %v4323
  %4325 = vmatmul.bf16.gmra.mxu0 %v726
  %v4326 = vpop.f32.mrf.mxu0
  %v4327 = vadd.f32 0.0, %v4326
  %v4328 = vpop.f32.mrf.mxu0
  %v4329 = vadd.f32 0.0, %v4328
  %4330 = vmatmul.bf16.gmra.mxu0 %v728
  %v4331 = vpop.f32.mrf.mxu0
  %v4332 = vadd.f32 0.0, %v4331
  %v4333 = vpop.f32.mrf.mxu0
  %v4334 = vadd.f32 0.0, %v4333
  %4335 = vmatmul.bf16.gmra.mxu0 %v730
  %v4336 = vpop.f32.mrf.mxu0
  %v4337 = vadd.f32 0.0, %v4336
  %v4338 = vpop.f32.mrf.mxu0
  %v4339 = vadd.f32 0.0, %v4338
  %4340 = vmatmul.bf16.gmra.mxu0 %v732
  %v4341 = vpop.f32.mrf.mxu0
  %v4342 = vadd.f32 0.0, %v4341
  %v4343 = vpop.f32.mrf.mxu0
  %v4344 = vadd.f32 0.0, %v4343
  %4345 = vmatmul.bf16.gmra.mxu0 %v734
  %v4346 = vpop.f32.mrf.mxu0
  %v4347 = vadd.f32 0.0, %v4346
  %v4348 = vpop.f32.mrf.mxu0
  %v4349 = vadd.f32 0.0, %v4348
  %4350 = vmatmul.bf16.gmra.mxu0 %v736
  %v4351 = vpop.f32.mrf.mxu0
  %v4352 = vadd.f32 0.0, %v4351
  %v4353 = vpop.f32.mrf.mxu0
  %v4354 = vadd.f32 0.0, %v4353
  %4355 = vmatmul.bf16.gmra.mxu0 %v738
  %v4356 = vpop.f32.mrf.mxu0
  %v4357 = vadd.f32 0.0, %v4356
  %v4358 = vpop.f32.mrf.mxu0
  %v4359 = vadd.f32 0.0, %v4358
  %4360 = vmatmul.bf16.gmra.mxu0 %v740
  %v4361 = vpop.f32.mrf.mxu0
  %v4362 = vadd.f32 0.0, %v4361
  %v4363 = vpop.f32.mrf.mxu0
  %v4364 = vadd.f32 0.0, %v4363
  %4365 = vmatmul.bf16.gmra.mxu0 %v742
  %v4366 = vpop.f32.mrf.mxu0
  %v4367 = vadd.f32 0.0, %v4366
  %v4368 = vpop.f32.mrf.mxu0
  %v4369 = vadd.f32 0.0, %v4368
  %4370 = vmatmul.bf16.gmra.mxu0 %v744
  %v4371 = vpop.f32.mrf.mxu0
  %v4372 = vadd.f32 0.0, %v4371
  %v4373 = vpop.f32.mrf.mxu0
  %v4374 = vadd.f32 0.0, %v4373
  %4375 = vmatmul.bf16.gmra.mxu0 %v746
  %v4376 = vpop.f32.mrf.mxu0
  %v4377 = vadd.f32 0.0, %v4376
  %v4378 = vpop.f32.mrf.mxu0
  %v4379 = vadd.f32 0.0, %v4378
  %4380 = vmatmul.bf16.gmra.mxu0 %v748
  %v4381 = vpop.f32.mrf.mxu0
  %v4382 = vadd.f32 0.0, %v4381
  %v4383 = vpop.f32.mrf.mxu0
  %v4384 = vadd.f32 0.0, %v4383
  %4385 = vmatmul.bf16.gmra.mxu0 %v750
  %v4386 = vpop.f32.mrf.mxu0
  %v4387 = vadd.f32 0.0, %v4386
  %v4388 = vpop.f32.mrf.mxu0
  %v4389 = vadd.f32 0.0, %v4388
  %4390 = vmatmul.bf16.gmra.mxu0 %v752
  %v4391 = vpop.f32.mrf.mxu0
  %v4392 = vadd.f32 0.0, %v4391
  %v4393 = vpop.f32.mrf.mxu0
  %v4394 = vadd.f32 0.0, %v4393
  %4395 = vmatmul.bf16.gmra.mxu0 %v754
  %v4396 = vpop.f32.mrf.mxu0
  %v4397 = vadd.f32 0.0, %v4396
  %v4398 = vpop.f32.mrf.mxu0
  %v4399 = vadd.f32 0.0, %v4398
  %4400 = vmatmul.bf16.gmra.mxu0 %v756
  %v4401 = vpop.f32.mrf.mxu0
  %v4402 = vadd.f32 0.0, %v4401
  %v4403 = vpop.f32.mrf.mxu0
  %v4404 = vadd.f32 0.0, %v4403
  %4405 = vmatmul.bf16.gmra.mxu0 %v758
  %v4406 = vpop.f32.mrf.mxu0
  %v4407 = vadd.f32 0.0, %v4406
  %v4408 = vpop.f32.mrf.mxu0
  %v4409 = vadd.f32 0.0, %v4408
  %4410 = vmatmul.bf16.gmra.mxu0 %v760
  %v4411 = vpop.f32.mrf.mxu0
  %v4412 = vadd.f32 0.0, %v4411
  %v4413 = vpop.f32.mrf.mxu0
  %v4414 = vadd.f32 0.0, %v4413
  %4415 = vmatmul.bf16.gmra.mxu0 %v762
  %v4416 = vpop.f32.mrf.mxu0
  %v4417 = vadd.f32 0.0, %v4416
  %v4418 = vpop.f32.mrf.mxu0
  %v4419 = vadd.f32 0.0, %v4418
  %4420 = vmatmul.bf16.gmra.mxu0 %v764
  %v4421 = vpop.f32.mrf.mxu0
  %v4422 = vadd.f32 0.0, %v4421
  %v4423 = vpop.f32.mrf.mxu0
  %v4424 = vadd.f32 0.0, %v4423
  %4425 = vmatmul.bf16.gmra.mxu0 %v766
  %v4426 = vpop.f32.mrf.mxu0
  %v4427 = vadd.f32 0.0, %v4426
  %v4428 = vpop.f32.mrf.mxu0
  %v4429 = vadd.f32 0.0, %v4428
  %4430 = vmatmul.bf16.gmra.mxu0 %v768
  %v4431 = vpop.f32.mrf.mxu0
  %v4432 = vadd.f32 0.0, %v4431
  %v4433 = vpop.f32.mrf.mxu0
  %v4434 = vadd.f32 0.0, %v4433
  %4435 = vmatmul.bf16.gmra.mxu0 %v770
  %v4436 = vpop.f32.mrf.mxu0
  %v4437 = vadd.f32 0.0, %v4436
  %v4438 = vpop.f32.mrf.mxu0
  %v4439 = vadd.f32 0.0, %v4438
  %4440 = vmatmul.bf16.gmra.mxu0 %v772
  %v4441 = vpop.f32.mrf.mxu0
  %v4442 = vadd.f32 0.0, %v4441
  %v4443 = vpop.f32.mrf.mxu0
  %v4444 = vadd.f32 0.0, %v4443
  %4445 = vmatmul.bf16.gmra.mxu0 %v774
  %v4446 = vpop.f32.mrf.mxu0
  %v4447 = vadd.f32 0.0, %v4446
  %v4448 = vpop.f32.mrf.mxu0
  %v4449 = vadd.f32 0.0, %v4448
  %4450 = vmatmul.bf16.gmra.mxu0 %v776
  %v4451 = vpop.f32.mrf.mxu0
  %v4452 = vadd.f32 0.0, %v4451
  %v4453 = vpop.f32.mrf.mxu0
  %v4454 = vadd.f32 0.0, %v4453
  %4455 = vmatmul.bf16.gmra.mxu0 %v778
  %v4456 = vpop.f32.mrf.mxu0
  %v4457 = vadd.f32 0.0, %v4456
  %v4458 = vpop.f32.mrf.mxu0
  %v4459 = vadd.f32 0.0, %v4458
  %4460 = vmatmul.bf16.gmra.mxu0 %v780
  %v4461 = vpop.f32.mrf.mxu0
  %v4462 = vadd.f32 0.0, %v4461
  %v4463 = vpop.f32.mrf.mxu0
  %v4464 = vadd.f32 0.0, %v4463
  %4465 = vmatmul.bf16.gmra.mxu0 %v782
  %v4466 = vpop.f32.mrf.mxu0
  %v4467 = vadd.f32 0.0, %v4466
  %v4468 = vpop.f32.mrf.mxu0
  %v4469 = vadd.f32 0.0, %v4468
  %4470 = vmatmul.bf16.gmra.mxu0 %v784
  %v4471 = vpop.f32.mrf.mxu0
  %v4472 = vadd.f32 0.0, %v4471
  %v4473 = vpop.f32.mrf.mxu0
  %v4474 = vadd.f32 0.0, %v4473
  %4475 = vmatmul.bf16.gmra.mxu0 %v786
  %v4476 = vpop.f32.mrf.mxu0
  %v4477 = vadd.f32 0.0, %v4476
  %v4478 = vpop.f32.mrf.mxu0
  %v4479 = vadd.f32 0.0, %v4478
  %4480 = vmatmul.bf16.gmra.mxu0 %v788
  %v4481 = vpop.f32.mrf.mxu0
  %v4482 = vadd.f32 0.0, %v4481
  %v4483 = vpop.f32.mrf.mxu0
  %v4484 = vadd.f32 0.0, %v4483
  %4485 = vmatmul.bf16.gmra.mxu0 %v790
  %v4486 = vpop.f32.mrf.mxu0
  %v4487 = vadd.f32 0.0, %v4486
  %v4488 = vpop.f32.mrf.mxu0
  %v4489 = vadd.f32 0.0, %v4488
  %4490 = vmatmul.bf16.gmra.mxu0 %v792
  %v4491 = vpop.f32.mrf.mxu0
  %v4492 = vadd.f32 0.0, %v4491
  %v4493 = vpop.f32.mrf.mxu0
  %v4494 = vadd.f32 0.0, %v4493
  %4495 = vmatmul.bf16.gmra.mxu0 %v794
  %v4496 = vpop.f32.mrf.mxu0
  %v4497 = vadd.f32 0.0, %v4496
  %v4498 = vpop.f32.mrf.mxu0
  %v4499 = vadd.f32 0.0, %v4498
  %4500 = vmatmul.bf16.gmra.mxu0 %v796
  %v4501 = vpop.f32.mrf.mxu0
  %v4502 = vadd.f32 0.0, %v4501
  %v4503 = vpop.f32.mrf.mxu0
  %v4504 = vadd.f32 0.0, %v4503
  %4505 = vmatmul.bf16.gmra.mxu0 %v798
  %v4506 = vpop.f32.mrf.mxu0
  %v4507 = vadd.f32 0.0, %v4506
  %v4508 = vpop.f32.mrf.mxu0
  %v4509 = vadd.f32 0.0, %v4508
  %4510 = vmatmul.bf16.gmra.mxu0 %v800
  %v4511 = vpop.f32.mrf.mxu0
  %v4512 = vadd.f32 0.0, %v4511
  %v4513 = vpop.f32.mrf.mxu0
  %v4514 = vadd.f32 0.0, %v4513
  %4515 = vmatmul.bf16.gmra.mxu0 %v802
  %v4516 = vpop.f32.mrf.mxu0
  %v4517 = vadd.f32 0.0, %v4516
  %v4518 = vpop.f32.mrf.mxu0
  %v4519 = vadd.f32 0.0, %v4518
  %4520 = vmatmul.bf16.gmra.mxu0 %v804
  %v4521 = vpop.f32.mrf.mxu0
  %v4522 = vadd.f32 0.0, %v4521
  %v4523 = vpop.f32.mrf.mxu0
  %v4524 = vadd.f32 0.0, %v4523
  %4525 = vmatmul.bf16.gmra.mxu0 %v806
  %v4526 = vpop.f32.mrf.mxu0
  %v4527 = vadd.f32 0.0, %v4526
  %v4528 = vpop.f32.mrf.mxu0
  %v4529 = vadd.f32 0.0, %v4528
  %4530 = vmatmul.bf16.gmra.mxu0 %v808
  %v4531 = vpop.f32.mrf.mxu0
  %v4532 = vadd.f32 0.0, %v4531
  %v4533 = vpop.f32.mrf.mxu0
  %v4534 = vadd.f32 0.0, %v4533
  %4535 = vmatmul.bf16.gmra.mxu0 %v810
  %v4536 = vpop.f32.mrf.mxu0
  %v4537 = vadd.f32 0.0, %v4536
  %v4538 = vpop.f32.mrf.mxu0
  %v4539 = vadd.f32 0.0, %v4538
  %4540 = vdwg.mxu0
  %4541 = vmatpush.bf16.msra.mxu0 %v1448
  %4542 = vmatpush.bf16.msra.mxu0 %v1440
  %4543 = vmatpush.bf16.msra.mxu0 %v1432
  %4544 = vmatpush.bf16.msra.mxu0 %v1424
  %4545 = vmatpush.bf16.msra.mxu0 %v1416
  %4546 = vmatpush.bf16.msra.mxu0 %v1408
  %4547 = vmatpush.bf16.msra.mxu0 %v1400
  %4548 = vmatpush.bf16.msra.mxu0 %v1392
  %4549 = vmatmul.bf16.gmra.mxu0 %v685
  %v4550 = vpop.f32.mrf.mxu0
  %v4551 = vadd.f32 %v4222, %v4550
  %v4552 = vpop.f32.mrf.mxu0
  %v4553 = vadd.f32 %v4224, %v4552
  %4554 = vmatmul.bf16.gmra.mxu0 %v687
  %v4555 = vpop.f32.mrf.mxu0
  %v4556 = vadd.f32 %v4227, %v4555
  %v4557 = vpop.f32.mrf.mxu0
  %v4558 = vadd.f32 %v4229, %v4557
  %4559 = vmatmul.bf16.gmra.mxu0 %v689
  %v4560 = vpop.f32.mrf.mxu0
  %v4561 = vadd.f32 %v4232, %v4560
  %v4562 = vpop.f32.mrf.mxu0
  %v4563 = vadd.f32 %v4234, %v4562
  %4564 = vmatmul.bf16.gmra.mxu0 %v691
  %v4565 = vpop.f32.mrf.mxu0
  %v4566 = vadd.f32 %v4237, %v4565
  %v4567 = vpop.f32.mrf.mxu0
  %v4568 = vadd.f32 %v4239, %v4567
  %4569 = vmatmul.bf16.gmra.mxu0 %v693
  %v4570 = vpop.f32.mrf.mxu0
  %v4571 = vadd.f32 %v4242, %v4570
  %v4572 = vpop.f32.mrf.mxu0
  %v4573 = vadd.f32 %v4244, %v4572
  %4574 = vmatmul.bf16.gmra.mxu0 %v695
  %v4575 = vpop.f32.mrf.mxu0
  %v4576 = vadd.f32 %v4247, %v4575
  %v4577 = vpop.f32.mrf.mxu0
  %v4578 = vadd.f32 %v4249, %v4577
  %4579 = vmatmul.bf16.gmra.mxu0 %v697
  %v4580 = vpop.f32.mrf.mxu0
  %v4581 = vadd.f32 %v4252, %v4580
  %v4582 = vpop.f32.mrf.mxu0
  %v4583 = vadd.f32 %v4254, %v4582
  %4584 = vmatmul.bf16.gmra.mxu0 %v699
  %v4585 = vpop.f32.mrf.mxu0
  %v4586 = vadd.f32 %v4257, %v4585
  %v4587 = vpop.f32.mrf.mxu0
  %v4588 = vadd.f32 %v4259, %v4587
  %4589 = vmatmul.bf16.gmra.mxu0 %v701
  %v4590 = vpop.f32.mrf.mxu0
  %v4591 = vadd.f32 %v4262, %v4590
  %v4592 = vpop.f32.mrf.mxu0
  %v4593 = vadd.f32 %v4264, %v4592
  %4594 = vmatmul.bf16.gmra.mxu0 %v703
  %v4595 = vpop.f32.mrf.mxu0
  %v4596 = vadd.f32 %v4267, %v4595
  %v4597 = vpop.f32.mrf.mxu0
  %v4598 = vadd.f32 %v4269, %v4597
  %4599 = vmatmul.bf16.gmra.mxu0 %v705
  %v4600 = vpop.f32.mrf.mxu0
  %v4601 = vadd.f32 %v4272, %v4600
  %v4602 = vpop.f32.mrf.mxu0
  %v4603 = vadd.f32 %v4274, %v4602
  %4604 = vmatmul.bf16.gmra.mxu0 %v707
  %v4605 = vpop.f32.mrf.mxu0
  %v4606 = vadd.f32 %v4277, %v4605
  %v4607 = vpop.f32.mrf.mxu0
  %v4608 = vadd.f32 %v4279, %v4607
  %4609 = vmatmul.bf16.gmra.mxu0 %v709
  %v4610 = vpop.f32.mrf.mxu0
  %v4611 = vadd.f32 %v4282, %v4610
  %v4612 = vpop.f32.mrf.mxu0
  %v4613 = vadd.f32 %v4284, %v4612
  %4614 = vmatmul.bf16.gmra.mxu0 %v711
  %v4615 = vpop.f32.mrf.mxu0
  %v4616 = vadd.f32 %v4287, %v4615
  %v4617 = vpop.f32.mrf.mxu0
  %v4618 = vadd.f32 %v4289, %v4617
  %4619 = vmatmul.bf16.gmra.mxu0 %v713
  %v4620 = vpop.f32.mrf.mxu0
  %v4621 = vadd.f32 %v4292, %v4620
  %v4622 = vpop.f32.mrf.mxu0
  %v4623 = vadd.f32 %v4294, %v4622
  %4624 = vmatmul.bf16.gmra.mxu0 %v715
  %v4625 = vpop.f32.mrf.mxu0
  %v4626 = vadd.f32 %v4297, %v4625
  %v4627 = vpop.f32.mrf.mxu0
  %v4628 = vadd.f32 %v4299, %v4627
  %4629 = vmatmul.bf16.gmra.mxu0 %v717
  %v4630 = vpop.f32.mrf.mxu0
  %v4631 = vadd.f32 %v4302, %v4630
  %v4632 = vpop.f32.mrf.mxu0
  %v4633 = vadd.f32 %v4304, %v4632
  %4634 = vmatmul.bf16.gmra.mxu0 %v719
  %v4635 = vpop.f32.mrf.mxu0
  %v4636 = vadd.f32 %v4307, %v4635
  %v4637 = vpop.f32.mrf.mxu0
  %v4638 = vadd.f32 %v4309, %v4637
  %4639 = vmatmul.bf16.gmra.mxu0 %v721
  %v4640 = vpop.f32.mrf.mxu0
  %v4641 = vadd.f32 %v4312, %v4640
  %v4642 = vpop.f32.mrf.mxu0
  %v4643 = vadd.f32 %v4314, %v4642
  %4644 = vmatmul.bf16.gmra.mxu0 %v723
  %v4645 = vpop.f32.mrf.mxu0
  %v4646 = vadd.f32 %v4317, %v4645
  %v4647 = vpop.f32.mrf.mxu0
  %v4648 = vadd.f32 %v4319, %v4647
  %4649 = vmatmul.bf16.gmra.mxu0 %v725
  %v4650 = vpop.f32.mrf.mxu0
  %v4651 = vadd.f32 %v4322, %v4650
  %v4652 = vpop.f32.mrf.mxu0
  %v4653 = vadd.f32 %v4324, %v4652
  %4654 = vmatmul.bf16.gmra.mxu0 %v727
  %v4655 = vpop.f32.mrf.mxu0
  %v4656 = vadd.f32 %v4327, %v4655
  %v4657 = vpop.f32.mrf.mxu0
  %v4658 = vadd.f32 %v4329, %v4657
  %4659 = vmatmul.bf16.gmra.mxu0 %v729
  %v4660 = vpop.f32.mrf.mxu0
  %v4661 = vadd.f32 %v4332, %v4660
  %v4662 = vpop.f32.mrf.mxu0
  %v4663 = vadd.f32 %v4334, %v4662
  %4664 = vmatmul.bf16.gmra.mxu0 %v731
  %v4665 = vpop.f32.mrf.mxu0
  %v4666 = vadd.f32 %v4337, %v4665
  %v4667 = vpop.f32.mrf.mxu0
  %v4668 = vadd.f32 %v4339, %v4667
  %4669 = vmatmul.bf16.gmra.mxu0 %v733
  %v4670 = vpop.f32.mrf.mxu0
  %v4671 = vadd.f32 %v4342, %v4670
  %v4672 = vpop.f32.mrf.mxu0
  %v4673 = vadd.f32 %v4344, %v4672
  %4674 = vmatmul.bf16.gmra.mxu0 %v735
  %v4675 = vpop.f32.mrf.mxu0
  %v4676 = vadd.f32 %v4347, %v4675
  %v4677 = vpop.f32.mrf.mxu0
  %v4678 = vadd.f32 %v4349, %v4677
  %4679 = vmatmul.bf16.gmra.mxu0 %v737
  %v4680 = vpop.f32.mrf.mxu0
  %v4681 = vadd.f32 %v4352, %v4680
  %v4682 = vpop.f32.mrf.mxu0
  %v4683 = vadd.f32 %v4354, %v4682
  %4684 = vmatmul.bf16.gmra.mxu0 %v739
  %v4685 = vpop.f32.mrf.mxu0
  %v4686 = vadd.f32 %v4357, %v4685
  %v4687 = vpop.f32.mrf.mxu0
  %v4688 = vadd.f32 %v4359, %v4687
  %4689 = vmatmul.bf16.gmra.mxu0 %v741
  %v4690 = vpop.f32.mrf.mxu0
  %v4691 = vadd.f32 %v4362, %v4690
  %v4692 = vpop.f32.mrf.mxu0
  %v4693 = vadd.f32 %v4364, %v4692
  %4694 = vmatmul.bf16.gmra.mxu0 %v743
  %v4695 = vpop.f32.mrf.mxu0
  %v4696 = vadd.f32 %v4367, %v4695
  %v4697 = vpop.f32.mrf.mxu0
  %v4698 = vadd.f32 %v4369, %v4697
  %4699 = vmatmul.bf16.gmra.mxu0 %v745
  %v4700 = vpop.f32.mrf.mxu0
  %v4701 = vadd.f32 %v4372, %v4700
  %v4702 = vpop.f32.mrf.mxu0
  %v4703 = vadd.f32 %v4374, %v4702
  %4704 = vmatmul.bf16.gmra.mxu0 %v747
  %v4705 = vpop.f32.mrf.mxu0
  %v4706 = vadd.f32 %v4377, %v4705
  %v4707 = vpop.f32.mrf.mxu0
  %v4708 = vadd.f32 %v4379, %v4707
  %4709 = vmatmul.bf16.gmra.mxu0 %v749
  %v4710 = vpop.f32.mrf.mxu0
  %v4711 = vadd.f32 %v4382, %v4710
  %v4712 = vpop.f32.mrf.mxu0
  %v4713 = vadd.f32 %v4384, %v4712
  %4714 = vmatmul.bf16.gmra.mxu0 %v751
  %v4715 = vpop.f32.mrf.mxu0
  %v4716 = vadd.f32 %v4387, %v4715
  %v4717 = vpop.f32.mrf.mxu0
  %v4718 = vadd.f32 %v4389, %v4717
  %4719 = vmatmul.bf16.gmra.mxu0 %v753
  %v4720 = vpop.f32.mrf.mxu0
  %v4721 = vadd.f32 %v4392, %v4720
  %v4722 = vpop.f32.mrf.mxu0
  %v4723 = vadd.f32 %v4394, %v4722
  %4724 = vmatmul.bf16.gmra.mxu0 %v755
  %v4725 = vpop.f32.mrf.mxu0
  %v4726 = vadd.f32 %v4397, %v4725
  %v4727 = vpop.f32.mrf.mxu0
  %v4728 = vadd.f32 %v4399, %v4727
  %4729 = vmatmul.bf16.gmra.mxu0 %v757
  %v4730 = vpop.f32.mrf.mxu0
  %v4731 = vadd.f32 %v4402, %v4730
  %v4732 = vpop.f32.mrf.mxu0
  %v4733 = vadd.f32 %v4404, %v4732
  %4734 = vmatmul.bf16.gmra.mxu0 %v759
  %v4735 = vpop.f32.mrf.mxu0
  %v4736 = vadd.f32 %v4407, %v4735
  %v4737 = vpop.f32.mrf.mxu0
  %v4738 = vadd.f32 %v4409, %v4737
  %4739 = vmatmul.bf16.gmra.mxu0 %v761
  %v4740 = vpop.f32.mrf.mxu0
  %v4741 = vadd.f32 %v4412, %v4740
  %v4742 = vpop.f32.mrf.mxu0
  %v4743 = vadd.f32 %v4414, %v4742
  %4744 = vmatmul.bf16.gmra.mxu0 %v763
  %v4745 = vpop.f32.mrf.mxu0
  %v4746 = vadd.f32 %v4417, %v4745
  %v4747 = vpop.f32.mrf.mxu0
  %v4748 = vadd.f32 %v4419, %v4747
  %4749 = vmatmul.bf16.gmra.mxu0 %v765
  %v4750 = vpop.f32.mrf.mxu0
  %v4751 = vadd.f32 %v4422, %v4750
  %v4752 = vpop.f32.mrf.mxu0
  %v4753 = vadd.f32 %v4424, %v4752
  %4754 = vmatmul.bf16.gmra.mxu0 %v767
  %v4755 = vpop.f32.mrf.mxu0
  %v4756 = vadd.f32 %v4427, %v4755
  %v4757 = vpop.f32.mrf.mxu0
  %v4758 = vadd.f32 %v4429, %v4757
  %4759 = vmatmul.bf16.gmra.mxu0 %v769
  %v4760 = vpop.f32.mrf.mxu0
  %v4761 = vadd.f32 %v4432, %v4760
  %v4762 = vpop.f32.mrf.mxu0
  %v4763 = vadd.f32 %v4434, %v4762
  %4764 = vmatmul.bf16.gmra.mxu0 %v771
  %v4765 = vpop.f32.mrf.mxu0
  %v4766 = vadd.f32 %v4437, %v4765
  %v4767 = vpop.f32.mrf.mxu0
  %v4768 = vadd.f32 %v4439, %v4767
  %4769 = vmatmul.bf16.gmra.mxu0 %v773
  %v4770 = vpop.f32.mrf.mxu0
  %v4771 = vadd.f32 %v4442, %v4770
  %v4772 = vpop.f32.mrf.mxu0
  %v4773 = vadd.f32 %v4444, %v4772
  %4774 = vmatmul.bf16.gmra.mxu0 %v775
  %v4775 = vpop.f32.mrf.mxu0
  %v4776 = vadd.f32 %v4447, %v4775
  %v4777 = vpop.f32.mrf.mxu0
  %v4778 = vadd.f32 %v4449, %v4777
  %4779 = vmatmul.bf16.gmra.mxu0 %v777
  %v4780 = vpop.f32.mrf.mxu0
  %v4781 = vadd.f32 %v4452, %v4780
  %v4782 = vpop.f32.mrf.mxu0
  %v4783 = vadd.f32 %v4454, %v4782
  %4784 = vmatmul.bf16.gmra.mxu0 %v779
  %v4785 = vpop.f32.mrf.mxu0
  %v4786 = vadd.f32 %v4457, %v4785
  %v4787 = vpop.f32.mrf.mxu0
  %v4788 = vadd.f32 %v4459, %v4787
  %4789 = vmatmul.bf16.gmra.mxu0 %v781
  %v4790 = vpop.f32.mrf.mxu0
  %v4791 = vadd.f32 %v4462, %v4790
  %v4792 = vpop.f32.mrf.mxu0
  %v4793 = vadd.f32 %v4464, %v4792
  %4794 = vmatmul.bf16.gmra.mxu0 %v783
  %v4795 = vpop.f32.mrf.mxu0
  %v4796 = vadd.f32 %v4467, %v4795
  %v4797 = vpop.f32.mrf.mxu0
  %v4798 = vadd.f32 %v4469, %v4797
  %4799 = vmatmul.bf16.gmra.mxu0 %v785
  %v4800 = vpop.f32.mrf.mxu0
  %v4801 = vadd.f32 %v4472, %v4800
  %v4802 = vpop.f32.mrf.mxu0
  %v4803 = vadd.f32 %v4474, %v4802
  %4804 = vmatmul.bf16.gmra.mxu0 %v787
  %v4805 = vpop.f32.mrf.mxu0
  %v4806 = vadd.f32 %v4477, %v4805
  %v4807 = vpop.f32.mrf.mxu0
  %v4808 = vadd.f32 %v4479, %v4807
  %4809 = vmatmul.bf16.gmra.mxu0 %v789
  %v4810 = vpop.f32.mrf.mxu0
  %v4811 = vadd.f32 %v4482, %v4810
  %v4812 = vpop.f32.mrf.mxu0
  %v4813 = vadd.f32 %v4484, %v4812
  %4814 = vmatmul.bf16.gmra.mxu0 %v791
  %v4815 = vpop.f32.mrf.mxu0
  %v4816 = vadd.f32 %v4487, %v4815
  %v4817 = vpop.f32.mrf.mxu0
  %v4818 = vadd.f32 %v4489, %v4817
  %4819 = vmatmul.bf16.gmra.mxu0 %v793
  %v4820 = vpop.f32.mrf.mxu0
  %v4821 = vadd.f32 %v4492, %v4820
  %v4822 = vpop.f32.mrf.mxu0
  %v4823 = vadd.f32 %v4494, %v4822
  %4824 = vmatmul.bf16.gmra.mxu0 %v795
  %v4825 = vpop.f32.mrf.mxu0
  %v4826 = vadd.f32 %v4497, %v4825
  %v4827 = vpop.f32.mrf.mxu0
  %v4828 = vadd.f32 %v4499, %v4827
  %4829 = vmatmul.bf16.gmra.mxu0 %v797
  %v4830 = vpop.f32.mrf.mxu0
  %v4831 = vadd.f32 %v4502, %v4830
  %v4832 = vpop.f32.mrf.mxu0
  %v4833 = vadd.f32 %v4504, %v4832
  %4834 = vmatmul.bf16.gmra.mxu0 %v799
  %v4835 = vpop.f32.mrf.mxu0
  %v4836 = vadd.f32 %v4507, %v4835
  %v4837 = vpop.f32.mrf.mxu0
  %v4838 = vadd.f32 %v4509, %v4837
  %4839 = vmatmul.bf16.gmra.mxu0 %v801
  %v4840 = vpop.f32.mrf.mxu0
  %v4841 = vadd.f32 %v4512, %v4840
  %v4842 = vpop.f32.mrf.mxu0
  %v4843 = vadd.f32 %v4514, %v4842
  %4844 = vmatmul.bf16.gmra.mxu0 %v803
  %v4845 = vpop.f32.mrf.mxu0
  %v4846 = vadd.f32 %v4517, %v4845
  %v4847 = vpop.f32.mrf.mxu0
  %v4848 = vadd.f32 %v4519, %v4847
  %4849 = vmatmul.bf16.gmra.mxu0 %v805
  %v4850 = vpop.f32.mrf.mxu0
  %v4851 = vadd.f32 %v4522, %v4850
  %v4852 = vpop.f32.mrf.mxu0
  %v4853 = vadd.f32 %v4524, %v4852
  %4854 = vmatmul.bf16.gmra.mxu0 %v807
  %v4855 = vpop.f32.mrf.mxu0
  %v4856 = vadd.f32 %v4527, %v4855
  %v4857 = vpop.f32.mrf.mxu0
  %v4858 = vadd.f32 %v4529, %v4857
  %4859 = vmatmul.bf16.gmra.mxu0 %v809
  %v4860 = vpop.f32.mrf.mxu0
  %v4861 = vadd.f32 %v4532, %v4860
  %v4862 = vpop.f32.mrf.mxu0
  %v4863 = vadd.f32 %v4534, %v4862
  %4864 = vmatmul.bf16.gmra.mxu0 %v811
  %v4865 = vpop.f32.mrf.mxu0
  %v4866 = vadd.f32 %v4537, %v4865
  %v4867 = vpop.f32.mrf.mxu0
  %v4868 = vadd.f32 %v4539, %v4867
  %4869 = vdwg.mxu0
  %4870 = vmatpush.bf16.msra.mxu0 %v1385
  %4871 = vmatpush.bf16.msra.mxu0 %v1377
  %4872 = vmatpush.bf16.msra.mxu0 %v1369
  %4873 = vmatpush.bf16.msra.mxu0 %v1361
  %4874 = vmatpush.bf16.msra.mxu0 %v1353
  %4875 = vmatpush.bf16.msra.mxu0 %v1345
  %4876 = vmatpush.bf16.msra.mxu0 %v1337
  %4877 = vmatpush.bf16.msra.mxu0 %v1329
  %4878 = vmatmul.bf16.gmra.mxu0 %v684
  %v4879 = vpop.f32.mrf.mxu0
  %v4880 = vadd.f32 0.0, %v4879
  %v4881 = vpop.f32.mrf.mxu0
  %v4882 = vadd.f32 0.0, %v4881
  %4883 = vmatmul.bf16.gmra.mxu0 %v686
  %v4884 = vpop.f32.mrf.mxu0
  %v4885 = vadd.f32 0.0, %v4884
  %v4886 = vpop.f32.mrf.mxu0
  %v4887 = vadd.f32 0.0, %v4886
  %4888 = vmatmul.bf16.gmra.mxu0 %v688
  %v4889 = vpop.f32.mrf.mxu0
  %v4890 = vadd.f32 0.0, %v4889
  %v4891 = vpop.f32.mrf.mxu0
  %v4892 = vadd.f32 0.0, %v4891
  %4893 = vmatmul.bf16.gmra.mxu0 %v690
  %v4894 = vpop.f32.mrf.mxu0
  %v4895 = vadd.f32 0.0, %v4894
  %v4896 = vpop.f32.mrf.mxu0
  %v4897 = vadd.f32 0.0, %v4896
  %4898 = vmatmul.bf16.gmra.mxu0 %v692
  %v4899 = vpop.f32.mrf.mxu0
  %v4900 = vadd.f32 0.0, %v4899
  %v4901 = vpop.f32.mrf.mxu0
  %v4902 = vadd.f32 0.0, %v4901
  %4903 = vmatmul.bf16.gmra.mxu0 %v694
  %v4904 = vpop.f32.mrf.mxu0
  %v4905 = vadd.f32 0.0, %v4904
  %v4906 = vpop.f32.mrf.mxu0
  %v4907 = vadd.f32 0.0, %v4906
  %4908 = vmatmul.bf16.gmra.mxu0 %v696
  %v4909 = vpop.f32.mrf.mxu0
  %v4910 = vadd.f32 0.0, %v4909
  %v4911 = vpop.f32.mrf.mxu0
  %v4912 = vadd.f32 0.0, %v4911
  %4913 = vmatmul.bf16.gmra.mxu0 %v698
  %v4914 = vpop.f32.mrf.mxu0
  %v4915 = vadd.f32 0.0, %v4914
  %v4916 = vpop.f32.mrf.mxu0
  %v4917 = vadd.f32 0.0, %v4916
  %4918 = vmatmul.bf16.gmra.mxu0 %v700
  %v4919 = vpop.f32.mrf.mxu0
  %v4920 = vadd.f32 0.0, %v4919
  %v4921 = vpop.f32.mrf.mxu0
  %v4922 = vadd.f32 0.0, %v4921
  %4923 = vmatmul.bf16.gmra.mxu0 %v702
  %v4924 = vpop.f32.mrf.mxu0
  %v4925 = vadd.f32 0.0, %v4924
  %v4926 = vpop.f32.mrf.mxu0
  %v4927 = vadd.f32 0.0, %v4926
  %4928 = vmatmul.bf16.gmra.mxu0 %v704
  %v4929 = vpop.f32.mrf.mxu0
  %v4930 = vadd.f32 0.0, %v4929
  %v4931 = vpop.f32.mrf.mxu0
  %v4932 = vadd.f32 0.0, %v4931
  %4933 = vmatmul.bf16.gmra.mxu0 %v706
  %v4934 = vpop.f32.mrf.mxu0
  %v4935 = vadd.f32 0.0, %v4934
  %v4936 = vpop.f32.mrf.mxu0
  %v4937 = vadd.f32 0.0, %v4936
  %4938 = vmatmul.bf16.gmra.mxu0 %v708
  %v4939 = vpop.f32.mrf.mxu0
  %v4940 = vadd.f32 0.0, %v4939
  %v4941 = vpop.f32.mrf.mxu0
  %v4942 = vadd.f32 0.0, %v4941
  %4943 = vmatmul.bf16.gmra.mxu0 %v710
  %v4944 = vpop.f32.mrf.mxu0
  %v4945 = vadd.f32 0.0, %v4944
  %v4946 = vpop.f32.mrf.mxu0
  %v4947 = vadd.f32 0.0, %v4946
  %4948 = vmatmul.bf16.gmra.mxu0 %v712
  %v4949 = vpop.f32.mrf.mxu0
  %v4950 = vadd.f32 0.0, %v4949
  %v4951 = vpop.f32.mrf.mxu0
  %v4952 = vadd.f32 0.0, %v4951
  %4953 = vmatmul.bf16.gmra.mxu0 %v714
  %v4954 = vpop.f32.mrf.mxu0
  %v4955 = vadd.f32 0.0, %v4954
  %v4956 = vpop.f32.mrf.mxu0
  %v4957 = vadd.f32 0.0, %v4956
  %4958 = vmatmul.bf16.gmra.mxu0 %v716
  %v4959 = vpop.f32.mrf.mxu0
  %v4960 = vadd.f32 0.0, %v4959
  %v4961 = vpop.f32.mrf.mxu0
  %v4962 = vadd.f32 0.0, %v4961
  %4963 = vmatmul.bf16.gmra.mxu0 %v718
  %v4964 = vpop.f32.mrf.mxu0
  %v4965 = vadd.f32 0.0, %v4964
  %v4966 = vpop.f32.mrf.mxu0
  %v4967 = vadd.f32 0.0, %v4966
  %4968 = vmatmul.bf16.gmra.mxu0 %v720
  %v4969 = vpop.f32.mrf.mxu0
  %v4970 = vadd.f32 0.0, %v4969
  %v4971 = vpop.f32.mrf.mxu0
  %v4972 = vadd.f32 0.0, %v4971
  %4973 = vmatmul.bf16.gmra.mxu0 %v722
  %v4974 = vpop.f32.mrf.mxu0
  %v4975 = vadd.f32 0.0, %v4974
  %v4976 = vpop.f32.mrf.mxu0
  %v4977 = vadd.f32 0.0, %v4976
  %4978 = vmatmul.bf16.gmra.mxu0 %v724
  %v4979 = vpop.f32.mrf.mxu0
  %v4980 = vadd.f32 0.0, %v4979
  %v4981 = vpop.f32.mrf.mxu0
  %v4982 = vadd.f32 0.0, %v4981
  %4983 = vmatmul.bf16.gmra.mxu0 %v726
  %v4984 = vpop.f32.mrf.mxu0
  %v4985 = vadd.f32 0.0, %v4984
  %v4986 = vpop.f32.mrf.mxu0
  %v4987 = vadd.f32 0.0, %v4986
  %4988 = vmatmul.bf16.gmra.mxu0 %v728
  %v4989 = vpop.f32.mrf.mxu0
  %v4990 = vadd.f32 0.0, %v4989
  %v4991 = vpop.f32.mrf.mxu0
  %v4992 = vadd.f32 0.0, %v4991
  %4993 = vmatmul.bf16.gmra.mxu0 %v730
  %v4994 = vpop.f32.mrf.mxu0
  %v4995 = vadd.f32 0.0, %v4994
  %v4996 = vpop.f32.mrf.mxu0
  %v4997 = vadd.f32 0.0, %v4996
  %4998 = vmatmul.bf16.gmra.mxu0 %v732
  %v4999 = vpop.f32.mrf.mxu0
  %v5000 = vadd.f32 0.0, %v4999
  %v5001 = vpop.f32.mrf.mxu0
  %v5002 = vadd.f32 0.0, %v5001
  %5003 = vmatmul.bf16.gmra.mxu0 %v734
  %v5004 = vpop.f32.mrf.mxu0
  %v5005 = vadd.f32 0.0, %v5004
  %v5006 = vpop.f32.mrf.mxu0
  %v5007 = vadd.f32 0.0, %v5006
  %5008 = vmatmul.bf16.gmra.mxu0 %v736
  %v5009 = vpop.f32.mrf.mxu0
  %v5010 = vadd.f32 0.0, %v5009
  %v5011 = vpop.f32.mrf.mxu0
  %v5012 = vadd.f32 0.0, %v5011
  %5013 = vmatmul.bf16.gmra.mxu0 %v738
  %v5014 = vpop.f32.mrf.mxu0
  %v5015 = vadd.f32 0.0, %v5014
  %v5016 = vpop.f32.mrf.mxu0
  %v5017 = vadd.f32 0.0, %v5016
  %5018 = vmatmul.bf16.gmra.mxu0 %v740
  %v5019 = vpop.f32.mrf.mxu0
  %v5020 = vadd.f32 0.0, %v5019
  %v5021 = vpop.f32.mrf.mxu0
  %v5022 = vadd.f32 0.0, %v5021
  %5023 = vmatmul.bf16.gmra.mxu0 %v742
  %v5024 = vpop.f32.mrf.mxu0
  %v5025 = vadd.f32 0.0, %v5024
  %v5026 = vpop.f32.mrf.mxu0
  %v5027 = vadd.f32 0.0, %v5026
  %5028 = vmatmul.bf16.gmra.mxu0 %v744
  %v5029 = vpop.f32.mrf.mxu0
  %v5030 = vadd.f32 0.0, %v5029
  %v5031 = vpop.f32.mrf.mxu0
  %v5032 = vadd.f32 0.0, %v5031
  %5033 = vmatmul.bf16.gmra.mxu0 %v746
  %v5034 = vpop.f32.mrf.mxu0
  %v5035 = vadd.f32 0.0, %v5034
  %v5036 = vpop.f32.mrf.mxu0
  %v5037 = vadd.f32 0.0, %v5036
  %5038 = vmatmul.bf16.gmra.mxu0 %v748
  %v5039 = vpop.f32.mrf.mxu0
  %v5040 = vadd.f32 0.0, %v5039
  %v5041 = vpop.f32.mrf.mxu0
  %v5042 = vadd.f32 0.0, %v5041
  %5043 = vmatmul.bf16.gmra.mxu0 %v750
  %v5044 = vpop.f32.mrf.mxu0
  %v5045 = vadd.f32 0.0, %v5044
  %v5046 = vpop.f32.mrf.mxu0
  %v5047 = vadd.f32 0.0, %v5046
  %5048 = vmatmul.bf16.gmra.mxu0 %v752
  %v5049 = vpop.f32.mrf.mxu0
  %v5050 = vadd.f32 0.0, %v5049
  %v5051 = vpop.f32.mrf.mxu0
  %v5052 = vadd.f32 0.0, %v5051
  %5053 = vmatmul.bf16.gmra.mxu0 %v754
  %v5054 = vpop.f32.mrf.mxu0
  %v5055 = vadd.f32 0.0, %v5054
  %v5056 = vpop.f32.mrf.mxu0
  %v5057 = vadd.f32 0.0, %v5056
  %5058 = vmatmul.bf16.gmra.mxu0 %v756
  %v5059 = vpop.f32.mrf.mxu0
  %v5060 = vadd.f32 0.0, %v5059
  %v5061 = vpop.f32.mrf.mxu0
  %v5062 = vadd.f32 0.0, %v5061
  %5063 = vmatmul.bf16.gmra.mxu0 %v758
  %v5064 = vpop.f32.mrf.mxu0
  %v5065 = vadd.f32 0.0, %v5064
  %v5066 = vpop.f32.mrf.mxu0
  %v5067 = vadd.f32 0.0, %v5066
  %5068 = vmatmul.bf16.gmra.mxu0 %v760
  %v5069 = vpop.f32.mrf.mxu0
  %v5070 = vadd.f32 0.0, %v5069
  %v5071 = vpop.f32.mrf.mxu0
  %v5072 = vadd.f32 0.0, %v5071
  %5073 = vmatmul.bf16.gmra.mxu0 %v762
  %v5074 = vpop.f32.mrf.mxu0
  %v5075 = vadd.f32 0.0, %v5074
  %v5076 = vpop.f32.mrf.mxu0
  %v5077 = vadd.f32 0.0, %v5076
  %5078 = vmatmul.bf16.gmra.mxu0 %v764
  %v5079 = vpop.f32.mrf.mxu0
  %v5080 = vadd.f32 0.0, %v5079
  %v5081 = vpop.f32.mrf.mxu0
  %v5082 = vadd.f32 0.0, %v5081
  %5083 = vmatmul.bf16.gmra.mxu0 %v766
  %v5084 = vpop.f32.mrf.mxu0
  %v5085 = vadd.f32 0.0, %v5084
  %v5086 = vpop.f32.mrf.mxu0
  %v5087 = vadd.f32 0.0, %v5086
  %5088 = vmatmul.bf16.gmra.mxu0 %v768
  %v5089 = vpop.f32.mrf.mxu0
  %v5090 = vadd.f32 0.0, %v5089
  %v5091 = vpop.f32.mrf.mxu0
  %v5092 = vadd.f32 0.0, %v5091
  %5093 = vmatmul.bf16.gmra.mxu0 %v770
  %v5094 = vpop.f32.mrf.mxu0
  %v5095 = vadd.f32 0.0, %v5094
  %v5096 = vpop.f32.mrf.mxu0
  %v5097 = vadd.f32 0.0, %v5096
  %5098 = vmatmul.bf16.gmra.mxu0 %v772
  %v5099 = vpop.f32.mrf.mxu0
  %v5100 = vadd.f32 0.0, %v5099
  %v5101 = vpop.f32.mrf.mxu0
  %v5102 = vadd.f32 0.0, %v5101
  %5103 = vmatmul.bf16.gmra.mxu0 %v774
  %v5104 = vpop.f32.mrf.mxu0
  %v5105 = vadd.f32 0.0, %v5104
  %v5106 = vpop.f32.mrf.mxu0
  %v5107 = vadd.f32 0.0, %v5106
  %5108 = vmatmul.bf16.gmra.mxu0 %v776
  %v5109 = vpop.f32.mrf.mxu0
  %v5110 = vadd.f32 0.0, %v5109
  %v5111 = vpop.f32.mrf.mxu0
  %v5112 = vadd.f32 0.0, %v5111
  %5113 = vmatmul.bf16.gmra.mxu0 %v778
  %v5114 = vpop.f32.mrf.mxu0
  %v5115 = vadd.f32 0.0, %v5114
  %v5116 = vpop.f32.mrf.mxu0
  %v5117 = vadd.f32 0.0, %v5116
  %5118 = vmatmul.bf16.gmra.mxu0 %v780
  %v5119 = vpop.f32.mrf.mxu0
  %v5120 = vadd.f32 0.0, %v5119
  %v5121 = vpop.f32.mrf.mxu0
  %v5122 = vadd.f32 0.0, %v5121
  %5123 = vmatmul.bf16.gmra.mxu0 %v782
  %v5124 = vpop.f32.mrf.mxu0
  %v5125 = vadd.f32 0.0, %v5124
  %v5126 = vpop.f32.mrf.mxu0
  %v5127 = vadd.f32 0.0, %v5126
  %5128 = vmatmul.bf16.gmra.mxu0 %v784
  %v5129 = vpop.f32.mrf.mxu0
  %v5130 = vadd.f32 0.0, %v5129
  %v5131 = vpop.f32.mrf.mxu0
  %v5132 = vadd.f32 0.0, %v5131
  %5133 = vmatmul.bf16.gmra.mxu0 %v786
  %v5134 = vpop.f32.mrf.mxu0
  %v5135 = vadd.f32 0.0, %v5134
  %v5136 = vpop.f32.mrf.mxu0
  %v5137 = vadd.f32 0.0, %v5136
  %5138 = vmatmul.bf16.gmra.mxu0 %v788
  %v5139 = vpop.f32.mrf.mxu0
  %v5140 = vadd.f32 0.0, %v5139
  %v5141 = vpop.f32.mrf.mxu0
  %v5142 = vadd.f32 0.0, %v5141
  %5143 = vmatmul.bf16.gmra.mxu0 %v790
  %v5144 = vpop.f32.mrf.mxu0
  %v5145 = vadd.f32 0.0, %v5144
  %v5146 = vpop.f32.mrf.mxu0
  %v5147 = vadd.f32 0.0, %v5146
  %5148 = vmatmul.bf16.gmra.mxu0 %v792
  %v5149 = vpop.f32.mrf.mxu0
  %v5150 = vadd.f32 0.0, %v5149
  %v5151 = vpop.f32.mrf.mxu0
  %v5152 = vadd.f32 0.0, %v5151
  %5153 = vmatmul.bf16.gmra.mxu0 %v794
  %v5154 = vpop.f32.mrf.mxu0
  %v5155 = vadd.f32 0.0, %v5154
  %v5156 = vpop.f32.mrf.mxu0
  %v5157 = vadd.f32 0.0, %v5156
  %5158 = vmatmul.bf16.gmra.mxu0 %v796
  %v5159 = vpop.f32.mrf.mxu0
  %v5160 = vadd.f32 0.0, %v5159
  %v5161 = vpop.f32.mrf.mxu0
  %v5162 = vadd.f32 0.0, %v5161
  %5163 = vmatmul.bf16.gmra.mxu0 %v798
  %v5164 = vpop.f32.mrf.mxu0
  %v5165 = vadd.f32 0.0, %v5164
  %v5166 = vpop.f32.mrf.mxu0
  %v5167 = vadd.f32 0.0, %v5166
  %5168 = vmatmul.bf16.gmra.mxu0 %v800
  %v5169 = vpop.f32.mrf.mxu0
  %v5170 = vadd.f32 0.0, %v5169
  %v5171 = vpop.f32.mrf.mxu0
  %v5172 = vadd.f32 0.0, %v5171
  %5173 = vmatmul.bf16.gmra.mxu0 %v802
  %v5174 = vpop.f32.mrf.mxu0
  %v5175 = vadd.f32 0.0, %v5174
  %v5176 = vpop.f32.mrf.mxu0
  %v5177 = vadd.f32 0.0, %v5176
  %5178 = vmatmul.bf16.gmra.mxu0 %v804
  %v5179 = vpop.f32.mrf.mxu0
  %v5180 = vadd.f32 0.0, %v5179
  %v5181 = vpop.f32.mrf.mxu0
  %v5182 = vadd.f32 0.0, %v5181
  %5183 = vmatmul.bf16.gmra.mxu0 %v806
  %v5184 = vpop.f32.mrf.mxu0
  %v5185 = vadd.f32 0.0, %v5184
  %v5186 = vpop.f32.mrf.mxu0
  %v5187 = vadd.f32 0.0, %v5186
  %5188 = vmatmul.bf16.gmra.mxu0 %v808
  %v5189 = vpop.f32.mrf.mxu0
  %v5190 = vadd.f32 0.0, %v5189
  %v5191 = vpop.f32.mrf.mxu0
  %v5192 = vadd.f32 0.0, %v5191
  %5193 = vmatmul.bf16.gmra.mxu0 %v810
  %v5194 = vpop.f32.mrf.mxu0
  %v5195 = vadd.f32 0.0, %v5194
  %v5196 = vpop.f32.mrf.mxu0
  %v5197 = vadd.f32 0.0, %v5196
  %5198 = vdwg.mxu0
  %5199 = vmatpush.bf16.msra.mxu0 %v1449
  %5200 = vmatpush.bf16.msra.mxu0 %v1441
  %5201 = vmatpush.bf16.msra.mxu0 %v1433
  %5202 = vmatpush.bf16.msra.mxu0 %v1425
  %5203 = vmatpush.bf16.msra.mxu0 %v1417
  %5204 = vmatpush.bf16.msra.mxu0 %v1409
  %5205 = vmatpush.bf16.msra.mxu0 %v1401
  %5206 = vmatpush.bf16.msra.mxu0 %v1393
  %5207 = vmatmul.bf16.gmra.mxu0 %v685
  %v5208 = vpop.f32.mrf.mxu0
  %v5209 = vadd.f32 %v4880, %v5208
  %v5210 = vpop.f32.mrf.mxu0
  %v5211 = vadd.f32 %v4882, %v5210
  %5212 = vmatmul.bf16.gmra.mxu0 %v687
  %v5213 = vpop.f32.mrf.mxu0
  %v5214 = vadd.f32 %v4885, %v5213
  %v5215 = vpop.f32.mrf.mxu0
  %v5216 = vadd.f32 %v4887, %v5215
  %5217 = vmatmul.bf16.gmra.mxu0 %v689
  %v5218 = vpop.f32.mrf.mxu0
  %v5219 = vadd.f32 %v4890, %v5218
  %v5220 = vpop.f32.mrf.mxu0
  %v5221 = vadd.f32 %v4892, %v5220
  %5222 = vmatmul.bf16.gmra.mxu0 %v691
  %v5223 = vpop.f32.mrf.mxu0
  %v5224 = vadd.f32 %v4895, %v5223
  %v5225 = vpop.f32.mrf.mxu0
  %v5226 = vadd.f32 %v4897, %v5225
  %5227 = vmatmul.bf16.gmra.mxu0 %v693
  %v5228 = vpop.f32.mrf.mxu0
  %v5229 = vadd.f32 %v4900, %v5228
  %v5230 = vpop.f32.mrf.mxu0
  %v5231 = vadd.f32 %v4902, %v5230
  %5232 = vmatmul.bf16.gmra.mxu0 %v695
  %v5233 = vpop.f32.mrf.mxu0
  %v5234 = vadd.f32 %v4905, %v5233
  %v5235 = vpop.f32.mrf.mxu0
  %v5236 = vadd.f32 %v4907, %v5235
  %5237 = vmatmul.bf16.gmra.mxu0 %v697
  %v5238 = vpop.f32.mrf.mxu0
  %v5239 = vadd.f32 %v4910, %v5238
  %v5240 = vpop.f32.mrf.mxu0
  %v5241 = vadd.f32 %v4912, %v5240
  %5242 = vmatmul.bf16.gmra.mxu0 %v699
  %v5243 = vpop.f32.mrf.mxu0
  %v5244 = vadd.f32 %v4915, %v5243
  %v5245 = vpop.f32.mrf.mxu0
  %v5246 = vadd.f32 %v4917, %v5245
  %5247 = vmatmul.bf16.gmra.mxu0 %v701
  %v5248 = vpop.f32.mrf.mxu0
  %v5249 = vadd.f32 %v4920, %v5248
  %v5250 = vpop.f32.mrf.mxu0
  %v5251 = vadd.f32 %v4922, %v5250
  %5252 = vmatmul.bf16.gmra.mxu0 %v703
  %v5253 = vpop.f32.mrf.mxu0
  %v5254 = vadd.f32 %v4925, %v5253
  %v5255 = vpop.f32.mrf.mxu0
  %v5256 = vadd.f32 %v4927, %v5255
  %5257 = vmatmul.bf16.gmra.mxu0 %v705
  %v5258 = vpop.f32.mrf.mxu0
  %v5259 = vadd.f32 %v4930, %v5258
  %v5260 = vpop.f32.mrf.mxu0
  %v5261 = vadd.f32 %v4932, %v5260
  %5262 = vmatmul.bf16.gmra.mxu0 %v707
  %v5263 = vpop.f32.mrf.mxu0
  %v5264 = vadd.f32 %v4935, %v5263
  %v5265 = vpop.f32.mrf.mxu0
  %v5266 = vadd.f32 %v4937, %v5265
  %5267 = vmatmul.bf16.gmra.mxu0 %v709
  %v5268 = vpop.f32.mrf.mxu0
  %v5269 = vadd.f32 %v4940, %v5268
  %v5270 = vpop.f32.mrf.mxu0
  %v5271 = vadd.f32 %v4942, %v5270
  %5272 = vmatmul.bf16.gmra.mxu0 %v711
  %v5273 = vpop.f32.mrf.mxu0
  %v5274 = vadd.f32 %v4945, %v5273
  %v5275 = vpop.f32.mrf.mxu0
  %v5276 = vadd.f32 %v4947, %v5275
  %5277 = vmatmul.bf16.gmra.mxu0 %v713
  %v5278 = vpop.f32.mrf.mxu0
  %v5279 = vadd.f32 %v4950, %v5278
  %v5280 = vpop.f32.mrf.mxu0
  %v5281 = vadd.f32 %v4952, %v5280
  %5282 = vmatmul.bf16.gmra.mxu0 %v715
  %v5283 = vpop.f32.mrf.mxu0
  %v5284 = vadd.f32 %v4955, %v5283
  %v5285 = vpop.f32.mrf.mxu0
  %v5286 = vadd.f32 %v4957, %v5285
  %5287 = vmatmul.bf16.gmra.mxu0 %v717
  %v5288 = vpop.f32.mrf.mxu0
  %v5289 = vadd.f32 %v4960, %v5288
  %v5290 = vpop.f32.mrf.mxu0
  %v5291 = vadd.f32 %v4962, %v5290
  %5292 = vmatmul.bf16.gmra.mxu0 %v719
  %v5293 = vpop.f32.mrf.mxu0
  %v5294 = vadd.f32 %v4965, %v5293
  %v5295 = vpop.f32.mrf.mxu0
  %v5296 = vadd.f32 %v4967, %v5295
  %5297 = vmatmul.bf16.gmra.mxu0 %v721
  %v5298 = vpop.f32.mrf.mxu0
  %v5299 = vadd.f32 %v4970, %v5298
  %v5300 = vpop.f32.mrf.mxu0
  %v5301 = vadd.f32 %v4972, %v5300
  %5302 = vmatmul.bf16.gmra.mxu0 %v723
  %v5303 = vpop.f32.mrf.mxu0
  %v5304 = vadd.f32 %v4975, %v5303
  %v5305 = vpop.f32.mrf.mxu0
  %v5306 = vadd.f32 %v4977, %v5305
  %5307 = vmatmul.bf16.gmra.mxu0 %v725
  %v5308 = vpop.f32.mrf.mxu0
  %v5309 = vadd.f32 %v4980, %v5308
  %v5310 = vpop.f32.mrf.mxu0
  %v5311 = vadd.f32 %v4982, %v5310
  %5312 = vmatmul.bf16.gmra.mxu0 %v727
  %v5313 = vpop.f32.mrf.mxu0
  %v5314 = vadd.f32 %v4985, %v5313
  %v5315 = vpop.f32.mrf.mxu0
  %v5316 = vadd.f32 %v4987, %v5315
  %5317 = vmatmul.bf16.gmra.mxu0 %v729
  %v5318 = vpop.f32.mrf.mxu0
  %v5319 = vadd.f32 %v4990, %v5318
  %v5320 = vpop.f32.mrf.mxu0
  %v5321 = vadd.f32 %v4992, %v5320
  %5322 = vmatmul.bf16.gmra.mxu0 %v731
  %v5323 = vpop.f32.mrf.mxu0
  %v5324 = vadd.f32 %v4995, %v5323
  %v5325 = vpop.f32.mrf.mxu0
  %v5326 = vadd.f32 %v4997, %v5325
  %5327 = vmatmul.bf16.gmra.mxu0 %v733
  %v5328 = vpop.f32.mrf.mxu0
  %v5329 = vadd.f32 %v5000, %v5328
  %v5330 = vpop.f32.mrf.mxu0
  %v5331 = vadd.f32 %v5002, %v5330
  %5332 = vmatmul.bf16.gmra.mxu0 %v735
  %v5333 = vpop.f32.mrf.mxu0
  %v5334 = vadd.f32 %v5005, %v5333
  %v5335 = vpop.f32.mrf.mxu0
  %v5336 = vadd.f32 %v5007, %v5335
  %5337 = vmatmul.bf16.gmra.mxu0 %v737
  %v5338 = vpop.f32.mrf.mxu0
  %v5339 = vadd.f32 %v5010, %v5338
  %v5340 = vpop.f32.mrf.mxu0
  %v5341 = vadd.f32 %v5012, %v5340
  %5342 = vmatmul.bf16.gmra.mxu0 %v739
  %v5343 = vpop.f32.mrf.mxu0
  %v5344 = vadd.f32 %v5015, %v5343
  %v5345 = vpop.f32.mrf.mxu0
  %v5346 = vadd.f32 %v5017, %v5345
  %5347 = vmatmul.bf16.gmra.mxu0 %v741
  %v5348 = vpop.f32.mrf.mxu0
  %v5349 = vadd.f32 %v5020, %v5348
  %v5350 = vpop.f32.mrf.mxu0
  %v5351 = vadd.f32 %v5022, %v5350
  %5352 = vmatmul.bf16.gmra.mxu0 %v743
  %v5353 = vpop.f32.mrf.mxu0
  %v5354 = vadd.f32 %v5025, %v5353
  %v5355 = vpop.f32.mrf.mxu0
  %v5356 = vadd.f32 %v5027, %v5355
  %5357 = vmatmul.bf16.gmra.mxu0 %v745
  %v5358 = vpop.f32.mrf.mxu0
  %v5359 = vadd.f32 %v5030, %v5358
  %v5360 = vpop.f32.mrf.mxu0
  %v5361 = vadd.f32 %v5032, %v5360
  %5362 = vmatmul.bf16.gmra.mxu0 %v747
  %v5363 = vpop.f32.mrf.mxu0
  %v5364 = vadd.f32 %v5035, %v5363
  %v5365 = vpop.f32.mrf.mxu0
  %v5366 = vadd.f32 %v5037, %v5365
  %5367 = vmatmul.bf16.gmra.mxu0 %v749
  %v5368 = vpop.f32.mrf.mxu0
  %v5369 = vadd.f32 %v5040, %v5368
  %v5370 = vpop.f32.mrf.mxu0
  %v5371 = vadd.f32 %v5042, %v5370
  %5372 = vmatmul.bf16.gmra.mxu0 %v751
  %v5373 = vpop.f32.mrf.mxu0
  %v5374 = vadd.f32 %v5045, %v5373
  %v5375 = vpop.f32.mrf.mxu0
  %v5376 = vadd.f32 %v5047, %v5375
  %5377 = vmatmul.bf16.gmra.mxu0 %v753
  %v5378 = vpop.f32.mrf.mxu0
  %v5379 = vadd.f32 %v5050, %v5378
  %v5380 = vpop.f32.mrf.mxu0
  %v5381 = vadd.f32 %v5052, %v5380
  %5382 = vmatmul.bf16.gmra.mxu0 %v755
  %v5383 = vpop.f32.mrf.mxu0
  %v5384 = vadd.f32 %v5055, %v5383
  %v5385 = vpop.f32.mrf.mxu0
  %v5386 = vadd.f32 %v5057, %v5385
  %5387 = vmatmul.bf16.gmra.mxu0 %v757
  %v5388 = vpop.f32.mrf.mxu0
  %v5389 = vadd.f32 %v5060, %v5388
  %v5390 = vpop.f32.mrf.mxu0
  %v5391 = vadd.f32 %v5062, %v5390
  %5392 = vmatmul.bf16.gmra.mxu0 %v759
  %v5393 = vpop.f32.mrf.mxu0
  %v5394 = vadd.f32 %v5065, %v5393
  %v5395 = vpop.f32.mrf.mxu0
  %v5396 = vadd.f32 %v5067, %v5395
  %5397 = vmatmul.bf16.gmra.mxu0 %v761
  %v5398 = vpop.f32.mrf.mxu0
  %v5399 = vadd.f32 %v5070, %v5398
  %v5400 = vpop.f32.mrf.mxu0
  %v5401 = vadd.f32 %v5072, %v5400
  %5402 = vmatmul.bf16.gmra.mxu0 %v763
  %v5403 = vpop.f32.mrf.mxu0
  %v5404 = vadd.f32 %v5075, %v5403
  %v5405 = vpop.f32.mrf.mxu0
  %v5406 = vadd.f32 %v5077, %v5405
  %5407 = vmatmul.bf16.gmra.mxu0 %v765
  %v5408 = vpop.f32.mrf.mxu0
  %v5409 = vadd.f32 %v5080, %v5408
  %v5410 = vpop.f32.mrf.mxu0
  %v5411 = vadd.f32 %v5082, %v5410
  %5412 = vmatmul.bf16.gmra.mxu0 %v767
  %v5413 = vpop.f32.mrf.mxu0
  %v5414 = vadd.f32 %v5085, %v5413
  %v5415 = vpop.f32.mrf.mxu0
  %v5416 = vadd.f32 %v5087, %v5415
  %5417 = vmatmul.bf16.gmra.mxu0 %v769
  %v5418 = vpop.f32.mrf.mxu0
  %v5419 = vadd.f32 %v5090, %v5418
  %v5420 = vpop.f32.mrf.mxu0
  %v5421 = vadd.f32 %v5092, %v5420
  %5422 = vmatmul.bf16.gmra.mxu0 %v771
  %v5423 = vpop.f32.mrf.mxu0
  %v5424 = vadd.f32 %v5095, %v5423
  %v5425 = vpop.f32.mrf.mxu0
  %v5426 = vadd.f32 %v5097, %v5425
  %5427 = vmatmul.bf16.gmra.mxu0 %v773
  %v5428 = vpop.f32.mrf.mxu0
  %v5429 = vadd.f32 %v5100, %v5428
  %v5430 = vpop.f32.mrf.mxu0
  %v5431 = vadd.f32 %v5102, %v5430
  %5432 = vmatmul.bf16.gmra.mxu0 %v775
  %v5433 = vpop.f32.mrf.mxu0
  %v5434 = vadd.f32 %v5105, %v5433
  %v5435 = vpop.f32.mrf.mxu0
  %v5436 = vadd.f32 %v5107, %v5435
  %5437 = vmatmul.bf16.gmra.mxu0 %v777
  %v5438 = vpop.f32.mrf.mxu0
  %v5439 = vadd.f32 %v5110, %v5438
  %v5440 = vpop.f32.mrf.mxu0
  %v5441 = vadd.f32 %v5112, %v5440
  %5442 = vmatmul.bf16.gmra.mxu0 %v779
  %v5443 = vpop.f32.mrf.mxu0
  %v5444 = vadd.f32 %v5115, %v5443
  %v5445 = vpop.f32.mrf.mxu0
  %v5446 = vadd.f32 %v5117, %v5445
  %5447 = vmatmul.bf16.gmra.mxu0 %v781
  %v5448 = vpop.f32.mrf.mxu0
  %v5449 = vadd.f32 %v5120, %v5448
  %v5450 = vpop.f32.mrf.mxu0
  %v5451 = vadd.f32 %v5122, %v5450
  %5452 = vmatmul.bf16.gmra.mxu0 %v783
  %v5453 = vpop.f32.mrf.mxu0
  %v5454 = vadd.f32 %v5125, %v5453
  %v5455 = vpop.f32.mrf.mxu0
  %v5456 = vadd.f32 %v5127, %v5455
  %5457 = vmatmul.bf16.gmra.mxu0 %v785
  %v5458 = vpop.f32.mrf.mxu0
  %v5459 = vadd.f32 %v5130, %v5458
  %v5460 = vpop.f32.mrf.mxu0
  %v5461 = vadd.f32 %v5132, %v5460
  %5462 = vmatmul.bf16.gmra.mxu0 %v787
  %v5463 = vpop.f32.mrf.mxu0
  %v5464 = vadd.f32 %v5135, %v5463
  %v5465 = vpop.f32.mrf.mxu0
  %v5466 = vadd.f32 %v5137, %v5465
  %5467 = vmatmul.bf16.gmra.mxu0 %v789
  %v5468 = vpop.f32.mrf.mxu0
  %v5469 = vadd.f32 %v5140, %v5468
  %v5470 = vpop.f32.mrf.mxu0
  %v5471 = vadd.f32 %v5142, %v5470
  %5472 = vmatmul.bf16.gmra.mxu0 %v791
  %v5473 = vpop.f32.mrf.mxu0
  %v5474 = vadd.f32 %v5145, %v5473
  %v5475 = vpop.f32.mrf.mxu0
  %v5476 = vadd.f32 %v5147, %v5475
  %5477 = vmatmul.bf16.gmra.mxu0 %v793
  %v5478 = vpop.f32.mrf.mxu0
  %v5479 = vadd.f32 %v5150, %v5478
  %v5480 = vpop.f32.mrf.mxu0
  %v5481 = vadd.f32 %v5152, %v5480
  %5482 = vmatmul.bf16.gmra.mxu0 %v795
  %v5483 = vpop.f32.mrf.mxu0
  %v5484 = vadd.f32 %v5155, %v5483
  %v5485 = vpop.f32.mrf.mxu0
  %v5486 = vadd.f32 %v5157, %v5485
  %5487 = vmatmul.bf16.gmra.mxu0 %v797
  %v5488 = vpop.f32.mrf.mxu0
  %v5489 = vadd.f32 %v5160, %v5488
  %v5490 = vpop.f32.mrf.mxu0
  %v5491 = vadd.f32 %v5162, %v5490
  %5492 = vmatmul.bf16.gmra.mxu0 %v799
  %v5493 = vpop.f32.mrf.mxu0
  %v5494 = vadd.f32 %v5165, %v5493
  %v5495 = vpop.f32.mrf.mxu0
  %v5496 = vadd.f32 %v5167, %v5495
  %5497 = vmatmul.bf16.gmra.mxu0 %v801
  %v5498 = vpop.f32.mrf.mxu0
  %v5499 = vadd.f32 %v5170, %v5498
  %v5500 = vpop.f32.mrf.mxu0
  %v5501 = vadd.f32 %v5172, %v5500
  %5502 = vmatmul.bf16.gmra.mxu0 %v803
  %v5503 = vpop.f32.mrf.mxu0
  %v5504 = vadd.f32 %v5175, %v5503
  %v5505 = vpop.f32.mrf.mxu0
  %v5506 = vadd.f32 %v5177, %v5505
  %5507 = vmatmul.bf16.gmra.mxu0 %v805
  %v5508 = vpop.f32.mrf.mxu0
  %v5509 = vadd.f32 %v5180, %v5508
  %v5510 = vpop.f32.mrf.mxu0
  %v5511 = vadd.f32 %v5182, %v5510
  %5512 = vmatmul.bf16.gmra.mxu0 %v807
  %v5513 = vpop.f32.mrf.mxu0
  %v5514 = vadd.f32 %v5185, %v5513
  %v5515 = vpop.f32.mrf.mxu0
  %v5516 = vadd.f32 %v5187, %v5515
  %5517 = vmatmul.bf16.gmra.mxu0 %v809
  %v5518 = vpop.f32.mrf.mxu0
  %v5519 = vadd.f32 %v5190, %v5518
  %v5520 = vpop.f32.mrf.mxu0
  %v5521 = vadd.f32 %v5192, %v5520
  %5522 = vmatmul.bf16.gmra.mxu0 %v811
  %v5523 = vpop.f32.mrf.mxu0
  %v5524 = vadd.f32 %v5195, %v5523
  %v5525 = vpop.f32.mrf.mxu0
  %v5526 = vadd.f32 %v5197, %v5525
  %5527 = vdwg.mxu0
  %5528 = vmatpush.bf16.msra.mxu0 %v1386
  %5529 = vmatpush.bf16.msra.mxu0 %v1378
  %5530 = vmatpush.bf16.msra.mxu0 %v1370
  %5531 = vmatpush.bf16.msra.mxu0 %v1362
  %5532 = vmatpush.bf16.msra.mxu0 %v1354
  %5533 = vmatpush.bf16.msra.mxu0 %v1346
  %5534 = vmatpush.bf16.msra.mxu0 %v1338
  %5535 = vmatpush.bf16.msra.mxu0 %v1330
  %5536 = vmatmul.bf16.gmra.mxu0 %v684
  %v5537 = vpop.f32.mrf.mxu0
  %v5538 = vadd.f32 0.0, %v5537
  %v5539 = vpop.f32.mrf.mxu0
  %v5540 = vadd.f32 0.0, %v5539
  %5541 = vmatmul.bf16.gmra.mxu0 %v686
  %v5542 = vpop.f32.mrf.mxu0
  %v5543 = vadd.f32 0.0, %v5542
  %v5544 = vpop.f32.mrf.mxu0
  %v5545 = vadd.f32 0.0, %v5544
  %5546 = vmatmul.bf16.gmra.mxu0 %v688
  %v5547 = vpop.f32.mrf.mxu0
  %v5548 = vadd.f32 0.0, %v5547
  %v5549 = vpop.f32.mrf.mxu0
  %v5550 = vadd.f32 0.0, %v5549
  %5551 = vmatmul.bf16.gmra.mxu0 %v690
  %v5552 = vpop.f32.mrf.mxu0
  %v5553 = vadd.f32 0.0, %v5552
  %v5554 = vpop.f32.mrf.mxu0
  %v5555 = vadd.f32 0.0, %v5554
  %5556 = vmatmul.bf16.gmra.mxu0 %v692
  %v5557 = vpop.f32.mrf.mxu0
  %v5558 = vadd.f32 0.0, %v5557
  %v5559 = vpop.f32.mrf.mxu0
  %v5560 = vadd.f32 0.0, %v5559
  %5561 = vmatmul.bf16.gmra.mxu0 %v694
  %v5562 = vpop.f32.mrf.mxu0
  %v5563 = vadd.f32 0.0, %v5562
  %v5564 = vpop.f32.mrf.mxu0
  %v5565 = vadd.f32 0.0, %v5564
  %5566 = vmatmul.bf16.gmra.mxu0 %v696
  %v5567 = vpop.f32.mrf.mxu0
  %v5568 = vadd.f32 0.0, %v5567
  %v5569 = vpop.f32.mrf.mxu0
  %v5570 = vadd.f32 0.0, %v5569
  %5571 = vmatmul.bf16.gmra.mxu0 %v698
  %v5572 = vpop.f32.mrf.mxu0
  %v5573 = vadd.f32 0.0, %v5572
  %v5574 = vpop.f32.mrf.mxu0
  %v5575 = vadd.f32 0.0, %v5574
  %5576 = vmatmul.bf16.gmra.mxu0 %v700
  %v5577 = vpop.f32.mrf.mxu0
  %v5578 = vadd.f32 0.0, %v5577
  %v5579 = vpop.f32.mrf.mxu0
  %v5580 = vadd.f32 0.0, %v5579
  %5581 = vmatmul.bf16.gmra.mxu0 %v702
  %v5582 = vpop.f32.mrf.mxu0
  %v5583 = vadd.f32 0.0, %v5582
  %v5584 = vpop.f32.mrf.mxu0
  %v5585 = vadd.f32 0.0, %v5584
  %5586 = vmatmul.bf16.gmra.mxu0 %v704
  %v5587 = vpop.f32.mrf.mxu0
  %v5588 = vadd.f32 0.0, %v5587
  %v5589 = vpop.f32.mrf.mxu0
  %v5590 = vadd.f32 0.0, %v5589
  %5591 = vmatmul.bf16.gmra.mxu0 %v706
  %v5592 = vpop.f32.mrf.mxu0
  %v5593 = vadd.f32 0.0, %v5592
  %v5594 = vpop.f32.mrf.mxu0
  %v5595 = vadd.f32 0.0, %v5594
  %5596 = vmatmul.bf16.gmra.mxu0 %v708
  %v5597 = vpop.f32.mrf.mxu0
  %v5598 = vadd.f32 0.0, %v5597
  %v5599 = vpop.f32.mrf.mxu0
  %v5600 = vadd.f32 0.0, %v5599
  %5601 = vmatmul.bf16.gmra.mxu0 %v710
  %v5602 = vpop.f32.mrf.mxu0
  %v5603 = vadd.f32 0.0, %v5602
  %v5604 = vpop.f32.mrf.mxu0
  %v5605 = vadd.f32 0.0, %v5604
  %5606 = vmatmul.bf16.gmra.mxu0 %v712
  %v5607 = vpop.f32.mrf.mxu0
  %v5608 = vadd.f32 0.0, %v5607
  %v5609 = vpop.f32.mrf.mxu0
  %v5610 = vadd.f32 0.0, %v5609
  %5611 = vmatmul.bf16.gmra.mxu0 %v714
  %v5612 = vpop.f32.mrf.mxu0
  %v5613 = vadd.f32 0.0, %v5612
  %v5614 = vpop.f32.mrf.mxu0
  %v5615 = vadd.f32 0.0, %v5614
  %5616 = vmatmul.bf16.gmra.mxu0 %v716
  %v5617 = vpop.f32.mrf.mxu0
  %v5618 = vadd.f32 0.0, %v5617
  %v5619 = vpop.f32.mrf.mxu0
  %v5620 = vadd.f32 0.0, %v5619
  %5621 = vmatmul.bf16.gmra.mxu0 %v718
  %v5622 = vpop.f32.mrf.mxu0
  %v5623 = vadd.f32 0.0, %v5622
  %v5624 = vpop.f32.mrf.mxu0
  %v5625 = vadd.f32 0.0, %v5624
  %5626 = vmatmul.bf16.gmra.mxu0 %v720
  %v5627 = vpop.f32.mrf.mxu0
  %v5628 = vadd.f32 0.0, %v5627
  %v5629 = vpop.f32.mrf.mxu0
  %v5630 = vadd.f32 0.0, %v5629
  %5631 = vmatmul.bf16.gmra.mxu0 %v722
  %v5632 = vpop.f32.mrf.mxu0
  %v5633 = vadd.f32 0.0, %v5632
  %v5634 = vpop.f32.mrf.mxu0
  %v5635 = vadd.f32 0.0, %v5634
  %5636 = vmatmul.bf16.gmra.mxu0 %v724
  %v5637 = vpop.f32.mrf.mxu0
  %v5638 = vadd.f32 0.0, %v5637
  %v5639 = vpop.f32.mrf.mxu0
  %v5640 = vadd.f32 0.0, %v5639
  %5641 = vmatmul.bf16.gmra.mxu0 %v726
  %v5642 = vpop.f32.mrf.mxu0
  %v5643 = vadd.f32 0.0, %v5642
  %v5644 = vpop.f32.mrf.mxu0
  %v5645 = vadd.f32 0.0, %v5644
  %5646 = vmatmul.bf16.gmra.mxu0 %v728
  %v5647 = vpop.f32.mrf.mxu0
  %v5648 = vadd.f32 0.0, %v5647
  %v5649 = vpop.f32.mrf.mxu0
  %v5650 = vadd.f32 0.0, %v5649
  %5651 = vmatmul.bf16.gmra.mxu0 %v730
  %v5652 = vpop.f32.mrf.mxu0
  %v5653 = vadd.f32 0.0, %v5652
  %v5654 = vpop.f32.mrf.mxu0
  %v5655 = vadd.f32 0.0, %v5654
  %5656 = vmatmul.bf16.gmra.mxu0 %v732
  %v5657 = vpop.f32.mrf.mxu0
  %v5658 = vadd.f32 0.0, %v5657
  %v5659 = vpop.f32.mrf.mxu0
  %v5660 = vadd.f32 0.0, %v5659
  %5661 = vmatmul.bf16.gmra.mxu0 %v734
  %v5662 = vpop.f32.mrf.mxu0
  %v5663 = vadd.f32 0.0, %v5662
  %v5664 = vpop.f32.mrf.mxu0
  %v5665 = vadd.f32 0.0, %v5664
  %5666 = vmatmul.bf16.gmra.mxu0 %v736
  %v5667 = vpop.f32.mrf.mxu0
  %v5668 = vadd.f32 0.0, %v5667
  %v5669 = vpop.f32.mrf.mxu0
  %v5670 = vadd.f32 0.0, %v5669
  %5671 = vmatmul.bf16.gmra.mxu0 %v738
  %v5672 = vpop.f32.mrf.mxu0
  %v5673 = vadd.f32 0.0, %v5672
  %v5674 = vpop.f32.mrf.mxu0
  %v5675 = vadd.f32 0.0, %v5674
  %5676 = vmatmul.bf16.gmra.mxu0 %v740
  %v5677 = vpop.f32.mrf.mxu0
  %v5678 = vadd.f32 0.0, %v5677
  %v5679 = vpop.f32.mrf.mxu0
  %v5680 = vadd.f32 0.0, %v5679
  %5681 = vmatmul.bf16.gmra.mxu0 %v742
  %v5682 = vpop.f32.mrf.mxu0
  %v5683 = vadd.f32 0.0, %v5682
  %v5684 = vpop.f32.mrf.mxu0
  %v5685 = vadd.f32 0.0, %v5684
  %5686 = vmatmul.bf16.gmra.mxu0 %v744
  %v5687 = vpop.f32.mrf.mxu0
  %v5688 = vadd.f32 0.0, %v5687
  %v5689 = vpop.f32.mrf.mxu0
  %v5690 = vadd.f32 0.0, %v5689
  %5691 = vmatmul.bf16.gmra.mxu0 %v746
  %v5692 = vpop.f32.mrf.mxu0
  %v5693 = vadd.f32 0.0, %v5692
  %v5694 = vpop.f32.mrf.mxu0
  %v5695 = vadd.f32 0.0, %v5694
  %5696 = vmatmul.bf16.gmra.mxu0 %v748
  %v5697 = vpop.f32.mrf.mxu0
  %v5698 = vadd.f32 0.0, %v5697
  %v5699 = vpop.f32.mrf.mxu0
  %v5700 = vadd.f32 0.0, %v5699
  %5701 = vmatmul.bf16.gmra.mxu0 %v750
  %v5702 = vpop.f32.mrf.mxu0
  %v5703 = vadd.f32 0.0, %v5702
  %v5704 = vpop.f32.mrf.mxu0
  %v5705 = vadd.f32 0.0, %v5704
  %5706 = vmatmul.bf16.gmra.mxu0 %v752
  %v5707 = vpop.f32.mrf.mxu0
  %v5708 = vadd.f32 0.0, %v5707
  %v5709 = vpop.f32.mrf.mxu0
  %v5710 = vadd.f32 0.0, %v5709
  %5711 = vmatmul.bf16.gmra.mxu0 %v754
  %v5712 = vpop.f32.mrf.mxu0
  %v5713 = vadd.f32 0.0, %v5712
  %v5714 = vpop.f32.mrf.mxu0
  %v5715 = vadd.f32 0.0, %v5714
  %5716 = vmatmul.bf16.gmra.mxu0 %v756
  %v5717 = vpop.f32.mrf.mxu0
  %v5718 = vadd.f32 0.0, %v5717
  %v5719 = vpop.f32.mrf.mxu0
  %v5720 = vadd.f32 0.0, %v5719
  %5721 = vmatmul.bf16.gmra.mxu0 %v758
  %v5722 = vpop.f32.mrf.mxu0
  %v5723 = vadd.f32 0.0, %v5722
  %v5724 = vpop.f32.mrf.mxu0
  %v5725 = vadd.f32 0.0, %v5724
  %5726 = vmatmul.bf16.gmra.mxu0 %v760
  %v5727 = vpop.f32.mrf.mxu0
  %v5728 = vadd.f32 0.0, %v5727
  %v5729 = vpop.f32.mrf.mxu0
  %v5730 = vadd.f32 0.0, %v5729
  %5731 = vmatmul.bf16.gmra.mxu0 %v762
  %v5732 = vpop.f32.mrf.mxu0
  %v5733 = vadd.f32 0.0, %v5732
  %v5734 = vpop.f32.mrf.mxu0
  %v5735 = vadd.f32 0.0, %v5734
  %5736 = vmatmul.bf16.gmra.mxu0 %v764
  %v5737 = vpop.f32.mrf.mxu0
  %v5738 = vadd.f32 0.0, %v5737
  %v5739 = vpop.f32.mrf.mxu0
  %v5740 = vadd.f32 0.0, %v5739
  %5741 = vmatmul.bf16.gmra.mxu0 %v766
  %v5742 = vpop.f32.mrf.mxu0
  %v5743 = vadd.f32 0.0, %v5742
  %v5744 = vpop.f32.mrf.mxu0
  %v5745 = vadd.f32 0.0, %v5744
  %5746 = vmatmul.bf16.gmra.mxu0 %v768
  %v5747 = vpop.f32.mrf.mxu0
  %v5748 = vadd.f32 0.0, %v5747
  %v5749 = vpop.f32.mrf.mxu0
  %v5750 = vadd.f32 0.0, %v5749
  %5751 = vmatmul.bf16.gmra.mxu0 %v770
  %v5752 = vpop.f32.mrf.mxu0
  %v5753 = vadd.f32 0.0, %v5752
  %v5754 = vpop.f32.mrf.mxu0
  %v5755 = vadd.f32 0.0, %v5754
  %5756 = vmatmul.bf16.gmra.mxu0 %v772
  %v5757 = vpop.f32.mrf.mxu0
  %v5758 = vadd.f32 0.0, %v5757
  %v5759 = vpop.f32.mrf.mxu0
  %v5760 = vadd.f32 0.0, %v5759
  %5761 = vmatmul.bf16.gmra.mxu0 %v774
  %v5762 = vpop.f32.mrf.mxu0
  %v5763 = vadd.f32 0.0, %v5762
  %v5764 = vpop.f32.mrf.mxu0
  %v5765 = vadd.f32 0.0, %v5764
  %5766 = vmatmul.bf16.gmra.mxu0 %v776
  %v5767 = vpop.f32.mrf.mxu0
  %v5768 = vadd.f32 0.0, %v5767
  %v5769 = vpop.f32.mrf.mxu0
  %v5770 = vadd.f32 0.0, %v5769
  %5771 = vmatmul.bf16.gmra.mxu0 %v778
  %v5772 = vpop.f32.mrf.mxu0
  %v5773 = vadd.f32 0.0, %v5772
  %v5774 = vpop.f32.mrf.mxu0
  %v5775 = vadd.f32 0.0, %v5774
  %5776 = vmatmul.bf16.gmra.mxu0 %v780
  %v5777 = vpop.f32.mrf.mxu0
  %v5778 = vadd.f32 0.0, %v5777
  %v5779 = vpop.f32.mrf.mxu0
  %v5780 = vadd.f32 0.0, %v5779
  %5781 = vmatmul.bf16.gmra.mxu0 %v782
  %v5782 = vpop.f32.mrf.mxu0
  %v5783 = vadd.f32 0.0, %v5782
  %v5784 = vpop.f32.mrf.mxu0
  %v5785 = vadd.f32 0.0, %v5784
  %5786 = vmatmul.bf16.gmra.mxu0 %v784
  %v5787 = vpop.f32.mrf.mxu0
  %v5788 = vadd.f32 0.0, %v5787
  %v5789 = vpop.f32.mrf.mxu0
  %v5790 = vadd.f32 0.0, %v5789
  %5791 = vmatmul.bf16.gmra.mxu0 %v786
  %v5792 = vpop.f32.mrf.mxu0
  %v5793 = vadd.f32 0.0, %v5792
  %v5794 = vpop.f32.mrf.mxu0
  %v5795 = vadd.f32 0.0, %v5794
  %5796 = vmatmul.bf16.gmra.mxu0 %v788
  %v5797 = vpop.f32.mrf.mxu0
  %v5798 = vadd.f32 0.0, %v5797
  %v5799 = vpop.f32.mrf.mxu0
  %v5800 = vadd.f32 0.0, %v5799
  %5801 = vmatmul.bf16.gmra.mxu0 %v790
  %v5802 = vpop.f32.mrf.mxu0
  %v5803 = vadd.f32 0.0, %v5802
  %v5804 = vpop.f32.mrf.mxu0
  %v5805 = vadd.f32 0.0, %v5804
  %5806 = vmatmul.bf16.gmra.mxu0 %v792
  %v5807 = vpop.f32.mrf.mxu0
  %v5808 = vadd.f32 0.0, %v5807
  %v5809 = vpop.f32.mrf.mxu0
  %v5810 = vadd.f32 0.0, %v5809
  %5811 = vmatmul.bf16.gmra.mxu0 %v794
  %v5812 = vpop.f32.mrf.mxu0
  %v5813 = vadd.f32 0.0, %v5812
  %v5814 = vpop.f32.mrf.mxu0
  %v5815 = vadd.f32 0.0, %v5814
  %5816 = vmatmul.bf16.gmra.mxu0 %v796
  %v5817 = vpop.f32.mrf.mxu0
  %v5818 = vadd.f32 0.0, %v5817
  %v5819 = vpop.f32.mrf.mxu0
  %v5820 = vadd.f32 0.0, %v5819
  %5821 = vmatmul.bf16.gmra.mxu0 %v798
  %v5822 = vpop.f32.mrf.mxu0
  %v5823 = vadd.f32 0.0, %v5822
  %v5824 = vpop.f32.mrf.mxu0
  %v5825 = vadd.f32 0.0, %v5824
  %5826 = vmatmul.bf16.gmra.mxu0 %v800
  %v5827 = vpop.f32.mrf.mxu0
  %v5828 = vadd.f32 0.0, %v5827
  %v5829 = vpop.f32.mrf.mxu0
  %v5830 = vadd.f32 0.0, %v5829
  %5831 = vmatmul.bf16.gmra.mxu0 %v802
  %v5832 = vpop.f32.mrf.mxu0
  %v5833 = vadd.f32 0.0, %v5832
  %v5834 = vpop.f32.mrf.mxu0
  %v5835 = vadd.f32 0.0, %v5834
  %5836 = vmatmul.bf16.gmra.mxu0 %v804
  %v5837 = vpop.f32.mrf.mxu0
  %v5838 = vadd.f32 0.0, %v5837
  %v5839 = vpop.f32.mrf.mxu0
  %v5840 = vadd.f32 0.0, %v5839
  %5841 = vmatmul.bf16.gmra.mxu0 %v806
  %v5842 = vpop.f32.mrf.mxu0
  %v5843 = vadd.f32 0.0, %v5842
  %v5844 = vpop.f32.mrf.mxu0
  %v5845 = vadd.f32 0.0, %v5844
  %5846 = vmatmul.bf16.gmra.mxu0 %v808
  %v5847 = vpop.f32.mrf.mxu0
  %v5848 = vadd.f32 0.0, %v5847
  %v5849 = vpop.f32.mrf.mxu0
  %v5850 = vadd.f32 0.0, %v5849
  %5851 = vmatmul.bf16.gmra.mxu0 %v810
  %v5852 = vpop.f32.mrf.mxu0
  %v5853 = vadd.f32 0.0, %v5852
  %v5854 = vpop.f32.mrf.mxu0
  %v5855 = vadd.f32 0.0, %v5854
  %5856 = vdwg.mxu0
  %5857 = vmatpush.bf16.msra.mxu0 %v1450
  %5858 = vmatpush.bf16.msra.mxu0 %v1442
  %5859 = vmatpush.bf16.msra.mxu0 %v1434
  %5860 = vmatpush.bf16.msra.mxu0 %v1426
  %5861 = vmatpush.bf16.msra.mxu0 %v1418
  %5862 = vmatpush.bf16.msra.mxu0 %v1410
  %5863 = vmatpush.bf16.msra.mxu0 %v1402
  %5864 = vmatpush.bf16.msra.mxu0 %v1394
  %5865 = vmatmul.bf16.gmra.mxu0 %v685
  %v5866 = vpop.f32.mrf.mxu0
  %v5867 = vadd.f32 %v5538, %v5866
  %v5868 = vpop.f32.mrf.mxu0
  %v5869 = vadd.f32 %v5540, %v5868
  %5870 = vmatmul.bf16.gmra.mxu0 %v687
  %v5871 = vpop.f32.mrf.mxu0
  %v5872 = vadd.f32 %v5543, %v5871
  %v5873 = vpop.f32.mrf.mxu0
  %v5874 = vadd.f32 %v5545, %v5873
  %5875 = vmatmul.bf16.gmra.mxu0 %v689
  %v5876 = vpop.f32.mrf.mxu0
  %v5877 = vadd.f32 %v5548, %v5876
  %v5878 = vpop.f32.mrf.mxu0
  %v5879 = vadd.f32 %v5550, %v5878
  %5880 = vmatmul.bf16.gmra.mxu0 %v691
  %v5881 = vpop.f32.mrf.mxu0
  %v5882 = vadd.f32 %v5553, %v5881
  %v5883 = vpop.f32.mrf.mxu0
  %v5884 = vadd.f32 %v5555, %v5883
  %5885 = vmatmul.bf16.gmra.mxu0 %v693
  %v5886 = vpop.f32.mrf.mxu0
  %v5887 = vadd.f32 %v5558, %v5886
  %v5888 = vpop.f32.mrf.mxu0
  %v5889 = vadd.f32 %v5560, %v5888
  %5890 = vmatmul.bf16.gmra.mxu0 %v695
  %v5891 = vpop.f32.mrf.mxu0
  %v5892 = vadd.f32 %v5563, %v5891
  %v5893 = vpop.f32.mrf.mxu0
  %v5894 = vadd.f32 %v5565, %v5893
  %5895 = vmatmul.bf16.gmra.mxu0 %v697
  %v5896 = vpop.f32.mrf.mxu0
  %v5897 = vadd.f32 %v5568, %v5896
  %v5898 = vpop.f32.mrf.mxu0
  %v5899 = vadd.f32 %v5570, %v5898
  %5900 = vmatmul.bf16.gmra.mxu0 %v699
  %v5901 = vpop.f32.mrf.mxu0
  %v5902 = vadd.f32 %v5573, %v5901
  %v5903 = vpop.f32.mrf.mxu0
  %v5904 = vadd.f32 %v5575, %v5903
  %5905 = vmatmul.bf16.gmra.mxu0 %v701
  %v5906 = vpop.f32.mrf.mxu0
  %v5907 = vadd.f32 %v5578, %v5906
  %v5908 = vpop.f32.mrf.mxu0
  %v5909 = vadd.f32 %v5580, %v5908
  %5910 = vmatmul.bf16.gmra.mxu0 %v703
  %v5911 = vpop.f32.mrf.mxu0
  %v5912 = vadd.f32 %v5583, %v5911
  %v5913 = vpop.f32.mrf.mxu0
  %v5914 = vadd.f32 %v5585, %v5913
  %5915 = vmatmul.bf16.gmra.mxu0 %v705
  %v5916 = vpop.f32.mrf.mxu0
  %v5917 = vadd.f32 %v5588, %v5916
  %v5918 = vpop.f32.mrf.mxu0
  %v5919 = vadd.f32 %v5590, %v5918
  %5920 = vmatmul.bf16.gmra.mxu0 %v707
  %v5921 = vpop.f32.mrf.mxu0
  %v5922 = vadd.f32 %v5593, %v5921
  %v5923 = vpop.f32.mrf.mxu0
  %v5924 = vadd.f32 %v5595, %v5923
  %5925 = vmatmul.bf16.gmra.mxu0 %v709
  %v5926 = vpop.f32.mrf.mxu0
  %v5927 = vadd.f32 %v5598, %v5926
  %v5928 = vpop.f32.mrf.mxu0
  %v5929 = vadd.f32 %v5600, %v5928
  %5930 = vmatmul.bf16.gmra.mxu0 %v711
  %v5931 = vpop.f32.mrf.mxu0
  %v5932 = vadd.f32 %v5603, %v5931
  %v5933 = vpop.f32.mrf.mxu0
  %v5934 = vadd.f32 %v5605, %v5933
  %5935 = vmatmul.bf16.gmra.mxu0 %v713
  %v5936 = vpop.f32.mrf.mxu0
  %v5937 = vadd.f32 %v5608, %v5936
  %v5938 = vpop.f32.mrf.mxu0
  %v5939 = vadd.f32 %v5610, %v5938
  %5940 = vmatmul.bf16.gmra.mxu0 %v715
  %v5941 = vpop.f32.mrf.mxu0
  %v5942 = vadd.f32 %v5613, %v5941
  %v5943 = vpop.f32.mrf.mxu0
  %v5944 = vadd.f32 %v5615, %v5943
  %5945 = vmatmul.bf16.gmra.mxu0 %v717
  %v5946 = vpop.f32.mrf.mxu0
  %v5947 = vadd.f32 %v5618, %v5946
  %v5948 = vpop.f32.mrf.mxu0
  %v5949 = vadd.f32 %v5620, %v5948
  %5950 = vmatmul.bf16.gmra.mxu0 %v719
  %v5951 = vpop.f32.mrf.mxu0
  %v5952 = vadd.f32 %v5623, %v5951
  %v5953 = vpop.f32.mrf.mxu0
  %v5954 = vadd.f32 %v5625, %v5953
  %5955 = vmatmul.bf16.gmra.mxu0 %v721
  %v5956 = vpop.f32.mrf.mxu0
  %v5957 = vadd.f32 %v5628, %v5956
  %v5958 = vpop.f32.mrf.mxu0
  %v5959 = vadd.f32 %v5630, %v5958
  %5960 = vmatmul.bf16.gmra.mxu0 %v723
  %v5961 = vpop.f32.mrf.mxu0
  %v5962 = vadd.f32 %v5633, %v5961
  %v5963 = vpop.f32.mrf.mxu0
  %v5964 = vadd.f32 %v5635, %v5963
  %5965 = vmatmul.bf16.gmra.mxu0 %v725
  %v5966 = vpop.f32.mrf.mxu0
  %v5967 = vadd.f32 %v5638, %v5966
  %v5968 = vpop.f32.mrf.mxu0
  %v5969 = vadd.f32 %v5640, %v5968
  %5970 = vmatmul.bf16.gmra.mxu0 %v727
  %v5971 = vpop.f32.mrf.mxu0
  %v5972 = vadd.f32 %v5643, %v5971
  %v5973 = vpop.f32.mrf.mxu0
  %v5974 = vadd.f32 %v5645, %v5973
  %5975 = vmatmul.bf16.gmra.mxu0 %v729
  %v5976 = vpop.f32.mrf.mxu0
  %v5977 = vadd.f32 %v5648, %v5976
  %v5978 = vpop.f32.mrf.mxu0
  %v5979 = vadd.f32 %v5650, %v5978
  %5980 = vmatmul.bf16.gmra.mxu0 %v731
  %v5981 = vpop.f32.mrf.mxu0
  %v5982 = vadd.f32 %v5653, %v5981
  %v5983 = vpop.f32.mrf.mxu0
  %v5984 = vadd.f32 %v5655, %v5983
  %5985 = vmatmul.bf16.gmra.mxu0 %v733
  %v5986 = vpop.f32.mrf.mxu0
  %v5987 = vadd.f32 %v5658, %v5986
  %v5988 = vpop.f32.mrf.mxu0
  %v5989 = vadd.f32 %v5660, %v5988
  %5990 = vmatmul.bf16.gmra.mxu0 %v735
  %v5991 = vpop.f32.mrf.mxu0
  %v5992 = vadd.f32 %v5663, %v5991
  %v5993 = vpop.f32.mrf.mxu0
  %v5994 = vadd.f32 %v5665, %v5993
  %5995 = vmatmul.bf16.gmra.mxu0 %v737
  %v5996 = vpop.f32.mrf.mxu0
  %v5997 = vadd.f32 %v5668, %v5996
  %v5998 = vpop.f32.mrf.mxu0
  %v5999 = vadd.f32 %v5670, %v5998
  %6000 = vmatmul.bf16.gmra.mxu0 %v739
  %v6001 = vpop.f32.mrf.mxu0
  %v6002 = vadd.f32 %v5673, %v6001
  %v6003 = vpop.f32.mrf.mxu0
  %v6004 = vadd.f32 %v5675, %v6003
  %6005 = vmatmul.bf16.gmra.mxu0 %v741
  %v6006 = vpop.f32.mrf.mxu0
  %v6007 = vadd.f32 %v5678, %v6006
  %v6008 = vpop.f32.mrf.mxu0
  %v6009 = vadd.f32 %v5680, %v6008
  %6010 = vmatmul.bf16.gmra.mxu0 %v743
  %v6011 = vpop.f32.mrf.mxu0
  %v6012 = vadd.f32 %v5683, %v6011
  %v6013 = vpop.f32.mrf.mxu0
  %v6014 = vadd.f32 %v5685, %v6013
  %6015 = vmatmul.bf16.gmra.mxu0 %v745
  %v6016 = vpop.f32.mrf.mxu0
  %v6017 = vadd.f32 %v5688, %v6016
  %v6018 = vpop.f32.mrf.mxu0
  %v6019 = vadd.f32 %v5690, %v6018
  %6020 = vmatmul.bf16.gmra.mxu0 %v747
  %v6021 = vpop.f32.mrf.mxu0
  %v6022 = vadd.f32 %v5693, %v6021
  %v6023 = vpop.f32.mrf.mxu0
  %v6024 = vadd.f32 %v5695, %v6023
  %6025 = vmatmul.bf16.gmra.mxu0 %v749
  %v6026 = vpop.f32.mrf.mxu0
  %v6027 = vadd.f32 %v5698, %v6026
  %v6028 = vpop.f32.mrf.mxu0
  %v6029 = vadd.f32 %v5700, %v6028
  %6030 = vmatmul.bf16.gmra.mxu0 %v751
  %v6031 = vpop.f32.mrf.mxu0
  %v6032 = vadd.f32 %v5703, %v6031
  %v6033 = vpop.f32.mrf.mxu0
  %v6034 = vadd.f32 %v5705, %v6033
  %6035 = vmatmul.bf16.gmra.mxu0 %v753
  %v6036 = vpop.f32.mrf.mxu0
  %v6037 = vadd.f32 %v5708, %v6036
  %v6038 = vpop.f32.mrf.mxu0
  %v6039 = vadd.f32 %v5710, %v6038
  %6040 = vmatmul.bf16.gmra.mxu0 %v755
  %v6041 = vpop.f32.mrf.mxu0
  %v6042 = vadd.f32 %v5713, %v6041
  %v6043 = vpop.f32.mrf.mxu0
  %v6044 = vadd.f32 %v5715, %v6043
  %6045 = vmatmul.bf16.gmra.mxu0 %v757
  %v6046 = vpop.f32.mrf.mxu0
  %v6047 = vadd.f32 %v5718, %v6046
  %v6048 = vpop.f32.mrf.mxu0
  %v6049 = vadd.f32 %v5720, %v6048
  %6050 = vmatmul.bf16.gmra.mxu0 %v759
  %v6051 = vpop.f32.mrf.mxu0
  %v6052 = vadd.f32 %v5723, %v6051
  %v6053 = vpop.f32.mrf.mxu0
  %v6054 = vadd.f32 %v5725, %v6053
  %6055 = vmatmul.bf16.gmra.mxu0 %v761
  %v6056 = vpop.f32.mrf.mxu0
  %v6057 = vadd.f32 %v5728, %v6056
  %v6058 = vpop.f32.mrf.mxu0
  %v6059 = vadd.f32 %v5730, %v6058
  %6060 = vmatmul.bf16.gmra.mxu0 %v763
  %v6061 = vpop.f32.mrf.mxu0
  %v6062 = vadd.f32 %v5733, %v6061
  %v6063 = vpop.f32.mrf.mxu0
  %v6064 = vadd.f32 %v5735, %v6063
  %6065 = vmatmul.bf16.gmra.mxu0 %v765
  %v6066 = vpop.f32.mrf.mxu0
  %v6067 = vadd.f32 %v5738, %v6066
  %v6068 = vpop.f32.mrf.mxu0
  %v6069 = vadd.f32 %v5740, %v6068
  %6070 = vmatmul.bf16.gmra.mxu0 %v767
  %v6071 = vpop.f32.mrf.mxu0
  %v6072 = vadd.f32 %v5743, %v6071
  %v6073 = vpop.f32.mrf.mxu0
  %v6074 = vadd.f32 %v5745, %v6073
  %6075 = vmatmul.bf16.gmra.mxu0 %v769
  %v6076 = vpop.f32.mrf.mxu0
  %v6077 = vadd.f32 %v5748, %v6076
  %v6078 = vpop.f32.mrf.mxu0
  %v6079 = vadd.f32 %v5750, %v6078
  %6080 = vmatmul.bf16.gmra.mxu0 %v771
  %v6081 = vpop.f32.mrf.mxu0
  %v6082 = vadd.f32 %v5753, %v6081
  %v6083 = vpop.f32.mrf.mxu0
  %v6084 = vadd.f32 %v5755, %v6083
  %6085 = vmatmul.bf16.gmra.mxu0 %v773
  %v6086 = vpop.f32.mrf.mxu0
  %v6087 = vadd.f32 %v5758, %v6086
  %v6088 = vpop.f32.mrf.mxu0
  %v6089 = vadd.f32 %v5760, %v6088
  %6090 = vmatmul.bf16.gmra.mxu0 %v775
  %v6091 = vpop.f32.mrf.mxu0
  %v6092 = vadd.f32 %v5763, %v6091
  %v6093 = vpop.f32.mrf.mxu0
  %v6094 = vadd.f32 %v5765, %v6093
  %6095 = vmatmul.bf16.gmra.mxu0 %v777
  %v6096 = vpop.f32.mrf.mxu0
  %v6097 = vadd.f32 %v5768, %v6096
  %v6098 = vpop.f32.mrf.mxu0
  %v6099 = vadd.f32 %v5770, %v6098
  %6100 = vmatmul.bf16.gmra.mxu0 %v779
  %v6101 = vpop.f32.mrf.mxu0
  %v6102 = vadd.f32 %v5773, %v6101
  %v6103 = vpop.f32.mrf.mxu0
  %v6104 = vadd.f32 %v5775, %v6103
  %6105 = vmatmul.bf16.gmra.mxu0 %v781
  %v6106 = vpop.f32.mrf.mxu0
  %v6107 = vadd.f32 %v5778, %v6106
  %v6108 = vpop.f32.mrf.mxu0
  %v6109 = vadd.f32 %v5780, %v6108
  %6110 = vmatmul.bf16.gmra.mxu0 %v783
  %v6111 = vpop.f32.mrf.mxu0
  %v6112 = vadd.f32 %v5783, %v6111
  %v6113 = vpop.f32.mrf.mxu0
  %v6114 = vadd.f32 %v5785, %v6113
  %6115 = vmatmul.bf16.gmra.mxu0 %v785
  %v6116 = vpop.f32.mrf.mxu0
  %v6117 = vadd.f32 %v5788, %v6116
  %v6118 = vpop.f32.mrf.mxu0
  %v6119 = vadd.f32 %v5790, %v6118
  %6120 = vmatmul.bf16.gmra.mxu0 %v787
  %v6121 = vpop.f32.mrf.mxu0
  %v6122 = vadd.f32 %v5793, %v6121
  %v6123 = vpop.f32.mrf.mxu0
  %v6124 = vadd.f32 %v5795, %v6123
  %6125 = vmatmul.bf16.gmra.mxu0 %v789
  %v6126 = vpop.f32.mrf.mxu0
  %v6127 = vadd.f32 %v5798, %v6126
  %v6128 = vpop.f32.mrf.mxu0
  %v6129 = vadd.f32 %v5800, %v6128
  %6130 = vmatmul.bf16.gmra.mxu0 %v791
  %v6131 = vpop.f32.mrf.mxu0
  %v6132 = vadd.f32 %v5803, %v6131
  %v6133 = vpop.f32.mrf.mxu0
  %v6134 = vadd.f32 %v5805, %v6133
  %6135 = vmatmul.bf16.gmra.mxu0 %v793
  %v6136 = vpop.f32.mrf.mxu0
  %v6137 = vadd.f32 %v5808, %v6136
  %v6138 = vpop.f32.mrf.mxu0
  %v6139 = vadd.f32 %v5810, %v6138
  %6140 = vmatmul.bf16.gmra.mxu0 %v795
  %v6141 = vpop.f32.mrf.mxu0
  %v6142 = vadd.f32 %v5813, %v6141
  %v6143 = vpop.f32.mrf.mxu0
  %v6144 = vadd.f32 %v5815, %v6143
  %6145 = vmatmul.bf16.gmra.mxu0 %v797
  %v6146 = vpop.f32.mrf.mxu0
  %v6147 = vadd.f32 %v5818, %v6146
  %v6148 = vpop.f32.mrf.mxu0
  %v6149 = vadd.f32 %v5820, %v6148
  %6150 = vmatmul.bf16.gmra.mxu0 %v799
  %v6151 = vpop.f32.mrf.mxu0
  %v6152 = vadd.f32 %v5823, %v6151
  %v6153 = vpop.f32.mrf.mxu0
  %v6154 = vadd.f32 %v5825, %v6153
  %6155 = vmatmul.bf16.gmra.mxu0 %v801
  %v6156 = vpop.f32.mrf.mxu0
  %v6157 = vadd.f32 %v5828, %v6156
  %v6158 = vpop.f32.mrf.mxu0
  %v6159 = vadd.f32 %v5830, %v6158
  %6160 = vmatmul.bf16.gmra.mxu0 %v803
  %v6161 = vpop.f32.mrf.mxu0
  %v6162 = vadd.f32 %v5833, %v6161
  %v6163 = vpop.f32.mrf.mxu0
  %v6164 = vadd.f32 %v5835, %v6163
  %6165 = vmatmul.bf16.gmra.mxu0 %v805
  %v6166 = vpop.f32.mrf.mxu0
  %v6167 = vadd.f32 %v5838, %v6166
  %v6168 = vpop.f32.mrf.mxu0
  %v6169 = vadd.f32 %v5840, %v6168
  %6170 = vmatmul.bf16.gmra.mxu0 %v807
  %v6171 = vpop.f32.mrf.mxu0
  %v6172 = vadd.f32 %v5843, %v6171
  %v6173 = vpop.f32.mrf.mxu0
  %v6174 = vadd.f32 %v5845, %v6173
  %6175 = vmatmul.bf16.gmra.mxu0 %v809
  %v6176 = vpop.f32.mrf.mxu0
  %v6177 = vadd.f32 %v5848, %v6176
  %v6178 = vpop.f32.mrf.mxu0
  %v6179 = vadd.f32 %v5850, %v6178
  %6180 = vmatmul.bf16.gmra.mxu0 %v811
  %v6181 = vpop.f32.mrf.mxu0
  %v6182 = vadd.f32 %v5853, %v6181
  %v6183 = vpop.f32.mrf.mxu0
  %v6184 = vadd.f32 %v5855, %v6183
  %6185 = vdwg.mxu0
  %6186 = vmatpush.bf16.msra.mxu0 %v1387
  %6187 = vmatpush.bf16.msra.mxu0 %v1379
  %6188 = vmatpush.bf16.msra.mxu0 %v1371
  %6189 = vmatpush.bf16.msra.mxu0 %v1363
  %6190 = vmatpush.bf16.msra.mxu0 %v1355
  %6191 = vmatpush.bf16.msra.mxu0 %v1347
  %6192 = vmatpush.bf16.msra.mxu0 %v1339
  %6193 = vmatpush.bf16.msra.mxu0 %v1331
  %6194 = vmatmul.bf16.gmra.mxu0 %v684
  %v6195 = vpop.f32.mrf.mxu0
  %v6196 = vadd.f32 0.0, %v6195
  %v6197 = vpop.f32.mrf.mxu0
  %v6198 = vadd.f32 0.0, %v6197
  %6199 = vmatmul.bf16.gmra.mxu0 %v686
  %v6200 = vpop.f32.mrf.mxu0
  %v6201 = vadd.f32 0.0, %v6200
  %v6202 = vpop.f32.mrf.mxu0
  %v6203 = vadd.f32 0.0, %v6202
  %6204 = vmatmul.bf16.gmra.mxu0 %v688
  %v6205 = vpop.f32.mrf.mxu0
  %v6206 = vadd.f32 0.0, %v6205
  %v6207 = vpop.f32.mrf.mxu0
  %v6208 = vadd.f32 0.0, %v6207
  %6209 = vmatmul.bf16.gmra.mxu0 %v690
  %v6210 = vpop.f32.mrf.mxu0
  %v6211 = vadd.f32 0.0, %v6210
  %v6212 = vpop.f32.mrf.mxu0
  %v6213 = vadd.f32 0.0, %v6212
  %6214 = vmatmul.bf16.gmra.mxu0 %v692
  %v6215 = vpop.f32.mrf.mxu0
  %v6216 = vadd.f32 0.0, %v6215
  %v6217 = vpop.f32.mrf.mxu0
  %v6218 = vadd.f32 0.0, %v6217
  %6219 = vmatmul.bf16.gmra.mxu0 %v694
  %v6220 = vpop.f32.mrf.mxu0
  %v6221 = vadd.f32 0.0, %v6220
  %v6222 = vpop.f32.mrf.mxu0
  %v6223 = vadd.f32 0.0, %v6222
  %6224 = vmatmul.bf16.gmra.mxu0 %v696
  %v6225 = vpop.f32.mrf.mxu0
  %v6226 = vadd.f32 0.0, %v6225
  %v6227 = vpop.f32.mrf.mxu0
  %v6228 = vadd.f32 0.0, %v6227
  %6229 = vmatmul.bf16.gmra.mxu0 %v698
  %v6230 = vpop.f32.mrf.mxu0
  %v6231 = vadd.f32 0.0, %v6230
  %v6232 = vpop.f32.mrf.mxu0
  %v6233 = vadd.f32 0.0, %v6232
  %6234 = vmatmul.bf16.gmra.mxu0 %v700
  %v6235 = vpop.f32.mrf.mxu0
  %v6236 = vadd.f32 0.0, %v6235
  %v6237 = vpop.f32.mrf.mxu0
  %v6238 = vadd.f32 0.0, %v6237
  %6239 = vmatmul.bf16.gmra.mxu0 %v702
  %v6240 = vpop.f32.mrf.mxu0
  %v6241 = vadd.f32 0.0, %v6240
  %v6242 = vpop.f32.mrf.mxu0
  %v6243 = vadd.f32 0.0, %v6242
  %6244 = vmatmul.bf16.gmra.mxu0 %v704
  %v6245 = vpop.f32.mrf.mxu0
  %v6246 = vadd.f32 0.0, %v6245
  %v6247 = vpop.f32.mrf.mxu0
  %v6248 = vadd.f32 0.0, %v6247
  %6249 = vmatmul.bf16.gmra.mxu0 %v706
  %v6250 = vpop.f32.mrf.mxu0
  %v6251 = vadd.f32 0.0, %v6250
  %v6252 = vpop.f32.mrf.mxu0
  %v6253 = vadd.f32 0.0, %v6252
  %6254 = vmatmul.bf16.gmra.mxu0 %v708
  %v6255 = vpop.f32.mrf.mxu0
  %v6256 = vadd.f32 0.0, %v6255
  %v6257 = vpop.f32.mrf.mxu0
  %v6258 = vadd.f32 0.0, %v6257
  %6259 = vmatmul.bf16.gmra.mxu0 %v710
  %v6260 = vpop.f32.mrf.mxu0
  %v6261 = vadd.f32 0.0, %v6260
  %v6262 = vpop.f32.mrf.mxu0
  %v6263 = vadd.f32 0.0, %v6262
  %6264 = vmatmul.bf16.gmra.mxu0 %v712
  %v6265 = vpop.f32.mrf.mxu0
  %v6266 = vadd.f32 0.0, %v6265
  %v6267 = vpop.f32.mrf.mxu0
  %v6268 = vadd.f32 0.0, %v6267
  %6269 = vmatmul.bf16.gmra.mxu0 %v714
  %v6270 = vpop.f32.mrf.mxu0
  %v6271 = vadd.f32 0.0, %v6270
  %v6272 = vpop.f32.mrf.mxu0
  %v6273 = vadd.f32 0.0, %v6272
  %6274 = vmatmul.bf16.gmra.mxu0 %v716
  %v6275 = vpop.f32.mrf.mxu0
  %v6276 = vadd.f32 0.0, %v6275
  %v6277 = vpop.f32.mrf.mxu0
  %v6278 = vadd.f32 0.0, %v6277
  %6279 = vmatmul.bf16.gmra.mxu0 %v718
  %v6280 = vpop.f32.mrf.mxu0
  %v6281 = vadd.f32 0.0, %v6280
  %v6282 = vpop.f32.mrf.mxu0
  %v6283 = vadd.f32 0.0, %v6282
  %6284 = vmatmul.bf16.gmra.mxu0 %v720
  %v6285 = vpop.f32.mrf.mxu0
  %v6286 = vadd.f32 0.0, %v6285
  %v6287 = vpop.f32.mrf.mxu0
  %v6288 = vadd.f32 0.0, %v6287
  %6289 = vmatmul.bf16.gmra.mxu0 %v722
  %v6290 = vpop.f32.mrf.mxu0
  %v6291 = vadd.f32 0.0, %v6290
  %v6292 = vpop.f32.mrf.mxu0
  %v6293 = vadd.f32 0.0, %v6292
  %6294 = vmatmul.bf16.gmra.mxu0 %v724
  %v6295 = vpop.f32.mrf.mxu0
  %v6296 = vadd.f32 0.0, %v6295
  %v6297 = vpop.f32.mrf.mxu0
  %v6298 = vadd.f32 0.0, %v6297
  %6299 = vmatmul.bf16.gmra.mxu0 %v726
  %v6300 = vpop.f32.mrf.mxu0
  %v6301 = vadd.f32 0.0, %v6300
  %v6302 = vpop.f32.mrf.mxu0
  %v6303 = vadd.f32 0.0, %v6302
  %6304 = vmatmul.bf16.gmra.mxu0 %v728
  %v6305 = vpop.f32.mrf.mxu0
  %v6306 = vadd.f32 0.0, %v6305
  %v6307 = vpop.f32.mrf.mxu0
  %v6308 = vadd.f32 0.0, %v6307
  %6309 = vmatmul.bf16.gmra.mxu0 %v730
  %v6310 = vpop.f32.mrf.mxu0
  %v6311 = vadd.f32 0.0, %v6310
  %v6312 = vpop.f32.mrf.mxu0
  %v6313 = vadd.f32 0.0, %v6312
  %6314 = vmatmul.bf16.gmra.mxu0 %v732
  %v6315 = vpop.f32.mrf.mxu0
  %v6316 = vadd.f32 0.0, %v6315
  %v6317 = vpop.f32.mrf.mxu0
  %v6318 = vadd.f32 0.0, %v6317
  %6319 = vmatmul.bf16.gmra.mxu0 %v734
  %v6320 = vpop.f32.mrf.mxu0
  %v6321 = vadd.f32 0.0, %v6320
  %v6322 = vpop.f32.mrf.mxu0
  %v6323 = vadd.f32 0.0, %v6322
  %6324 = vmatmul.bf16.gmra.mxu0 %v736
  %v6325 = vpop.f32.mrf.mxu0
  %v6326 = vadd.f32 0.0, %v6325
  %v6327 = vpop.f32.mrf.mxu0
  %v6328 = vadd.f32 0.0, %v6327
  %6329 = vmatmul.bf16.gmra.mxu0 %v738
  %v6330 = vpop.f32.mrf.mxu0
  %v6331 = vadd.f32 0.0, %v6330
  %v6332 = vpop.f32.mrf.mxu0
  %v6333 = vadd.f32 0.0, %v6332
  %6334 = vmatmul.bf16.gmra.mxu0 %v740
  %v6335 = vpop.f32.mrf.mxu0
  %v6336 = vadd.f32 0.0, %v6335
  %v6337 = vpop.f32.mrf.mxu0
  %v6338 = vadd.f32 0.0, %v6337
  %6339 = vmatmul.bf16.gmra.mxu0 %v742
  %v6340 = vpop.f32.mrf.mxu0
  %v6341 = vadd.f32 0.0, %v6340
  %v6342 = vpop.f32.mrf.mxu0
  %v6343 = vadd.f32 0.0, %v6342
  %6344 = vmatmul.bf16.gmra.mxu0 %v744
  %v6345 = vpop.f32.mrf.mxu0
  %v6346 = vadd.f32 0.0, %v6345
  %v6347 = vpop.f32.mrf.mxu0
  %v6348 = vadd.f32 0.0, %v6347
  %6349 = vmatmul.bf16.gmra.mxu0 %v746
  %v6350 = vpop.f32.mrf.mxu0
  %v6351 = vadd.f32 0.0, %v6350
  %v6352 = vpop.f32.mrf.mxu0
  %v6353 = vadd.f32 0.0, %v6352
  %6354 = vmatmul.bf16.gmra.mxu0 %v748
  %v6355 = vpop.f32.mrf.mxu0
  %v6356 = vadd.f32 0.0, %v6355
  %v6357 = vpop.f32.mrf.mxu0
  %v6358 = vadd.f32 0.0, %v6357
  %6359 = vmatmul.bf16.gmra.mxu0 %v750
  %v6360 = vpop.f32.mrf.mxu0
  %v6361 = vadd.f32 0.0, %v6360
  %v6362 = vpop.f32.mrf.mxu0
  %v6363 = vadd.f32 0.0, %v6362
  %6364 = vmatmul.bf16.gmra.mxu0 %v752
  %v6365 = vpop.f32.mrf.mxu0
  %v6366 = vadd.f32 0.0, %v6365
  %v6367 = vpop.f32.mrf.mxu0
  %v6368 = vadd.f32 0.0, %v6367
  %6369 = vmatmul.bf16.gmra.mxu0 %v754
  %v6370 = vpop.f32.mrf.mxu0
  %v6371 = vadd.f32 0.0, %v6370
  %v6372 = vpop.f32.mrf.mxu0
  %v6373 = vadd.f32 0.0, %v6372
  %6374 = vmatmul.bf16.gmra.mxu0 %v756
  %v6375 = vpop.f32.mrf.mxu0
  %v6376 = vadd.f32 0.0, %v6375
  %v6377 = vpop.f32.mrf.mxu0
  %v6378 = vadd.f32 0.0, %v6377
  %6379 = vmatmul.bf16.gmra.mxu0 %v758
  %v6380 = vpop.f32.mrf.mxu0
  %v6381 = vadd.f32 0.0, %v6380
  %v6382 = vpop.f32.mrf.mxu0
  %v6383 = vadd.f32 0.0, %v6382
  %6384 = vmatmul.bf16.gmra.mxu0 %v760
  %v6385 = vpop.f32.mrf.mxu0
  %v6386 = vadd.f32 0.0, %v6385
  %v6387 = vpop.f32.mrf.mxu0
  %v6388 = vadd.f32 0.0, %v6387
  %6389 = vmatmul.bf16.gmra.mxu0 %v762
  %v6390 = vpop.f32.mrf.mxu0
  %v6391 = vadd.f32 0.0, %v6390
  %v6392 = vpop.f32.mrf.mxu0
  %v6393 = vadd.f32 0.0, %v6392
  %6394 = vmatmul.bf16.gmra.mxu0 %v764
  %v6395 = vpop.f32.mrf.mxu0
  %v6396 = vadd.f32 0.0, %v6395
  %v6397 = vpop.f32.mrf.mxu0
  %v6398 = vadd.f32 0.0, %v6397
  %6399 = vmatmul.bf16.gmra.mxu0 %v766
  %v6400 = vpop.f32.mrf.mxu0
  %v6401 = vadd.f32 0.0, %v6400
  %v6402 = vpop.f32.mrf.mxu0
  %v6403 = vadd.f32 0.0, %v6402
  %6404 = vmatmul.bf16.gmra.mxu0 %v768
  %v6405 = vpop.f32.mrf.mxu0
  %v6406 = vadd.f32 0.0, %v6405
  %v6407 = vpop.f32.mrf.mxu0
  %v6408 = vadd.f32 0.0, %v6407
  %6409 = vmatmul.bf16.gmra.mxu0 %v770
  %v6410 = vpop.f32.mrf.mxu0
  %v6411 = vadd.f32 0.0, %v6410
  %v6412 = vpop.f32.mrf.mxu0
  %v6413 = vadd.f32 0.0, %v6412
  %6414 = vmatmul.bf16.gmra.mxu0 %v772
  %v6415 = vpop.f32.mrf.mxu0
  %v6416 = vadd.f32 0.0, %v6415
  %v6417 = vpop.f32.mrf.mxu0
  %v6418 = vadd.f32 0.0, %v6417
  %6419 = vmatmul.bf16.gmra.mxu0 %v774
  %v6420 = vpop.f32.mrf.mxu0
  %v6421 = vadd.f32 0.0, %v6420
  %v6422 = vpop.f32.mrf.mxu0
  %v6423 = vadd.f32 0.0, %v6422
  %6424 = vmatmul.bf16.gmra.mxu0 %v776
  %v6425 = vpop.f32.mrf.mxu0
  %v6426 = vadd.f32 0.0, %v6425
  %v6427 = vpop.f32.mrf.mxu0
  %v6428 = vadd.f32 0.0, %v6427
  %6429 = vmatmul.bf16.gmra.mxu0 %v778
  %v6430 = vpop.f32.mrf.mxu0
  %v6431 = vadd.f32 0.0, %v6430
  %v6432 = vpop.f32.mrf.mxu0
  %v6433 = vadd.f32 0.0, %v6432
  %6434 = vmatmul.bf16.gmra.mxu0 %v780
  %v6435 = vpop.f32.mrf.mxu0
  %v6436 = vadd.f32 0.0, %v6435
  %v6437 = vpop.f32.mrf.mxu0
  %v6438 = vadd.f32 0.0, %v6437
  %6439 = vmatmul.bf16.gmra.mxu0 %v782
  %v6440 = vpop.f32.mrf.mxu0
  %v6441 = vadd.f32 0.0, %v6440
  %v6442 = vpop.f32.mrf.mxu0
  %v6443 = vadd.f32 0.0, %v6442
  %6444 = vmatmul.bf16.gmra.mxu0 %v784
  %v6445 = vpop.f32.mrf.mxu0
  %v6446 = vadd.f32 0.0, %v6445
  %v6447 = vpop.f32.mrf.mxu0
  %v6448 = vadd.f32 0.0, %v6447
  %6449 = vmatmul.bf16.gmra.mxu0 %v786
  %v6450 = vpop.f32.mrf.mxu0
  %v6451 = vadd.f32 0.0, %v6450
  %v6452 = vpop.f32.mrf.mxu0
  %v6453 = vadd.f32 0.0, %v6452
  %6454 = vmatmul.bf16.gmra.mxu0 %v788
  %v6455 = vpop.f32.mrf.mxu0
  %v6456 = vadd.f32 0.0, %v6455
  %v6457 = vpop.f32.mrf.mxu0
  %v6458 = vadd.f32 0.0, %v6457
  %6459 = vmatmul.bf16.gmra.mxu0 %v790
  %v6460 = vpop.f32.mrf.mxu0
  %v6461 = vadd.f32 0.0, %v6460
  %v6462 = vpop.f32.mrf.mxu0
  %v6463 = vadd.f32 0.0, %v6462
  %6464 = vmatmul.bf16.gmra.mxu0 %v792
  %v6465 = vpop.f32.mrf.mxu0
  %v6466 = vadd.f32 0.0, %v6465
  %v6467 = vpop.f32.mrf.mxu0
  %v6468 = vadd.f32 0.0, %v6467
  %6469 = vmatmul.bf16.gmra.mxu0 %v794
  %v6470 = vpop.f32.mrf.mxu0
  %v6471 = vadd.f32 0.0, %v6470
  %v6472 = vpop.f32.mrf.mxu0
  %v6473 = vadd.f32 0.0, %v6472
  %6474 = vmatmul.bf16.gmra.mxu0 %v796
  %v6475 = vpop.f32.mrf.mxu0
  %v6476 = vadd.f32 0.0, %v6475
  %v6477 = vpop.f32.mrf.mxu0
  %v6478 = vadd.f32 0.0, %v6477
  %6479 = vmatmul.bf16.gmra.mxu0 %v798
  %v6480 = vpop.f32.mrf.mxu0
  %v6481 = vadd.f32 0.0, %v6480
  %v6482 = vpop.f32.mrf.mxu0
  %v6483 = vadd.f32 0.0, %v6482
  %6484 = vmatmul.bf16.gmra.mxu0 %v800
  %v6485 = vpop.f32.mrf.mxu0
  %v6486 = vadd.f32 0.0, %v6485
  %v6487 = vpop.f32.mrf.mxu0
  %v6488 = vadd.f32 0.0, %v6487
  %6489 = vmatmul.bf16.gmra.mxu0 %v802
  %v6490 = vpop.f32.mrf.mxu0
  %v6491 = vadd.f32 0.0, %v6490
  %v6492 = vpop.f32.mrf.mxu0
  %v6493 = vadd.f32 0.0, %v6492
  %6494 = vmatmul.bf16.gmra.mxu0 %v804
  %v6495 = vpop.f32.mrf.mxu0
  %v6496 = vadd.f32 0.0, %v6495
  %v6497 = vpop.f32.mrf.mxu0
  %v6498 = vadd.f32 0.0, %v6497
  %6499 = vmatmul.bf16.gmra.mxu0 %v806
  %v6500 = vpop.f32.mrf.mxu0
  %v6501 = vadd.f32 0.0, %v6500
  %v6502 = vpop.f32.mrf.mxu0
  %v6503 = vadd.f32 0.0, %v6502
  %6504 = vmatmul.bf16.gmra.mxu0 %v808
  %v6505 = vpop.f32.mrf.mxu0
  %v6506 = vadd.f32 0.0, %v6505
  %v6507 = vpop.f32.mrf.mxu0
  %v6508 = vadd.f32 0.0, %v6507
  %6509 = vmatmul.bf16.gmra.mxu0 %v810
  %v6510 = vpop.f32.mrf.mxu0
  %v6511 = vadd.f32 0.0, %v6510
  %v6512 = vpop.f32.mrf.mxu0
  %v6513 = vadd.f32 0.0, %v6512
  %6514 = vdwg.mxu0
  %6515 = vmatpush.bf16.msra.mxu0 %v1451
  %6516 = vmatpush.bf16.msra.mxu0 %v1443
  %6517 = vmatpush.bf16.msra.mxu0 %v1435
  %6518 = vmatpush.bf16.msra.mxu0 %v1427
  %6519 = vmatpush.bf16.msra.mxu0 %v1419
  %6520 = vmatpush.bf16.msra.mxu0 %v1411
  %6521 = vmatpush.bf16.msra.mxu0 %v1403
  %6522 = vmatpush.bf16.msra.mxu0 %v1395
  %6523 = vmatmul.bf16.gmra.mxu0 %v685
  %v6524 = vpop.f32.mrf.mxu0
  %v6525 = vadd.f32 %v6196, %v6524
  %v6526 = vpop.f32.mrf.mxu0
  %v6527 = vadd.f32 %v6198, %v6526
  %6528 = vmatmul.bf16.gmra.mxu0 %v687
  %v6529 = vpop.f32.mrf.mxu0
  %v6530 = vadd.f32 %v6201, %v6529
  %v6531 = vpop.f32.mrf.mxu0
  %v6532 = vadd.f32 %v6203, %v6531
  %6533 = vmatmul.bf16.gmra.mxu0 %v689
  %v6534 = vpop.f32.mrf.mxu0
  %v6535 = vadd.f32 %v6206, %v6534
  %v6536 = vpop.f32.mrf.mxu0
  %v6537 = vadd.f32 %v6208, %v6536
  %6538 = vmatmul.bf16.gmra.mxu0 %v691
  %v6539 = vpop.f32.mrf.mxu0
  %v6540 = vadd.f32 %v6211, %v6539
  %v6541 = vpop.f32.mrf.mxu0
  %v6542 = vadd.f32 %v6213, %v6541
  %6543 = vmatmul.bf16.gmra.mxu0 %v693
  %v6544 = vpop.f32.mrf.mxu0
  %v6545 = vadd.f32 %v6216, %v6544
  %v6546 = vpop.f32.mrf.mxu0
  %v6547 = vadd.f32 %v6218, %v6546
  %6548 = vmatmul.bf16.gmra.mxu0 %v695
  %v6549 = vpop.f32.mrf.mxu0
  %v6550 = vadd.f32 %v6221, %v6549
  %v6551 = vpop.f32.mrf.mxu0
  %v6552 = vadd.f32 %v6223, %v6551
  %6553 = vmatmul.bf16.gmra.mxu0 %v697
  %v6554 = vpop.f32.mrf.mxu0
  %v6555 = vadd.f32 %v6226, %v6554
  %v6556 = vpop.f32.mrf.mxu0
  %v6557 = vadd.f32 %v6228, %v6556
  %6558 = vmatmul.bf16.gmra.mxu0 %v699
  %v6559 = vpop.f32.mrf.mxu0
  %v6560 = vadd.f32 %v6231, %v6559
  %v6561 = vpop.f32.mrf.mxu0
  %v6562 = vadd.f32 %v6233, %v6561
  %6563 = vmatmul.bf16.gmra.mxu0 %v701
  %v6564 = vpop.f32.mrf.mxu0
  %v6565 = vadd.f32 %v6236, %v6564
  %v6566 = vpop.f32.mrf.mxu0
  %v6567 = vadd.f32 %v6238, %v6566
  %6568 = vmatmul.bf16.gmra.mxu0 %v703
  %v6569 = vpop.f32.mrf.mxu0
  %v6570 = vadd.f32 %v6241, %v6569
  %v6571 = vpop.f32.mrf.mxu0
  %v6572 = vadd.f32 %v6243, %v6571
  %6573 = vmatmul.bf16.gmra.mxu0 %v705
  %v6574 = vpop.f32.mrf.mxu0
  %v6575 = vadd.f32 %v6246, %v6574
  %v6576 = vpop.f32.mrf.mxu0
  %v6577 = vadd.f32 %v6248, %v6576
  %6578 = vmatmul.bf16.gmra.mxu0 %v707
  %v6579 = vpop.f32.mrf.mxu0
  %v6580 = vadd.f32 %v6251, %v6579
  %v6581 = vpop.f32.mrf.mxu0
  %v6582 = vadd.f32 %v6253, %v6581
  %6583 = vmatmul.bf16.gmra.mxu0 %v709
  %v6584 = vpop.f32.mrf.mxu0
  %v6585 = vadd.f32 %v6256, %v6584
  %v6586 = vpop.f32.mrf.mxu0
  %v6587 = vadd.f32 %v6258, %v6586
  %6588 = vmatmul.bf16.gmra.mxu0 %v711
  %v6589 = vpop.f32.mrf.mxu0
  %v6590 = vadd.f32 %v6261, %v6589
  %v6591 = vpop.f32.mrf.mxu0
  %v6592 = vadd.f32 %v6263, %v6591
  %6593 = vmatmul.bf16.gmra.mxu0 %v713
  %v6594 = vpop.f32.mrf.mxu0
  %v6595 = vadd.f32 %v6266, %v6594
  %v6596 = vpop.f32.mrf.mxu0
  %v6597 = vadd.f32 %v6268, %v6596
  %6598 = vmatmul.bf16.gmra.mxu0 %v715
  %v6599 = vpop.f32.mrf.mxu0
  %v6600 = vadd.f32 %v6271, %v6599
  %v6601 = vpop.f32.mrf.mxu0
  %v6602 = vadd.f32 %v6273, %v6601
  %6603 = vmatmul.bf16.gmra.mxu0 %v717
  %v6604 = vpop.f32.mrf.mxu0
  %v6605 = vadd.f32 %v6276, %v6604
  %v6606 = vpop.f32.mrf.mxu0
  %v6607 = vadd.f32 %v6278, %v6606
  %6608 = vmatmul.bf16.gmra.mxu0 %v719
  %v6609 = vpop.f32.mrf.mxu0
  %v6610 = vadd.f32 %v6281, %v6609
  %v6611 = vpop.f32.mrf.mxu0
  %v6612 = vadd.f32 %v6283, %v6611
  %6613 = vmatmul.bf16.gmra.mxu0 %v721
  %v6614 = vpop.f32.mrf.mxu0
  %v6615 = vadd.f32 %v6286, %v6614
  %v6616 = vpop.f32.mrf.mxu0
  %v6617 = vadd.f32 %v6288, %v6616
  %6618 = vmatmul.bf16.gmra.mxu0 %v723
  %v6619 = vpop.f32.mrf.mxu0
  %v6620 = vadd.f32 %v6291, %v6619
  %v6621 = vpop.f32.mrf.mxu0
  %v6622 = vadd.f32 %v6293, %v6621
  %6623 = vmatmul.bf16.gmra.mxu0 %v725
  %v6624 = vpop.f32.mrf.mxu0
  %v6625 = vadd.f32 %v6296, %v6624
  %v6626 = vpop.f32.mrf.mxu0
  %v6627 = vadd.f32 %v6298, %v6626
  %6628 = vmatmul.bf16.gmra.mxu0 %v727
  %v6629 = vpop.f32.mrf.mxu0
  %v6630 = vadd.f32 %v6301, %v6629
  %v6631 = vpop.f32.mrf.mxu0
  %v6632 = vadd.f32 %v6303, %v6631
  %6633 = vmatmul.bf16.gmra.mxu0 %v729
  %v6634 = vpop.f32.mrf.mxu0
  %v6635 = vadd.f32 %v6306, %v6634
  %v6636 = vpop.f32.mrf.mxu0
  %v6637 = vadd.f32 %v6308, %v6636
  %6638 = vmatmul.bf16.gmra.mxu0 %v731
  %v6639 = vpop.f32.mrf.mxu0
  %v6640 = vadd.f32 %v6311, %v6639
  %v6641 = vpop.f32.mrf.mxu0
  %v6642 = vadd.f32 %v6313, %v6641
  %6643 = vmatmul.bf16.gmra.mxu0 %v733
  %v6644 = vpop.f32.mrf.mxu0
  %v6645 = vadd.f32 %v6316, %v6644
  %v6646 = vpop.f32.mrf.mxu0
  %v6647 = vadd.f32 %v6318, %v6646
  %6648 = vmatmul.bf16.gmra.mxu0 %v735
  %v6649 = vpop.f32.mrf.mxu0
  %v6650 = vadd.f32 %v6321, %v6649
  %v6651 = vpop.f32.mrf.mxu0
  %v6652 = vadd.f32 %v6323, %v6651
  %6653 = vmatmul.bf16.gmra.mxu0 %v737
  %v6654 = vpop.f32.mrf.mxu0
  %v6655 = vadd.f32 %v6326, %v6654
  %v6656 = vpop.f32.mrf.mxu0
  %v6657 = vadd.f32 %v6328, %v6656
  %6658 = vmatmul.bf16.gmra.mxu0 %v739
  %v6659 = vpop.f32.mrf.mxu0
  %v6660 = vadd.f32 %v6331, %v6659
  %v6661 = vpop.f32.mrf.mxu0
  %v6662 = vadd.f32 %v6333, %v6661
  %6663 = vmatmul.bf16.gmra.mxu0 %v741
  %v6664 = vpop.f32.mrf.mxu0
  %v6665 = vadd.f32 %v6336, %v6664
  %v6666 = vpop.f32.mrf.mxu0
  %v6667 = vadd.f32 %v6338, %v6666
  %6668 = vmatmul.bf16.gmra.mxu0 %v743
  %v6669 = vpop.f32.mrf.mxu0
  %v6670 = vadd.f32 %v6341, %v6669
  %v6671 = vpop.f32.mrf.mxu0
  %v6672 = vadd.f32 %v6343, %v6671
  %6673 = vmatmul.bf16.gmra.mxu0 %v745
  %v6674 = vpop.f32.mrf.mxu0
  %v6675 = vadd.f32 %v6346, %v6674
  %v6676 = vpop.f32.mrf.mxu0
  %v6677 = vadd.f32 %v6348, %v6676
  %6678 = vmatmul.bf16.gmra.mxu0 %v747
  %v6679 = vpop.f32.mrf.mxu0
  %v6680 = vadd.f32 %v6351, %v6679
  %v6681 = vpop.f32.mrf.mxu0
  %v6682 = vadd.f32 %v6353, %v6681
  %6683 = vmatmul.bf16.gmra.mxu0 %v749
  %v6684 = vpop.f32.mrf.mxu0
  %v6685 = vadd.f32 %v6356, %v6684
  %v6686 = vpop.f32.mrf.mxu0
  %v6687 = vadd.f32 %v6358, %v6686
  %6688 = vmatmul.bf16.gmra.mxu0 %v751
  %v6689 = vpop.f32.mrf.mxu0
  %v6690 = vadd.f32 %v6361, %v6689
  %v6691 = vpop.f32.mrf.mxu0
  %v6692 = vadd.f32 %v6363, %v6691
  %6693 = vmatmul.bf16.gmra.mxu0 %v753
  %v6694 = vpop.f32.mrf.mxu0
  %v6695 = vadd.f32 %v6366, %v6694
  %v6696 = vpop.f32.mrf.mxu0
  %v6697 = vadd.f32 %v6368, %v6696
  %6698 = vmatmul.bf16.gmra.mxu0 %v755
  %v6699 = vpop.f32.mrf.mxu0
  %v6700 = vadd.f32 %v6371, %v6699
  %v6701 = vpop.f32.mrf.mxu0
  %v6702 = vadd.f32 %v6373, %v6701
  %6703 = vmatmul.bf16.gmra.mxu0 %v757
  %v6704 = vpop.f32.mrf.mxu0
  %v6705 = vadd.f32 %v6376, %v6704
  %v6706 = vpop.f32.mrf.mxu0
  %v6707 = vadd.f32 %v6378, %v6706
  %6708 = vmatmul.bf16.gmra.mxu0 %v759
  %v6709 = vpop.f32.mrf.mxu0
  %v6710 = vadd.f32 %v6381, %v6709
  %v6711 = vpop.f32.mrf.mxu0
  %v6712 = vadd.f32 %v6383, %v6711
  %6713 = vmatmul.bf16.gmra.mxu0 %v761
  %v6714 = vpop.f32.mrf.mxu0
  %v6715 = vadd.f32 %v6386, %v6714
  %v6716 = vpop.f32.mrf.mxu0
  %v6717 = vadd.f32 %v6388, %v6716
  %6718 = vmatmul.bf16.gmra.mxu0 %v763
  %v6719 = vpop.f32.mrf.mxu0
  %v6720 = vadd.f32 %v6391, %v6719
  %v6721 = vpop.f32.mrf.mxu0
  %v6722 = vadd.f32 %v6393, %v6721
  %6723 = vmatmul.bf16.gmra.mxu0 %v765
  %v6724 = vpop.f32.mrf.mxu0
  %v6725 = vadd.f32 %v6396, %v6724
  %v6726 = vpop.f32.mrf.mxu0
  %v6727 = vadd.f32 %v6398, %v6726
  %6728 = vmatmul.bf16.gmra.mxu0 %v767
  %v6729 = vpop.f32.mrf.mxu0
  %v6730 = vadd.f32 %v6401, %v6729
  %v6731 = vpop.f32.mrf.mxu0
  %v6732 = vadd.f32 %v6403, %v6731
  %6733 = vmatmul.bf16.gmra.mxu0 %v769
  %v6734 = vpop.f32.mrf.mxu0
  %v6735 = vadd.f32 %v6406, %v6734
  %v6736 = vpop.f32.mrf.mxu0
  %v6737 = vadd.f32 %v6408, %v6736
  %6738 = vmatmul.bf16.gmra.mxu0 %v771
  %v6739 = vpop.f32.mrf.mxu0
  %v6740 = vadd.f32 %v6411, %v6739
  %v6741 = vpop.f32.mrf.mxu0
  %v6742 = vadd.f32 %v6413, %v6741
  %6743 = vmatmul.bf16.gmra.mxu0 %v773
  %v6744 = vpop.f32.mrf.mxu0
  %v6745 = vadd.f32 %v6416, %v6744
  %v6746 = vpop.f32.mrf.mxu0
  %v6747 = vadd.f32 %v6418, %v6746
  %6748 = vmatmul.bf16.gmra.mxu0 %v775
  %v6749 = vpop.f32.mrf.mxu0
  %v6750 = vadd.f32 %v6421, %v6749
  %v6751 = vpop.f32.mrf.mxu0
  %v6752 = vadd.f32 %v6423, %v6751
  %6753 = vmatmul.bf16.gmra.mxu0 %v777
  %v6754 = vpop.f32.mrf.mxu0
  %v6755 = vadd.f32 %v6426, %v6754
  %v6756 = vpop.f32.mrf.mxu0
  %v6757 = vadd.f32 %v6428, %v6756
  %6758 = vmatmul.bf16.gmra.mxu0 %v779
  %v6759 = vpop.f32.mrf.mxu0
  %v6760 = vadd.f32 %v6431, %v6759
  %v6761 = vpop.f32.mrf.mxu0
  %v6762 = vadd.f32 %v6433, %v6761
  %6763 = vmatmul.bf16.gmra.mxu0 %v781
  %v6764 = vpop.f32.mrf.mxu0
  %v6765 = vadd.f32 %v6436, %v6764
  %v6766 = vpop.f32.mrf.mxu0
  %v6767 = vadd.f32 %v6438, %v6766
  %6768 = vmatmul.bf16.gmra.mxu0 %v783
  %v6769 = vpop.f32.mrf.mxu0
  %v6770 = vadd.f32 %v6441, %v6769
  %v6771 = vpop.f32.mrf.mxu0
  %v6772 = vadd.f32 %v6443, %v6771
  %6773 = vmatmul.bf16.gmra.mxu0 %v785
  %v6774 = vpop.f32.mrf.mxu0
  %v6775 = vadd.f32 %v6446, %v6774
  %v6776 = vpop.f32.mrf.mxu0
  %v6777 = vadd.f32 %v6448, %v6776
  %6778 = vmatmul.bf16.gmra.mxu0 %v787
  %v6779 = vpop.f32.mrf.mxu0
  %v6780 = vadd.f32 %v6451, %v6779
  %v6781 = vpop.f32.mrf.mxu0
  %v6782 = vadd.f32 %v6453, %v6781
  %6783 = vmatmul.bf16.gmra.mxu0 %v789
  %v6784 = vpop.f32.mrf.mxu0
  %v6785 = vadd.f32 %v6456, %v6784
  %v6786 = vpop.f32.mrf.mxu0
  %v6787 = vadd.f32 %v6458, %v6786
  %6788 = vmatmul.bf16.gmra.mxu0 %v791
  %v6789 = vpop.f32.mrf.mxu0
  %v6790 = vadd.f32 %v6461, %v6789
  %v6791 = vpop.f32.mrf.mxu0
  %v6792 = vadd.f32 %v6463, %v6791
  %6793 = vmatmul.bf16.gmra.mxu0 %v793
  %v6794 = vpop.f32.mrf.mxu0
  %v6795 = vadd.f32 %v6466, %v6794
  %v6796 = vpop.f32.mrf.mxu0
  %v6797 = vadd.f32 %v6468, %v6796
  %6798 = vmatmul.bf16.gmra.mxu0 %v795
  %v6799 = vpop.f32.mrf.mxu0
  %v6800 = vadd.f32 %v6471, %v6799
  %v6801 = vpop.f32.mrf.mxu0
  %v6802 = vadd.f32 %v6473, %v6801
  %6803 = vmatmul.bf16.gmra.mxu0 %v797
  %v6804 = vpop.f32.mrf.mxu0
  %v6805 = vadd.f32 %v6476, %v6804
  %v6806 = vpop.f32.mrf.mxu0
  %v6807 = vadd.f32 %v6478, %v6806
  %6808 = vmatmul.bf16.gmra.mxu0 %v799
  %v6809 = vpop.f32.mrf.mxu0
  %v6810 = vadd.f32 %v6481, %v6809
  %v6811 = vpop.f32.mrf.mxu0
  %v6812 = vadd.f32 %v6483, %v6811
  %6813 = vmatmul.bf16.gmra.mxu0 %v801
  %v6814 = vpop.f32.mrf.mxu0
  %v6815 = vadd.f32 %v6486, %v6814
  %v6816 = vpop.f32.mrf.mxu0
  %v6817 = vadd.f32 %v6488, %v6816
  %6818 = vmatmul.bf16.gmra.mxu0 %v803
  %v6819 = vpop.f32.mrf.mxu0
  %v6820 = vadd.f32 %v6491, %v6819
  %v6821 = vpop.f32.mrf.mxu0
  %v6822 = vadd.f32 %v6493, %v6821
  %6823 = vmatmul.bf16.gmra.mxu0 %v805
  %v6824 = vpop.f32.mrf.mxu0
  %v6825 = vadd.f32 %v6496, %v6824
  %v6826 = vpop.f32.mrf.mxu0
  %v6827 = vadd.f32 %v6498, %v6826
  %6828 = vmatmul.bf16.gmra.mxu0 %v807
  %v6829 = vpop.f32.mrf.mxu0
  %v6830 = vadd.f32 %v6501, %v6829
  %v6831 = vpop.f32.mrf.mxu0
  %v6832 = vadd.f32 %v6503, %v6831
  %6833 = vmatmul.bf16.gmra.mxu0 %v809
  %v6834 = vpop.f32.mrf.mxu0
  %v6835 = vadd.f32 %v6506, %v6834
  %v6836 = vpop.f32.mrf.mxu0
  %v6837 = vadd.f32 %v6508, %v6836
  %6838 = vmatmul.bf16.gmra.mxu0 %v811
  %v6839 = vpop.f32.mrf.mxu0
  %v6840 = vadd.f32 %v6511, %v6839
  %v6841 = vpop.f32.mrf.mxu0
  %v6842 = vadd.f32 %v6513, %v6841
  %6843 = vdwg.mxu0
  %v6844 = vld [vmem:[%s2] sm:$0xff]
  %v6846 = vperm.slane %v6844, 0
  %v6847 = vperm.slane %v6844, 1
  %v6848 = vperm.slane %v6844, 2
  %v6849 = vperm.slane %v6844, 3
  %v6850 = vperm.slane %v6844, 4
  %v6851 = vperm.slane %v6844, 5
  %v6852 = vperm.slane %v6844, 6
  %v6853 = vperm.slane %v6844, 7
  %v6862 = vmul.f32 %v1919, %v6846
  %v6863 = vmul.f32 %v2577, %v6847
  %v6864 = vmul.f32 %v3235, %v6848
  %v6865 = vmul.f32 %v3893, %v6849
  %v6866 = vmul.f32 %v4551, %v6850
  %v6867 = vmul.f32 %v5209, %v6851
  %v6868 = vmul.f32 %v5867, %v6852
  %v6869 = vmul.f32 %v6525, %v6853
  %v6870 = vmul.f32 %v1921, %v6846
  %v6871 = vmul.f32 %v2579, %v6847
  %v6872 = vmul.f32 %v3237, %v6848
  %v6873 = vmul.f32 %v3895, %v6849
  %v6874 = vmul.f32 %v4553, %v6850
  %v6875 = vmul.f32 %v5211, %v6851
  %v6876 = vmul.f32 %v5869, %v6852
  %v6877 = vmul.f32 %v6527, %v6853
  %v6878 = vmul.f32 %v1924, %v6846
  %v6879 = vmul.f32 %v2582, %v6847
  %v6880 = vmul.f32 %v3240, %v6848
  %v6881 = vmul.f32 %v3898, %v6849
  %v6882 = vmul.f32 %v4556, %v6850
  %v6883 = vmul.f32 %v5214, %v6851
  %v6884 = vmul.f32 %v5872, %v6852
  %v6885 = vmul.f32 %v6530, %v6853
  %v6886 = vmul.f32 %v1926, %v6846
  %v6887 = vmul.f32 %v2584, %v6847
  %v6888 = vmul.f32 %v3242, %v6848
  %v6889 = vmul.f32 %v3900, %v6849
  %v6890 = vmul.f32 %v4558, %v6850
  %v6891 = vmul.f32 %v5216, %v6851
  %v6892 = vmul.f32 %v5874, %v6852
  %v6893 = vmul.f32 %v6532, %v6853
  %v6894 = vmul.f32 %v1929, %v6846
  %v6895 = vmul.f32 %v2587, %v6847
  %v6896 = vmul.f32 %v3245, %v6848
  %v6897 = vmul.f32 %v3903, %v6849
  %v6898 = vmul.f32 %v4561, %v6850
  %v6899 = vmul.f32 %v5219, %v6851
  %v6900 = vmul.f32 %v5877, %v6852
  %v6901 = vmul.f32 %v6535, %v6853
  %v6902 = vmul.f32 %v1931, %v6846
  %v6903 = vmul.f32 %v2589, %v6847
  %v6904 = vmul.f32 %v3247, %v6848
  %v6905 = vmul.f32 %v3905, %v6849
  %v6906 = vmul.f32 %v4563, %v6850
  %v6907 = vmul.f32 %v5221, %v6851
  %v6908 = vmul.f32 %v5879, %v6852
  %v6909 = vmul.f32 %v6537, %v6853
  %v6910 = vmul.f32 %v1934, %v6846
  %v6911 = vmul.f32 %v2592, %v6847
  %v6912 = vmul.f32 %v3250, %v6848
  %v6913 = vmul.f32 %v3908, %v6849
  %v6914 = vmul.f32 %v4566, %v6850
  %v6915 = vmul.f32 %v5224, %v6851
  %v6916 = vmul.f32 %v5882, %v6852
  %v6917 = vmul.f32 %v6540, %v6853
  %v6918 = vmul.f32 %v1936, %v6846
  %v6919 = vmul.f32 %v2594, %v6847
  %v6920 = vmul.f32 %v3252, %v6848
  %v6921 = vmul.f32 %v3910, %v6849
  %v6922 = vmul.f32 %v4568, %v6850
  %v6923 = vmul.f32 %v5226, %v6851
  %v6924 = vmul.f32 %v5884, %v6852
  %v6925 = vmul.f32 %v6542, %v6853
  %v6926 = vmul.f32 %v1939, %v6846
  %v6927 = vmul.f32 %v2597, %v6847
  %v6928 = vmul.f32 %v3255, %v6848
  %v6929 = vmul.f32 %v3913, %v6849
  %v6930 = vmul.f32 %v4571, %v6850
  %v6931 = vmul.f32 %v5229, %v6851
  %v6932 = vmul.f32 %v5887, %v6852
  %v6933 = vmul.f32 %v6545, %v6853
  %v6934 = vmul.f32 %v1941, %v6846
  %v6935 = vmul.f32 %v2599, %v6847
  %v6936 = vmul.f32 %v3257, %v6848
  %v6937 = vmul.f32 %v3915, %v6849
  %v6938 = vmul.f32 %v4573, %v6850
  %v6939 = vmul.f32 %v5231, %v6851
  %v6940 = vmul.f32 %v5889, %v6852
  %v6941 = vmul.f32 %v6547, %v6853
  %v6942 = vmul.f32 %v1944, %v6846
  %v6943 = vmul.f32 %v2602, %v6847
  %v6944 = vmul.f32 %v3260, %v6848
  %v6945 = vmul.f32 %v3918, %v6849
  %v6946 = vmul.f32 %v4576, %v6850
  %v6947 = vmul.f32 %v5234, %v6851
  %v6948 = vmul.f32 %v5892, %v6852
  %v6949 = vmul.f32 %v6550, %v6853
  %v6950 = vmul.f32 %v1946, %v6846
  %v6951 = vmul.f32 %v2604, %v6847
  %v6952 = vmul.f32 %v3262, %v6848
  %v6953 = vmul.f32 %v3920, %v6849
  %v6954 = vmul.f32 %v4578, %v6850
  %v6955 = vmul.f32 %v5236, %v6851
  %v6956 = vmul.f32 %v5894, %v6852
  %v6957 = vmul.f32 %v6552, %v6853
  %v6958 = vmul.f32 %v1949, %v6846
  %v6959 = vmul.f32 %v2607, %v6847
  %v6960 = vmul.f32 %v3265, %v6848
  %v6961 = vmul.f32 %v3923, %v6849
  %v6962 = vmul.f32 %v4581, %v6850
  %v6963 = vmul.f32 %v5239, %v6851
  %v6964 = vmul.f32 %v5897, %v6852
  %v6965 = vmul.f32 %v6555, %v6853
  %v6966 = vmul.f32 %v1951, %v6846
  %v6967 = vmul.f32 %v2609, %v6847
  %v6968 = vmul.f32 %v3267, %v6848
  %v6969 = vmul.f32 %v3925, %v6849
  %v6970 = vmul.f32 %v4583, %v6850
  %v6971 = vmul.f32 %v5241, %v6851
  %v6972 = vmul.f32 %v5899, %v6852
  %v6973 = vmul.f32 %v6557, %v6853
  %v6974 = vmul.f32 %v1954, %v6846
  %v6975 = vmul.f32 %v2612, %v6847
  %v6976 = vmul.f32 %v3270, %v6848
  %v6977 = vmul.f32 %v3928, %v6849
  %v6978 = vmul.f32 %v4586, %v6850
  %v6979 = vmul.f32 %v5244, %v6851
  %v6980 = vmul.f32 %v5902, %v6852
  %v6981 = vmul.f32 %v6560, %v6853
  %v6982 = vmul.f32 %v1956, %v6846
  %v6983 = vmul.f32 %v2614, %v6847
  %v6984 = vmul.f32 %v3272, %v6848
  %v6985 = vmul.f32 %v3930, %v6849
  %v6986 = vmul.f32 %v4588, %v6850
  %v6987 = vmul.f32 %v5246, %v6851
  %v6988 = vmul.f32 %v5904, %v6852
  %v6989 = vmul.f32 %v6562, %v6853
  %v6990 = vmul.f32 %v1959, %v6846
  %v6991 = vmul.f32 %v2617, %v6847
  %v6992 = vmul.f32 %v3275, %v6848
  %v6993 = vmul.f32 %v3933, %v6849
  %v6994 = vmul.f32 %v4591, %v6850
  %v6995 = vmul.f32 %v5249, %v6851
  %v6996 = vmul.f32 %v5907, %v6852
  %v6997 = vmul.f32 %v6565, %v6853
  %v6998 = vmul.f32 %v1961, %v6846
  %v6999 = vmul.f32 %v2619, %v6847
  %v7000 = vmul.f32 %v3277, %v6848
  %v7001 = vmul.f32 %v3935, %v6849
  %v7002 = vmul.f32 %v4593, %v6850
  %v7003 = vmul.f32 %v5251, %v6851
  %v7004 = vmul.f32 %v5909, %v6852
  %v7005 = vmul.f32 %v6567, %v6853
  %v7006 = vmul.f32 %v1964, %v6846
  %v7007 = vmul.f32 %v2622, %v6847
  %v7008 = vmul.f32 %v3280, %v6848
  %v7009 = vmul.f32 %v3938, %v6849
  %v7010 = vmul.f32 %v4596, %v6850
  %v7011 = vmul.f32 %v5254, %v6851
  %v7012 = vmul.f32 %v5912, %v6852
  %v7013 = vmul.f32 %v6570, %v6853
  %v7014 = vmul.f32 %v1966, %v6846
  %v7015 = vmul.f32 %v2624, %v6847
  %v7016 = vmul.f32 %v3282, %v6848
  %v7017 = vmul.f32 %v3940, %v6849
  %v7018 = vmul.f32 %v4598, %v6850
  %v7019 = vmul.f32 %v5256, %v6851
  %v7020 = vmul.f32 %v5914, %v6852
  %v7021 = vmul.f32 %v6572, %v6853
  %v7022 = vmul.f32 %v1969, %v6846
  %v7023 = vmul.f32 %v2627, %v6847
  %v7024 = vmul.f32 %v3285, %v6848
  %v7025 = vmul.f32 %v3943, %v6849
  %v7026 = vmul.f32 %v4601, %v6850
  %v7027 = vmul.f32 %v5259, %v6851
  %v7028 = vmul.f32 %v5917, %v6852
  %v7029 = vmul.f32 %v6575, %v6853
  %v7030 = vmul.f32 %v1971, %v6846
  %v7031 = vmul.f32 %v2629, %v6847
  %v7032 = vmul.f32 %v3287, %v6848
  %v7033 = vmul.f32 %v3945, %v6849
  %v7034 = vmul.f32 %v4603, %v6850
  %v7035 = vmul.f32 %v5261, %v6851
  %v7036 = vmul.f32 %v5919, %v6852
  %v7037 = vmul.f32 %v6577, %v6853
  %v7038 = vmul.f32 %v1974, %v6846
  %v7039 = vmul.f32 %v2632, %v6847
  %v7040 = vmul.f32 %v3290, %v6848
  %v7041 = vmul.f32 %v3948, %v6849
  %v7042 = vmul.f32 %v4606, %v6850
  %v7043 = vmul.f32 %v5264, %v6851
  %v7044 = vmul.f32 %v5922, %v6852
  %v7045 = vmul.f32 %v6580, %v6853
  %v7046 = vmul.f32 %v1976, %v6846
  %v7047 = vmul.f32 %v2634, %v6847
  %v7048 = vmul.f32 %v3292, %v6848
  %v7049 = vmul.f32 %v3950, %v6849
  %v7050 = vmul.f32 %v4608, %v6850
  %v7051 = vmul.f32 %v5266, %v6851
  %v7052 = vmul.f32 %v5924, %v6852
  %v7053 = vmul.f32 %v6582, %v6853
  %v7054 = vmul.f32 %v1979, %v6846
  %v7055 = vmul.f32 %v2637, %v6847
  %v7056 = vmul.f32 %v3295, %v6848
  %v7057 = vmul.f32 %v3953, %v6849
  %v7058 = vmul.f32 %v4611, %v6850
  %v7059 = vmul.f32 %v5269, %v6851
  %v7060 = vmul.f32 %v5927, %v6852
  %v7061 = vmul.f32 %v6585, %v6853
  %v7062 = vmul.f32 %v1981, %v6846
  %v7063 = vmul.f32 %v2639, %v6847
  %v7064 = vmul.f32 %v3297, %v6848
  %v7065 = vmul.f32 %v3955, %v6849
  %v7066 = vmul.f32 %v4613, %v6850
  %v7067 = vmul.f32 %v5271, %v6851
  %v7068 = vmul.f32 %v5929, %v6852
  %v7069 = vmul.f32 %v6587, %v6853
  %v7070 = vmul.f32 %v1984, %v6846
  %v7071 = vmul.f32 %v2642, %v6847
  %v7072 = vmul.f32 %v3300, %v6848
  %v7073 = vmul.f32 %v3958, %v6849
  %v7074 = vmul.f32 %v4616, %v6850
  %v7075 = vmul.f32 %v5274, %v6851
  %v7076 = vmul.f32 %v5932, %v6852
  %v7077 = vmul.f32 %v6590, %v6853
  %v7078 = vmul.f32 %v1986, %v6846
  %v7079 = vmul.f32 %v2644, %v6847
  %v7080 = vmul.f32 %v3302, %v6848
  %v7081 = vmul.f32 %v3960, %v6849
  %v7082 = vmul.f32 %v4618, %v6850
  %v7083 = vmul.f32 %v5276, %v6851
  %v7084 = vmul.f32 %v5934, %v6852
  %v7085 = vmul.f32 %v6592, %v6853
  %v7086 = vmul.f32 %v1989, %v6846
  %v7087 = vmul.f32 %v2647, %v6847
  %v7088 = vmul.f32 %v3305, %v6848
  %v7089 = vmul.f32 %v3963, %v6849
  %v7090 = vmul.f32 %v4621, %v6850
  %v7091 = vmul.f32 %v5279, %v6851
  %v7092 = vmul.f32 %v5937, %v6852
  %v7093 = vmul.f32 %v6595, %v6853
  %v7094 = vmul.f32 %v1991, %v6846
  %v7095 = vmul.f32 %v2649, %v6847
  %v7096 = vmul.f32 %v3307, %v6848
  %v7097 = vmul.f32 %v3965, %v6849
  %v7098 = vmul.f32 %v4623, %v6850
  %v7099 = vmul.f32 %v5281, %v6851
  %v7100 = vmul.f32 %v5939, %v6852
  %v7101 = vmul.f32 %v6597, %v6853
  %v7102 = vmul.f32 %v1994, %v6846
  %v7103 = vmul.f32 %v2652, %v6847
  %v7104 = vmul.f32 %v3310, %v6848
  %v7105 = vmul.f32 %v3968, %v6849
  %v7106 = vmul.f32 %v4626, %v6850
  %v7107 = vmul.f32 %v5284, %v6851
  %v7108 = vmul.f32 %v5942, %v6852
  %v7109 = vmul.f32 %v6600, %v6853
  %v7110 = vmul.f32 %v1996, %v6846
  %v7111 = vmul.f32 %v2654, %v6847
  %v7112 = vmul.f32 %v3312, %v6848
  %v7113 = vmul.f32 %v3970, %v6849
  %v7114 = vmul.f32 %v4628, %v6850
  %v7115 = vmul.f32 %v5286, %v6851
  %v7116 = vmul.f32 %v5944, %v6852
  %v7117 = vmul.f32 %v6602, %v6853
  %v7118 = vmul.f32 %v1999, %v6846
  %v7119 = vmul.f32 %v2657, %v6847
  %v7120 = vmul.f32 %v3315, %v6848
  %v7121 = vmul.f32 %v3973, %v6849
  %v7122 = vmul.f32 %v4631, %v6850
  %v7123 = vmul.f32 %v5289, %v6851
  %v7124 = vmul.f32 %v5947, %v6852
  %v7125 = vmul.f32 %v6605, %v6853
  %v7126 = vmul.f32 %v2001, %v6846
  %v7127 = vmul.f32 %v2659, %v6847
  %v7128 = vmul.f32 %v3317, %v6848
  %v7129 = vmul.f32 %v3975, %v6849
  %v7130 = vmul.f32 %v4633, %v6850
  %v7131 = vmul.f32 %v5291, %v6851
  %v7132 = vmul.f32 %v5949, %v6852
  %v7133 = vmul.f32 %v6607, %v6853
  %v7134 = vmul.f32 %v2004, %v6846
  %v7135 = vmul.f32 %v2662, %v6847
  %v7136 = vmul.f32 %v3320, %v6848
  %v7137 = vmul.f32 %v3978, %v6849
  %v7138 = vmul.f32 %v4636, %v6850
  %v7139 = vmul.f32 %v5294, %v6851
  %v7140 = vmul.f32 %v5952, %v6852
  %v7141 = vmul.f32 %v6610, %v6853
  %v7142 = vmul.f32 %v2006, %v6846
  %v7143 = vmul.f32 %v2664, %v6847
  %v7144 = vmul.f32 %v3322, %v6848
  %v7145 = vmul.f32 %v3980, %v6849
  %v7146 = vmul.f32 %v4638, %v6850
  %v7147 = vmul.f32 %v5296, %v6851
  %v7148 = vmul.f32 %v5954, %v6852
  %v7149 = vmul.f32 %v6612, %v6853
  %v7150 = vmul.f32 %v2009, %v6846
  %v7151 = vmul.f32 %v2667, %v6847
  %v7152 = vmul.f32 %v3325, %v6848
  %v7153 = vmul.f32 %v3983, %v6849
  %v7154 = vmul.f32 %v4641, %v6850
  %v7155 = vmul.f32 %v5299, %v6851
  %v7156 = vmul.f32 %v5957, %v6852
  %v7157 = vmul.f32 %v6615, %v6853
  %v7158 = vmul.f32 %v2011, %v6846
  %v7159 = vmul.f32 %v2669, %v6847
  %v7160 = vmul.f32 %v3327, %v6848
  %v7161 = vmul.f32 %v3985, %v6849
  %v7162 = vmul.f32 %v4643, %v6850
  %v7163 = vmul.f32 %v5301, %v6851
  %v7164 = vmul.f32 %v5959, %v6852
  %v7165 = vmul.f32 %v6617, %v6853
  %v7166 = vmul.f32 %v2014, %v6846
  %v7167 = vmul.f32 %v2672, %v6847
  %v7168 = vmul.f32 %v3330, %v6848
  %v7169 = vmul.f32 %v3988, %v6849
  %v7170 = vmul.f32 %v4646, %v6850
  %v7171 = vmul.f32 %v5304, %v6851
  %v7172 = vmul.f32 %v5962, %v6852
  %v7173 = vmul.f32 %v6620, %v6853
  %v7174 = vmul.f32 %v2016, %v6846
  %v7175 = vmul.f32 %v2674, %v6847
  %v7176 = vmul.f32 %v3332, %v6848
  %v7177 = vmul.f32 %v3990, %v6849
  %v7178 = vmul.f32 %v4648, %v6850
  %v7179 = vmul.f32 %v5306, %v6851
  %v7180 = vmul.f32 %v5964, %v6852
  %v7181 = vmul.f32 %v6622, %v6853
  %v7182 = vmul.f32 %v2019, %v6846
  %v7183 = vmul.f32 %v2677, %v6847
  %v7184 = vmul.f32 %v3335, %v6848
  %v7185 = vmul.f32 %v3993, %v6849
  %v7186 = vmul.f32 %v4651, %v6850
  %v7187 = vmul.f32 %v5309, %v6851
  %v7188 = vmul.f32 %v5967, %v6852
  %v7189 = vmul.f32 %v6625, %v6853
  %v7190 = vmul.f32 %v2021, %v6846
  %v7191 = vmul.f32 %v2679, %v6847
  %v7192 = vmul.f32 %v3337, %v6848
  %v7193 = vmul.f32 %v3995, %v6849
  %v7194 = vmul.f32 %v4653, %v6850
  %v7195 = vmul.f32 %v5311, %v6851
  %v7196 = vmul.f32 %v5969, %v6852
  %v7197 = vmul.f32 %v6627, %v6853
  %v7198 = vmul.f32 %v2024, %v6846
  %v7199 = vmul.f32 %v2682, %v6847
  %v7200 = vmul.f32 %v3340, %v6848
  %v7201 = vmul.f32 %v3998, %v6849
  %v7202 = vmul.f32 %v4656, %v6850
  %v7203 = vmul.f32 %v5314, %v6851
  %v7204 = vmul.f32 %v5972, %v6852
  %v7205 = vmul.f32 %v6630, %v6853
  %v7206 = vmul.f32 %v2026, %v6846
  %v7207 = vmul.f32 %v2684, %v6847
  %v7208 = vmul.f32 %v3342, %v6848
  %v7209 = vmul.f32 %v4000, %v6849
  %v7210 = vmul.f32 %v4658, %v6850
  %v7211 = vmul.f32 %v5316, %v6851
  %v7212 = vmul.f32 %v5974, %v6852
  %v7213 = vmul.f32 %v6632, %v6853
  %v7214 = vmul.f32 %v2029, %v6846
  %v7215 = vmul.f32 %v2687, %v6847
  %v7216 = vmul.f32 %v3345, %v6848
  %v7217 = vmul.f32 %v4003, %v6849
  %v7218 = vmul.f32 %v4661, %v6850
  %v7219 = vmul.f32 %v5319, %v6851
  %v7220 = vmul.f32 %v5977, %v6852
  %v7221 = vmul.f32 %v6635, %v6853
  %v7222 = vmul.f32 %v2031, %v6846
  %v7223 = vmul.f32 %v2689, %v6847
  %v7224 = vmul.f32 %v3347, %v6848
  %v7225 = vmul.f32 %v4005, %v6849
  %v7226 = vmul.f32 %v4663, %v6850
  %v7227 = vmul.f32 %v5321, %v6851
  %v7228 = vmul.f32 %v5979, %v6852
  %v7229 = vmul.f32 %v6637, %v6853
  %v7230 = vmul.f32 %v2034, %v6846
  %v7231 = vmul.f32 %v2692, %v6847
  %v7232 = vmul.f32 %v3350, %v6848
  %v7233 = vmul.f32 %v4008, %v6849
  %v7234 = vmul.f32 %v4666, %v6850
  %v7235 = vmul.f32 %v5324, %v6851
  %v7236 = vmul.f32 %v5982, %v6852
  %v7237 = vmul.f32 %v6640, %v6853
  %v7238 = vmul.f32 %v2036, %v6846
  %v7239 = vmul.f32 %v2694, %v6847
  %v7240 = vmul.f32 %v3352, %v6848
  %v7241 = vmul.f32 %v4010, %v6849
  %v7242 = vmul.f32 %v4668, %v6850
  %v7243 = vmul.f32 %v5326, %v6851
  %v7244 = vmul.f32 %v5984, %v6852
  %v7245 = vmul.f32 %v6642, %v6853
  %v7246 = vmul.f32 %v2039, %v6846
  %v7247 = vmul.f32 %v2697, %v6847
  %v7248 = vmul.f32 %v3355, %v6848
  %v7249 = vmul.f32 %v4013, %v6849
  %v7250 = vmul.f32 %v4671, %v6850
  %v7251 = vmul.f32 %v5329, %v6851
  %v7252 = vmul.f32 %v5987, %v6852
  %v7253 = vmul.f32 %v6645, %v6853
  %v7254 = vmul.f32 %v2041, %v6846
  %v7255 = vmul.f32 %v2699, %v6847
  %v7256 = vmul.f32 %v3357, %v6848
  %v7257 = vmul.f32 %v4015, %v6849
  %v7258 = vmul.f32 %v4673, %v6850
  %v7259 = vmul.f32 %v5331, %v6851
  %v7260 = vmul.f32 %v5989, %v6852
  %v7261 = vmul.f32 %v6647, %v6853
  %v7262 = vmul.f32 %v2044, %v6846
  %v7263 = vmul.f32 %v2702, %v6847
  %v7264 = vmul.f32 %v3360, %v6848
  %v7265 = vmul.f32 %v4018, %v6849
  %v7266 = vmul.f32 %v4676, %v6850
  %v7267 = vmul.f32 %v5334, %v6851
  %v7268 = vmul.f32 %v5992, %v6852
  %v7269 = vmul.f32 %v6650, %v6853
  %v7270 = vmul.f32 %v2046, %v6846
  %v7271 = vmul.f32 %v2704, %v6847
  %v7272 = vmul.f32 %v3362, %v6848
  %v7273 = vmul.f32 %v4020, %v6849
  %v7274 = vmul.f32 %v4678, %v6850
  %v7275 = vmul.f32 %v5336, %v6851
  %v7276 = vmul.f32 %v5994, %v6852
  %v7277 = vmul.f32 %v6652, %v6853
  %v7278 = vmul.f32 %v2049, %v6846
  %v7279 = vmul.f32 %v2707, %v6847
  %v7280 = vmul.f32 %v3365, %v6848
  %v7281 = vmul.f32 %v4023, %v6849
  %v7282 = vmul.f32 %v4681, %v6850
  %v7283 = vmul.f32 %v5339, %v6851
  %v7284 = vmul.f32 %v5997, %v6852
  %v7285 = vmul.f32 %v6655, %v6853
  %v7286 = vmul.f32 %v2051, %v6846
  %v7287 = vmul.f32 %v2709, %v6847
  %v7288 = vmul.f32 %v3367, %v6848
  %v7289 = vmul.f32 %v4025, %v6849
  %v7290 = vmul.f32 %v4683, %v6850
  %v7291 = vmul.f32 %v5341, %v6851
  %v7292 = vmul.f32 %v5999, %v6852
  %v7293 = vmul.f32 %v6657, %v6853
  %v7294 = vmul.f32 %v2054, %v6846
  %v7295 = vmul.f32 %v2712, %v6847
  %v7296 = vmul.f32 %v3370, %v6848
  %v7297 = vmul.f32 %v4028, %v6849
  %v7298 = vmul.f32 %v4686, %v6850
  %v7299 = vmul.f32 %v5344, %v6851
  %v7300 = vmul.f32 %v6002, %v6852
  %v7301 = vmul.f32 %v6660, %v6853
  %v7302 = vmul.f32 %v2056, %v6846
  %v7303 = vmul.f32 %v2714, %v6847
  %v7304 = vmul.f32 %v3372, %v6848
  %v7305 = vmul.f32 %v4030, %v6849
  %v7306 = vmul.f32 %v4688, %v6850
  %v7307 = vmul.f32 %v5346, %v6851
  %v7308 = vmul.f32 %v6004, %v6852
  %v7309 = vmul.f32 %v6662, %v6853
  %v7310 = vmul.f32 %v2059, %v6846
  %v7311 = vmul.f32 %v2717, %v6847
  %v7312 = vmul.f32 %v3375, %v6848
  %v7313 = vmul.f32 %v4033, %v6849
  %v7314 = vmul.f32 %v4691, %v6850
  %v7315 = vmul.f32 %v5349, %v6851
  %v7316 = vmul.f32 %v6007, %v6852
  %v7317 = vmul.f32 %v6665, %v6853
  %v7318 = vmul.f32 %v2061, %v6846
  %v7319 = vmul.f32 %v2719, %v6847
  %v7320 = vmul.f32 %v3377, %v6848
  %v7321 = vmul.f32 %v4035, %v6849
  %v7322 = vmul.f32 %v4693, %v6850
  %v7323 = vmul.f32 %v5351, %v6851
  %v7324 = vmul.f32 %v6009, %v6852
  %v7325 = vmul.f32 %v6667, %v6853
  %v7326 = vmul.f32 %v2064, %v6846
  %v7327 = vmul.f32 %v2722, %v6847
  %v7328 = vmul.f32 %v3380, %v6848
  %v7329 = vmul.f32 %v4038, %v6849
  %v7330 = vmul.f32 %v4696, %v6850
  %v7331 = vmul.f32 %v5354, %v6851
  %v7332 = vmul.f32 %v6012, %v6852
  %v7333 = vmul.f32 %v6670, %v6853
  %v7334 = vmul.f32 %v2066, %v6846
  %v7335 = vmul.f32 %v2724, %v6847
  %v7336 = vmul.f32 %v3382, %v6848
  %v7337 = vmul.f32 %v4040, %v6849
  %v7338 = vmul.f32 %v4698, %v6850
  %v7339 = vmul.f32 %v5356, %v6851
  %v7340 = vmul.f32 %v6014, %v6852
  %v7341 = vmul.f32 %v6672, %v6853
  %v7342 = vmul.f32 %v2069, %v6846
  %v7343 = vmul.f32 %v2727, %v6847
  %v7344 = vmul.f32 %v3385, %v6848
  %v7345 = vmul.f32 %v4043, %v6849
  %v7346 = vmul.f32 %v4701, %v6850
  %v7347 = vmul.f32 %v5359, %v6851
  %v7348 = vmul.f32 %v6017, %v6852
  %v7349 = vmul.f32 %v6675, %v6853
  %v7350 = vmul.f32 %v2071, %v6846
  %v7351 = vmul.f32 %v2729, %v6847
  %v7352 = vmul.f32 %v3387, %v6848
  %v7353 = vmul.f32 %v4045, %v6849
  %v7354 = vmul.f32 %v4703, %v6850
  %v7355 = vmul.f32 %v5361, %v6851
  %v7356 = vmul.f32 %v6019, %v6852
  %v7357 = vmul.f32 %v6677, %v6853
  %v7358 = vmul.f32 %v2074, %v6846
  %v7359 = vmul.f32 %v2732, %v6847
  %v7360 = vmul.f32 %v3390, %v6848
  %v7361 = vmul.f32 %v4048, %v6849
  %v7362 = vmul.f32 %v4706, %v6850
  %v7363 = vmul.f32 %v5364, %v6851
  %v7364 = vmul.f32 %v6022, %v6852
  %v7365 = vmul.f32 %v6680, %v6853
  %v7366 = vmul.f32 %v2076, %v6846
  %v7367 = vmul.f32 %v2734, %v6847
  %v7368 = vmul.f32 %v3392, %v6848
  %v7369 = vmul.f32 %v4050, %v6849
  %v7370 = vmul.f32 %v4708, %v6850
  %v7371 = vmul.f32 %v5366, %v6851
  %v7372 = vmul.f32 %v6024, %v6852
  %v7373 = vmul.f32 %v6682, %v6853
  %v7374 = vmul.f32 %v2079, %v6846
  %v7375 = vmul.f32 %v2737, %v6847
  %v7376 = vmul.f32 %v3395, %v6848
  %v7377 = vmul.f32 %v4053, %v6849
  %v7378 = vmul.f32 %v4711, %v6850
  %v7379 = vmul.f32 %v5369, %v6851
  %v7380 = vmul.f32 %v6027, %v6852
  %v7381 = vmul.f32 %v6685, %v6853
  %v7382 = vmul.f32 %v2081, %v6846
  %v7383 = vmul.f32 %v2739, %v6847
  %v7384 = vmul.f32 %v3397, %v6848
  %v7385 = vmul.f32 %v4055, %v6849
  %v7386 = vmul.f32 %v4713, %v6850
  %v7387 = vmul.f32 %v5371, %v6851
  %v7388 = vmul.f32 %v6029, %v6852
  %v7389 = vmul.f32 %v6687, %v6853
  %v7390 = vmul.f32 %v2084, %v6846
  %v7391 = vmul.f32 %v2742, %v6847
  %v7392 = vmul.f32 %v3400, %v6848
  %v7393 = vmul.f32 %v4058, %v6849
  %v7394 = vmul.f32 %v4716, %v6850
  %v7395 = vmul.f32 %v5374, %v6851
  %v7396 = vmul.f32 %v6032, %v6852
  %v7397 = vmul.f32 %v6690, %v6853
  %v7398 = vmul.f32 %v2086, %v6846
  %v7399 = vmul.f32 %v2744, %v6847
  %v7400 = vmul.f32 %v3402, %v6848
  %v7401 = vmul.f32 %v4060, %v6849
  %v7402 = vmul.f32 %v4718, %v6850
  %v7403 = vmul.f32 %v5376, %v6851
  %v7404 = vmul.f32 %v6034, %v6852
  %v7405 = vmul.f32 %v6692, %v6853
  %v7406 = vmul.f32 %v2089, %v6846
  %v7407 = vmul.f32 %v2747, %v6847
  %v7408 = vmul.f32 %v3405, %v6848
  %v7409 = vmul.f32 %v4063, %v6849
  %v7410 = vmul.f32 %v4721, %v6850
  %v7411 = vmul.f32 %v5379, %v6851
  %v7412 = vmul.f32 %v6037, %v6852
  %v7413 = vmul.f32 %v6695, %v6853
  %v7414 = vmul.f32 %v2091, %v6846
  %v7415 = vmul.f32 %v2749, %v6847
  %v7416 = vmul.f32 %v3407, %v6848
  %v7417 = vmul.f32 %v4065, %v6849
  %v7418 = vmul.f32 %v4723, %v6850
  %v7419 = vmul.f32 %v5381, %v6851
  %v7420 = vmul.f32 %v6039, %v6852
  %v7421 = vmul.f32 %v6697, %v6853
  %v7422 = vmul.f32 %v2094, %v6846
  %v7423 = vmul.f32 %v2752, %v6847
  %v7424 = vmul.f32 %v3410, %v6848
  %v7425 = vmul.f32 %v4068, %v6849
  %v7426 = vmul.f32 %v4726, %v6850
  %v7427 = vmul.f32 %v5384, %v6851
  %v7428 = vmul.f32 %v6042, %v6852
  %v7429 = vmul.f32 %v6700, %v6853
  %v7430 = vmul.f32 %v2096, %v6846
  %v7431 = vmul.f32 %v2754, %v6847
  %v7432 = vmul.f32 %v3412, %v6848
  %v7433 = vmul.f32 %v4070, %v6849
  %v7434 = vmul.f32 %v4728, %v6850
  %v7435 = vmul.f32 %v5386, %v6851
  %v7436 = vmul.f32 %v6044, %v6852
  %v7437 = vmul.f32 %v6702, %v6853
  %v7438 = vmul.f32 %v2099, %v6846
  %v7439 = vmul.f32 %v2757, %v6847
  %v7440 = vmul.f32 %v3415, %v6848
  %v7441 = vmul.f32 %v4073, %v6849
  %v7442 = vmul.f32 %v4731, %v6850
  %v7443 = vmul.f32 %v5389, %v6851
  %v7444 = vmul.f32 %v6047, %v6852
  %v7445 = vmul.f32 %v6705, %v6853
  %v7446 = vmul.f32 %v2101, %v6846
  %v7447 = vmul.f32 %v2759, %v6847
  %v7448 = vmul.f32 %v3417, %v6848
  %v7449 = vmul.f32 %v4075, %v6849
  %v7450 = vmul.f32 %v4733, %v6850
  %v7451 = vmul.f32 %v5391, %v6851
  %v7452 = vmul.f32 %v6049, %v6852
  %v7453 = vmul.f32 %v6707, %v6853
  %v7454 = vmul.f32 %v2104, %v6846
  %v7455 = vmul.f32 %v2762, %v6847
  %v7456 = vmul.f32 %v3420, %v6848
  %v7457 = vmul.f32 %v4078, %v6849
  %v7458 = vmul.f32 %v4736, %v6850
  %v7459 = vmul.f32 %v5394, %v6851
  %v7460 = vmul.f32 %v6052, %v6852
  %v7461 = vmul.f32 %v6710, %v6853
  %v7462 = vmul.f32 %v2106, %v6846
  %v7463 = vmul.f32 %v2764, %v6847
  %v7464 = vmul.f32 %v3422, %v6848
  %v7465 = vmul.f32 %v4080, %v6849
  %v7466 = vmul.f32 %v4738, %v6850
  %v7467 = vmul.f32 %v5396, %v6851
  %v7468 = vmul.f32 %v6054, %v6852
  %v7469 = vmul.f32 %v6712, %v6853
  %v7470 = vmul.f32 %v2109, %v6846
  %v7471 = vmul.f32 %v2767, %v6847
  %v7472 = vmul.f32 %v3425, %v6848
  %v7473 = vmul.f32 %v4083, %v6849
  %v7474 = vmul.f32 %v4741, %v6850
  %v7475 = vmul.f32 %v5399, %v6851
  %v7476 = vmul.f32 %v6057, %v6852
  %v7477 = vmul.f32 %v6715, %v6853
  %v7478 = vmul.f32 %v2111, %v6846
  %v7479 = vmul.f32 %v2769, %v6847
  %v7480 = vmul.f32 %v3427, %v6848
  %v7481 = vmul.f32 %v4085, %v6849
  %v7482 = vmul.f32 %v4743, %v6850
  %v7483 = vmul.f32 %v5401, %v6851
  %v7484 = vmul.f32 %v6059, %v6852
  %v7485 = vmul.f32 %v6717, %v6853
  %v7486 = vmul.f32 %v2114, %v6846
  %v7487 = vmul.f32 %v2772, %v6847
  %v7488 = vmul.f32 %v3430, %v6848
  %v7489 = vmul.f32 %v4088, %v6849
  %v7490 = vmul.f32 %v4746, %v6850
  %v7491 = vmul.f32 %v5404, %v6851
  %v7492 = vmul.f32 %v6062, %v6852
  %v7493 = vmul.f32 %v6720, %v6853
  %v7494 = vmul.f32 %v2116, %v6846
  %v7495 = vmul.f32 %v2774, %v6847
  %v7496 = vmul.f32 %v3432, %v6848
  %v7497 = vmul.f32 %v4090, %v6849
  %v7498 = vmul.f32 %v4748, %v6850
  %v7499 = vmul.f32 %v5406, %v6851
  %v7500 = vmul.f32 %v6064, %v6852
  %v7501 = vmul.f32 %v6722, %v6853
  %v7502 = vmul.f32 %v2119, %v6846
  %v7503 = vmul.f32 %v2777, %v6847
  %v7504 = vmul.f32 %v3435, %v6848
  %v7505 = vmul.f32 %v4093, %v6849
  %v7506 = vmul.f32 %v4751, %v6850
  %v7507 = vmul.f32 %v5409, %v6851
  %v7508 = vmul.f32 %v6067, %v6852
  %v7509 = vmul.f32 %v6725, %v6853
  %v7510 = vmul.f32 %v2121, %v6846
  %v7511 = vmul.f32 %v2779, %v6847
  %v7512 = vmul.f32 %v3437, %v6848
  %v7513 = vmul.f32 %v4095, %v6849
  %v7514 = vmul.f32 %v4753, %v6850
  %v7515 = vmul.f32 %v5411, %v6851
  %v7516 = vmul.f32 %v6069, %v6852
  %v7517 = vmul.f32 %v6727, %v6853
  %v7518 = vmul.f32 %v2124, %v6846
  %v7519 = vmul.f32 %v2782, %v6847
  %v7520 = vmul.f32 %v3440, %v6848
  %v7521 = vmul.f32 %v4098, %v6849
  %v7522 = vmul.f32 %v4756, %v6850
  %v7523 = vmul.f32 %v5414, %v6851
  %v7524 = vmul.f32 %v6072, %v6852
  %v7525 = vmul.f32 %v6730, %v6853
  %v7526 = vmul.f32 %v2126, %v6846
  %v7527 = vmul.f32 %v2784, %v6847
  %v7528 = vmul.f32 %v3442, %v6848
  %v7529 = vmul.f32 %v4100, %v6849
  %v7530 = vmul.f32 %v4758, %v6850
  %v7531 = vmul.f32 %v5416, %v6851
  %v7532 = vmul.f32 %v6074, %v6852
  %v7533 = vmul.f32 %v6732, %v6853
  %v7534 = vmul.f32 %v2129, %v6846
  %v7535 = vmul.f32 %v2787, %v6847
  %v7536 = vmul.f32 %v3445, %v6848
  %v7537 = vmul.f32 %v4103, %v6849
  %v7538 = vmul.f32 %v4761, %v6850
  %v7539 = vmul.f32 %v5419, %v6851
  %v7540 = vmul.f32 %v6077, %v6852
  %v7541 = vmul.f32 %v6735, %v6853
  %v7542 = vmul.f32 %v2131, %v6846
  %v7543 = vmul.f32 %v2789, %v6847
  %v7544 = vmul.f32 %v3447, %v6848
  %v7545 = vmul.f32 %v4105, %v6849
  %v7546 = vmul.f32 %v4763, %v6850
  %v7547 = vmul.f32 %v5421, %v6851
  %v7548 = vmul.f32 %v6079, %v6852
  %v7549 = vmul.f32 %v6737, %v6853
  %v7550 = vmul.f32 %v2134, %v6846
  %v7551 = vmul.f32 %v2792, %v6847
  %v7552 = vmul.f32 %v3450, %v6848
  %v7553 = vmul.f32 %v4108, %v6849
  %v7554 = vmul.f32 %v4766, %v6850
  %v7555 = vmul.f32 %v5424, %v6851
  %v7556 = vmul.f32 %v6082, %v6852
  %v7557 = vmul.f32 %v6740, %v6853
  %v7558 = vmul.f32 %v2136, %v6846
  %v7559 = vmul.f32 %v2794, %v6847
  %v7560 = vmul.f32 %v3452, %v6848
  %v7561 = vmul.f32 %v4110, %v6849
  %v7562 = vmul.f32 %v4768, %v6850
  %v7563 = vmul.f32 %v5426, %v6851
  %v7564 = vmul.f32 %v6084, %v6852
  %v7565 = vmul.f32 %v6742, %v6853
  %v7566 = vmul.f32 %v2139, %v6846
  %v7567 = vmul.f32 %v2797, %v6847
  %v7568 = vmul.f32 %v3455, %v6848
  %v7569 = vmul.f32 %v4113, %v6849
  %v7570 = vmul.f32 %v4771, %v6850
  %v7571 = vmul.f32 %v5429, %v6851
  %v7572 = vmul.f32 %v6087, %v6852
  %v7573 = vmul.f32 %v6745, %v6853
  %v7574 = vmul.f32 %v2141, %v6846
  %v7575 = vmul.f32 %v2799, %v6847
  %v7576 = vmul.f32 %v3457, %v6848
  %v7577 = vmul.f32 %v4115, %v6849
  %v7578 = vmul.f32 %v4773, %v6850
  %v7579 = vmul.f32 %v5431, %v6851
  %v7580 = vmul.f32 %v6089, %v6852
  %v7581 = vmul.f32 %v6747, %v6853
  %v7582 = vmul.f32 %v2144, %v6846
  %v7583 = vmul.f32 %v2802, %v6847
  %v7584 = vmul.f32 %v3460, %v6848
  %v7585 = vmul.f32 %v4118, %v6849
  %v7586 = vmul.f32 %v4776, %v6850
  %v7587 = vmul.f32 %v5434, %v6851
  %v7588 = vmul.f32 %v6092, %v6852
  %v7589 = vmul.f32 %v6750, %v6853
  %v7590 = vmul.f32 %v2146, %v6846
  %v7591 = vmul.f32 %v2804, %v6847
  %v7592 = vmul.f32 %v3462, %v6848
  %v7593 = vmul.f32 %v4120, %v6849
  %v7594 = vmul.f32 %v4778, %v6850
  %v7595 = vmul.f32 %v5436, %v6851
  %v7596 = vmul.f32 %v6094, %v6852
  %v7597 = vmul.f32 %v6752, %v6853
  %v7598 = vmul.f32 %v2149, %v6846
  %v7599 = vmul.f32 %v2807, %v6847
  %v7600 = vmul.f32 %v3465, %v6848
  %v7601 = vmul.f32 %v4123, %v6849
  %v7602 = vmul.f32 %v4781, %v6850
  %v7603 = vmul.f32 %v5439, %v6851
  %v7604 = vmul.f32 %v6097, %v6852
  %v7605 = vmul.f32 %v6755, %v6853
  %v7606 = vmul.f32 %v2151, %v6846
  %v7607 = vmul.f32 %v2809, %v6847
  %v7608 = vmul.f32 %v3467, %v6848
  %v7609 = vmul.f32 %v4125, %v6849
  %v7610 = vmul.f32 %v4783, %v6850
  %v7611 = vmul.f32 %v5441, %v6851
  %v7612 = vmul.f32 %v6099, %v6852
  %v7613 = vmul.f32 %v6757, %v6853
  %v7614 = vmul.f32 %v2154, %v6846
  %v7615 = vmul.f32 %v2812, %v6847
  %v7616 = vmul.f32 %v3470, %v6848
  %v7617 = vmul.f32 %v4128, %v6849
  %v7618 = vmul.f32 %v4786, %v6850
  %v7619 = vmul.f32 %v5444, %v6851
  %v7620 = vmul.f32 %v6102, %v6852
  %v7621 = vmul.f32 %v6760, %v6853
  %v7622 = vmul.f32 %v2156, %v6846
  %v7623 = vmul.f32 %v2814, %v6847
  %v7624 = vmul.f32 %v3472, %v6848
  %v7625 = vmul.f32 %v4130, %v6849
  %v7626 = vmul.f32 %v4788, %v6850
  %v7627 = vmul.f32 %v5446, %v6851
  %v7628 = vmul.f32 %v6104, %v6852
  %v7629 = vmul.f32 %v6762, %v6853
  %v7630 = vmul.f32 %v2159, %v6846
  %v7631 = vmul.f32 %v2817, %v6847
  %v7632 = vmul.f32 %v3475, %v6848
  %v7633 = vmul.f32 %v4133, %v6849
  %v7634 = vmul.f32 %v4791, %v6850
  %v7635 = vmul.f32 %v5449, %v6851
  %v7636 = vmul.f32 %v6107, %v6852
  %v7637 = vmul.f32 %v6765, %v6853
  %v7638 = vmul.f32 %v2161, %v6846
  %v7639 = vmul.f32 %v2819, %v6847
  %v7640 = vmul.f32 %v3477, %v6848
  %v7641 = vmul.f32 %v4135, %v6849
  %v7642 = vmul.f32 %v4793, %v6850
  %v7643 = vmul.f32 %v5451, %v6851
  %v7644 = vmul.f32 %v6109, %v6852
  %v7645 = vmul.f32 %v6767, %v6853
  %v7646 = vmul.f32 %v2164, %v6846
  %v7647 = vmul.f32 %v2822, %v6847
  %v7648 = vmul.f32 %v3480, %v6848
  %v7649 = vmul.f32 %v4138, %v6849
  %v7650 = vmul.f32 %v4796, %v6850
  %v7651 = vmul.f32 %v5454, %v6851
  %v7652 = vmul.f32 %v6112, %v6852
  %v7653 = vmul.f32 %v6770, %v6853
  %v7654 = vmul.f32 %v2166, %v6846
  %v7655 = vmul.f32 %v2824, %v6847
  %v7656 = vmul.f32 %v3482, %v6848
  %v7657 = vmul.f32 %v4140, %v6849
  %v7658 = vmul.f32 %v4798, %v6850
  %v7659 = vmul.f32 %v5456, %v6851
  %v7660 = vmul.f32 %v6114, %v6852
  %v7661 = vmul.f32 %v6772, %v6853
  %v7662 = vmul.f32 %v2169, %v6846
  %v7663 = vmul.f32 %v2827, %v6847
  %v7664 = vmul.f32 %v3485, %v6848
  %v7665 = vmul.f32 %v4143, %v6849
  %v7666 = vmul.f32 %v4801, %v6850
  %v7667 = vmul.f32 %v5459, %v6851
  %v7668 = vmul.f32 %v6117, %v6852
  %v7669 = vmul.f32 %v6775, %v6853
  %v7670 = vmul.f32 %v2171, %v6846
  %v7671 = vmul.f32 %v2829, %v6847
  %v7672 = vmul.f32 %v3487, %v6848
  %v7673 = vmul.f32 %v4145, %v6849
  %v7674 = vmul.f32 %v4803, %v6850
  %v7675 = vmul.f32 %v5461, %v6851
  %v7676 = vmul.f32 %v6119, %v6852
  %v7677 = vmul.f32 %v6777, %v6853
  %v7678 = vmul.f32 %v2174, %v6846
  %v7679 = vmul.f32 %v2832, %v6847
  %v7680 = vmul.f32 %v3490, %v6848
  %v7681 = vmul.f32 %v4148, %v6849
  %v7682 = vmul.f32 %v4806, %v6850
  %v7683 = vmul.f32 %v5464, %v6851
  %v7684 = vmul.f32 %v6122, %v6852
  %v7685 = vmul.f32 %v6780, %v6853
  %v7686 = vmul.f32 %v2176, %v6846
  %v7687 = vmul.f32 %v2834, %v6847
  %v7688 = vmul.f32 %v3492, %v6848
  %v7689 = vmul.f32 %v4150, %v6849
  %v7690 = vmul.f32 %v4808, %v6850
  %v7691 = vmul.f32 %v5466, %v6851
  %v7692 = vmul.f32 %v6124, %v6852
  %v7693 = vmul.f32 %v6782, %v6853
  %v7694 = vmul.f32 %v2179, %v6846
  %v7695 = vmul.f32 %v2837, %v6847
  %v7696 = vmul.f32 %v3495, %v6848
  %v7697 = vmul.f32 %v4153, %v6849
  %v7698 = vmul.f32 %v4811, %v6850
  %v7699 = vmul.f32 %v5469, %v6851
  %v7700 = vmul.f32 %v6127, %v6852
  %v7701 = vmul.f32 %v6785, %v6853
  %v7702 = vmul.f32 %v2181, %v6846
  %v7703 = vmul.f32 %v2839, %v6847
  %v7704 = vmul.f32 %v3497, %v6848
  %v7705 = vmul.f32 %v4155, %v6849
  %v7706 = vmul.f32 %v4813, %v6850
  %v7707 = vmul.f32 %v5471, %v6851
  %v7708 = vmul.f32 %v6129, %v6852
  %v7709 = vmul.f32 %v6787, %v6853
  %v7710 = vmul.f32 %v2184, %v6846
  %v7711 = vmul.f32 %v2842, %v6847
  %v7712 = vmul.f32 %v3500, %v6848
  %v7713 = vmul.f32 %v4158, %v6849
  %v7714 = vmul.f32 %v4816, %v6850
  %v7715 = vmul.f32 %v5474, %v6851
  %v7716 = vmul.f32 %v6132, %v6852
  %v7717 = vmul.f32 %v6790, %v6853
  %v7718 = vmul.f32 %v2186, %v6846
  %v7719 = vmul.f32 %v2844, %v6847
  %v7720 = vmul.f32 %v3502, %v6848
  %v7721 = vmul.f32 %v4160, %v6849
  %v7722 = vmul.f32 %v4818, %v6850
  %v7723 = vmul.f32 %v5476, %v6851
  %v7724 = vmul.f32 %v6134, %v6852
  %v7725 = vmul.f32 %v6792, %v6853
  %v7726 = vmul.f32 %v2189, %v6846
  %v7727 = vmul.f32 %v2847, %v6847
  %v7728 = vmul.f32 %v3505, %v6848
  %v7729 = vmul.f32 %v4163, %v6849
  %v7730 = vmul.f32 %v4821, %v6850
  %v7731 = vmul.f32 %v5479, %v6851
  %v7732 = vmul.f32 %v6137, %v6852
  %v7733 = vmul.f32 %v6795, %v6853
  %v7734 = vmul.f32 %v2191, %v6846
  %v7735 = vmul.f32 %v2849, %v6847
  %v7736 = vmul.f32 %v3507, %v6848
  %v7737 = vmul.f32 %v4165, %v6849
  %v7738 = vmul.f32 %v4823, %v6850
  %v7739 = vmul.f32 %v5481, %v6851
  %v7740 = vmul.f32 %v6139, %v6852
  %v7741 = vmul.f32 %v6797, %v6853
  %v7742 = vmul.f32 %v2194, %v6846
  %v7743 = vmul.f32 %v2852, %v6847
  %v7744 = vmul.f32 %v3510, %v6848
  %v7745 = vmul.f32 %v4168, %v6849
  %v7746 = vmul.f32 %v4826, %v6850
  %v7747 = vmul.f32 %v5484, %v6851
  %v7748 = vmul.f32 %v6142, %v6852
  %v7749 = vmul.f32 %v6800, %v6853
  %v7750 = vmul.f32 %v2196, %v6846
  %v7751 = vmul.f32 %v2854, %v6847
  %v7752 = vmul.f32 %v3512, %v6848
  %v7753 = vmul.f32 %v4170, %v6849
  %v7754 = vmul.f32 %v4828, %v6850
  %v7755 = vmul.f32 %v5486, %v6851
  %v7756 = vmul.f32 %v6144, %v6852
  %v7757 = vmul.f32 %v6802, %v6853
  %v7758 = vmul.f32 %v2199, %v6846
  %v7759 = vmul.f32 %v2857, %v6847
  %v7760 = vmul.f32 %v3515, %v6848
  %v7761 = vmul.f32 %v4173, %v6849
  %v7762 = vmul.f32 %v4831, %v6850
  %v7763 = vmul.f32 %v5489, %v6851
  %v7764 = vmul.f32 %v6147, %v6852
  %v7765 = vmul.f32 %v6805, %v6853
  %v7766 = vmul.f32 %v2201, %v6846
  %v7767 = vmul.f32 %v2859, %v6847
  %v7768 = vmul.f32 %v3517, %v6848
  %v7769 = vmul.f32 %v4175, %v6849
  %v7770 = vmul.f32 %v4833, %v6850
  %v7771 = vmul.f32 %v5491, %v6851
  %v7772 = vmul.f32 %v6149, %v6852
  %v7773 = vmul.f32 %v6807, %v6853
  %v7774 = vmul.f32 %v2204, %v6846
  %v7775 = vmul.f32 %v2862, %v6847
  %v7776 = vmul.f32 %v3520, %v6848
  %v7777 = vmul.f32 %v4178, %v6849
  %v7778 = vmul.f32 %v4836, %v6850
  %v7779 = vmul.f32 %v5494, %v6851
  %v7780 = vmul.f32 %v6152, %v6852
  %v7781 = vmul.f32 %v6810, %v6853
  %v7782 = vmul.f32 %v2206, %v6846
  %v7783 = vmul.f32 %v2864, %v6847
  %v7784 = vmul.f32 %v3522, %v6848
  %v7785 = vmul.f32 %v4180, %v6849
  %v7786 = vmul.f32 %v4838, %v6850
  %v7787 = vmul.f32 %v5496, %v6851
  %v7788 = vmul.f32 %v6154, %v6852
  %v7789 = vmul.f32 %v6812, %v6853
  %v7790 = vmul.f32 %v2209, %v6846
  %v7791 = vmul.f32 %v2867, %v6847
  %v7792 = vmul.f32 %v3525, %v6848
  %v7793 = vmul.f32 %v4183, %v6849
  %v7794 = vmul.f32 %v4841, %v6850
  %v7795 = vmul.f32 %v5499, %v6851
  %v7796 = vmul.f32 %v6157, %v6852
  %v7797 = vmul.f32 %v6815, %v6853
  %v7798 = vmul.f32 %v2211, %v6846
  %v7799 = vmul.f32 %v2869, %v6847
  %v7800 = vmul.f32 %v3527, %v6848
  %v7801 = vmul.f32 %v4185, %v6849
  %v7802 = vmul.f32 %v4843, %v6850
  %v7803 = vmul.f32 %v5501, %v6851
  %v7804 = vmul.f32 %v6159, %v6852
  %v7805 = vmul.f32 %v6817, %v6853
  %v7806 = vmul.f32 %v2214, %v6846
  %v7807 = vmul.f32 %v2872, %v6847
  %v7808 = vmul.f32 %v3530, %v6848
  %v7809 = vmul.f32 %v4188, %v6849
  %v7810 = vmul.f32 %v4846, %v6850
  %v7811 = vmul.f32 %v5504, %v6851
  %v7812 = vmul.f32 %v6162, %v6852
  %v7813 = vmul.f32 %v6820, %v6853
  %v7814 = vmul.f32 %v2216, %v6846
  %v7815 = vmul.f32 %v2874, %v6847
  %v7816 = vmul.f32 %v3532, %v6848
  %v7817 = vmul.f32 %v4190, %v6849
  %v7818 = vmul.f32 %v4848, %v6850
  %v7819 = vmul.f32 %v5506, %v6851
  %v7820 = vmul.f32 %v6164, %v6852
  %v7821 = vmul.f32 %v6822, %v6853
  %v7822 = vmul.f32 %v2219, %v6846
  %v7823 = vmul.f32 %v2877, %v6847
  %v7824 = vmul.f32 %v3535, %v6848
  %v7825 = vmul.f32 %v4193, %v6849
  %v7826 = vmul.f32 %v4851, %v6850
  %v7827 = vmul.f32 %v5509, %v6851
  %v7828 = vmul.f32 %v6167, %v6852
  %v7829 = vmul.f32 %v6825, %v6853
  %v7830 = vmul.f32 %v2221, %v6846
  %v7831 = vmul.f32 %v2879, %v6847
  %v7832 = vmul.f32 %v3537, %v6848
  %v7833 = vmul.f32 %v4195, %v6849
  %v7834 = vmul.f32 %v4853, %v6850
  %v7835 = vmul.f32 %v5511, %v6851
  %v7836 = vmul.f32 %v6169, %v6852
  %v7837 = vmul.f32 %v6827, %v6853
  %v7838 = vmul.f32 %v2224, %v6846
  %v7839 = vmul.f32 %v2882, %v6847
  %v7840 = vmul.f32 %v3540, %v6848
  %v7841 = vmul.f32 %v4198, %v6849
  %v7842 = vmul.f32 %v4856, %v6850
  %v7843 = vmul.f32 %v5514, %v6851
  %v7844 = vmul.f32 %v6172, %v6852
  %v7845 = vmul.f32 %v6830, %v6853
  %v7846 = vmul.f32 %v2226, %v6846
  %v7847 = vmul.f32 %v2884, %v6847
  %v7848 = vmul.f32 %v3542, %v6848
  %v7849 = vmul.f32 %v4200, %v6849
  %v7850 = vmul.f32 %v4858, %v6850
  %v7851 = vmul.f32 %v5516, %v6851
  %v7852 = vmul.f32 %v6174, %v6852
  %v7853 = vmul.f32 %v6832, %v6853
  %v7854 = vmul.f32 %v2229, %v6846
  %v7855 = vmul.f32 %v2887, %v6847
  %v7856 = vmul.f32 %v3545, %v6848
  %v7857 = vmul.f32 %v4203, %v6849
  %v7858 = vmul.f32 %v4861, %v6850
  %v7859 = vmul.f32 %v5519, %v6851
  %v7860 = vmul.f32 %v6177, %v6852
  %v7861 = vmul.f32 %v6835, %v6853
  %v7862 = vmul.f32 %v2231, %v6846
  %v7863 = vmul.f32 %v2889, %v6847
  %v7864 = vmul.f32 %v3547, %v6848
  %v7865 = vmul.f32 %v4205, %v6849
  %v7866 = vmul.f32 %v4863, %v6850
  %v7867 = vmul.f32 %v5521, %v6851
  %v7868 = vmul.f32 %v6179, %v6852
  %v7869 = vmul.f32 %v6837, %v6853
  %v7870 = vmul.f32 %v2234, %v6846
  %v7871 = vmul.f32 %v2892, %v6847
  %v7872 = vmul.f32 %v3550, %v6848
  %v7873 = vmul.f32 %v4208, %v6849
  %v7874 = vmul.f32 %v4866, %v6850
  %v7875 = vmul.f32 %v5524, %v6851
  %v7876 = vmul.f32 %v6182, %v6852
  %v7877 = vmul.f32 %v6840, %v6853
  %v7878 = vmul.f32 %v2236, %v6846
  %v7879 = vmul.f32 %v2894, %v6847
  %v7880 = vmul.f32 %v3552, %v6848
  %v7881 = vmul.f32 %v4210, %v6849
  %v7882 = vmul.f32 %v4868, %v6850
  %v7883 = vmul.f32 %v5526, %v6851
  %v7884 = vmul.f32 %v6184, %v6852
  %v7885 = vmul.f32 %v6842, %v6853
  %v7886 = vld [vmem:[%s3] sm:$0xff]
  %v7888 = vperm.slane %v7886, 0
  %v7889 = vperm.slane %v7886, 1
  %v7890 = vperm.slane %v7886, 2
  %v7891 = vperm.slane %v7886, 3
  %v7892 = vperm.slane %v7886, 4
  %v7893 = vperm.slane %v7886, 5
  %v7894 = vperm.slane %v7886, 6
  %v7895 = vperm.slane %v7886, 7
  %v7904 = vadd.f32 %v6862, %v7888
  %v7905 = vadd.f32 %v6863, %v7889
  %v7906 = vadd.f32 %v6864, %v7890
  %v7907 = vadd.f32 %v6865, %v7891
  %v7908 = vadd.f32 %v6866, %v7892
  %v7909 = vadd.f32 %v6867, %v7893
  %v7910 = vadd.f32 %v6868, %v7894
  %v7911 = vadd.f32 %v6869, %v7895
  %v7912 = vadd.f32 %v6870, %v7888
  %v7913 = vadd.f32 %v6871, %v7889
  %v7914 = vadd.f32 %v6872, %v7890
  %v7915 = vadd.f32 %v6873, %v7891
  %v7916 = vadd.f32 %v6874, %v7892
  %v7917 = vadd.f32 %v6875, %v7893
  %v7918 = vadd.f32 %v6876, %v7894
  %v7919 = vadd.f32 %v6877, %v7895
  %v7920 = vadd.f32 %v6878, %v7888
  %v7921 = vadd.f32 %v6879, %v7889
  %v7922 = vadd.f32 %v6880, %v7890
  %v7923 = vadd.f32 %v6881, %v7891
  %v7924 = vadd.f32 %v6882, %v7892
  %v7925 = vadd.f32 %v6883, %v7893
  %v7926 = vadd.f32 %v6884, %v7894
  %v7927 = vadd.f32 %v6885, %v7895
  %v7928 = vadd.f32 %v6886, %v7888
  %v7929 = vadd.f32 %v6887, %v7889
  %v7930 = vadd.f32 %v6888, %v7890
  %v7931 = vadd.f32 %v6889, %v7891
  %v7932 = vadd.f32 %v6890, %v7892
  %v7933 = vadd.f32 %v6891, %v7893
  %v7934 = vadd.f32 %v6892, %v7894
  %v7935 = vadd.f32 %v6893, %v7895
  %v7936 = vadd.f32 %v6894, %v7888
  %v7937 = vadd.f32 %v6895, %v7889
  %v7938 = vadd.f32 %v6896, %v7890
  %v7939 = vadd.f32 %v6897, %v7891
  %v7940 = vadd.f32 %v6898, %v7892
  %v7941 = vadd.f32 %v6899, %v7893
  %v7942 = vadd.f32 %v6900, %v7894
  %v7943 = vadd.f32 %v6901, %v7895
  %v7944 = vadd.f32 %v6902, %v7888
  %v7945 = vadd.f32 %v6903, %v7889
  %v7946 = vadd.f32 %v6904, %v7890
  %v7947 = vadd.f32 %v6905, %v7891
  %v7948 = vadd.f32 %v6906, %v7892
  %v7949 = vadd.f32 %v6907, %v7893
  %v7950 = vadd.f32 %v6908, %v7894
  %v7951 = vadd.f32 %v6909, %v7895
  %v7952 = vadd.f32 %v6910, %v7888
  %v7953 = vadd.f32 %v6911, %v7889
  %v7954 = vadd.f32 %v6912, %v7890
  %v7955 = vadd.f32 %v6913, %v7891
  %v7956 = vadd.f32 %v6914, %v7892
  %v7957 = vadd.f32 %v6915, %v7893
  %v7958 = vadd.f32 %v6916, %v7894
  %v7959 = vadd.f32 %v6917, %v7895
  %v7960 = vadd.f32 %v6918, %v7888
  %v7961 = vadd.f32 %v6919, %v7889
  %v7962 = vadd.f32 %v6920, %v7890
  %v7963 = vadd.f32 %v6921, %v7891
  %v7964 = vadd.f32 %v6922, %v7892
  %v7965 = vadd.f32 %v6923, %v7893
  %v7966 = vadd.f32 %v6924, %v7894
  %v7967 = vadd.f32 %v6925, %v7895
  %v7968 = vadd.f32 %v6926, %v7888
  %v7969 = vadd.f32 %v6927, %v7889
  %v7970 = vadd.f32 %v6928, %v7890
  %v7971 = vadd.f32 %v6929, %v7891
  %v7972 = vadd.f32 %v6930, %v7892
  %v7973 = vadd.f32 %v6931, %v7893
  %v7974 = vadd.f32 %v6932, %v7894
  %v7975 = vadd.f32 %v6933, %v7895
  %v7976 = vadd.f32 %v6934, %v7888
  %v7977 = vadd.f32 %v6935, %v7889
  %v7978 = vadd.f32 %v6936, %v7890
  %v7979 = vadd.f32 %v6937, %v7891
  %v7980 = vadd.f32 %v6938, %v7892
  %v7981 = vadd.f32 %v6939, %v7893
  %v7982 = vadd.f32 %v6940, %v7894
  %v7983 = vadd.f32 %v6941, %v7895
  %v7984 = vadd.f32 %v6942, %v7888
  %v7985 = vadd.f32 %v6943, %v7889
  %v7986 = vadd.f32 %v6944, %v7890
  %v7987 = vadd.f32 %v6945, %v7891
  %v7988 = vadd.f32 %v6946, %v7892
  %v7989 = vadd.f32 %v6947, %v7893
  %v7990 = vadd.f32 %v6948, %v7894
  %v7991 = vadd.f32 %v6949, %v7895
  %v7992 = vadd.f32 %v6950, %v7888
  %v7993 = vadd.f32 %v6951, %v7889
  %v7994 = vadd.f32 %v6952, %v7890
  %v7995 = vadd.f32 %v6953, %v7891
  %v7996 = vadd.f32 %v6954, %v7892
  %v7997 = vadd.f32 %v6955, %v7893
  %v7998 = vadd.f32 %v6956, %v7894
  %v7999 = vadd.f32 %v6957, %v7895
  %v8000 = vadd.f32 %v6958, %v7888
  %v8001 = vadd.f32 %v6959, %v7889
  %v8002 = vadd.f32 %v6960, %v7890
  %v8003 = vadd.f32 %v6961, %v7891
  %v8004 = vadd.f32 %v6962, %v7892
  %v8005 = vadd.f32 %v6963, %v7893
  %v8006 = vadd.f32 %v6964, %v7894
  %v8007 = vadd.f32 %v6965, %v7895
  %v8008 = vadd.f32 %v6966, %v7888
  %v8009 = vadd.f32 %v6967, %v7889
  %v8010 = vadd.f32 %v6968, %v7890
  %v8011 = vadd.f32 %v6969, %v7891
  %v8012 = vadd.f32 %v6970, %v7892
  %v8013 = vadd.f32 %v6971, %v7893
  %v8014 = vadd.f32 %v6972, %v7894
  %v8015 = vadd.f32 %v6973, %v7895
  %v8016 = vadd.f32 %v6974, %v7888
  %v8017 = vadd.f32 %v6975, %v7889
  %v8018 = vadd.f32 %v6976, %v7890
  %v8019 = vadd.f32 %v6977, %v7891
  %v8020 = vadd.f32 %v6978, %v7892
  %v8021 = vadd.f32 %v6979, %v7893
  %v8022 = vadd.f32 %v6980, %v7894
  %v8023 = vadd.f32 %v6981, %v7895
  %v8024 = vadd.f32 %v6982, %v7888
  %v8025 = vadd.f32 %v6983, %v7889
  %v8026 = vadd.f32 %v6984, %v7890
  %v8027 = vadd.f32 %v6985, %v7891
  %v8028 = vadd.f32 %v6986, %v7892
  %v8029 = vadd.f32 %v6987, %v7893
  %v8030 = vadd.f32 %v6988, %v7894
  %v8031 = vadd.f32 %v6989, %v7895
  %v8032 = vadd.f32 %v6990, %v7888
  %v8033 = vadd.f32 %v6991, %v7889
  %v8034 = vadd.f32 %v6992, %v7890
  %v8035 = vadd.f32 %v6993, %v7891
  %v8036 = vadd.f32 %v6994, %v7892
  %v8037 = vadd.f32 %v6995, %v7893
  %v8038 = vadd.f32 %v6996, %v7894
  %v8039 = vadd.f32 %v6997, %v7895
  %v8040 = vadd.f32 %v6998, %v7888
  %v8041 = vadd.f32 %v6999, %v7889
  %v8042 = vadd.f32 %v7000, %v7890
  %v8043 = vadd.f32 %v7001, %v7891
  %v8044 = vadd.f32 %v7002, %v7892
  %v8045 = vadd.f32 %v7003, %v7893
  %v8046 = vadd.f32 %v7004, %v7894
  %v8047 = vadd.f32 %v7005, %v7895
  %v8048 = vadd.f32 %v7006, %v7888
  %v8049 = vadd.f32 %v7007, %v7889
  %v8050 = vadd.f32 %v7008, %v7890
  %v8051 = vadd.f32 %v7009, %v7891
  %v8052 = vadd.f32 %v7010, %v7892
  %v8053 = vadd.f32 %v7011, %v7893
  %v8054 = vadd.f32 %v7012, %v7894
  %v8055 = vadd.f32 %v7013, %v7895
  %v8056 = vadd.f32 %v7014, %v7888
  %v8057 = vadd.f32 %v7015, %v7889
  %v8058 = vadd.f32 %v7016, %v7890
  %v8059 = vadd.f32 %v7017, %v7891
  %v8060 = vadd.f32 %v7018, %v7892
  %v8061 = vadd.f32 %v7019, %v7893
  %v8062 = vadd.f32 %v7020, %v7894
  %v8063 = vadd.f32 %v7021, %v7895
  %v8064 = vadd.f32 %v7022, %v7888
  %v8065 = vadd.f32 %v7023, %v7889
  %v8066 = vadd.f32 %v7024, %v7890
  %v8067 = vadd.f32 %v7025, %v7891
  %v8068 = vadd.f32 %v7026, %v7892
  %v8069 = vadd.f32 %v7027, %v7893
  %v8070 = vadd.f32 %v7028, %v7894
  %v8071 = vadd.f32 %v7029, %v7895
  %v8072 = vadd.f32 %v7030, %v7888
  %v8073 = vadd.f32 %v7031, %v7889
  %v8074 = vadd.f32 %v7032, %v7890
  %v8075 = vadd.f32 %v7033, %v7891
  %v8076 = vadd.f32 %v7034, %v7892
  %v8077 = vadd.f32 %v7035, %v7893
  %v8078 = vadd.f32 %v7036, %v7894
  %v8079 = vadd.f32 %v7037, %v7895
  %v8080 = vadd.f32 %v7038, %v7888
  %v8081 = vadd.f32 %v7039, %v7889
  %v8082 = vadd.f32 %v7040, %v7890
  %v8083 = vadd.f32 %v7041, %v7891
  %v8084 = vadd.f32 %v7042, %v7892
  %v8085 = vadd.f32 %v7043, %v7893
  %v8086 = vadd.f32 %v7044, %v7894
  %v8087 = vadd.f32 %v7045, %v7895
  %v8088 = vadd.f32 %v7046, %v7888
  %v8089 = vadd.f32 %v7047, %v7889
  %v8090 = vadd.f32 %v7048, %v7890
  %v8091 = vadd.f32 %v7049, %v7891
  %v8092 = vadd.f32 %v7050, %v7892
  %v8093 = vadd.f32 %v7051, %v7893
  %v8094 = vadd.f32 %v7052, %v7894
  %v8095 = vadd.f32 %v7053, %v7895
  %v8096 = vadd.f32 %v7054, %v7888
  %v8097 = vadd.f32 %v7055, %v7889
  %v8098 = vadd.f32 %v7056, %v7890
  %v8099 = vadd.f32 %v7057, %v7891
  %v8100 = vadd.f32 %v7058, %v7892
  %v8101 = vadd.f32 %v7059, %v7893
  %v8102 = vadd.f32 %v7060, %v7894
  %v8103 = vadd.f32 %v7061, %v7895
  %v8104 = vadd.f32 %v7062, %v7888
  %v8105 = vadd.f32 %v7063, %v7889
  %v8106 = vadd.f32 %v7064, %v7890
  %v8107 = vadd.f32 %v7065, %v7891
  %v8108 = vadd.f32 %v7066, %v7892
  %v8109 = vadd.f32 %v7067, %v7893
  %v8110 = vadd.f32 %v7068, %v7894
  %v8111 = vadd.f32 %v7069, %v7895
  %v8112 = vadd.f32 %v7070, %v7888
  %v8113 = vadd.f32 %v7071, %v7889
  %v8114 = vadd.f32 %v7072, %v7890
  %v8115 = vadd.f32 %v7073, %v7891
  %v8116 = vadd.f32 %v7074, %v7892
  %v8117 = vadd.f32 %v7075, %v7893
  %v8118 = vadd.f32 %v7076, %v7894
  %v8119 = vadd.f32 %v7077, %v7895
  %v8120 = vadd.f32 %v7078, %v7888
  %v8121 = vadd.f32 %v7079, %v7889
  %v8122 = vadd.f32 %v7080, %v7890
  %v8123 = vadd.f32 %v7081, %v7891
  %v8124 = vadd.f32 %v7082, %v7892
  %v8125 = vadd.f32 %v7083, %v7893
  %v8126 = vadd.f32 %v7084, %v7894
  %v8127 = vadd.f32 %v7085, %v7895
  %v8128 = vadd.f32 %v7086, %v7888
  %v8129 = vadd.f32 %v7087, %v7889
  %v8130 = vadd.f32 %v7088, %v7890
  %v8131 = vadd.f32 %v7089, %v7891
  %v8132 = vadd.f32 %v7090, %v7892
  %v8133 = vadd.f32 %v7091, %v7893
  %v8134 = vadd.f32 %v7092, %v7894
  %v8135 = vadd.f32 %v7093, %v7895
  %v8136 = vadd.f32 %v7094, %v7888
  %v8137 = vadd.f32 %v7095, %v7889
  %v8138 = vadd.f32 %v7096, %v7890
  %v8139 = vadd.f32 %v7097, %v7891
  %v8140 = vadd.f32 %v7098, %v7892
  %v8141 = vadd.f32 %v7099, %v7893
  %v8142 = vadd.f32 %v7100, %v7894
  %v8143 = vadd.f32 %v7101, %v7895
  %v8144 = vadd.f32 %v7102, %v7888
  %v8145 = vadd.f32 %v7103, %v7889
  %v8146 = vadd.f32 %v7104, %v7890
  %v8147 = vadd.f32 %v7105, %v7891
  %v8148 = vadd.f32 %v7106, %v7892
  %v8149 = vadd.f32 %v7107, %v7893
  %v8150 = vadd.f32 %v7108, %v7894
  %v8151 = vadd.f32 %v7109, %v7895
  %v8152 = vadd.f32 %v7110, %v7888
  %v8153 = vadd.f32 %v7111, %v7889
  %v8154 = vadd.f32 %v7112, %v7890
  %v8155 = vadd.f32 %v7113, %v7891
  %v8156 = vadd.f32 %v7114, %v7892
  %v8157 = vadd.f32 %v7115, %v7893
  %v8158 = vadd.f32 %v7116, %v7894
  %v8159 = vadd.f32 %v7117, %v7895
  %v8160 = vadd.f32 %v7118, %v7888
  %v8161 = vadd.f32 %v7119, %v7889
  %v8162 = vadd.f32 %v7120, %v7890
  %v8163 = vadd.f32 %v7121, %v7891
  %v8164 = vadd.f32 %v7122, %v7892
  %v8165 = vadd.f32 %v7123, %v7893
  %v8166 = vadd.f32 %v7124, %v7894
  %v8167 = vadd.f32 %v7125, %v7895
  %v8168 = vadd.f32 %v7126, %v7888
  %v8169 = vadd.f32 %v7127, %v7889
  %v8170 = vadd.f32 %v7128, %v7890
  %v8171 = vadd.f32 %v7129, %v7891
  %v8172 = vadd.f32 %v7130, %v7892
  %v8173 = vadd.f32 %v7131, %v7893
  %v8174 = vadd.f32 %v7132, %v7894
  %v8175 = vadd.f32 %v7133, %v7895
  %v8176 = vadd.f32 %v7134, %v7888
  %v8177 = vadd.f32 %v7135, %v7889
  %v8178 = vadd.f32 %v7136, %v7890
  %v8179 = vadd.f32 %v7137, %v7891
  %v8180 = vadd.f32 %v7138, %v7892
  %v8181 = vadd.f32 %v7139, %v7893
  %v8182 = vadd.f32 %v7140, %v7894
  %v8183 = vadd.f32 %v7141, %v7895
  %v8184 = vadd.f32 %v7142, %v7888
  %v8185 = vadd.f32 %v7143, %v7889
  %v8186 = vadd.f32 %v7144, %v7890
  %v8187 = vadd.f32 %v7145, %v7891
  %v8188 = vadd.f32 %v7146, %v7892
  %v8189 = vadd.f32 %v7147, %v7893
  %v8190 = vadd.f32 %v7148, %v7894
  %v8191 = vadd.f32 %v7149, %v7895
  %v8192 = vadd.f32 %v7150, %v7888
  %v8193 = vadd.f32 %v7151, %v7889
  %v8194 = vadd.f32 %v7152, %v7890
  %v8195 = vadd.f32 %v7153, %v7891
  %v8196 = vadd.f32 %v7154, %v7892
  %v8197 = vadd.f32 %v7155, %v7893
  %v8198 = vadd.f32 %v7156, %v7894
  %v8199 = vadd.f32 %v7157, %v7895
  %v8200 = vadd.f32 %v7158, %v7888
  %v8201 = vadd.f32 %v7159, %v7889
  %v8202 = vadd.f32 %v7160, %v7890
  %v8203 = vadd.f32 %v7161, %v7891
  %v8204 = vadd.f32 %v7162, %v7892
  %v8205 = vadd.f32 %v7163, %v7893
  %v8206 = vadd.f32 %v7164, %v7894
  %v8207 = vadd.f32 %v7165, %v7895
  %v8208 = vadd.f32 %v7166, %v7888
  %v8209 = vadd.f32 %v7167, %v7889
  %v8210 = vadd.f32 %v7168, %v7890
  %v8211 = vadd.f32 %v7169, %v7891
  %v8212 = vadd.f32 %v7170, %v7892
  %v8213 = vadd.f32 %v7171, %v7893
  %v8214 = vadd.f32 %v7172, %v7894
  %v8215 = vadd.f32 %v7173, %v7895
  %v8216 = vadd.f32 %v7174, %v7888
  %v8217 = vadd.f32 %v7175, %v7889
  %v8218 = vadd.f32 %v7176, %v7890
  %v8219 = vadd.f32 %v7177, %v7891
  %v8220 = vadd.f32 %v7178, %v7892
  %v8221 = vadd.f32 %v7179, %v7893
  %v8222 = vadd.f32 %v7180, %v7894
  %v8223 = vadd.f32 %v7181, %v7895
  %v8224 = vadd.f32 %v7182, %v7888
  %v8225 = vadd.f32 %v7183, %v7889
  %v8226 = vadd.f32 %v7184, %v7890
  %v8227 = vadd.f32 %v7185, %v7891
  %v8228 = vadd.f32 %v7186, %v7892
  %v8229 = vadd.f32 %v7187, %v7893
  %v8230 = vadd.f32 %v7188, %v7894
  %v8231 = vadd.f32 %v7189, %v7895
  %v8232 = vadd.f32 %v7190, %v7888
  %v8233 = vadd.f32 %v7191, %v7889
  %v8234 = vadd.f32 %v7192, %v7890
  %v8235 = vadd.f32 %v7193, %v7891
  %v8236 = vadd.f32 %v7194, %v7892
  %v8237 = vadd.f32 %v7195, %v7893
  %v8238 = vadd.f32 %v7196, %v7894
  %v8239 = vadd.f32 %v7197, %v7895
  %v8240 = vadd.f32 %v7198, %v7888
  %v8241 = vadd.f32 %v7199, %v7889
  %v8242 = vadd.f32 %v7200, %v7890
  %v8243 = vadd.f32 %v7201, %v7891
  %v8244 = vadd.f32 %v7202, %v7892
  %v8245 = vadd.f32 %v7203, %v7893
  %v8246 = vadd.f32 %v7204, %v7894
  %v8247 = vadd.f32 %v7205, %v7895
  %v8248 = vadd.f32 %v7206, %v7888
  %v8249 = vadd.f32 %v7207, %v7889
  %v8250 = vadd.f32 %v7208, %v7890
  %v8251 = vadd.f32 %v7209, %v7891
  %v8252 = vadd.f32 %v7210, %v7892
  %v8253 = vadd.f32 %v7211, %v7893
  %v8254 = vadd.f32 %v7212, %v7894
  %v8255 = vadd.f32 %v7213, %v7895
  %v8256 = vadd.f32 %v7214, %v7888
  %v8257 = vadd.f32 %v7215, %v7889
  %v8258 = vadd.f32 %v7216, %v7890
  %v8259 = vadd.f32 %v7217, %v7891
  %v8260 = vadd.f32 %v7218, %v7892
  %v8261 = vadd.f32 %v7219, %v7893
  %v8262 = vadd.f32 %v7220, %v7894
  %v8263 = vadd.f32 %v7221, %v7895
  %v8264 = vadd.f32 %v7222, %v7888
  %v8265 = vadd.f32 %v7223, %v7889
  %v8266 = vadd.f32 %v7224, %v7890
  %v8267 = vadd.f32 %v7225, %v7891
  %v8268 = vadd.f32 %v7226, %v7892
  %v8269 = vadd.f32 %v7227, %v7893
  %v8270 = vadd.f32 %v7228, %v7894
  %v8271 = vadd.f32 %v7229, %v7895
  %v8272 = vadd.f32 %v7230, %v7888
  %v8273 = vadd.f32 %v7231, %v7889
  %v8274 = vadd.f32 %v7232, %v7890
  %v8275 = vadd.f32 %v7233, %v7891
  %v8276 = vadd.f32 %v7234, %v7892
  %v8277 = vadd.f32 %v7235, %v7893
  %v8278 = vadd.f32 %v7236, %v7894
  %v8279 = vadd.f32 %v7237, %v7895
  %v8280 = vadd.f32 %v7238, %v7888
  %v8281 = vadd.f32 %v7239, %v7889
  %v8282 = vadd.f32 %v7240, %v7890
  %v8283 = vadd.f32 %v7241, %v7891
  %v8284 = vadd.f32 %v7242, %v7892
  %v8285 = vadd.f32 %v7243, %v7893
  %v8286 = vadd.f32 %v7244, %v7894
  %v8287 = vadd.f32 %v7245, %v7895
  %v8288 = vadd.f32 %v7246, %v7888
  %v8289 = vadd.f32 %v7247, %v7889
  %v8290 = vadd.f32 %v7248, %v7890
  %v8291 = vadd.f32 %v7249, %v7891
  %v8292 = vadd.f32 %v7250, %v7892
  %v8293 = vadd.f32 %v7251, %v7893
  %v8294 = vadd.f32 %v7252, %v7894
  %v8295 = vadd.f32 %v7253, %v7895
  %v8296 = vadd.f32 %v7254, %v7888
  %v8297 = vadd.f32 %v7255, %v7889
  %v8298 = vadd.f32 %v7256, %v7890
  %v8299 = vadd.f32 %v7257, %v7891
  %v8300 = vadd.f32 %v7258, %v7892
  %v8301 = vadd.f32 %v7259, %v7893
  %v8302 = vadd.f32 %v7260, %v7894
  %v8303 = vadd.f32 %v7261, %v7895
  %v8304 = vadd.f32 %v7262, %v7888
  %v8305 = vadd.f32 %v7263, %v7889
  %v8306 = vadd.f32 %v7264, %v7890
  %v8307 = vadd.f32 %v7265, %v7891
  %v8308 = vadd.f32 %v7266, %v7892
  %v8309 = vadd.f32 %v7267, %v7893
  %v8310 = vadd.f32 %v7268, %v7894
  %v8311 = vadd.f32 %v7269, %v7895
  %v8312 = vadd.f32 %v7270, %v7888
  %v8313 = vadd.f32 %v7271, %v7889
  %v8314 = vadd.f32 %v7272, %v7890
  %v8315 = vadd.f32 %v7273, %v7891
  %v8316 = vadd.f32 %v7274, %v7892
  %v8317 = vadd.f32 %v7275, %v7893
  %v8318 = vadd.f32 %v7276, %v7894
  %v8319 = vadd.f32 %v7277, %v7895
  %v8320 = vadd.f32 %v7278, %v7888
  %v8321 = vadd.f32 %v7279, %v7889
  %v8322 = vadd.f32 %v7280, %v7890
  %v8323 = vadd.f32 %v7281, %v7891
  %v8324 = vadd.f32 %v7282, %v7892
  %v8325 = vadd.f32 %v7283, %v7893
  %v8326 = vadd.f32 %v7284, %v7894
  %v8327 = vadd.f32 %v7285, %v7895
  %v8328 = vadd.f32 %v7286, %v7888
  %v8329 = vadd.f32 %v7287, %v7889
  %v8330 = vadd.f32 %v7288, %v7890
  %v8331 = vadd.f32 %v7289, %v7891
  %v8332 = vadd.f32 %v7290, %v7892
  %v8333 = vadd.f32 %v7291, %v7893
  %v8334 = vadd.f32 %v7292, %v7894
  %v8335 = vadd.f32 %v7293, %v7895
  %v8336 = vadd.f32 %v7294, %v7888
  %v8337 = vadd.f32 %v7295, %v7889
  %v8338 = vadd.f32 %v7296, %v7890
  %v8339 = vadd.f32 %v7297, %v7891
  %v8340 = vadd.f32 %v7298, %v7892
  %v8341 = vadd.f32 %v7299, %v7893
  %v8342 = vadd.f32 %v7300, %v7894
  %v8343 = vadd.f32 %v7301, %v7895
  %v8344 = vadd.f32 %v7302, %v7888
  %v8345 = vadd.f32 %v7303, %v7889
  %v8346 = vadd.f32 %v7304, %v7890
  %v8347 = vadd.f32 %v7305, %v7891
  %v8348 = vadd.f32 %v7306, %v7892
  %v8349 = vadd.f32 %v7307, %v7893
  %v8350 = vadd.f32 %v7308, %v7894
  %v8351 = vadd.f32 %v7309, %v7895
  %v8352 = vadd.f32 %v7310, %v7888
  %v8353 = vadd.f32 %v7311, %v7889
  %v8354 = vadd.f32 %v7312, %v7890
  %v8355 = vadd.f32 %v7313, %v7891
  %v8356 = vadd.f32 %v7314, %v7892
  %v8357 = vadd.f32 %v7315, %v7893
  %v8358 = vadd.f32 %v7316, %v7894
  %v8359 = vadd.f32 %v7317, %v7895
  %v8360 = vadd.f32 %v7318, %v7888
  %v8361 = vadd.f32 %v7319, %v7889
  %v8362 = vadd.f32 %v7320, %v7890
  %v8363 = vadd.f32 %v7321, %v7891
  %v8364 = vadd.f32 %v7322, %v7892
  %v8365 = vadd.f32 %v7323, %v7893
  %v8366 = vadd.f32 %v7324, %v7894
  %v8367 = vadd.f32 %v7325, %v7895
  %v8368 = vadd.f32 %v7326, %v7888
  %v8369 = vadd.f32 %v7327, %v7889
  %v8370 = vadd.f32 %v7328, %v7890
  %v8371 = vadd.f32 %v7329, %v7891
  %v8372 = vadd.f32 %v7330, %v7892
  %v8373 = vadd.f32 %v7331, %v7893
  %v8374 = vadd.f32 %v7332, %v7894
  %v8375 = vadd.f32 %v7333, %v7895
  %v8376 = vadd.f32 %v7334, %v7888
  %v8377 = vadd.f32 %v7335, %v7889
  %v8378 = vadd.f32 %v7336, %v7890
  %v8379 = vadd.f32 %v7337, %v7891
  %v8380 = vadd.f32 %v7338, %v7892
  %v8381 = vadd.f32 %v7339, %v7893
  %v8382 = vadd.f32 %v7340, %v7894
  %v8383 = vadd.f32 %v7341, %v7895
  %v8384 = vadd.f32 %v7342, %v7888
  %v8385 = vadd.f32 %v7343, %v7889
  %v8386 = vadd.f32 %v7344, %v7890
  %v8387 = vadd.f32 %v7345, %v7891
  %v8388 = vadd.f32 %v7346, %v7892
  %v8389 = vadd.f32 %v7347, %v7893
  %v8390 = vadd.f32 %v7348, %v7894
  %v8391 = vadd.f32 %v7349, %v7895
  %v8392 = vadd.f32 %v7350, %v7888
  %v8393 = vadd.f32 %v7351, %v7889
  %v8394 = vadd.f32 %v7352, %v7890
  %v8395 = vadd.f32 %v7353, %v7891
  %v8396 = vadd.f32 %v7354, %v7892
  %v8397 = vadd.f32 %v7355, %v7893
  %v8398 = vadd.f32 %v7356, %v7894
  %v8399 = vadd.f32 %v7357, %v7895
  %v8400 = vadd.f32 %v7358, %v7888
  %v8401 = vadd.f32 %v7359, %v7889
  %v8402 = vadd.f32 %v7360, %v7890
  %v8403 = vadd.f32 %v7361, %v7891
  %v8404 = vadd.f32 %v7362, %v7892
  %v8405 = vadd.f32 %v7363, %v7893
  %v8406 = vadd.f32 %v7364, %v7894
  %v8407 = vadd.f32 %v7365, %v7895
  %v8408 = vadd.f32 %v7366, %v7888
  %v8409 = vadd.f32 %v7367, %v7889
  %v8410 = vadd.f32 %v7368, %v7890
  %v8411 = vadd.f32 %v7369, %v7891
  %v8412 = vadd.f32 %v7370, %v7892
  %v8413 = vadd.f32 %v7371, %v7893
  %v8414 = vadd.f32 %v7372, %v7894
  %v8415 = vadd.f32 %v7373, %v7895
  %v8416 = vadd.f32 %v7374, %v7888
  %v8417 = vadd.f32 %v7375, %v7889
  %v8418 = vadd.f32 %v7376, %v7890
  %v8419 = vadd.f32 %v7377, %v7891
  %v8420 = vadd.f32 %v7378, %v7892
  %v8421 = vadd.f32 %v7379, %v7893
  %v8422 = vadd.f32 %v7380, %v7894
  %v8423 = vadd.f32 %v7381, %v7895
  %v8424 = vadd.f32 %v7382, %v7888
  %v8425 = vadd.f32 %v7383, %v7889
  %v8426 = vadd.f32 %v7384, %v7890
  %v8427 = vadd.f32 %v7385, %v7891
  %v8428 = vadd.f32 %v7386, %v7892
  %v8429 = vadd.f32 %v7387, %v7893
  %v8430 = vadd.f32 %v7388, %v7894
  %v8431 = vadd.f32 %v7389, %v7895
  %v8432 = vadd.f32 %v7390, %v7888
  %v8433 = vadd.f32 %v7391, %v7889
  %v8434 = vadd.f32 %v7392, %v7890
  %v8435 = vadd.f32 %v7393, %v7891
  %v8436 = vadd.f32 %v7394, %v7892
  %v8437 = vadd.f32 %v7395, %v7893
  %v8438 = vadd.f32 %v7396, %v7894
  %v8439 = vadd.f32 %v7397, %v7895
  %v8440 = vadd.f32 %v7398, %v7888
  %v8441 = vadd.f32 %v7399, %v7889
  %v8442 = vadd.f32 %v7400, %v7890
  %v8443 = vadd.f32 %v7401, %v7891
  %v8444 = vadd.f32 %v7402, %v7892
  %v8445 = vadd.f32 %v7403, %v7893
  %v8446 = vadd.f32 %v7404, %v7894
  %v8447 = vadd.f32 %v7405, %v7895
  %v8448 = vadd.f32 %v7406, %v7888
  %v8449 = vadd.f32 %v7407, %v7889
  %v8450 = vadd.f32 %v7408, %v7890
  %v8451 = vadd.f32 %v7409, %v7891
  %v8452 = vadd.f32 %v7410, %v7892
  %v8453 = vadd.f32 %v7411, %v7893
  %v8454 = vadd.f32 %v7412, %v7894
  %v8455 = vadd.f32 %v7413, %v7895
  %v8456 = vadd.f32 %v7414, %v7888
  %v8457 = vadd.f32 %v7415, %v7889
  %v8458 = vadd.f32 %v7416, %v7890
  %v8459 = vadd.f32 %v7417, %v7891
  %v8460 = vadd.f32 %v7418, %v7892
  %v8461 = vadd.f32 %v7419, %v7893
  %v8462 = vadd.f32 %v7420, %v7894
  %v8463 = vadd.f32 %v7421, %v7895
  %v8464 = vadd.f32 %v7422, %v7888
  %v8465 = vadd.f32 %v7423, %v7889
  %v8466 = vadd.f32 %v7424, %v7890
  %v8467 = vadd.f32 %v7425, %v7891
  %v8468 = vadd.f32 %v7426, %v7892
  %v8469 = vadd.f32 %v7427, %v7893
  %v8470 = vadd.f32 %v7428, %v7894
  %v8471 = vadd.f32 %v7429, %v7895
  %v8472 = vadd.f32 %v7430, %v7888
  %v8473 = vadd.f32 %v7431, %v7889
  %v8474 = vadd.f32 %v7432, %v7890
  %v8475 = vadd.f32 %v7433, %v7891
  %v8476 = vadd.f32 %v7434, %v7892
  %v8477 = vadd.f32 %v7435, %v7893
  %v8478 = vadd.f32 %v7436, %v7894
  %v8479 = vadd.f32 %v7437, %v7895
  %v8480 = vadd.f32 %v7438, %v7888
  %v8481 = vadd.f32 %v7439, %v7889
  %v8482 = vadd.f32 %v7440, %v7890
  %v8483 = vadd.f32 %v7441, %v7891
  %v8484 = vadd.f32 %v7442, %v7892
  %v8485 = vadd.f32 %v7443, %v7893
  %v8486 = vadd.f32 %v7444, %v7894
  %v8487 = vadd.f32 %v7445, %v7895
  %v8488 = vadd.f32 %v7446, %v7888
  %v8489 = vadd.f32 %v7447, %v7889
  %v8490 = vadd.f32 %v7448, %v7890
  %v8491 = vadd.f32 %v7449, %v7891
  %v8492 = vadd.f32 %v7450, %v7892
  %v8493 = vadd.f32 %v7451, %v7893
  %v8494 = vadd.f32 %v7452, %v7894
  %v8495 = vadd.f32 %v7453, %v7895
  %v8496 = vadd.f32 %v7454, %v7888
  %v8497 = vadd.f32 %v7455, %v7889
  %v8498 = vadd.f32 %v7456, %v7890
  %v8499 = vadd.f32 %v7457, %v7891
  %v8500 = vadd.f32 %v7458, %v7892
  %v8501 = vadd.f32 %v7459, %v7893
  %v8502 = vadd.f32 %v7460, %v7894
  %v8503 = vadd.f32 %v7461, %v7895
  %v8504 = vadd.f32 %v7462, %v7888
  %v8505 = vadd.f32 %v7463, %v7889
  %v8506 = vadd.f32 %v7464, %v7890
  %v8507 = vadd.f32 %v7465, %v7891
  %v8508 = vadd.f32 %v7466, %v7892
  %v8509 = vadd.f32 %v7467, %v7893
  %v8510 = vadd.f32 %v7468, %v7894
  %v8511 = vadd.f32 %v7469, %v7895
  %v8512 = vadd.f32 %v7470, %v7888
  %v8513 = vadd.f32 %v7471, %v7889
  %v8514 = vadd.f32 %v7472, %v7890
  %v8515 = vadd.f32 %v7473, %v7891
  %v8516 = vadd.f32 %v7474, %v7892
  %v8517 = vadd.f32 %v7475, %v7893
  %v8518 = vadd.f32 %v7476, %v7894
  %v8519 = vadd.f32 %v7477, %v7895
  %v8520 = vadd.f32 %v7478, %v7888
  %v8521 = vadd.f32 %v7479, %v7889
  %v8522 = vadd.f32 %v7480, %v7890
  %v8523 = vadd.f32 %v7481, %v7891
  %v8524 = vadd.f32 %v7482, %v7892
  %v8525 = vadd.f32 %v7483, %v7893
  %v8526 = vadd.f32 %v7484, %v7894
  %v8527 = vadd.f32 %v7485, %v7895
  %v8528 = vadd.f32 %v7486, %v7888
  %v8529 = vadd.f32 %v7487, %v7889
  %v8530 = vadd.f32 %v7488, %v7890
  %v8531 = vadd.f32 %v7489, %v7891
  %v8532 = vadd.f32 %v7490, %v7892
  %v8533 = vadd.f32 %v7491, %v7893
  %v8534 = vadd.f32 %v7492, %v7894
  %v8535 = vadd.f32 %v7493, %v7895
  %v8536 = vadd.f32 %v7494, %v7888
  %v8537 = vadd.f32 %v7495, %v7889
  %v8538 = vadd.f32 %v7496, %v7890
  %v8539 = vadd.f32 %v7497, %v7891
  %v8540 = vadd.f32 %v7498, %v7892
  %v8541 = vadd.f32 %v7499, %v7893
  %v8542 = vadd.f32 %v7500, %v7894
  %v8543 = vadd.f32 %v7501, %v7895
  %v8544 = vadd.f32 %v7502, %v7888
  %v8545 = vadd.f32 %v7503, %v7889
  %v8546 = vadd.f32 %v7504, %v7890
  %v8547 = vadd.f32 %v7505, %v7891
  %v8548 = vadd.f32 %v7506, %v7892
  %v8549 = vadd.f32 %v7507, %v7893
  %v8550 = vadd.f32 %v7508, %v7894
  %v8551 = vadd.f32 %v7509, %v7895
  %v8552 = vadd.f32 %v7510, %v7888
  %v8553 = vadd.f32 %v7511, %v7889
  %v8554 = vadd.f32 %v7512, %v7890
  %v8555 = vadd.f32 %v7513, %v7891
  %v8556 = vadd.f32 %v7514, %v7892
  %v8557 = vadd.f32 %v7515, %v7893
  %v8558 = vadd.f32 %v7516, %v7894
  %v8559 = vadd.f32 %v7517, %v7895
  %v8560 = vadd.f32 %v7518, %v7888
  %v8561 = vadd.f32 %v7519, %v7889
  %v8562 = vadd.f32 %v7520, %v7890
  %v8563 = vadd.f32 %v7521, %v7891
  %v8564 = vadd.f32 %v7522, %v7892
  %v8565 = vadd.f32 %v7523, %v7893
  %v8566 = vadd.f32 %v7524, %v7894
  %v8567 = vadd.f32 %v7525, %v7895
  %v8568 = vadd.f32 %v7526, %v7888
  %v8569 = vadd.f32 %v7527, %v7889
  %v8570 = vadd.f32 %v7528, %v7890
  %v8571 = vadd.f32 %v7529, %v7891
  %v8572 = vadd.f32 %v7530, %v7892
  %v8573 = vadd.f32 %v7531, %v7893
  %v8574 = vadd.f32 %v7532, %v7894
  %v8575 = vadd.f32 %v7533, %v7895
  %v8576 = vadd.f32 %v7534, %v7888
  %v8577 = vadd.f32 %v7535, %v7889
  %v8578 = vadd.f32 %v7536, %v7890
  %v8579 = vadd.f32 %v7537, %v7891
  %v8580 = vadd.f32 %v7538, %v7892
  %v8581 = vadd.f32 %v7539, %v7893
  %v8582 = vadd.f32 %v7540, %v7894
  %v8583 = vadd.f32 %v7541, %v7895
  %v8584 = vadd.f32 %v7542, %v7888
  %v8585 = vadd.f32 %v7543, %v7889
  %v8586 = vadd.f32 %v7544, %v7890
  %v8587 = vadd.f32 %v7545, %v7891
  %v8588 = vadd.f32 %v7546, %v7892
  %v8589 = vadd.f32 %v7547, %v7893
  %v8590 = vadd.f32 %v7548, %v7894
  %v8591 = vadd.f32 %v7549, %v7895
  %v8592 = vadd.f32 %v7550, %v7888
  %v8593 = vadd.f32 %v7551, %v7889
  %v8594 = vadd.f32 %v7552, %v7890
  %v8595 = vadd.f32 %v7553, %v7891
  %v8596 = vadd.f32 %v7554, %v7892
  %v8597 = vadd.f32 %v7555, %v7893
  %v8598 = vadd.f32 %v7556, %v7894
  %v8599 = vadd.f32 %v7557, %v7895
  %v8600 = vadd.f32 %v7558, %v7888
  %v8601 = vadd.f32 %v7559, %v7889
  %v8602 = vadd.f32 %v7560, %v7890
  %v8603 = vadd.f32 %v7561, %v7891
  %v8604 = vadd.f32 %v7562, %v7892
  %v8605 = vadd.f32 %v7563, %v7893
  %v8606 = vadd.f32 %v7564, %v7894
  %v8607 = vadd.f32 %v7565, %v7895
  %v8608 = vadd.f32 %v7566, %v7888
  %v8609 = vadd.f32 %v7567, %v7889
  %v8610 = vadd.f32 %v7568, %v7890
  %v8611 = vadd.f32 %v7569, %v7891
  %v8612 = vadd.f32 %v7570, %v7892
  %v8613 = vadd.f32 %v7571, %v7893
  %v8614 = vadd.f32 %v7572, %v7894
  %v8615 = vadd.f32 %v7573, %v7895
  %v8616 = vadd.f32 %v7574, %v7888
  %v8617 = vadd.f32 %v7575, %v7889
  %v8618 = vadd.f32 %v7576, %v7890
  %v8619 = vadd.f32 %v7577, %v7891
  %v8620 = vadd.f32 %v7578, %v7892
  %v8621 = vadd.f32 %v7579, %v7893
  %v8622 = vadd.f32 %v7580, %v7894
  %v8623 = vadd.f32 %v7581, %v7895
  %v8624 = vadd.f32 %v7582, %v7888
  %v8625 = vadd.f32 %v7583, %v7889
  %v8626 = vadd.f32 %v7584, %v7890
  %v8627 = vadd.f32 %v7585, %v7891
  %v8628 = vadd.f32 %v7586, %v7892
  %v8629 = vadd.f32 %v7587, %v7893
  %v8630 = vadd.f32 %v7588, %v7894
  %v8631 = vadd.f32 %v7589, %v7895
  %v8632 = vadd.f32 %v7590, %v7888
  %v8633 = vadd.f32 %v7591, %v7889
  %v8634 = vadd.f32 %v7592, %v7890
  %v8635 = vadd.f32 %v7593, %v7891
  %v8636 = vadd.f32 %v7594, %v7892
  %v8637 = vadd.f32 %v7595, %v7893
  %v8638 = vadd.f32 %v7596, %v7894
  %v8639 = vadd.f32 %v7597, %v7895
  %v8640 = vadd.f32 %v7598, %v7888
  %v8641 = vadd.f32 %v7599, %v7889
  %v8642 = vadd.f32 %v7600, %v7890
  %v8643 = vadd.f32 %v7601, %v7891
  %v8644 = vadd.f32 %v7602, %v7892
  %v8645 = vadd.f32 %v7603, %v7893
  %v8646 = vadd.f32 %v7604, %v7894
  %v8647 = vadd.f32 %v7605, %v7895
  %v8648 = vadd.f32 %v7606, %v7888
  %v8649 = vadd.f32 %v7607, %v7889
  %v8650 = vadd.f32 %v7608, %v7890
  %v8651 = vadd.f32 %v7609, %v7891
  %v8652 = vadd.f32 %v7610, %v7892
  %v8653 = vadd.f32 %v7611, %v7893
  %v8654 = vadd.f32 %v7612, %v7894
  %v8655 = vadd.f32 %v7613, %v7895
  %v8656 = vadd.f32 %v7614, %v7888
  %v8657 = vadd.f32 %v7615, %v7889
  %v8658 = vadd.f32 %v7616, %v7890
  %v8659 = vadd.f32 %v7617, %v7891
  %v8660 = vadd.f32 %v7618, %v7892
  %v8661 = vadd.f32 %v7619, %v7893
  %v8662 = vadd.f32 %v7620, %v7894
  %v8663 = vadd.f32 %v7621, %v7895
  %v8664 = vadd.f32 %v7622, %v7888
  %v8665 = vadd.f32 %v7623, %v7889
  %v8666 = vadd.f32 %v7624, %v7890
  %v8667 = vadd.f32 %v7625, %v7891
  %v8668 = vadd.f32 %v7626, %v7892
  %v8669 = vadd.f32 %v7627, %v7893
  %v8670 = vadd.f32 %v7628, %v7894
  %v8671 = vadd.f32 %v7629, %v7895
  %v8672 = vadd.f32 %v7630, %v7888
  %v8673 = vadd.f32 %v7631, %v7889
  %v8674 = vadd.f32 %v7632, %v7890
  %v8675 = vadd.f32 %v7633, %v7891
  %v8676 = vadd.f32 %v7634, %v7892
  %v8677 = vadd.f32 %v7635, %v7893
  %v8678 = vadd.f32 %v7636, %v7894
  %v8679 = vadd.f32 %v7637, %v7895
  %v8680 = vadd.f32 %v7638, %v7888
  %v8681 = vadd.f32 %v7639, %v7889
  %v8682 = vadd.f32 %v7640, %v7890
  %v8683 = vadd.f32 %v7641, %v7891
  %v8684 = vadd.f32 %v7642, %v7892
  %v8685 = vadd.f32 %v7643, %v7893
  %v8686 = vadd.f32 %v7644, %v7894
  %v8687 = vadd.f32 %v7645, %v7895
  %v8688 = vadd.f32 %v7646, %v7888
  %v8689 = vadd.f32 %v7647, %v7889
  %v8690 = vadd.f32 %v7648, %v7890
  %v8691 = vadd.f32 %v7649, %v7891
  %v8692 = vadd.f32 %v7650, %v7892
  %v8693 = vadd.f32 %v7651, %v7893
  %v8694 = vadd.f32 %v7652, %v7894
  %v8695 = vadd.f32 %v7653, %v7895
  %v8696 = vadd.f32 %v7654, %v7888
  %v8697 = vadd.f32 %v7655, %v7889
  %v8698 = vadd.f32 %v7656, %v7890
  %v8699 = vadd.f32 %v7657, %v7891
  %v8700 = vadd.f32 %v7658, %v7892
  %v8701 = vadd.f32 %v7659, %v7893
  %v8702 = vadd.f32 %v7660, %v7894
  %v8703 = vadd.f32 %v7661, %v7895
  %v8704 = vadd.f32 %v7662, %v7888
  %v8705 = vadd.f32 %v7663, %v7889
  %v8706 = vadd.f32 %v7664, %v7890
  %v8707 = vadd.f32 %v7665, %v7891
  %v8708 = vadd.f32 %v7666, %v7892
  %v8709 = vadd.f32 %v7667, %v7893
  %v8710 = vadd.f32 %v7668, %v7894
  %v8711 = vadd.f32 %v7669, %v7895
  %v8712 = vadd.f32 %v7670, %v7888
  %v8713 = vadd.f32 %v7671, %v7889
  %v8714 = vadd.f32 %v7672, %v7890
  %v8715 = vadd.f32 %v7673, %v7891
  %v8716 = vadd.f32 %v7674, %v7892
  %v8717 = vadd.f32 %v7675, %v7893
  %v8718 = vadd.f32 %v7676, %v7894
  %v8719 = vadd.f32 %v7677, %v7895
  %v8720 = vadd.f32 %v7678, %v7888
  %v8721 = vadd.f32 %v7679, %v7889
  %v8722 = vadd.f32 %v7680, %v7890
  %v8723 = vadd.f32 %v7681, %v7891
  %v8724 = vadd.f32 %v7682, %v7892
  %v8725 = vadd.f32 %v7683, %v7893
  %v8726 = vadd.f32 %v7684, %v7894
  %v8727 = vadd.f32 %v7685, %v7895
  %v8728 = vadd.f32 %v7686, %v7888
  %v8729 = vadd.f32 %v7687, %v7889
  %v8730 = vadd.f32 %v7688, %v7890
  %v8731 = vadd.f32 %v7689, %v7891
  %v8732 = vadd.f32 %v7690, %v7892
  %v8733 = vadd.f32 %v7691, %v7893
  %v8734 = vadd.f32 %v7692, %v7894
  %v8735 = vadd.f32 %v7693, %v7895
  %v8736 = vadd.f32 %v7694, %v7888
  %v8737 = vadd.f32 %v7695, %v7889
  %v8738 = vadd.f32 %v7696, %v7890
  %v8739 = vadd.f32 %v7697, %v7891
  %v8740 = vadd.f32 %v7698, %v7892
  %v8741 = vadd.f32 %v7699, %v7893
  %v8742 = vadd.f32 %v7700, %v7894
  %v8743 = vadd.f32 %v7701, %v7895
  %v8744 = vadd.f32 %v7702, %v7888
  %v8745 = vadd.f32 %v7703, %v7889
  %v8746 = vadd.f32 %v7704, %v7890
  %v8747 = vadd.f32 %v7705, %v7891
  %v8748 = vadd.f32 %v7706, %v7892
  %v8749 = vadd.f32 %v7707, %v7893
  %v8750 = vadd.f32 %v7708, %v7894
  %v8751 = vadd.f32 %v7709, %v7895
  %v8752 = vadd.f32 %v7710, %v7888
  %v8753 = vadd.f32 %v7711, %v7889
  %v8754 = vadd.f32 %v7712, %v7890
  %v8755 = vadd.f32 %v7713, %v7891
  %v8756 = vadd.f32 %v7714, %v7892
  %v8757 = vadd.f32 %v7715, %v7893
  %v8758 = vadd.f32 %v7716, %v7894
  %v8759 = vadd.f32 %v7717, %v7895
  %v8760 = vadd.f32 %v7718, %v7888
  %v8761 = vadd.f32 %v7719, %v7889
  %v8762 = vadd.f32 %v7720, %v7890
  %v8763 = vadd.f32 %v7721, %v7891
  %v8764 = vadd.f32 %v7722, %v7892
  %v8765 = vadd.f32 %v7723, %v7893
  %v8766 = vadd.f32 %v7724, %v7894
  %v8767 = vadd.f32 %v7725, %v7895
  %v8768 = vadd.f32 %v7726, %v7888
  %v8769 = vadd.f32 %v7727, %v7889
  %v8770 = vadd.f32 %v7728, %v7890
  %v8771 = vadd.f32 %v7729, %v7891
  %v8772 = vadd.f32 %v7730, %v7892
  %v8773 = vadd.f32 %v7731, %v7893
  %v8774 = vadd.f32 %v7732, %v7894
  %v8775 = vadd.f32 %v7733, %v7895
  %v8776 = vadd.f32 %v7734, %v7888
  %v8777 = vadd.f32 %v7735, %v7889
  %v8778 = vadd.f32 %v7736, %v7890
  %v8779 = vadd.f32 %v7737, %v7891
  %v8780 = vadd.f32 %v7738, %v7892
  %v8781 = vadd.f32 %v7739, %v7893
  %v8782 = vadd.f32 %v7740, %v7894
  %v8783 = vadd.f32 %v7741, %v7895
  %v8784 = vadd.f32 %v7742, %v7888
  %v8785 = vadd.f32 %v7743, %v7889
  %v8786 = vadd.f32 %v7744, %v7890
  %v8787 = vadd.f32 %v7745, %v7891
  %v8788 = vadd.f32 %v7746, %v7892
  %v8789 = vadd.f32 %v7747, %v7893
  %v8790 = vadd.f32 %v7748, %v7894
  %v8791 = vadd.f32 %v7749, %v7895
  %v8792 = vadd.f32 %v7750, %v7888
  %v8793 = vadd.f32 %v7751, %v7889
  %v8794 = vadd.f32 %v7752, %v7890
  %v8795 = vadd.f32 %v7753, %v7891
  %v8796 = vadd.f32 %v7754, %v7892
  %v8797 = vadd.f32 %v7755, %v7893
  %v8798 = vadd.f32 %v7756, %v7894
  %v8799 = vadd.f32 %v7757, %v7895
  %v8800 = vadd.f32 %v7758, %v7888
  %v8801 = vadd.f32 %v7759, %v7889
  %v8802 = vadd.f32 %v7760, %v7890
  %v8803 = vadd.f32 %v7761, %v7891
  %v8804 = vadd.f32 %v7762, %v7892
  %v8805 = vadd.f32 %v7763, %v7893
  %v8806 = vadd.f32 %v7764, %v7894
  %v8807 = vadd.f32 %v7765, %v7895
  %v8808 = vadd.f32 %v7766, %v7888
  %v8809 = vadd.f32 %v7767, %v7889
  %v8810 = vadd.f32 %v7768, %v7890
  %v8811 = vadd.f32 %v7769, %v7891
  %v8812 = vadd.f32 %v7770, %v7892
  %v8813 = vadd.f32 %v7771, %v7893
  %v8814 = vadd.f32 %v7772, %v7894
  %v8815 = vadd.f32 %v7773, %v7895
  %v8816 = vadd.f32 %v7774, %v7888
  %v8817 = vadd.f32 %v7775, %v7889
  %v8818 = vadd.f32 %v7776, %v7890
  %v8819 = vadd.f32 %v7777, %v7891
  %v8820 = vadd.f32 %v7778, %v7892
  %v8821 = vadd.f32 %v7779, %v7893
  %v8822 = vadd.f32 %v7780, %v7894
  %v8823 = vadd.f32 %v7781, %v7895
  %v8824 = vadd.f32 %v7782, %v7888
  %v8825 = vadd.f32 %v7783, %v7889
  %v8826 = vadd.f32 %v7784, %v7890
  %v8827 = vadd.f32 %v7785, %v7891
  %v8828 = vadd.f32 %v7786, %v7892
  %v8829 = vadd.f32 %v7787, %v7893
  %v8830 = vadd.f32 %v7788, %v7894
  %v8831 = vadd.f32 %v7789, %v7895
  %v8832 = vadd.f32 %v7790, %v7888
  %v8833 = vadd.f32 %v7791, %v7889
  %v8834 = vadd.f32 %v7792, %v7890
  %v8835 = vadd.f32 %v7793, %v7891
  %v8836 = vadd.f32 %v7794, %v7892
  %v8837 = vadd.f32 %v7795, %v7893
  %v8838 = vadd.f32 %v7796, %v7894
  %v8839 = vadd.f32 %v7797, %v7895
  %v8840 = vadd.f32 %v7798, %v7888
  %v8841 = vadd.f32 %v7799, %v7889
  %v8842 = vadd.f32 %v7800, %v7890
  %v8843 = vadd.f32 %v7801, %v7891
  %v8844 = vadd.f32 %v7802, %v7892
  %v8845 = vadd.f32 %v7803, %v7893
  %v8846 = vadd.f32 %v7804, %v7894
  %v8847 = vadd.f32 %v7805, %v7895
  %v8848 = vadd.f32 %v7806, %v7888
  %v8849 = vadd.f32 %v7807, %v7889
  %v8850 = vadd.f32 %v7808, %v7890
  %v8851 = vadd.f32 %v7809, %v7891
  %v8852 = vadd.f32 %v7810, %v7892
  %v8853 = vadd.f32 %v7811, %v7893
  %v8854 = vadd.f32 %v7812, %v7894
  %v8855 = vadd.f32 %v7813, %v7895
  %v8856 = vadd.f32 %v7814, %v7888
  %v8857 = vadd.f32 %v7815, %v7889
  %v8858 = vadd.f32 %v7816, %v7890
  %v8859 = vadd.f32 %v7817, %v7891
  %v8860 = vadd.f32 %v7818, %v7892
  %v8861 = vadd.f32 %v7819, %v7893
  %v8862 = vadd.f32 %v7820, %v7894
  %v8863 = vadd.f32 %v7821, %v7895
  %v8864 = vadd.f32 %v7822, %v7888
  %v8865 = vadd.f32 %v7823, %v7889
  %v8866 = vadd.f32 %v7824, %v7890
  %v8867 = vadd.f32 %v7825, %v7891
  %v8868 = vadd.f32 %v7826, %v7892
  %v8869 = vadd.f32 %v7827, %v7893
  %v8870 = vadd.f32 %v7828, %v7894
  %v8871 = vadd.f32 %v7829, %v7895
  %v8872 = vadd.f32 %v7830, %v7888
  %v8873 = vadd.f32 %v7831, %v7889
  %v8874 = vadd.f32 %v7832, %v7890
  %v8875 = vadd.f32 %v7833, %v7891
  %v8876 = vadd.f32 %v7834, %v7892
  %v8877 = vadd.f32 %v7835, %v7893
  %v8878 = vadd.f32 %v7836, %v7894
  %v8879 = vadd.f32 %v7837, %v7895
  %v8880 = vadd.f32 %v7838, %v7888
  %v8881 = vadd.f32 %v7839, %v7889
  %v8882 = vadd.f32 %v7840, %v7890
  %v8883 = vadd.f32 %v7841, %v7891
  %v8884 = vadd.f32 %v7842, %v7892
  %v8885 = vadd.f32 %v7843, %v7893
  %v8886 = vadd.f32 %v7844, %v7894
  %v8887 = vadd.f32 %v7845, %v7895
  %v8888 = vadd.f32 %v7846, %v7888
  %v8889 = vadd.f32 %v7847, %v7889
  %v8890 = vadd.f32 %v7848, %v7890
  %v8891 = vadd.f32 %v7849, %v7891
  %v8892 = vadd.f32 %v7850, %v7892
  %v8893 = vadd.f32 %v7851, %v7893
  %v8894 = vadd.f32 %v7852, %v7894
  %v8895 = vadd.f32 %v7853, %v7895
  %v8896 = vadd.f32 %v7854, %v7888
  %v8897 = vadd.f32 %v7855, %v7889
  %v8898 = vadd.f32 %v7856, %v7890
  %v8899 = vadd.f32 %v7857, %v7891
  %v8900 = vadd.f32 %v7858, %v7892
  %v8901 = vadd.f32 %v7859, %v7893
  %v8902 = vadd.f32 %v7860, %v7894
  %v8903 = vadd.f32 %v7861, %v7895
  %v8904 = vadd.f32 %v7862, %v7888
  %v8905 = vadd.f32 %v7863, %v7889
  %v8906 = vadd.f32 %v7864, %v7890
  %v8907 = vadd.f32 %v7865, %v7891
  %v8908 = vadd.f32 %v7866, %v7892
  %v8909 = vadd.f32 %v7867, %v7893
  %v8910 = vadd.f32 %v7868, %v7894
  %v8911 = vadd.f32 %v7869, %v7895
  %v8912 = vadd.f32 %v7870, %v7888
  %v8913 = vadd.f32 %v7871, %v7889
  %v8914 = vadd.f32 %v7872, %v7890
  %v8915 = vadd.f32 %v7873, %v7891
  %v8916 = vadd.f32 %v7874, %v7892
  %v8917 = vadd.f32 %v7875, %v7893
  %v8918 = vadd.f32 %v7876, %v7894
  %v8919 = vadd.f32 %v7877, %v7895
  %v8920 = vadd.f32 %v7878, %v7888
  %v8921 = vadd.f32 %v7879, %v7889
  %v8922 = vadd.f32 %v7880, %v7890
  %v8923 = vadd.f32 %v7881, %v7891
  %v8924 = vadd.f32 %v7882, %v7892
  %v8925 = vadd.f32 %v7883, %v7893
  %v8926 = vadd.f32 %v7884, %v7894
  %v8927 = vadd.f32 %v7885, %v7895
  %v8928 = vmax.f32 %v7904, 0.0
  %v8929 = vmax.f32 %v7905, 0.0
  %v8930 = vmax.f32 %v7906, 0.0
  %v8931 = vmax.f32 %v7907, 0.0
  %v8932 = vmax.f32 %v7908, 0.0
  %v8933 = vmax.f32 %v7909, 0.0
  %v8934 = vmax.f32 %v7910, 0.0
  %v8935 = vmax.f32 %v7911, 0.0
  %v8936 = vmax.f32 %v7912, 0.0
  %v8937 = vmax.f32 %v7913, 0.0
  %v8938 = vmax.f32 %v7914, 0.0
  %v8939 = vmax.f32 %v7915, 0.0
  %v8940 = vmax.f32 %v7916, 0.0
  %v8941 = vmax.f32 %v7917, 0.0
  %v8942 = vmax.f32 %v7918, 0.0
  %v8943 = vmax.f32 %v7919, 0.0
  %v8944 = vmax.f32 %v7920, 0.0
  %v8945 = vmax.f32 %v7921, 0.0
  %v8946 = vmax.f32 %v7922, 0.0
  %v8947 = vmax.f32 %v7923, 0.0
  %v8948 = vmax.f32 %v7924, 0.0
  %v8949 = vmax.f32 %v7925, 0.0
  %v8950 = vmax.f32 %v7926, 0.0
  %v8951 = vmax.f32 %v7927, 0.0
  %v8952 = vmax.f32 %v7928, 0.0
  %v8953 = vmax.f32 %v7929, 0.0
  %v8954 = vmax.f32 %v7930, 0.0
  %v8955 = vmax.f32 %v7931, 0.0
  %v8956 = vmax.f32 %v7932, 0.0
  %v8957 = vmax.f32 %v7933, 0.0
  %v8958 = vmax.f32 %v7934, 0.0
  %v8959 = vmax.f32 %v7935, 0.0
  %v8960 = vmax.f32 %v7936, 0.0
  %v8961 = vmax.f32 %v7937, 0.0
  %v8962 = vmax.f32 %v7938, 0.0
  %v8963 = vmax.f32 %v7939, 0.0
  %v8964 = vmax.f32 %v7940, 0.0
  %v8965 = vmax.f32 %v7941, 0.0
  %v8966 = vmax.f32 %v7942, 0.0
  %v8967 = vmax.f32 %v7943, 0.0
  %v8968 = vmax.f32 %v7944, 0.0
  %v8969 = vmax.f32 %v7945, 0.0
  %v8970 = vmax.f32 %v7946, 0.0
  %v8971 = vmax.f32 %v7947, 0.0
  %v8972 = vmax.f32 %v7948, 0.0
  %v8973 = vmax.f32 %v7949, 0.0
  %v8974 = vmax.f32 %v7950, 0.0
  %v8975 = vmax.f32 %v7951, 0.0
  %v8976 = vmax.f32 %v7952, 0.0
  %v8977 = vmax.f32 %v7953, 0.0
  %v8978 = vmax.f32 %v7954, 0.0
  %v8979 = vmax.f32 %v7955, 0.0
  %v8980 = vmax.f32 %v7956, 0.0
  %v8981 = vmax.f32 %v7957, 0.0
  %v8982 = vmax.f32 %v7958, 0.0
  %v8983 = vmax.f32 %v7959, 0.0
  %v8984 = vmax.f32 %v7960, 0.0
  %v8985 = vmax.f32 %v7961, 0.0
  %v8986 = vmax.f32 %v7962, 0.0
  %v8987 = vmax.f32 %v7963, 0.0
  %v8988 = vmax.f32 %v7964, 0.0
  %v8989 = vmax.f32 %v7965, 0.0
  %v8990 = vmax.f32 %v7966, 0.0
  %v8991 = vmax.f32 %v7967, 0.0
  %v8992 = vmax.f32 %v7968, 0.0
  %v8993 = vmax.f32 %v7969, 0.0
  %v8994 = vmax.f32 %v7970, 0.0
  %v8995 = vmax.f32 %v7971, 0.0
  %v8996 = vmax.f32 %v7972, 0.0
  %v8997 = vmax.f32 %v7973, 0.0
  %v8998 = vmax.f32 %v7974, 0.0
  %v8999 = vmax.f32 %v7975, 0.0
  %v9000 = vmax.f32 %v7976, 0.0
  %v9001 = vmax.f32 %v7977, 0.0
  %v9002 = vmax.f32 %v7978, 0.0
  %v9003 = vmax.f32 %v7979, 0.0
  %v9004 = vmax.f32 %v7980, 0.0
  %v9005 = vmax.f32 %v7981, 0.0
  %v9006 = vmax.f32 %v7982, 0.0
  %v9007 = vmax.f32 %v7983, 0.0
  %v9008 = vmax.f32 %v7984, 0.0
  %v9009 = vmax.f32 %v7985, 0.0
  %v9010 = vmax.f32 %v7986, 0.0
  %v9011 = vmax.f32 %v7987, 0.0
  %v9012 = vmax.f32 %v7988, 0.0
  %v9013 = vmax.f32 %v7989, 0.0
  %v9014 = vmax.f32 %v7990, 0.0
  %v9015 = vmax.f32 %v7991, 0.0
  %v9016 = vmax.f32 %v7992, 0.0
  %v9017 = vmax.f32 %v7993, 0.0
  %v9018 = vmax.f32 %v7994, 0.0
  %v9019 = vmax.f32 %v7995, 0.0
  %v9020 = vmax.f32 %v7996, 0.0
  %v9021 = vmax.f32 %v7997, 0.0
  %v9022 = vmax.f32 %v7998, 0.0
  %v9023 = vmax.f32 %v7999, 0.0
  %v9024 = vmax.f32 %v8000, 0.0
  %v9025 = vmax.f32 %v8001, 0.0
  %v9026 = vmax.f32 %v8002, 0.0
  %v9027 = vmax.f32 %v8003, 0.0
  %v9028 = vmax.f32 %v8004, 0.0
  %v9029 = vmax.f32 %v8005, 0.0
  %v9030 = vmax.f32 %v8006, 0.0
  %v9031 = vmax.f32 %v8007, 0.0
  %v9032 = vmax.f32 %v8008, 0.0
  %v9033 = vmax.f32 %v8009, 0.0
  %v9034 = vmax.f32 %v8010, 0.0
  %v9035 = vmax.f32 %v8011, 0.0
  %v9036 = vmax.f32 %v8012, 0.0
  %v9037 = vmax.f32 %v8013, 0.0
  %v9038 = vmax.f32 %v8014, 0.0
  %v9039 = vmax.f32 %v8015, 0.0
  %v9040 = vmax.f32 %v8016, 0.0
  %v9041 = vmax.f32 %v8017, 0.0
  %v9042 = vmax.f32 %v8018, 0.0
  %v9043 = vmax.f32 %v8019, 0.0
  %v9044 = vmax.f32 %v8020, 0.0
  %v9045 = vmax.f32 %v8021, 0.0
  %v9046 = vmax.f32 %v8022, 0.0
  %v9047 = vmax.f32 %v8023, 0.0
  %v9048 = vmax.f32 %v8024, 0.0
  %v9049 = vmax.f32 %v8025, 0.0
  %v9050 = vmax.f32 %v8026, 0.0
  %v9051 = vmax.f32 %v8027, 0.0
  %v9052 = vmax.f32 %v8028, 0.0
  %v9053 = vmax.f32 %v8029, 0.0
  %v9054 = vmax.f32 %v8030, 0.0
  %v9055 = vmax.f32 %v8031, 0.0
  %v9056 = vmax.f32 %v8032, 0.0
  %v9057 = vmax.f32 %v8033, 0.0
  %v9058 = vmax.f32 %v8034, 0.0
  %v9059 = vmax.f32 %v8035, 0.0
  %v9060 = vmax.f32 %v8036, 0.0
  %v9061 = vmax.f32 %v8037, 0.0
  %v9062 = vmax.f32 %v8038, 0.0
  %v9063 = vmax.f32 %v8039, 0.0
  %v9064 = vmax.f32 %v8040, 0.0
  %v9065 = vmax.f32 %v8041, 0.0
  %v9066 = vmax.f32 %v8042, 0.0
  %v9067 = vmax.f32 %v8043, 0.0
  %v9068 = vmax.f32 %v8044, 0.0
  %v9069 = vmax.f32 %v8045, 0.0
  %v9070 = vmax.f32 %v8046, 0.0
  %v9071 = vmax.f32 %v8047, 0.0
  %v9072 = vmax.f32 %v8048, 0.0
  %v9073 = vmax.f32 %v8049, 0.0
  %v9074 = vmax.f32 %v8050, 0.0
  %v9075 = vmax.f32 %v8051, 0.0
  %v9076 = vmax.f32 %v8052, 0.0
  %v9077 = vmax.f32 %v8053, 0.0
  %v9078 = vmax.f32 %v8054, 0.0
  %v9079 = vmax.f32 %v8055, 0.0
  %v9080 = vmax.f32 %v8056, 0.0
  %v9081 = vmax.f32 %v8057, 0.0
  %v9082 = vmax.f32 %v8058, 0.0
  %v9083 = vmax.f32 %v8059, 0.0
  %v9084 = vmax.f32 %v8060, 0.0
  %v9085 = vmax.f32 %v8061, 0.0
  %v9086 = vmax.f32 %v8062, 0.0
  %v9087 = vmax.f32 %v8063, 0.0
  %v9088 = vmax.f32 %v8064, 0.0
  %v9089 = vmax.f32 %v8065, 0.0
  %v9090 = vmax.f32 %v8066, 0.0
  %v9091 = vmax.f32 %v8067, 0.0
  %v9092 = vmax.f32 %v8068, 0.0
  %v9093 = vmax.f32 %v8069, 0.0
  %v9094 = vmax.f32 %v8070, 0.0
  %v9095 = vmax.f32 %v8071, 0.0
  %v9096 = vmax.f32 %v8072, 0.0
  %v9097 = vmax.f32 %v8073, 0.0
  %v9098 = vmax.f32 %v8074, 0.0
  %v9099 = vmax.f32 %v8075, 0.0
  %v9100 = vmax.f32 %v8076, 0.0
  %v9101 = vmax.f32 %v8077, 0.0
  %v9102 = vmax.f32 %v8078, 0.0
  %v9103 = vmax.f32 %v8079, 0.0
  %v9104 = vmax.f32 %v8080, 0.0
  %v9105 = vmax.f32 %v8081, 0.0
  %v9106 = vmax.f32 %v8082, 0.0
  %v9107 = vmax.f32 %v8083, 0.0
  %v9108 = vmax.f32 %v8084, 0.0
  %v9109 = vmax.f32 %v8085, 0.0
  %v9110 = vmax.f32 %v8086, 0.0
  %v9111 = vmax.f32 %v8087, 0.0
  %v9112 = vmax.f32 %v8088, 0.0
  %v9113 = vmax.f32 %v8089, 0.0
  %v9114 = vmax.f32 %v8090, 0.0
  %v9115 = vmax.f32 %v8091, 0.0
  %v9116 = vmax.f32 %v8092, 0.0
  %v9117 = vmax.f32 %v8093, 0.0
  %v9118 = vmax.f32 %v8094, 0.0
  %v9119 = vmax.f32 %v8095, 0.0
  %v9120 = vmax.f32 %v8096, 0.0
  %v9121 = vmax.f32 %v8097, 0.0
  %v9122 = vmax.f32 %v8098, 0.0
  %v9123 = vmax.f32 %v8099, 0.0
  %v9124 = vmax.f32 %v8100, 0.0
  %v9125 = vmax.f32 %v8101, 0.0
  %v9126 = vmax.f32 %v8102, 0.0
  %v9127 = vmax.f32 %v8103, 0.0
  %v9128 = vmax.f32 %v8104, 0.0
  %v9129 = vmax.f32 %v8105, 0.0
  %v9130 = vmax.f32 %v8106, 0.0
  %v9131 = vmax.f32 %v8107, 0.0
  %v9132 = vmax.f32 %v8108, 0.0
  %v9133 = vmax.f32 %v8109, 0.0
  %v9134 = vmax.f32 %v8110, 0.0
  %v9135 = vmax.f32 %v8111, 0.0
  %v9136 = vmax.f32 %v8112, 0.0
  %v9137 = vmax.f32 %v8113, 0.0
  %v9138 = vmax.f32 %v8114, 0.0
  %v9139 = vmax.f32 %v8115, 0.0
  %v9140 = vmax.f32 %v8116, 0.0
  %v9141 = vmax.f32 %v8117, 0.0
  %v9142 = vmax.f32 %v8118, 0.0
  %v9143 = vmax.f32 %v8119, 0.0
  %v9144 = vmax.f32 %v8120, 0.0
  %v9145 = vmax.f32 %v8121, 0.0
  %v9146 = vmax.f32 %v8122, 0.0
  %v9147 = vmax.f32 %v8123, 0.0
  %v9148 = vmax.f32 %v8124, 0.0
  %v9149 = vmax.f32 %v8125, 0.0
  %v9150 = vmax.f32 %v8126, 0.0
  %v9151 = vmax.f32 %v8127, 0.0
  %v9152 = vmax.f32 %v8128, 0.0
  %v9153 = vmax.f32 %v8129, 0.0
  %v9154 = vmax.f32 %v8130, 0.0
  %v9155 = vmax.f32 %v8131, 0.0
  %v9156 = vmax.f32 %v8132, 0.0
  %v9157 = vmax.f32 %v8133, 0.0
  %v9158 = vmax.f32 %v8134, 0.0
  %v9159 = vmax.f32 %v8135, 0.0
  %v9160 = vmax.f32 %v8136, 0.0
  %v9161 = vmax.f32 %v8137, 0.0
  %v9162 = vmax.f32 %v8138, 0.0
  %v9163 = vmax.f32 %v8139, 0.0
  %v9164 = vmax.f32 %v8140, 0.0
  %v9165 = vmax.f32 %v8141, 0.0
  %v9166 = vmax.f32 %v8142, 0.0
  %v9167 = vmax.f32 %v8143, 0.0
  %v9168 = vmax.f32 %v8144, 0.0
  %v9169 = vmax.f32 %v8145, 0.0
  %v9170 = vmax.f32 %v8146, 0.0
  %v9171 = vmax.f32 %v8147, 0.0
  %v9172 = vmax.f32 %v8148, 0.0
  %v9173 = vmax.f32 %v8149, 0.0
  %v9174 = vmax.f32 %v8150, 0.0
  %v9175 = vmax.f32 %v8151, 0.0
  %v9176 = vmax.f32 %v8152, 0.0
  %v9177 = vmax.f32 %v8153, 0.0
  %v9178 = vmax.f32 %v8154, 0.0
  %v9179 = vmax.f32 %v8155, 0.0
  %v9180 = vmax.f32 %v8156, 0.0
  %v9181 = vmax.f32 %v8157, 0.0
  %v9182 = vmax.f32 %v8158, 0.0
  %v9183 = vmax.f32 %v8159, 0.0
  %v9184 = vmax.f32 %v8160, 0.0
  %v9185 = vmax.f32 %v8161, 0.0
  %v9186 = vmax.f32 %v8162, 0.0
  %v9187 = vmax.f32 %v8163, 0.0
  %v9188 = vmax.f32 %v8164, 0.0
  %v9189 = vmax.f32 %v8165, 0.0
  %v9190 = vmax.f32 %v8166, 0.0
  %v9191 = vmax.f32 %v8167, 0.0
  %v9192 = vmax.f32 %v8168, 0.0
  %v9193 = vmax.f32 %v8169, 0.0
  %v9194 = vmax.f32 %v8170, 0.0
  %v9195 = vmax.f32 %v8171, 0.0
  %v9196 = vmax.f32 %v8172, 0.0
  %v9197 = vmax.f32 %v8173, 0.0
  %v9198 = vmax.f32 %v8174, 0.0
  %v9199 = vmax.f32 %v8175, 0.0
  %v9200 = vmax.f32 %v8176, 0.0
  %v9201 = vmax.f32 %v8177, 0.0
  %v9202 = vmax.f32 %v8178, 0.0
  %v9203 = vmax.f32 %v8179, 0.0
  %v9204 = vmax.f32 %v8180, 0.0
  %v9205 = vmax.f32 %v8181, 0.0
  %v9206 = vmax.f32 %v8182, 0.0
  %v9207 = vmax.f32 %v8183, 0.0
  %v9208 = vmax.f32 %v8184, 0.0
  %v9209 = vmax.f32 %v8185, 0.0
  %v9210 = vmax.f32 %v8186, 0.0
  %v9211 = vmax.f32 %v8187, 0.0
  %v9212 = vmax.f32 %v8188, 0.0
  %v9213 = vmax.f32 %v8189, 0.0
  %v9214 = vmax.f32 %v8190, 0.0
  %v9215 = vmax.f32 %v8191, 0.0
  %v9216 = vmax.f32 %v8192, 0.0
  %v9217 = vmax.f32 %v8193, 0.0
  %v9218 = vmax.f32 %v8194, 0.0
  %v9219 = vmax.f32 %v8195, 0.0
  %v9220 = vmax.f32 %v8196, 0.0
  %v9221 = vmax.f32 %v8197, 0.0
  %v9222 = vmax.f32 %v8198, 0.0
  %v9223 = vmax.f32 %v8199, 0.0
  %v9224 = vmax.f32 %v8200, 0.0
  %v9225 = vmax.f32 %v8201, 0.0
  %v9226 = vmax.f32 %v8202, 0.0
  %v9227 = vmax.f32 %v8203, 0.0
  %v9228 = vmax.f32 %v8204, 0.0
  %v9229 = vmax.f32 %v8205, 0.0
  %v9230 = vmax.f32 %v8206, 0.0
  %v9231 = vmax.f32 %v8207, 0.0
  %v9232 = vmax.f32 %v8208, 0.0
  %v9233 = vmax.f32 %v8209, 0.0
  %v9234 = vmax.f32 %v8210, 0.0
  %v9235 = vmax.f32 %v8211, 0.0
  %v9236 = vmax.f32 %v8212, 0.0
  %v9237 = vmax.f32 %v8213, 0.0
  %v9238 = vmax.f32 %v8214, 0.0
  %v9239 = vmax.f32 %v8215, 0.0
  %v9240 = vmax.f32 %v8216, 0.0
  %v9241 = vmax.f32 %v8217, 0.0
  %v9242 = vmax.f32 %v8218, 0.0
  %v9243 = vmax.f32 %v8219, 0.0
  %v9244 = vmax.f32 %v8220, 0.0
  %v9245 = vmax.f32 %v8221, 0.0
  %v9246 = vmax.f32 %v8222, 0.0
  %v9247 = vmax.f32 %v8223, 0.0
  %v9248 = vmax.f32 %v8224, 0.0
  %v9249 = vmax.f32 %v8225, 0.0
  %v9250 = vmax.f32 %v8226, 0.0
  %v9251 = vmax.f32 %v8227, 0.0
  %v9252 = vmax.f32 %v8228, 0.0
  %v9253 = vmax.f32 %v8229, 0.0
  %v9254 = vmax.f32 %v8230, 0.0
  %v9255 = vmax.f32 %v8231, 0.0
  %v9256 = vmax.f32 %v8232, 0.0
  %v9257 = vmax.f32 %v8233, 0.0
  %v9258 = vmax.f32 %v8234, 0.0
  %v9259 = vmax.f32 %v8235, 0.0
  %v9260 = vmax.f32 %v8236, 0.0
  %v9261 = vmax.f32 %v8237, 0.0
  %v9262 = vmax.f32 %v8238, 0.0
  %v9263 = vmax.f32 %v8239, 0.0
  %v9264 = vmax.f32 %v8240, 0.0
  %v9265 = vmax.f32 %v8241, 0.0
  %v9266 = vmax.f32 %v8242, 0.0
  %v9267 = vmax.f32 %v8243, 0.0
  %v9268 = vmax.f32 %v8244, 0.0
  %v9269 = vmax.f32 %v8245, 0.0
  %v9270 = vmax.f32 %v8246, 0.0
  %v9271 = vmax.f32 %v8247, 0.0
  %v9272 = vmax.f32 %v8248, 0.0
  %v9273 = vmax.f32 %v8249, 0.0
  %v9274 = vmax.f32 %v8250, 0.0
  %v9275 = vmax.f32 %v8251, 0.0
  %v9276 = vmax.f32 %v8252, 0.0
  %v9277 = vmax.f32 %v8253, 0.0
  %v9278 = vmax.f32 %v8254, 0.0
  %v9279 = vmax.f32 %v8255, 0.0
  %v9280 = vmax.f32 %v8256, 0.0
  %v9281 = vmax.f32 %v8257, 0.0
  %v9282 = vmax.f32 %v8258, 0.0
  %v9283 = vmax.f32 %v8259, 0.0
  %v9284 = vmax.f32 %v8260, 0.0
  %v9285 = vmax.f32 %v8261, 0.0
  %v9286 = vmax.f32 %v8262, 0.0
  %v9287 = vmax.f32 %v8263, 0.0
  %v9288 = vmax.f32 %v8264, 0.0
  %v9289 = vmax.f32 %v8265, 0.0
  %v9290 = vmax.f32 %v8266, 0.0
  %v9291 = vmax.f32 %v8267, 0.0
  %v9292 = vmax.f32 %v8268, 0.0
  %v9293 = vmax.f32 %v8269, 0.0
  %v9294 = vmax.f32 %v8270, 0.0
  %v9295 = vmax.f32 %v8271, 0.0
  %v9296 = vmax.f32 %v8272, 0.0
  %v9297 = vmax.f32 %v8273, 0.0
  %v9298 = vmax.f32 %v8274, 0.0
  %v9299 = vmax.f32 %v8275, 0.0
  %v9300 = vmax.f32 %v8276, 0.0
  %v9301 = vmax.f32 %v8277, 0.0
  %v9302 = vmax.f32 %v8278, 0.0
  %v9303 = vmax.f32 %v8279, 0.0
  %v9304 = vmax.f32 %v8280, 0.0
  %v9305 = vmax.f32 %v8281, 0.0
  %v9306 = vmax.f32 %v8282, 0.0
  %v9307 = vmax.f32 %v8283, 0.0
  %v9308 = vmax.f32 %v8284, 0.0
  %v9309 = vmax.f32 %v8285, 0.0
  %v9310 = vmax.f32 %v8286, 0.0
  %v9311 = vmax.f32 %v8287, 0.0
  %v9312 = vmax.f32 %v8288, 0.0
  %v9313 = vmax.f32 %v8289, 0.0
  %v9314 = vmax.f32 %v8290, 0.0
  %v9315 = vmax.f32 %v8291, 0.0
  %v9316 = vmax.f32 %v8292, 0.0
  %v9317 = vmax.f32 %v8293, 0.0
  %v9318 = vmax.f32 %v8294, 0.0
  %v9319 = vmax.f32 %v8295, 0.0
  %v9320 = vmax.f32 %v8296, 0.0
  %v9321 = vmax.f32 %v8297, 0.0
  %v9322 = vmax.f32 %v8298, 0.0
  %v9323 = vmax.f32 %v8299, 0.0
  %v9324 = vmax.f32 %v8300, 0.0
  %v9325 = vmax.f32 %v8301, 0.0
  %v9326 = vmax.f32 %v8302, 0.0
  %v9327 = vmax.f32 %v8303, 0.0
  %v9328 = vmax.f32 %v8304, 0.0
  %v9329 = vmax.f32 %v8305, 0.0
  %v9330 = vmax.f32 %v8306, 0.0
  %v9331 = vmax.f32 %v8307, 0.0
  %v9332 = vmax.f32 %v8308, 0.0
  %v9333 = vmax.f32 %v8309, 0.0
  %v9334 = vmax.f32 %v8310, 0.0
  %v9335 = vmax.f32 %v8311, 0.0
  %v9336 = vmax.f32 %v8312, 0.0
  %v9337 = vmax.f32 %v8313, 0.0
  %v9338 = vmax.f32 %v8314, 0.0
  %v9339 = vmax.f32 %v8315, 0.0
  %v9340 = vmax.f32 %v8316, 0.0
  %v9341 = vmax.f32 %v8317, 0.0
  %v9342 = vmax.f32 %v8318, 0.0
  %v9343 = vmax.f32 %v8319, 0.0
  %v9344 = vmax.f32 %v8320, 0.0
  %v9345 = vmax.f32 %v8321, 0.0
  %v9346 = vmax.f32 %v8322, 0.0
  %v9347 = vmax.f32 %v8323, 0.0
  %v9348 = vmax.f32 %v8324, 0.0
  %v9349 = vmax.f32 %v8325, 0.0
  %v9350 = vmax.f32 %v8326, 0.0
  %v9351 = vmax.f32 %v8327, 0.0
  %v9352 = vmax.f32 %v8328, 0.0
  %v9353 = vmax.f32 %v8329, 0.0
  %v9354 = vmax.f32 %v8330, 0.0
  %v9355 = vmax.f32 %v8331, 0.0
  %v9356 = vmax.f32 %v8332, 0.0
  %v9357 = vmax.f32 %v8333, 0.0
  %v9358 = vmax.f32 %v8334, 0.0
  %v9359 = vmax.f32 %v8335, 0.0
  %v9360 = vmax.f32 %v8336, 0.0
  %v9361 = vmax.f32 %v8337, 0.0
  %v9362 = vmax.f32 %v8338, 0.0
  %v9363 = vmax.f32 %v8339, 0.0
  %v9364 = vmax.f32 %v8340, 0.0
  %v9365 = vmax.f32 %v8341, 0.0
  %v9366 = vmax.f32 %v8342, 0.0
  %v9367 = vmax.f32 %v8343, 0.0
  %v9368 = vmax.f32 %v8344, 0.0
  %v9369 = vmax.f32 %v8345, 0.0
  %v9370 = vmax.f32 %v8346, 0.0
  %v9371 = vmax.f32 %v8347, 0.0
  %v9372 = vmax.f32 %v8348, 0.0
  %v9373 = vmax.f32 %v8349, 0.0
  %v9374 = vmax.f32 %v8350, 0.0
  %v9375 = vmax.f32 %v8351, 0.0
  %v9376 = vmax.f32 %v8352, 0.0
  %v9377 = vmax.f32 %v8353, 0.0
  %v9378 = vmax.f32 %v8354, 0.0
  %v9379 = vmax.f32 %v8355, 0.0
  %v9380 = vmax.f32 %v8356, 0.0
  %v9381 = vmax.f32 %v8357, 0.0
  %v9382 = vmax.f32 %v8358, 0.0
  %v9383 = vmax.f32 %v8359, 0.0
  %v9384 = vmax.f32 %v8360, 0.0
  %v9385 = vmax.f32 %v8361, 0.0
  %v9386 = vmax.f32 %v8362, 0.0
  %v9387 = vmax.f32 %v8363, 0.0
  %v9388 = vmax.f32 %v8364, 0.0
  %v9389 = vmax.f32 %v8365, 0.0
  %v9390 = vmax.f32 %v8366, 0.0
  %v9391 = vmax.f32 %v8367, 0.0
  %v9392 = vmax.f32 %v8368, 0.0
  %v9393 = vmax.f32 %v8369, 0.0
  %v9394 = vmax.f32 %v8370, 0.0
  %v9395 = vmax.f32 %v8371, 0.0
  %v9396 = vmax.f32 %v8372, 0.0
  %v9397 = vmax.f32 %v8373, 0.0
  %v9398 = vmax.f32 %v8374, 0.0
  %v9399 = vmax.f32 %v8375, 0.0
  %v9400 = vmax.f32 %v8376, 0.0
  %v9401 = vmax.f32 %v8377, 0.0
  %v9402 = vmax.f32 %v8378, 0.0
  %v9403 = vmax.f32 %v8379, 0.0
  %v9404 = vmax.f32 %v8380, 0.0
  %v9405 = vmax.f32 %v8381, 0.0
  %v9406 = vmax.f32 %v8382, 0.0
  %v9407 = vmax.f32 %v8383, 0.0
  %v9408 = vmax.f32 %v8384, 0.0
  %v9409 = vmax.f32 %v8385, 0.0
  %v9410 = vmax.f32 %v8386, 0.0
  %v9411 = vmax.f32 %v8387, 0.0
  %v9412 = vmax.f32 %v8388, 0.0
  %v9413 = vmax.f32 %v8389, 0.0
  %v9414 = vmax.f32 %v8390, 0.0
  %v9415 = vmax.f32 %v8391, 0.0
  %v9416 = vmax.f32 %v8392, 0.0
  %v9417 = vmax.f32 %v8393, 0.0
  %v9418 = vmax.f32 %v8394, 0.0
  %v9419 = vmax.f32 %v8395, 0.0
  %v9420 = vmax.f32 %v8396, 0.0
  %v9421 = vmax.f32 %v8397, 0.0
  %v9422 = vmax.f32 %v8398, 0.0
  %v9423 = vmax.f32 %v8399, 0.0
  %v9424 = vmax.f32 %v8400, 0.0
  %v9425 = vmax.f32 %v8401, 0.0
  %v9426 = vmax.f32 %v8402, 0.0
  %v9427 = vmax.f32 %v8403, 0.0
  %v9428 = vmax.f32 %v8404, 0.0
  %v9429 = vmax.f32 %v8405, 0.0
  %v9430 = vmax.f32 %v8406, 0.0
  %v9431 = vmax.f32 %v8407, 0.0
  %v9432 = vmax.f32 %v8408, 0.0
  %v9433 = vmax.f32 %v8409, 0.0
  %v9434 = vmax.f32 %v8410, 0.0
  %v9435 = vmax.f32 %v8411, 0.0
  %v9436 = vmax.f32 %v8412, 0.0
  %v9437 = vmax.f32 %v8413, 0.0
  %v9438 = vmax.f32 %v8414, 0.0
  %v9439 = vmax.f32 %v8415, 0.0
  %v9440 = vmax.f32 %v8416, 0.0
  %v9441 = vmax.f32 %v8417, 0.0
  %v9442 = vmax.f32 %v8418, 0.0
  %v9443 = vmax.f32 %v8419, 0.0
  %v9444 = vmax.f32 %v8420, 0.0
  %v9445 = vmax.f32 %v8421, 0.0
  %v9446 = vmax.f32 %v8422, 0.0
  %v9447 = vmax.f32 %v8423, 0.0
  %v9448 = vmax.f32 %v8424, 0.0
  %v9449 = vmax.f32 %v8425, 0.0
  %v9450 = vmax.f32 %v8426, 0.0
  %v9451 = vmax.f32 %v8427, 0.0
  %v9452 = vmax.f32 %v8428, 0.0
  %v9453 = vmax.f32 %v8429, 0.0
  %v9454 = vmax.f32 %v8430, 0.0
  %v9455 = vmax.f32 %v8431, 0.0
  %v9456 = vmax.f32 %v8432, 0.0
  %v9457 = vmax.f32 %v8433, 0.0
  %v9458 = vmax.f32 %v8434, 0.0
  %v9459 = vmax.f32 %v8435, 0.0
  %v9460 = vmax.f32 %v8436, 0.0
  %v9461 = vmax.f32 %v8437, 0.0
  %v9462 = vmax.f32 %v8438, 0.0
  %v9463 = vmax.f32 %v8439, 0.0
  %v9464 = vmax.f32 %v8440, 0.0
  %v9465 = vmax.f32 %v8441, 0.0
  %v9466 = vmax.f32 %v8442, 0.0
  %v9467 = vmax.f32 %v8443, 0.0
  %v9468 = vmax.f32 %v8444, 0.0
  %v9469 = vmax.f32 %v8445, 0.0
  %v9470 = vmax.f32 %v8446, 0.0
  %v9471 = vmax.f32 %v8447, 0.0
  %v9472 = vmax.f32 %v8448, 0.0
  %v9473 = vmax.f32 %v8449, 0.0
  %v9474 = vmax.f32 %v8450, 0.0
  %v9475 = vmax.f32 %v8451, 0.0
  %v9476 = vmax.f32 %v8452, 0.0
  %v9477 = vmax.f32 %v8453, 0.0
  %v9478 = vmax.f32 %v8454, 0.0
  %v9479 = vmax.f32 %v8455, 0.0
  %v9480 = vmax.f32 %v8456, 0.0
  %v9481 = vmax.f32 %v8457, 0.0
  %v9482 = vmax.f32 %v8458, 0.0
  %v9483 = vmax.f32 %v8459, 0.0
  %v9484 = vmax.f32 %v8460, 0.0
  %v9485 = vmax.f32 %v8461, 0.0
  %v9486 = vmax.f32 %v8462, 0.0
  %v9487 = vmax.f32 %v8463, 0.0
  %v9488 = vmax.f32 %v8464, 0.0
  %v9489 = vmax.f32 %v8465, 0.0
  %v9490 = vmax.f32 %v8466, 0.0
  %v9491 = vmax.f32 %v8467, 0.0
  %v9492 = vmax.f32 %v8468, 0.0
  %v9493 = vmax.f32 %v8469, 0.0
  %v9494 = vmax.f32 %v8470, 0.0
  %v9495 = vmax.f32 %v8471, 0.0
  %v9496 = vmax.f32 %v8472, 0.0
  %v9497 = vmax.f32 %v8473, 0.0
  %v9498 = vmax.f32 %v8474, 0.0
  %v9499 = vmax.f32 %v8475, 0.0
  %v9500 = vmax.f32 %v8476, 0.0
  %v9501 = vmax.f32 %v8477, 0.0
  %v9502 = vmax.f32 %v8478, 0.0
  %v9503 = vmax.f32 %v8479, 0.0
  %v9504 = vmax.f32 %v8480, 0.0
  %v9505 = vmax.f32 %v8481, 0.0
  %v9506 = vmax.f32 %v8482, 0.0
  %v9507 = vmax.f32 %v8483, 0.0
  %v9508 = vmax.f32 %v8484, 0.0
  %v9509 = vmax.f32 %v8485, 0.0
  %v9510 = vmax.f32 %v8486, 0.0
  %v9511 = vmax.f32 %v8487, 0.0
  %v9512 = vmax.f32 %v8488, 0.0
  %v9513 = vmax.f32 %v8489, 0.0
  %v9514 = vmax.f32 %v8490, 0.0
  %v9515 = vmax.f32 %v8491, 0.0
  %v9516 = vmax.f32 %v8492, 0.0
  %v9517 = vmax.f32 %v8493, 0.0
  %v9518 = vmax.f32 %v8494, 0.0
  %v9519 = vmax.f32 %v8495, 0.0
  %v9520 = vmax.f32 %v8496, 0.0
  %v9521 = vmax.f32 %v8497, 0.0
  %v9522 = vmax.f32 %v8498, 0.0
  %v9523 = vmax.f32 %v8499, 0.0
  %v9524 = vmax.f32 %v8500, 0.0
  %v9525 = vmax.f32 %v8501, 0.0
  %v9526 = vmax.f32 %v8502, 0.0
  %v9527 = vmax.f32 %v8503, 0.0
  %v9528 = vmax.f32 %v8504, 0.0
  %v9529 = vmax.f32 %v8505, 0.0
  %v9530 = vmax.f32 %v8506, 0.0
  %v9531 = vmax.f32 %v8507, 0.0
  %v9532 = vmax.f32 %v8508, 0.0
  %v9533 = vmax.f32 %v8509, 0.0
  %v9534 = vmax.f32 %v8510, 0.0
  %v9535 = vmax.f32 %v8511, 0.0
  %v9536 = vmax.f32 %v8512, 0.0
  %v9537 = vmax.f32 %v8513, 0.0
  %v9538 = vmax.f32 %v8514, 0.0
  %v9539 = vmax.f32 %v8515, 0.0
  %v9540 = vmax.f32 %v8516, 0.0
  %v9541 = vmax.f32 %v8517, 0.0
  %v9542 = vmax.f32 %v8518, 0.0
  %v9543 = vmax.f32 %v8519, 0.0
  %v9544 = vmax.f32 %v8520, 0.0
  %v9545 = vmax.f32 %v8521, 0.0
  %v9546 = vmax.f32 %v8522, 0.0
  %v9547 = vmax.f32 %v8523, 0.0
  %v9548 = vmax.f32 %v8524, 0.0
  %v9549 = vmax.f32 %v8525, 0.0
  %v9550 = vmax.f32 %v8526, 0.0
  %v9551 = vmax.f32 %v8527, 0.0
  %v9552 = vmax.f32 %v8528, 0.0
  %v9553 = vmax.f32 %v8529, 0.0
  %v9554 = vmax.f32 %v8530, 0.0
  %v9555 = vmax.f32 %v8531, 0.0
  %v9556 = vmax.f32 %v8532, 0.0
  %v9557 = vmax.f32 %v8533, 0.0
  %v9558 = vmax.f32 %v8534, 0.0
  %v9559 = vmax.f32 %v8535, 0.0
  %v9560 = vmax.f32 %v8536, 0.0
  %v9561 = vmax.f32 %v8537, 0.0
  %v9562 = vmax.f32 %v8538, 0.0
  %v9563 = vmax.f32 %v8539, 0.0
  %v9564 = vmax.f32 %v8540, 0.0
  %v9565 = vmax.f32 %v8541, 0.0
  %v9566 = vmax.f32 %v8542, 0.0
  %v9567 = vmax.f32 %v8543, 0.0
  %v9568 = vmax.f32 %v8544, 0.0
  %v9569 = vmax.f32 %v8545, 0.0
  %v9570 = vmax.f32 %v8546, 0.0
  %v9571 = vmax.f32 %v8547, 0.0
  %v9572 = vmax.f32 %v8548, 0.0
  %v9573 = vmax.f32 %v8549, 0.0
  %v9574 = vmax.f32 %v8550, 0.0
  %v9575 = vmax.f32 %v8551, 0.0
  %v9576 = vmax.f32 %v8552, 0.0
  %v9577 = vmax.f32 %v8553, 0.0
  %v9578 = vmax.f32 %v8554, 0.0
  %v9579 = vmax.f32 %v8555, 0.0
  %v9580 = vmax.f32 %v8556, 0.0
  %v9581 = vmax.f32 %v8557, 0.0
  %v9582 = vmax.f32 %v8558, 0.0
  %v9583 = vmax.f32 %v8559, 0.0
  %v9584 = vmax.f32 %v8560, 0.0
  %v9585 = vmax.f32 %v8561, 0.0
  %v9586 = vmax.f32 %v8562, 0.0
  %v9587 = vmax.f32 %v8563, 0.0
  %v9588 = vmax.f32 %v8564, 0.0
  %v9589 = vmax.f32 %v8565, 0.0
  %v9590 = vmax.f32 %v8566, 0.0
  %v9591 = vmax.f32 %v8567, 0.0
  %v9592 = vmax.f32 %v8568, 0.0
  %v9593 = vmax.f32 %v8569, 0.0
  %v9594 = vmax.f32 %v8570, 0.0
  %v9595 = vmax.f32 %v8571, 0.0
  %v9596 = vmax.f32 %v8572, 0.0
  %v9597 = vmax.f32 %v8573, 0.0
  %v9598 = vmax.f32 %v8574, 0.0
  %v9599 = vmax.f32 %v8575, 0.0
  %v9600 = vmax.f32 %v8576, 0.0
  %v9601 = vmax.f32 %v8577, 0.0
  %v9602 = vmax.f32 %v8578, 0.0
  %v9603 = vmax.f32 %v8579, 0.0
  %v9604 = vmax.f32 %v8580, 0.0
  %v9605 = vmax.f32 %v8581, 0.0
  %v9606 = vmax.f32 %v8582, 0.0
  %v9607 = vmax.f32 %v8583, 0.0
  %v9608 = vmax.f32 %v8584, 0.0
  %v9609 = vmax.f32 %v8585, 0.0
  %v9610 = vmax.f32 %v8586, 0.0
  %v9611 = vmax.f32 %v8587, 0.0
  %v9612 = vmax.f32 %v8588, 0.0
  %v9613 = vmax.f32 %v8589, 0.0
  %v9614 = vmax.f32 %v8590, 0.0
  %v9615 = vmax.f32 %v8591, 0.0
  %v9616 = vmax.f32 %v8592, 0.0
  %v9617 = vmax.f32 %v8593, 0.0
  %v9618 = vmax.f32 %v8594, 0.0
  %v9619 = vmax.f32 %v8595, 0.0
  %v9620 = vmax.f32 %v8596, 0.0
  %v9621 = vmax.f32 %v8597, 0.0
  %v9622 = vmax.f32 %v8598, 0.0
  %v9623 = vmax.f32 %v8599, 0.0
  %v9624 = vmax.f32 %v8600, 0.0
  %v9625 = vmax.f32 %v8601, 0.0
  %v9626 = vmax.f32 %v8602, 0.0
  %v9627 = vmax.f32 %v8603, 0.0
  %v9628 = vmax.f32 %v8604, 0.0
  %v9629 = vmax.f32 %v8605, 0.0
  %v9630 = vmax.f32 %v8606, 0.0
  %v9631 = vmax.f32 %v8607, 0.0
  %v9632 = vmax.f32 %v8608, 0.0
  %v9633 = vmax.f32 %v8609, 0.0
  %v9634 = vmax.f32 %v8610, 0.0
  %v9635 = vmax.f32 %v8611, 0.0
  %v9636 = vmax.f32 %v8612, 0.0
  %v9637 = vmax.f32 %v8613, 0.0
  %v9638 = vmax.f32 %v8614, 0.0
  %v9639 = vmax.f32 %v8615, 0.0
  %v9640 = vmax.f32 %v8616, 0.0
  %v9641 = vmax.f32 %v8617, 0.0
  %v9642 = vmax.f32 %v8618, 0.0
  %v9643 = vmax.f32 %v8619, 0.0
  %v9644 = vmax.f32 %v8620, 0.0
  %v9645 = vmax.f32 %v8621, 0.0
  %v9646 = vmax.f32 %v8622, 0.0
  %v9647 = vmax.f32 %v8623, 0.0
  %v9648 = vmax.f32 %v8624, 0.0
  %v9649 = vmax.f32 %v8625, 0.0
  %v9650 = vmax.f32 %v8626, 0.0
  %v9651 = vmax.f32 %v8627, 0.0
  %v9652 = vmax.f32 %v8628, 0.0
  %v9653 = vmax.f32 %v8629, 0.0
  %v9654 = vmax.f32 %v8630, 0.0
  %v9655 = vmax.f32 %v8631, 0.0
  %v9656 = vmax.f32 %v8632, 0.0
  %v9657 = vmax.f32 %v8633, 0.0
  %v9658 = vmax.f32 %v8634, 0.0
  %v9659 = vmax.f32 %v8635, 0.0
  %v9660 = vmax.f32 %v8636, 0.0
  %v9661 = vmax.f32 %v8637, 0.0
  %v9662 = vmax.f32 %v8638, 0.0
  %v9663 = vmax.f32 %v8639, 0.0
  %v9664 = vmax.f32 %v8640, 0.0
  %v9665 = vmax.f32 %v8641, 0.0
  %v9666 = vmax.f32 %v8642, 0.0
  %v9667 = vmax.f32 %v8643, 0.0
  %v9668 = vmax.f32 %v8644, 0.0
  %v9669 = vmax.f32 %v8645, 0.0
  %v9670 = vmax.f32 %v8646, 0.0
  %v9671 = vmax.f32 %v8647, 0.0
  %v9672 = vmax.f32 %v8648, 0.0
  %v9673 = vmax.f32 %v8649, 0.0
  %v9674 = vmax.f32 %v8650, 0.0
  %v9675 = vmax.f32 %v8651, 0.0
  %v9676 = vmax.f32 %v8652, 0.0
  %v9677 = vmax.f32 %v8653, 0.0
  %v9678 = vmax.f32 %v8654, 0.0
  %v9679 = vmax.f32 %v8655, 0.0
  %v9680 = vmax.f32 %v8656, 0.0
  %v9681 = vmax.f32 %v8657, 0.0
  %v9682 = vmax.f32 %v8658, 0.0
  %v9683 = vmax.f32 %v8659, 0.0
  %v9684 = vmax.f32 %v8660, 0.0
  %v9685 = vmax.f32 %v8661, 0.0
  %v9686 = vmax.f32 %v8662, 0.0
  %v9687 = vmax.f32 %v8663, 0.0
  %v9688 = vmax.f32 %v8664, 0.0
  %v9689 = vmax.f32 %v8665, 0.0
  %v9690 = vmax.f32 %v8666, 0.0
  %v9691 = vmax.f32 %v8667, 0.0
  %v9692 = vmax.f32 %v8668, 0.0
  %v9693 = vmax.f32 %v8669, 0.0
  %v9694 = vmax.f32 %v8670, 0.0
  %v9695 = vmax.f32 %v8671, 0.0
  %v9696 = vmax.f32 %v8672, 0.0
  %v9697 = vmax.f32 %v8673, 0.0
  %v9698 = vmax.f32 %v8674, 0.0
  %v9699 = vmax.f32 %v8675, 0.0
  %v9700 = vmax.f32 %v8676, 0.0
  %v9701 = vmax.f32 %v8677, 0.0
  %v9702 = vmax.f32 %v8678, 0.0
  %v9703 = vmax.f32 %v8679, 0.0
  %v9704 = vmax.f32 %v8680, 0.0
  %v9705 = vmax.f32 %v8681, 0.0
  %v9706 = vmax.f32 %v8682, 0.0
  %v9707 = vmax.f32 %v8683, 0.0
  %v9708 = vmax.f32 %v8684, 0.0
  %v9709 = vmax.f32 %v8685, 0.0
  %v9710 = vmax.f32 %v8686, 0.0
  %v9711 = vmax.f32 %v8687, 0.0
  %v9712 = vmax.f32 %v8688, 0.0
  %v9713 = vmax.f32 %v8689, 0.0
  %v9714 = vmax.f32 %v8690, 0.0
  %v9715 = vmax.f32 %v8691, 0.0
  %v9716 = vmax.f32 %v8692, 0.0
  %v9717 = vmax.f32 %v8693, 0.0
  %v9718 = vmax.f32 %v8694, 0.0
  %v9719 = vmax.f32 %v8695, 0.0
  %v9720 = vmax.f32 %v8696, 0.0
  %v9721 = vmax.f32 %v8697, 0.0
  %v9722 = vmax.f32 %v8698, 0.0
  %v9723 = vmax.f32 %v8699, 0.0
  %v9724 = vmax.f32 %v8700, 0.0
  %v9725 = vmax.f32 %v8701, 0.0
  %v9726 = vmax.f32 %v8702, 0.0
  %v9727 = vmax.f32 %v8703, 0.0
  %v9728 = vmax.f32 %v8704, 0.0
  %v9729 = vmax.f32 %v8705, 0.0
  %v9730 = vmax.f32 %v8706, 0.0
  %v9731 = vmax.f32 %v8707, 0.0
  %v9732 = vmax.f32 %v8708, 0.0
  %v9733 = vmax.f32 %v8709, 0.0
  %v9734 = vmax.f32 %v8710, 0.0
  %v9735 = vmax.f32 %v8711, 0.0
  %v9736 = vmax.f32 %v8712, 0.0
  %v9737 = vmax.f32 %v8713, 0.0
  %v9738 = vmax.f32 %v8714, 0.0
  %v9739 = vmax.f32 %v8715, 0.0
  %v9740 = vmax.f32 %v8716, 0.0
  %v9741 = vmax.f32 %v8717, 0.0
  %v9742 = vmax.f32 %v8718, 0.0
  %v9743 = vmax.f32 %v8719, 0.0
  %v9744 = vmax.f32 %v8720, 0.0
  %v9745 = vmax.f32 %v8721, 0.0
  %v9746 = vmax.f32 %v8722, 0.0
  %v9747 = vmax.f32 %v8723, 0.0
  %v9748 = vmax.f32 %v8724, 0.0
  %v9749 = vmax.f32 %v8725, 0.0
  %v9750 = vmax.f32 %v8726, 0.0
  %v9751 = vmax.f32 %v8727, 0.0
  %v9752 = vmax.f32 %v8728, 0.0
  %v9753 = vmax.f32 %v8729, 0.0
  %v9754 = vmax.f32 %v8730, 0.0
  %v9755 = vmax.f32 %v8731, 0.0
  %v9756 = vmax.f32 %v8732, 0.0
  %v9757 = vmax.f32 %v8733, 0.0
  %v9758 = vmax.f32 %v8734, 0.0
  %v9759 = vmax.f32 %v8735, 0.0
  %v9760 = vmax.f32 %v8736, 0.0
  %v9761 = vmax.f32 %v8737, 0.0
  %v9762 = vmax.f32 %v8738, 0.0
  %v9763 = vmax.f32 %v8739, 0.0
  %v9764 = vmax.f32 %v8740, 0.0
  %v9765 = vmax.f32 %v8741, 0.0
  %v9766 = vmax.f32 %v8742, 0.0
  %v9767 = vmax.f32 %v8743, 0.0
  %v9768 = vmax.f32 %v8744, 0.0
  %v9769 = vmax.f32 %v8745, 0.0
  %v9770 = vmax.f32 %v8746, 0.0
  %v9771 = vmax.f32 %v8747, 0.0
  %v9772 = vmax.f32 %v8748, 0.0
  %v9773 = vmax.f32 %v8749, 0.0
  %v9774 = vmax.f32 %v8750, 0.0
  %v9775 = vmax.f32 %v8751, 0.0
  %v9776 = vmax.f32 %v8752, 0.0
  %v9777 = vmax.f32 %v8753, 0.0
  %v9778 = vmax.f32 %v8754, 0.0
  %v9779 = vmax.f32 %v8755, 0.0
  %v9780 = vmax.f32 %v8756, 0.0
  %v9781 = vmax.f32 %v8757, 0.0
  %v9782 = vmax.f32 %v8758, 0.0
  %v9783 = vmax.f32 %v8759, 0.0
  %v9784 = vmax.f32 %v8760, 0.0
  %v9785 = vmax.f32 %v8761, 0.0
  %v9786 = vmax.f32 %v8762, 0.0
  %v9787 = vmax.f32 %v8763, 0.0
  %v9788 = vmax.f32 %v8764, 0.0
  %v9789 = vmax.f32 %v8765, 0.0
  %v9790 = vmax.f32 %v8766, 0.0
  %v9791 = vmax.f32 %v8767, 0.0
  %v9792 = vmax.f32 %v8768, 0.0
  %v9793 = vmax.f32 %v8769, 0.0
  %v9794 = vmax.f32 %v8770, 0.0
  %v9795 = vmax.f32 %v8771, 0.0
  %v9796 = vmax.f32 %v8772, 0.0
  %v9797 = vmax.f32 %v8773, 0.0
  %v9798 = vmax.f32 %v8774, 0.0
  %v9799 = vmax.f32 %v8775, 0.0
  %v9800 = vmax.f32 %v8776, 0.0
  %v9801 = vmax.f32 %v8777, 0.0
  %v9802 = vmax.f32 %v8778, 0.0
  %v9803 = vmax.f32 %v8779, 0.0
  %v9804 = vmax.f32 %v8780, 0.0
  %v9805 = vmax.f32 %v8781, 0.0
  %v9806 = vmax.f32 %v8782, 0.0
  %v9807 = vmax.f32 %v8783, 0.0
  %v9808 = vmax.f32 %v8784, 0.0
  %v9809 = vmax.f32 %v8785, 0.0
  %v9810 = vmax.f32 %v8786, 0.0
  %v9811 = vmax.f32 %v8787, 0.0
  %v9812 = vmax.f32 %v8788, 0.0
  %v9813 = vmax.f32 %v8789, 0.0
  %v9814 = vmax.f32 %v8790, 0.0
  %v9815 = vmax.f32 %v8791, 0.0
  %v9816 = vmax.f32 %v8792, 0.0
  %v9817 = vmax.f32 %v8793, 0.0
  %v9818 = vmax.f32 %v8794, 0.0
  %v9819 = vmax.f32 %v8795, 0.0
  %v9820 = vmax.f32 %v8796, 0.0
  %v9821 = vmax.f32 %v8797, 0.0
  %v9822 = vmax.f32 %v8798, 0.0
  %v9823 = vmax.f32 %v8799, 0.0
  %v9824 = vmax.f32 %v8800, 0.0
  %v9825 = vmax.f32 %v8801, 0.0
  %v9826 = vmax.f32 %v8802, 0.0
  %v9827 = vmax.f32 %v8803, 0.0
  %v9828 = vmax.f32 %v8804, 0.0
  %v9829 = vmax.f32 %v8805, 0.0
  %v9830 = vmax.f32 %v8806, 0.0
  %v9831 = vmax.f32 %v8807, 0.0
  %v9832 = vmax.f32 %v8808, 0.0
  %v9833 = vmax.f32 %v8809, 0.0
  %v9834 = vmax.f32 %v8810, 0.0
  %v9835 = vmax.f32 %v8811, 0.0
  %v9836 = vmax.f32 %v8812, 0.0
  %v9837 = vmax.f32 %v8813, 0.0
  %v9838 = vmax.f32 %v8814, 0.0
  %v9839 = vmax.f32 %v8815, 0.0
  %v9840 = vmax.f32 %v8816, 0.0
  %v9841 = vmax.f32 %v8817, 0.0
  %v9842 = vmax.f32 %v8818, 0.0
  %v9843 = vmax.f32 %v8819, 0.0
  %v9844 = vmax.f32 %v8820, 0.0
  %v9845 = vmax.f32 %v8821, 0.0
  %v9846 = vmax.f32 %v8822, 0.0
  %v9847 = vmax.f32 %v8823, 0.0
  %v9848 = vmax.f32 %v8824, 0.0
  %v9849 = vmax.f32 %v8825, 0.0
  %v9850 = vmax.f32 %v8826, 0.0
  %v9851 = vmax.f32 %v8827, 0.0
  %v9852 = vmax.f32 %v8828, 0.0
  %v9853 = vmax.f32 %v8829, 0.0
  %v9854 = vmax.f32 %v8830, 0.0
  %v9855 = vmax.f32 %v8831, 0.0
  %v9856 = vmax.f32 %v8832, 0.0
  %v9857 = vmax.f32 %v8833, 0.0
  %v9858 = vmax.f32 %v8834, 0.0
  %v9859 = vmax.f32 %v8835, 0.0
  %v9860 = vmax.f32 %v8836, 0.0
  %v9861 = vmax.f32 %v8837, 0.0
  %v9862 = vmax.f32 %v8838, 0.0
  %v9863 = vmax.f32 %v8839, 0.0
  %v9864 = vmax.f32 %v8840, 0.0
  %v9865 = vmax.f32 %v8841, 0.0
  %v9866 = vmax.f32 %v8842, 0.0
  %v9867 = vmax.f32 %v8843, 0.0
  %v9868 = vmax.f32 %v8844, 0.0
  %v9869 = vmax.f32 %v8845, 0.0
  %v9870 = vmax.f32 %v8846, 0.0
  %v9871 = vmax.f32 %v8847, 0.0
  %v9872 = vmax.f32 %v8848, 0.0
  %v9873 = vmax.f32 %v8849, 0.0
  %v9874 = vmax.f32 %v8850, 0.0
  %v9875 = vmax.f32 %v8851, 0.0
  %v9876 = vmax.f32 %v8852, 0.0
  %v9877 = vmax.f32 %v8853, 0.0
  %v9878 = vmax.f32 %v8854, 0.0
  %v9879 = vmax.f32 %v8855, 0.0
  %v9880 = vmax.f32 %v8856, 0.0
  %v9881 = vmax.f32 %v8857, 0.0
  %v9882 = vmax.f32 %v8858, 0.0
  %v9883 = vmax.f32 %v8859, 0.0
  %v9884 = vmax.f32 %v8860, 0.0
  %v9885 = vmax.f32 %v8861, 0.0
  %v9886 = vmax.f32 %v8862, 0.0
  %v9887 = vmax.f32 %v8863, 0.0
  %v9888 = vmax.f32 %v8864, 0.0
  %v9889 = vmax.f32 %v8865, 0.0
  %v9890 = vmax.f32 %v8866, 0.0
  %v9891 = vmax.f32 %v8867, 0.0
  %v9892 = vmax.f32 %v8868, 0.0
  %v9893 = vmax.f32 %v8869, 0.0
  %v9894 = vmax.f32 %v8870, 0.0
  %v9895 = vmax.f32 %v8871, 0.0
  %v9896 = vmax.f32 %v8872, 0.0
  %v9897 = vmax.f32 %v8873, 0.0
  %v9898 = vmax.f32 %v8874, 0.0
  %v9899 = vmax.f32 %v8875, 0.0
  %v9900 = vmax.f32 %v8876, 0.0
  %v9901 = vmax.f32 %v8877, 0.0
  %v9902 = vmax.f32 %v8878, 0.0
  %v9903 = vmax.f32 %v8879, 0.0
  %v9904 = vmax.f32 %v8880, 0.0
  %v9905 = vmax.f32 %v8881, 0.0
  %v9906 = vmax.f32 %v8882, 0.0
  %v9907 = vmax.f32 %v8883, 0.0
  %v9908 = vmax.f32 %v8884, 0.0
  %v9909 = vmax.f32 %v8885, 0.0
  %v9910 = vmax.f32 %v8886, 0.0
  %v9911 = vmax.f32 %v8887, 0.0
  %v9912 = vmax.f32 %v8888, 0.0
  %v9913 = vmax.f32 %v8889, 0.0
  %v9914 = vmax.f32 %v8890, 0.0
  %v9915 = vmax.f32 %v8891, 0.0
  %v9916 = vmax.f32 %v8892, 0.0
  %v9917 = vmax.f32 %v8893, 0.0
  %v9918 = vmax.f32 %v8894, 0.0
  %v9919 = vmax.f32 %v8895, 0.0
  %v9920 = vmax.f32 %v8896, 0.0
  %v9921 = vmax.f32 %v8897, 0.0
  %v9922 = vmax.f32 %v8898, 0.0
  %v9923 = vmax.f32 %v8899, 0.0
  %v9924 = vmax.f32 %v8900, 0.0
  %v9925 = vmax.f32 %v8901, 0.0
  %v9926 = vmax.f32 %v8902, 0.0
  %v9927 = vmax.f32 %v8903, 0.0
  %v9928 = vmax.f32 %v8904, 0.0
  %v9929 = vmax.f32 %v8905, 0.0
  %v9930 = vmax.f32 %v8906, 0.0
  %v9931 = vmax.f32 %v8907, 0.0
  %v9932 = vmax.f32 %v8908, 0.0
  %v9933 = vmax.f32 %v8909, 0.0
  %v9934 = vmax.f32 %v8910, 0.0
  %v9935 = vmax.f32 %v8911, 0.0
  %v9936 = vmax.f32 %v8912, 0.0
  %v9937 = vmax.f32 %v8913, 0.0
  %v9938 = vmax.f32 %v8914, 0.0
  %v9939 = vmax.f32 %v8915, 0.0
  %v9940 = vmax.f32 %v8916, 0.0
  %v9941 = vmax.f32 %v8917, 0.0
  %v9942 = vmax.f32 %v8918, 0.0
  %v9943 = vmax.f32 %v8919, 0.0
  %v9944 = vmax.f32 %v8920, 0.0
  %v9945 = vmax.f32 %v8921, 0.0
  %v9946 = vmax.f32 %v8922, 0.0
  %v9947 = vmax.f32 %v8923, 0.0
  %v9948 = vmax.f32 %v8924, 0.0
  %v9949 = vmax.f32 %v8925, 0.0
  %v9950 = vmax.f32 %v8926, 0.0
  %v9951 = vmax.f32 %v8927, 0.0
  %v9952 = vmax.f32 %v8928, %v8930
  %v9953 = vmax.f32 %v8929, %v8931
  %v9954 = vmax.f32 %v8936, %v8938
  %v9955 = vmax.f32 %v8937, %v8939
  %v9956 = vmax.f32 %v8944, %v8946
  %v9957 = vmax.f32 %v8945, %v8947
  %v9958 = vmax.f32 %v8952, %v8954
  %v9959 = vmax.f32 %v8953, %v8955
  %v9960 = vmax.f32 %v8960, %v8962
  %v9961 = vmax.f32 %v8961, %v8963
  %v9962 = vmax.f32 %v8968, %v8970
  %v9963 = vmax.f32 %v8969, %v8971
  %v9964 = vmax.f32 %v8976, %v8978
  %v9965 = vmax.f32 %v8977, %v8979
  %v9966 = vmax.f32 %v8984, %v8986
  %v9967 = vmax.f32 %v8985, %v8987
  %v9968 = vmax.f32 %v8992, %v8994
  %v9969 = vmax.f32 %v8993, %v8995
  %v9970 = vmax.f32 %v9000, %v9002
  %v9971 = vmax.f32 %v9001, %v9003
  %v9972 = vmax.f32 %v9008, %v9010
  %v9973 = vmax.f32 %v9009, %v9011
  %v9974 = vmax.f32 %v9016, %v9018
  %v9975 = vmax.f32 %v9017, %v9019
  %v9976 = vmax.f32 %v9024, %v9026
  %v9977 = vmax.f32 %v9025, %v9027
  %v9978 = vmax.f32 %v9032, %v9034
  %v9979 = vmax.f32 %v9033, %v9035
  %v9980 = vmax.f32 %v9040, %v9042
  %v9981 = vmax.f32 %v9041, %v9043
  %v9982 = vmax.f32 %v9048, %v9050
  %v9983 = vmax.f32 %v9049, %v9051
  %v9984 = vmax.f32 %v9056, %v9058
  %v9985 = vmax.f32 %v9057, %v9059
  %v9986 = vmax.f32 %v9064, %v9066
  %v9987 = vmax.f32 %v9065, %v9067
  %v9988 = vmax.f32 %v9072, %v9074
  %v9989 = vmax.f32 %v9073, %v9075
  %v9990 = vmax.f32 %v9080, %v9082
  %v9991 = vmax.f32 %v9081, %v9083
  %v9992 = vmax.f32 %v9088, %v9090
  %v9993 = vmax.f32 %v9089, %v9091
  %v9994 = vmax.f32 %v9096, %v9098
  %v9995 = vmax.f32 %v9097, %v9099
  %v9996 = vmax.f32 %v9104, %v9106
  %v9997 = vmax.f32 %v9105, %v9107
  %v9998 = vmax.f32 %v9112, %v9114
  %v9999 = vmax.f32 %v9113, %v9115
  %v10000 = vmax.f32 %v9120, %v9122
  %v10001 = vmax.f32 %v9121, %v9123
  %v10002 = vmax.f32 %v9128, %v9130
  %v10003 = vmax.f32 %v9129, %v9131
  %v10004 = vmax.f32 %v9136, %v9138
  %v10005 = vmax.f32 %v9137, %v9139
  %v10006 = vmax.f32 %v9144, %v9146
  %v10007 = vmax.f32 %v9145, %v9147
  %v10008 = vmax.f32 %v9152, %v9154
  %v10009 = vmax.f32 %v9153, %v9155
  %v10010 = vmax.f32 %v9160, %v9162
  %v10011 = vmax.f32 %v9161, %v9163
  %v10012 = vmax.f32 %v9168, %v9170
  %v10013 = vmax.f32 %v9169, %v9171
  %v10014 = vmax.f32 %v9176, %v9178
  %v10015 = vmax.f32 %v9177, %v9179
  %v10016 = vmax.f32 %v9184, %v9186
  %v10017 = vmax.f32 %v9185, %v9187
  %v10018 = vmax.f32 %v9192, %v9194
  %v10019 = vmax.f32 %v9193, %v9195
  %v10020 = vmax.f32 %v9200, %v9202
  %v10021 = vmax.f32 %v9201, %v9203
  %v10022 = vmax.f32 %v9208, %v9210
  %v10023 = vmax.f32 %v9209, %v9211
  %v10024 = vmax.f32 %v9216, %v9218
  %v10025 = vmax.f32 %v9217, %v9219
  %v10026 = vmax.f32 %v9224, %v9226
  %v10027 = vmax.f32 %v9225, %v9227
  %v10028 = vmax.f32 %v9232, %v9234
  %v10029 = vmax.f32 %v9233, %v9235
  %v10030 = vmax.f32 %v9240, %v9242
  %v10031 = vmax.f32 %v9241, %v9243
  %v10032 = vmax.f32 %v9248, %v9250
  %v10033 = vmax.f32 %v9249, %v9251
  %v10034 = vmax.f32 %v9256, %v9258
  %v10035 = vmax.f32 %v9257, %v9259
  %v10036 = vmax.f32 %v9264, %v9266
  %v10037 = vmax.f32 %v9265, %v9267
  %v10038 = vmax.f32 %v9272, %v9274
  %v10039 = vmax.f32 %v9273, %v9275
  %v10040 = vmax.f32 %v9280, %v9282
  %v10041 = vmax.f32 %v9281, %v9283
  %v10042 = vmax.f32 %v9288, %v9290
  %v10043 = vmax.f32 %v9289, %v9291
  %v10044 = vmax.f32 %v9296, %v9298
  %v10045 = vmax.f32 %v9297, %v9299
  %v10046 = vmax.f32 %v9304, %v9306
  %v10047 = vmax.f32 %v9305, %v9307
  %v10048 = vmax.f32 %v9312, %v9314
  %v10049 = vmax.f32 %v9313, %v9315
  %v10050 = vmax.f32 %v9320, %v9322
  %v10051 = vmax.f32 %v9321, %v9323
  %v10052 = vmax.f32 %v9328, %v9330
  %v10053 = vmax.f32 %v9329, %v9331
  %v10054 = vmax.f32 %v9336, %v9338
  %v10055 = vmax.f32 %v9337, %v9339
  %v10056 = vmax.f32 %v9344, %v9346
  %v10057 = vmax.f32 %v9345, %v9347
  %v10058 = vmax.f32 %v9352, %v9354
  %v10059 = vmax.f32 %v9353, %v9355
  %v10060 = vmax.f32 %v9360, %v9362
  %v10061 = vmax.f32 %v9361, %v9363
  %v10062 = vmax.f32 %v9368, %v9370
  %v10063 = vmax.f32 %v9369, %v9371
  %v10064 = vmax.f32 %v9376, %v9378
  %v10065 = vmax.f32 %v9377, %v9379
  %v10066 = vmax.f32 %v9384, %v9386
  %v10067 = vmax.f32 %v9385, %v9387
  %v10068 = vmax.f32 %v9392, %v9394
  %v10069 = vmax.f32 %v9393, %v9395
  %v10070 = vmax.f32 %v9400, %v9402
  %v10071 = vmax.f32 %v9401, %v9403
  %v10072 = vmax.f32 %v9408, %v9410
  %v10073 = vmax.f32 %v9409, %v9411
  %v10074 = vmax.f32 %v9416, %v9418
  %v10075 = vmax.f32 %v9417, %v9419
  %v10076 = vmax.f32 %v9424, %v9426
  %v10077 = vmax.f32 %v9425, %v9427
  %v10078 = vmax.f32 %v9432, %v9434
  %v10079 = vmax.f32 %v9433, %v9435
  %v10080 = vmax.f32 %v9440, %v9442
  %v10081 = vmax.f32 %v9441, %v9443
  %v10082 = vmax.f32 %v9448, %v9450
  %v10083 = vmax.f32 %v9449, %v9451
  %v10084 = vmax.f32 %v9456, %v9458
  %v10085 = vmax.f32 %v9457, %v9459
  %v10086 = vmax.f32 %v9464, %v9466
  %v10087 = vmax.f32 %v9465, %v9467
  %v10088 = vmax.f32 %v9472, %v9474
  %v10089 = vmax.f32 %v9473, %v9475
  %v10090 = vmax.f32 %v9480, %v9482
  %v10091 = vmax.f32 %v9481, %v9483
  %v10092 = vmax.f32 %v9488, %v9490
  %v10093 = vmax.f32 %v9489, %v9491
  %v10094 = vmax.f32 %v9496, %v9498
  %v10095 = vmax.f32 %v9497, %v9499
  %v10096 = vmax.f32 %v9504, %v9506
  %v10097 = vmax.f32 %v9505, %v9507
  %v10098 = vmax.f32 %v9512, %v9514
  %v10099 = vmax.f32 %v9513, %v9515
  %v10100 = vmax.f32 %v9520, %v9522
  %v10101 = vmax.f32 %v9521, %v9523
  %v10102 = vmax.f32 %v9528, %v9530
  %v10103 = vmax.f32 %v9529, %v9531
  %v10104 = vmax.f32 %v9536, %v9538
  %v10105 = vmax.f32 %v9537, %v9539
  %v10106 = vmax.f32 %v9544, %v9546
  %v10107 = vmax.f32 %v9545, %v9547
  %v10108 = vmax.f32 %v9552, %v9554
  %v10109 = vmax.f32 %v9553, %v9555
  %v10110 = vmax.f32 %v9560, %v9562
  %v10111 = vmax.f32 %v9561, %v9563
  %v10112 = vmax.f32 %v9568, %v9570
  %v10113 = vmax.f32 %v9569, %v9571
  %v10114 = vmax.f32 %v9576, %v9578
  %v10115 = vmax.f32 %v9577, %v9579
  %v10116 = vmax.f32 %v9584, %v9586
  %v10117 = vmax.f32 %v9585, %v9587
  %v10118 = vmax.f32 %v9592, %v9594
  %v10119 = vmax.f32 %v9593, %v9595
  %v10120 = vmax.f32 %v9600, %v9602
  %v10121 = vmax.f32 %v9601, %v9603
  %v10122 = vmax.f32 %v9608, %v9610
  %v10123 = vmax.f32 %v9609, %v9611
  %v10124 = vmax.f32 %v9616, %v9618
  %v10125 = vmax.f32 %v9617, %v9619
  %v10126 = vmax.f32 %v9624, %v9626
  %v10127 = vmax.f32 %v9625, %v9627
  %v10128 = vmax.f32 %v9632, %v9634
  %v10129 = vmax.f32 %v9633, %v9635
  %v10130 = vmax.f32 %v9640, %v9642
  %v10131 = vmax.f32 %v9641, %v9643
  %v10132 = vmax.f32 %v9648, %v9650
  %v10133 = vmax.f32 %v9649, %v9651
  %v10134 = vmax.f32 %v9656, %v9658
  %v10135 = vmax.f32 %v9657, %v9659
  %v10136 = vmax.f32 %v9664, %v9666
  %v10137 = vmax.f32 %v9665, %v9667
  %v10138 = vmax.f32 %v9672, %v9674
  %v10139 = vmax.f32 %v9673, %v9675
  %v10140 = vmax.f32 %v9680, %v9682
  %v10141 = vmax.f32 %v9681, %v9683
  %v10142 = vmax.f32 %v9688, %v9690
  %v10143 = vmax.f32 %v9689, %v9691
  %v10144 = vmax.f32 %v9696, %v9698
  %v10145 = vmax.f32 %v9697, %v9699
  %v10146 = vmax.f32 %v9704, %v9706
  %v10147 = vmax.f32 %v9705, %v9707
  %v10148 = vmax.f32 %v9712, %v9714
  %v10149 = vmax.f32 %v9713, %v9715
  %v10150 = vmax.f32 %v9720, %v9722
  %v10151 = vmax.f32 %v9721, %v9723
  %v10152 = vmax.f32 %v9728, %v9730
  %v10153 = vmax.f32 %v9729, %v9731
  %v10154 = vmax.f32 %v9736, %v9738
  %v10155 = vmax.f32 %v9737, %v9739
  %v10156 = vmax.f32 %v9744, %v9746
  %v10157 = vmax.f32 %v9745, %v9747
  %v10158 = vmax.f32 %v9752, %v9754
  %v10159 = vmax.f32 %v9753, %v9755
  %v10160 = vmax.f32 %v9760, %v9762
  %v10161 = vmax.f32 %v9761, %v9763
  %v10162 = vmax.f32 %v9768, %v9770
  %v10163 = vmax.f32 %v9769, %v9771
  %v10164 = vmax.f32 %v9776, %v9778
  %v10165 = vmax.f32 %v9777, %v9779
  %v10166 = vmax.f32 %v9784, %v9786
  %v10167 = vmax.f32 %v9785, %v9787
  %v10168 = vmax.f32 %v9792, %v9794
  %v10169 = vmax.f32 %v9793, %v9795
  %v10170 = vmax.f32 %v9800, %v9802
  %v10171 = vmax.f32 %v9801, %v9803
  %v10172 = vmax.f32 %v9808, %v9810
  %v10173 = vmax.f32 %v9809, %v9811
  %v10174 = vmax.f32 %v9816, %v9818
  %v10175 = vmax.f32 %v9817, %v9819
  %v10176 = vmax.f32 %v9824, %v9826
  %v10177 = vmax.f32 %v9825, %v9827
  %v10178 = vmax.f32 %v9832, %v9834
  %v10179 = vmax.f32 %v9833, %v9835
  %v10180 = vmax.f32 %v9840, %v9842
  %v10181 = vmax.f32 %v9841, %v9843
  %v10182 = vmax.f32 %v9848, %v9850
  %v10183 = vmax.f32 %v9849, %v9851
  %v10184 = vmax.f32 %v9856, %v9858
  %v10185 = vmax.f32 %v9857, %v9859
  %v10186 = vmax.f32 %v9864, %v9866
  %v10187 = vmax.f32 %v9865, %v9867
  %v10188 = vmax.f32 %v9872, %v9874
  %v10189 = vmax.f32 %v9873, %v9875
  %v10190 = vmax.f32 %v9880, %v9882
  %v10191 = vmax.f32 %v9881, %v9883
  %v10192 = vmax.f32 %v9888, %v9890
  %v10193 = vmax.f32 %v9889, %v9891
  %v10194 = vmax.f32 %v9896, %v9898
  %v10195 = vmax.f32 %v9897, %v9899
  %v10196 = vmax.f32 %v9904, %v9906
  %v10197 = vmax.f32 %v9905, %v9907
  %v10198 = vmax.f32 %v9912, %v9914
  %v10199 = vmax.f32 %v9913, %v9915
  %v10200 = vmax.f32 %v9920, %v9922
  %v10201 = vmax.f32 %v9921, %v9923
  %v10202 = vmax.f32 %v9928, %v9930
  %v10203 = vmax.f32 %v9929, %v9931
  %v10204 = vmax.f32 %v9936, %v9938
  %v10205 = vmax.f32 %v9937, %v9939
  %v10206 = vmax.f32 %v9944, %v9946
  %v10207 = vmax.f32 %v9945, %v9947
  %v10208 = vmax.f32 %v8932, %v8934
  %v10209 = vmax.f32 %v8933, %v8935
  %v10210 = vmax.f32 %v8940, %v8942
  %v10211 = vmax.f32 %v8941, %v8943
  %v10212 = vmax.f32 %v8948, %v8950
  %v10213 = vmax.f32 %v8949, %v8951
  %v10214 = vmax.f32 %v8956, %v8958
  %v10215 = vmax.f32 %v8957, %v8959
  %v10216 = vmax.f32 %v8964, %v8966
  %v10217 = vmax.f32 %v8965, %v8967
  %v10218 = vmax.f32 %v8972, %v8974
  %v10219 = vmax.f32 %v8973, %v8975
  %v10220 = vmax.f32 %v8980, %v8982
  %v10221 = vmax.f32 %v8981, %v8983
  %v10222 = vmax.f32 %v8988, %v8990
  %v10223 = vmax.f32 %v8989, %v8991
  %v10224 = vmax.f32 %v8996, %v8998
  %v10225 = vmax.f32 %v8997, %v8999
  %v10226 = vmax.f32 %v9004, %v9006
  %v10227 = vmax.f32 %v9005, %v9007
  %v10228 = vmax.f32 %v9012, %v9014
  %v10229 = vmax.f32 %v9013, %v9015
  %v10230 = vmax.f32 %v9020, %v9022
  %v10231 = vmax.f32 %v9021, %v9023
  %v10232 = vmax.f32 %v9028, %v9030
  %v10233 = vmax.f32 %v9029, %v9031
  %v10234 = vmax.f32 %v9036, %v9038
  %v10235 = vmax.f32 %v9037, %v9039
  %v10236 = vmax.f32 %v9044, %v9046
  %v10237 = vmax.f32 %v9045, %v9047
  %v10238 = vmax.f32 %v9052, %v9054
  %v10239 = vmax.f32 %v9053, %v9055
  %v10240 = vmax.f32 %v9060, %v9062
  %v10241 = vmax.f32 %v9061, %v9063
  %v10242 = vmax.f32 %v9068, %v9070
  %v10243 = vmax.f32 %v9069, %v9071
  %v10244 = vmax.f32 %v9076, %v9078
  %v10245 = vmax.f32 %v9077, %v9079
  %v10246 = vmax.f32 %v9084, %v9086
  %v10247 = vmax.f32 %v9085, %v9087
  %v10248 = vmax.f32 %v9092, %v9094
  %v10249 = vmax.f32 %v9093, %v9095
  %v10250 = vmax.f32 %v9100, %v9102
  %v10251 = vmax.f32 %v9101, %v9103
  %v10252 = vmax.f32 %v9108, %v9110
  %v10253 = vmax.f32 %v9109, %v9111
  %v10254 = vmax.f32 %v9116, %v9118
  %v10255 = vmax.f32 %v9117, %v9119
  %v10256 = vmax.f32 %v9124, %v9126
  %v10257 = vmax.f32 %v9125, %v9127
  %v10258 = vmax.f32 %v9132, %v9134
  %v10259 = vmax.f32 %v9133, %v9135
  %v10260 = vmax.f32 %v9140, %v9142
  %v10261 = vmax.f32 %v9141, %v9143
  %v10262 = vmax.f32 %v9148, %v9150
  %v10263 = vmax.f32 %v9149, %v9151
  %v10264 = vmax.f32 %v9156, %v9158
  %v10265 = vmax.f32 %v9157, %v9159
  %v10266 = vmax.f32 %v9164, %v9166
  %v10267 = vmax.f32 %v9165, %v9167
  %v10268 = vmax.f32 %v9172, %v9174
  %v10269 = vmax.f32 %v9173, %v9175
  %v10270 = vmax.f32 %v9180, %v9182
  %v10271 = vmax.f32 %v9181, %v9183
  %v10272 = vmax.f32 %v9188, %v9190
  %v10273 = vmax.f32 %v9189, %v9191
  %v10274 = vmax.f32 %v9196, %v9198
  %v10275 = vmax.f32 %v9197, %v9199
  %v10276 = vmax.f32 %v9204, %v9206
  %v10277 = vmax.f32 %v9205, %v9207
  %v10278 = vmax.f32 %v9212, %v9214
  %v10279 = vmax.f32 %v9213, %v9215
  %v10280 = vmax.f32 %v9220, %v9222
  %v10281 = vmax.f32 %v9221, %v9223
  %v10282 = vmax.f32 %v9228, %v9230
  %v10283 = vmax.f32 %v9229, %v9231
  %v10284 = vmax.f32 %v9236, %v9238
  %v10285 = vmax.f32 %v9237, %v9239
  %v10286 = vmax.f32 %v9244, %v9246
  %v10287 = vmax.f32 %v9245, %v9247
  %v10288 = vmax.f32 %v9252, %v9254
  %v10289 = vmax.f32 %v9253, %v9255
  %v10290 = vmax.f32 %v9260, %v9262
  %v10291 = vmax.f32 %v9261, %v9263
  %v10292 = vmax.f32 %v9268, %v9270
  %v10293 = vmax.f32 %v9269, %v9271
  %v10294 = vmax.f32 %v9276, %v9278
  %v10295 = vmax.f32 %v9277, %v9279
  %v10296 = vmax.f32 %v9284, %v9286
  %v10297 = vmax.f32 %v9285, %v9287
  %v10298 = vmax.f32 %v9292, %v9294
  %v10299 = vmax.f32 %v9293, %v9295
  %v10300 = vmax.f32 %v9300, %v9302
  %v10301 = vmax.f32 %v9301, %v9303
  %v10302 = vmax.f32 %v9308, %v9310
  %v10303 = vmax.f32 %v9309, %v9311
  %v10304 = vmax.f32 %v9316, %v9318
  %v10305 = vmax.f32 %v9317, %v9319
  %v10306 = vmax.f32 %v9324, %v9326
  %v10307 = vmax.f32 %v9325, %v9327
  %v10308 = vmax.f32 %v9332, %v9334
  %v10309 = vmax.f32 %v9333, %v9335
  %v10310 = vmax.f32 %v9340, %v9342
  %v10311 = vmax.f32 %v9341, %v9343
  %v10312 = vmax.f32 %v9348, %v9350
  %v10313 = vmax.f32 %v9349, %v9351
  %v10314 = vmax.f32 %v9356, %v9358
  %v10315 = vmax.f32 %v9357, %v9359
  %v10316 = vmax.f32 %v9364, %v9366
  %v10317 = vmax.f32 %v9365, %v9367
  %v10318 = vmax.f32 %v9372, %v9374
  %v10319 = vmax.f32 %v9373, %v9375
  %v10320 = vmax.f32 %v9380, %v9382
  %v10321 = vmax.f32 %v9381, %v9383
  %v10322 = vmax.f32 %v9388, %v9390
  %v10323 = vmax.f32 %v9389, %v9391
  %v10324 = vmax.f32 %v9396, %v9398
  %v10325 = vmax.f32 %v9397, %v9399
  %v10326 = vmax.f32 %v9404, %v9406
  %v10327 = vmax.f32 %v9405, %v9407
  %v10328 = vmax.f32 %v9412, %v9414
  %v10329 = vmax.f32 %v9413, %v9415
  %v10330 = vmax.f32 %v9420, %v9422
  %v10331 = vmax.f32 %v9421, %v9423
  %v10332 = vmax.f32 %v9428, %v9430
  %v10333 = vmax.f32 %v9429, %v9431
  %v10334 = vmax.f32 %v9436, %v9438
  %v10335 = vmax.f32 %v9437, %v9439
  %v10336 = vmax.f32 %v9444, %v9446
  %v10337 = vmax.f32 %v9445, %v9447
  %v10338 = vmax.f32 %v9452, %v9454
  %v10339 = vmax.f32 %v9453, %v9455
  %v10340 = vmax.f32 %v9460, %v9462
  %v10341 = vmax.f32 %v9461, %v9463
  %v10342 = vmax.f32 %v9468, %v9470
  %v10343 = vmax.f32 %v9469, %v9471
  %v10344 = vmax.f32 %v9476, %v9478
  %v10345 = vmax.f32 %v9477, %v9479
  %v10346 = vmax.f32 %v9484, %v9486
  %v10347 = vmax.f32 %v9485, %v9487
  %v10348 = vmax.f32 %v9492, %v9494
  %v10349 = vmax.f32 %v9493, %v9495
  %v10350 = vmax.f32 %v9500, %v9502
  %v10351 = vmax.f32 %v9501, %v9503
  %v10352 = vmax.f32 %v9508, %v9510
  %v10353 = vmax.f32 %v9509, %v9511
  %v10354 = vmax.f32 %v9516, %v9518
  %v10355 = vmax.f32 %v9517, %v9519
  %v10356 = vmax.f32 %v9524, %v9526
  %v10357 = vmax.f32 %v9525, %v9527
  %v10358 = vmax.f32 %v9532, %v9534
  %v10359 = vmax.f32 %v9533, %v9535
  %v10360 = vmax.f32 %v9540, %v9542
  %v10361 = vmax.f32 %v9541, %v9543
  %v10362 = vmax.f32 %v9548, %v9550
  %v10363 = vmax.f32 %v9549, %v9551
  %v10364 = vmax.f32 %v9556, %v9558
  %v10365 = vmax.f32 %v9557, %v9559
  %v10366 = vmax.f32 %v9564, %v9566
  %v10367 = vmax.f32 %v9565, %v9567
  %v10368 = vmax.f32 %v9572, %v9574
  %v10369 = vmax.f32 %v9573, %v9575
  %v10370 = vmax.f32 %v9580, %v9582
  %v10371 = vmax.f32 %v9581, %v9583
  %v10372 = vmax.f32 %v9588, %v9590
  %v10373 = vmax.f32 %v9589, %v9591
  %v10374 = vmax.f32 %v9596, %v9598
  %v10375 = vmax.f32 %v9597, %v9599
  %v10376 = vmax.f32 %v9604, %v9606
  %v10377 = vmax.f32 %v9605, %v9607
  %v10378 = vmax.f32 %v9612, %v9614
  %v10379 = vmax.f32 %v9613, %v9615
  %v10380 = vmax.f32 %v9620, %v9622
  %v10381 = vmax.f32 %v9621, %v9623
  %v10382 = vmax.f32 %v9628, %v9630
  %v10383 = vmax.f32 %v9629, %v9631
  %v10384 = vmax.f32 %v9636, %v9638
  %v10385 = vmax.f32 %v9637, %v9639
  %v10386 = vmax.f32 %v9644, %v9646
  %v10387 = vmax.f32 %v9645, %v9647
  %v10388 = vmax.f32 %v9652, %v9654
  %v10389 = vmax.f32 %v9653, %v9655
  %v10390 = vmax.f32 %v9660, %v9662
  %v10391 = vmax.f32 %v9661, %v9663
  %v10392 = vmax.f32 %v9668, %v9670
  %v10393 = vmax.f32 %v9669, %v9671
  %v10394 = vmax.f32 %v9676, %v9678
  %v10395 = vmax.f32 %v9677, %v9679
  %v10396 = vmax.f32 %v9684, %v9686
  %v10397 = vmax.f32 %v9685, %v9687
  %v10398 = vmax.f32 %v9692, %v9694
  %v10399 = vmax.f32 %v9693, %v9695
  %v10400 = vmax.f32 %v9700, %v9702
  %v10401 = vmax.f32 %v9701, %v9703
  %v10402 = vmax.f32 %v9708, %v9710
  %v10403 = vmax.f32 %v9709, %v9711
  %v10404 = vmax.f32 %v9716, %v9718
  %v10405 = vmax.f32 %v9717, %v9719
  %v10406 = vmax.f32 %v9724, %v9726
  %v10407 = vmax.f32 %v9725, %v9727
  %v10408 = vmax.f32 %v9732, %v9734
  %v10409 = vmax.f32 %v9733, %v9735
  %v10410 = vmax.f32 %v9740, %v9742
  %v10411 = vmax.f32 %v9741, %v9743
  %v10412 = vmax.f32 %v9748, %v9750
  %v10413 = vmax.f32 %v9749, %v9751
  %v10414 = vmax.f32 %v9756, %v9758
  %v10415 = vmax.f32 %v9757, %v9759
  %v10416 = vmax.f32 %v9764, %v9766
  %v10417 = vmax.f32 %v9765, %v9767
  %v10418 = vmax.f32 %v9772, %v9774
  %v10419 = vmax.f32 %v9773, %v9775
  %v10420 = vmax.f32 %v9780, %v9782
  %v10421 = vmax.f32 %v9781, %v9783
  %v10422 = vmax.f32 %v9788, %v9790
  %v10423 = vmax.f32 %v9789, %v9791
  %v10424 = vmax.f32 %v9796, %v9798
  %v10425 = vmax.f32 %v9797, %v9799
  %v10426 = vmax.f32 %v9804, %v9806
  %v10427 = vmax.f32 %v9805, %v9807
  %v10428 = vmax.f32 %v9812, %v9814
  %v10429 = vmax.f32 %v9813, %v9815
  %v10430 = vmax.f32 %v9820, %v9822
  %v10431 = vmax.f32 %v9821, %v9823
  %v10432 = vmax.f32 %v9828, %v9830
  %v10433 = vmax.f32 %v9829, %v9831
  %v10434 = vmax.f32 %v9836, %v9838
  %v10435 = vmax.f32 %v9837, %v9839
  %v10436 = vmax.f32 %v9844, %v9846
  %v10437 = vmax.f32 %v9845, %v9847
  %v10438 = vmax.f32 %v9852, %v9854
  %v10439 = vmax.f32 %v9853, %v9855
  %v10440 = vmax.f32 %v9860, %v9862
  %v10441 = vmax.f32 %v9861, %v9863
  %v10442 = vmax.f32 %v9868, %v9870
  %v10443 = vmax.f32 %v9869, %v9871
  %v10444 = vmax.f32 %v9876, %v9878
  %v10445 = vmax.f32 %v9877, %v9879
  %v10446 = vmax.f32 %v9884, %v9886
  %v10447 = vmax.f32 %v9885, %v9887
  %v10448 = vmax.f32 %v9892, %v9894
  %v10449 = vmax.f32 %v9893, %v9895
  %v10450 = vmax.f32 %v9900, %v9902
  %v10451 = vmax.f32 %v9901, %v9903
  %v10452 = vmax.f32 %v9908, %v9910
  %v10453 = vmax.f32 %v9909, %v9911
  %v10454 = vmax.f32 %v9916, %v9918
  %v10455 = vmax.f32 %v9917, %v9919
  %v10456 = vmax.f32 %v9924, %v9926
  %v10457 = vmax.f32 %v9925, %v9927
  %v10458 = vmax.f32 %v9932, %v9934
  %v10459 = vmax.f32 %v9933, %v9935
  %v10460 = vmax.f32 %v9940, %v9942
  %v10461 = vmax.f32 %v9941, %v9943
  %v10462 = vmax.f32 %v9948, %v9950
  %v10463 = vmax.f32 %v9949, %v9951
  %v10464 = vmax.f32 %v9952, %v10208
  %v10465 = vmax.f32 %v9953, %v10209
  %v10466 = vmax.f32 %v9954, %v10210
  %v10467 = vmax.f32 %v9955, %v10211
  %v10468 = vmax.f32 %v9956, %v10212
  %v10469 = vmax.f32 %v9957, %v10213
  %v10470 = vmax.f32 %v9958, %v10214
  %v10471 = vmax.f32 %v9959, %v10215
  %v10472 = vmax.f32 %v9960, %v10216
  %v10473 = vmax.f32 %v9961, %v10217
  %v10474 = vmax.f32 %v9962, %v10218
  %v10475 = vmax.f32 %v9963, %v10219
  %v10476 = vmax.f32 %v9964, %v10220
  %v10477 = vmax.f32 %v9965, %v10221
  %v10478 = vmax.f32 %v9966, %v10222
  %v10479 = vmax.f32 %v9967, %v10223
  %v10480 = vmax.f32 %v9968, %v10224
  %v10481 = vmax.f32 %v9969, %v10225
  %v10482 = vmax.f32 %v9970, %v10226
  %v10483 = vmax.f32 %v9971, %v10227
  %v10484 = vmax.f32 %v9972, %v10228
  %v10485 = vmax.f32 %v9973, %v10229
  %v10486 = vmax.f32 %v9974, %v10230
  %v10487 = vmax.f32 %v9975, %v10231
  %v10488 = vmax.f32 %v9976, %v10232
  %v10489 = vmax.f32 %v9977, %v10233
  %v10490 = vmax.f32 %v9978, %v10234
  %v10491 = vmax.f32 %v9979, %v10235
  %v10492 = vmax.f32 %v9980, %v10236
  %v10493 = vmax.f32 %v9981, %v10237
  %v10494 = vmax.f32 %v9982, %v10238
  %v10495 = vmax.f32 %v9983, %v10239
  %v10496 = vmax.f32 %v9984, %v10240
  %v10497 = vmax.f32 %v9985, %v10241
  %v10498 = vmax.f32 %v9986, %v10242
  %v10499 = vmax.f32 %v9987, %v10243
  %v10500 = vmax.f32 %v9988, %v10244
  %v10501 = vmax.f32 %v9989, %v10245
  %v10502 = vmax.f32 %v9990, %v10246
  %v10503 = vmax.f32 %v9991, %v10247
  %v10504 = vmax.f32 %v9992, %v10248
  %v10505 = vmax.f32 %v9993, %v10249
  %v10506 = vmax.f32 %v9994, %v10250
  %v10507 = vmax.f32 %v9995, %v10251
  %v10508 = vmax.f32 %v9996, %v10252
  %v10509 = vmax.f32 %v9997, %v10253
  %v10510 = vmax.f32 %v9998, %v10254
  %v10511 = vmax.f32 %v9999, %v10255
  %v10512 = vmax.f32 %v10000, %v10256
  %v10513 = vmax.f32 %v10001, %v10257
  %v10514 = vmax.f32 %v10002, %v10258
  %v10515 = vmax.f32 %v10003, %v10259
  %v10516 = vmax.f32 %v10004, %v10260
  %v10517 = vmax.f32 %v10005, %v10261
  %v10518 = vmax.f32 %v10006, %v10262
  %v10519 = vmax.f32 %v10007, %v10263
  %v10520 = vmax.f32 %v10008, %v10264
  %v10521 = vmax.f32 %v10009, %v10265
  %v10522 = vmax.f32 %v10010, %v10266
  %v10523 = vmax.f32 %v10011, %v10267
  %v10524 = vmax.f32 %v10012, %v10268
  %v10525 = vmax.f32 %v10013, %v10269
  %v10526 = vmax.f32 %v10014, %v10270
  %v10527 = vmax.f32 %v10015, %v10271
  %v10528 = vmax.f32 %v10016, %v10272
  %v10529 = vmax.f32 %v10017, %v10273
  %v10530 = vmax.f32 %v10018, %v10274
  %v10531 = vmax.f32 %v10019, %v10275
  %v10532 = vmax.f32 %v10020, %v10276
  %v10533 = vmax.f32 %v10021, %v10277
  %v10534 = vmax.f32 %v10022, %v10278
  %v10535 = vmax.f32 %v10023, %v10279
  %v10536 = vmax.f32 %v10024, %v10280
  %v10537 = vmax.f32 %v10025, %v10281
  %v10538 = vmax.f32 %v10026, %v10282
  %v10539 = vmax.f32 %v10027, %v10283
  %v10540 = vmax.f32 %v10028, %v10284
  %v10541 = vmax.f32 %v10029, %v10285
  %v10542 = vmax.f32 %v10030, %v10286
  %v10543 = vmax.f32 %v10031, %v10287
  %v10544 = vmax.f32 %v10032, %v10288
  %v10545 = vmax.f32 %v10033, %v10289
  %v10546 = vmax.f32 %v10034, %v10290
  %v10547 = vmax.f32 %v10035, %v10291
  %v10548 = vmax.f32 %v10036, %v10292
  %v10549 = vmax.f32 %v10037, %v10293
  %v10550 = vmax.f32 %v10038, %v10294
  %v10551 = vmax.f32 %v10039, %v10295
  %v10552 = vmax.f32 %v10040, %v10296
  %v10553 = vmax.f32 %v10041, %v10297
  %v10554 = vmax.f32 %v10042, %v10298
  %v10555 = vmax.f32 %v10043, %v10299
  %v10556 = vmax.f32 %v10044, %v10300
  %v10557 = vmax.f32 %v10045, %v10301
  %v10558 = vmax.f32 %v10046, %v10302
  %v10559 = vmax.f32 %v10047, %v10303
  %v10560 = vmax.f32 %v10048, %v10304
  %v10561 = vmax.f32 %v10049, %v10305
  %v10562 = vmax.f32 %v10050, %v10306
  %v10563 = vmax.f32 %v10051, %v10307
  %v10564 = vmax.f32 %v10052, %v10308
  %v10565 = vmax.f32 %v10053, %v10309
  %v10566 = vmax.f32 %v10054, %v10310
  %v10567 = vmax.f32 %v10055, %v10311
  %v10568 = vmax.f32 %v10056, %v10312
  %v10569 = vmax.f32 %v10057, %v10313
  %v10570 = vmax.f32 %v10058, %v10314
  %v10571 = vmax.f32 %v10059, %v10315
  %v10572 = vmax.f32 %v10060, %v10316
  %v10573 = vmax.f32 %v10061, %v10317
  %v10574 = vmax.f32 %v10062, %v10318
  %v10575 = vmax.f32 %v10063, %v10319
  %v10576 = vmax.f32 %v10064, %v10320
  %v10577 = vmax.f32 %v10065, %v10321
  %v10578 = vmax.f32 %v10066, %v10322
  %v10579 = vmax.f32 %v10067, %v10323
  %v10580 = vmax.f32 %v10068, %v10324
  %v10581 = vmax.f32 %v10069, %v10325
  %v10582 = vmax.f32 %v10070, %v10326
  %v10583 = vmax.f32 %v10071, %v10327
  %v10584 = vmax.f32 %v10072, %v10328
  %v10585 = vmax.f32 %v10073, %v10329
  %v10586 = vmax.f32 %v10074, %v10330
  %v10587 = vmax.f32 %v10075, %v10331
  %v10588 = vmax.f32 %v10076, %v10332
  %v10589 = vmax.f32 %v10077, %v10333
  %v10590 = vmax.f32 %v10078, %v10334
  %v10591 = vmax.f32 %v10079, %v10335
  %v10592 = vmax.f32 %v10080, %v10336
  %v10593 = vmax.f32 %v10081, %v10337
  %v10594 = vmax.f32 %v10082, %v10338
  %v10595 = vmax.f32 %v10083, %v10339
  %v10596 = vmax.f32 %v10084, %v10340
  %v10597 = vmax.f32 %v10085, %v10341
  %v10598 = vmax.f32 %v10086, %v10342
  %v10599 = vmax.f32 %v10087, %v10343
  %v10600 = vmax.f32 %v10088, %v10344
  %v10601 = vmax.f32 %v10089, %v10345
  %v10602 = vmax.f32 %v10090, %v10346
  %v10603 = vmax.f32 %v10091, %v10347
  %v10604 = vmax.f32 %v10092, %v10348
  %v10605 = vmax.f32 %v10093, %v10349
  %v10606 = vmax.f32 %v10094, %v10350
  %v10607 = vmax.f32 %v10095, %v10351
  %v10608 = vmax.f32 %v10096, %v10352
  %v10609 = vmax.f32 %v10097, %v10353
  %v10610 = vmax.f32 %v10098, %v10354
  %v10611 = vmax.f32 %v10099, %v10355
  %v10612 = vmax.f32 %v10100, %v10356
  %v10613 = vmax.f32 %v10101, %v10357
  %v10614 = vmax.f32 %v10102, %v10358
  %v10615 = vmax.f32 %v10103, %v10359
  %v10616 = vmax.f32 %v10104, %v10360
  %v10617 = vmax.f32 %v10105, %v10361
  %v10618 = vmax.f32 %v10106, %v10362
  %v10619 = vmax.f32 %v10107, %v10363
  %v10620 = vmax.f32 %v10108, %v10364
  %v10621 = vmax.f32 %v10109, %v10365
  %v10622 = vmax.f32 %v10110, %v10366
  %v10623 = vmax.f32 %v10111, %v10367
  %v10624 = vmax.f32 %v10112, %v10368
  %v10625 = vmax.f32 %v10113, %v10369
  %v10626 = vmax.f32 %v10114, %v10370
  %v10627 = vmax.f32 %v10115, %v10371
  %v10628 = vmax.f32 %v10116, %v10372
  %v10629 = vmax.f32 %v10117, %v10373
  %v10630 = vmax.f32 %v10118, %v10374
  %v10631 = vmax.f32 %v10119, %v10375
  %v10632 = vmax.f32 %v10120, %v10376
  %v10633 = vmax.f32 %v10121, %v10377
  %v10634 = vmax.f32 %v10122, %v10378
  %v10635 = vmax.f32 %v10123, %v10379
  %v10636 = vmax.f32 %v10124, %v10380
  %v10637 = vmax.f32 %v10125, %v10381
  %v10638 = vmax.f32 %v10126, %v10382
  %v10639 = vmax.f32 %v10127, %v10383
  %v10640 = vmax.f32 %v10128, %v10384
  %v10641 = vmax.f32 %v10129, %v10385
  %v10642 = vmax.f32 %v10130, %v10386
  %v10643 = vmax.f32 %v10131, %v10387
  %v10644 = vmax.f32 %v10132, %v10388
  %v10645 = vmax.f32 %v10133, %v10389
  %v10646 = vmax.f32 %v10134, %v10390
  %v10647 = vmax.f32 %v10135, %v10391
  %v10648 = vmax.f32 %v10136, %v10392
  %v10649 = vmax.f32 %v10137, %v10393
  %v10650 = vmax.f32 %v10138, %v10394
  %v10651 = vmax.f32 %v10139, %v10395
  %v10652 = vmax.f32 %v10140, %v10396
  %v10653 = vmax.f32 %v10141, %v10397
  %v10654 = vmax.f32 %v10142, %v10398
  %v10655 = vmax.f32 %v10143, %v10399
  %v10656 = vmax.f32 %v10144, %v10400
  %v10657 = vmax.f32 %v10145, %v10401
  %v10658 = vmax.f32 %v10146, %v10402
  %v10659 = vmax.f32 %v10147, %v10403
  %v10660 = vmax.f32 %v10148, %v10404
  %v10661 = vmax.f32 %v10149, %v10405
  %v10662 = vmax.f32 %v10150, %v10406
  %v10663 = vmax.f32 %v10151, %v10407
  %v10664 = vmax.f32 %v10152, %v10408
  %v10665 = vmax.f32 %v10153, %v10409
  %v10666 = vmax.f32 %v10154, %v10410
  %v10667 = vmax.f32 %v10155, %v10411
  %v10668 = vmax.f32 %v10156, %v10412
  %v10669 = vmax.f32 %v10157, %v10413
  %v10670 = vmax.f32 %v10158, %v10414
  %v10671 = vmax.f32 %v10159, %v10415
  %v10672 = vmax.f32 %v10160, %v10416
  %v10673 = vmax.f32 %v10161, %v10417
  %v10674 = vmax.f32 %v10162, %v10418
  %v10675 = vmax.f32 %v10163, %v10419
  %v10676 = vmax.f32 %v10164, %v10420
  %v10677 = vmax.f32 %v10165, %v10421
  %v10678 = vmax.f32 %v10166, %v10422
  %v10679 = vmax.f32 %v10167, %v10423
  %v10680 = vmax.f32 %v10168, %v10424
  %v10681 = vmax.f32 %v10169, %v10425
  %v10682 = vmax.f32 %v10170, %v10426
  %v10683 = vmax.f32 %v10171, %v10427
  %v10684 = vmax.f32 %v10172, %v10428
  %v10685 = vmax.f32 %v10173, %v10429
  %v10686 = vmax.f32 %v10174, %v10430
  %v10687 = vmax.f32 %v10175, %v10431
  %v10688 = vmax.f32 %v10176, %v10432
  %v10689 = vmax.f32 %v10177, %v10433
  %v10690 = vmax.f32 %v10178, %v10434
  %v10691 = vmax.f32 %v10179, %v10435
  %v10692 = vmax.f32 %v10180, %v10436
  %v10693 = vmax.f32 %v10181, %v10437
  %v10694 = vmax.f32 %v10182, %v10438
  %v10695 = vmax.f32 %v10183, %v10439
  %v10696 = vmax.f32 %v10184, %v10440
  %v10697 = vmax.f32 %v10185, %v10441
  %v10698 = vmax.f32 %v10186, %v10442
  %v10699 = vmax.f32 %v10187, %v10443
  %v10700 = vmax.f32 %v10188, %v10444
  %v10701 = vmax.f32 %v10189, %v10445
  %v10702 = vmax.f32 %v10190, %v10446
  %v10703 = vmax.f32 %v10191, %v10447
  %v10704 = vmax.f32 %v10192, %v10448
  %v10705 = vmax.f32 %v10193, %v10449
  %v10706 = vmax.f32 %v10194, %v10450
  %v10707 = vmax.f32 %v10195, %v10451
  %v10708 = vmax.f32 %v10196, %v10452
  %v10709 = vmax.f32 %v10197, %v10453
  %v10710 = vmax.f32 %v10198, %v10454
  %v10711 = vmax.f32 %v10199, %v10455
  %v10712 = vmax.f32 %v10200, %v10456
  %v10713 = vmax.f32 %v10201, %v10457
  %v10714 = vmax.f32 %v10202, %v10458
  %v10715 = vmax.f32 %v10203, %v10459
  %v10716 = vmax.f32 %v10204, %v10460
  %v10717 = vmax.f32 %v10205, %v10461
  %v10718 = vmax.f32 %v10206, %v10462
  %v10719 = vmax.f32 %v10207, %v10463
  %v10720 = vld [vmem:[%s4] sm:$0xff]
  %v10721 = vld [vmem:[%s4 + $0x8] sm:$0xff]
  %v10722 = vld [vmem:[%s4 + $0x10] sm:$0xff]
  %v10723 = vld [vmem:[%s4 + $0x18] sm:$0xff]
  %v10724 = vld [vmem:[%s4 + $0x20] sm:$0xff]
  %v10725 = vld [vmem:[%s4 + $0x28] sm:$0xff]
  %v10726 = vld [vmem:[%s4 + $0x30] sm:$0xff]
  %v10727 = vld [vmem:[%s4 + $0x38] sm:$0xff]
  %v10728 = vld [vmem:[%s4 + $0x40] sm:$0xff]
  %v10729 = vld [vmem:[%s4 + $0x48] sm:$0xff]
  %v10730 = vld [vmem:[%s4 + $0x50] sm:$0xff]
  %v10731 = vld [vmem:[%s4 + $0x58] sm:$0xff]
  %v10732 = vld [vmem:[%s4 + $0x60] sm:$0xff]
  %v10733 = vld [vmem:[%s4 + $0x68] sm:$0xff]
  %v10734 = vld [vmem:[%s4 + $0x70] sm:$0xff]
  %v10735 = vld [vmem:[%s4 + $0x78] sm:$0xff]
  %v10736 = vld [vmem:[%s4 + $0x80] sm:$0xff]
  %v10737 = vld [vmem:[%s4 + $0x88] sm:$0xff]
  %v10738 = vld [vmem:[%s4 + $0x90] sm:$0xff]
  %v10739 = vld [vmem:[%s4 + $0x98] sm:$0xff]
  %v10740 = vld [vmem:[%s4 + $0xa0] sm:$0xff]
  %v10741 = vld [vmem:[%s4 + $0xa8] sm:$0xff]
  %v10742 = vld [vmem:[%s4 + $0xb0] sm:$0xff]
  %v10743 = vld [vmem:[%s4 + $0xb8] sm:$0xff]
  %v10744 = vld [vmem:[%s4 + $0xc0] sm:$0xff]
  %v10745 = vld [vmem:[%s4 + $0xc8] sm:$0xff]
  %v10746 = vld [vmem:[%s4 + $0xd0] sm:$0xff]
  %v10747 = vld [vmem:[%s4 + $0xd8] sm:$0xff]
  %v10748 = vld [vmem:[%s4 + $0xe0] sm:$0xff]
  %v10749 = vld [vmem:[%s4 + $0xe8] sm:$0xff]
  %v10750 = vld [vmem:[%s4 + $0xf0] sm:$0xff]
  %v10751 = vld [vmem:[%s4 + $0xf8] sm:$0xff]
  %10752 = vmatpush.msra.mxu0 %v10735
  %10753 = vmatpush.msra.mxu0 %v10734
  %10754 = vmatpush.msra.mxu0 %v10733
  %10755 = vmatpush.msra.mxu0 %v10732
  %10756 = vmatpush.msra.mxu0 %v10731
  %10757 = vmatpush.msra.mxu0 %v10730
  %10758 = vmatpush.msra.mxu0 %v10729
  %10759 = vmatpush.msra.mxu0 %v10728
  %10760 = vmatpush.msra.mxu0 %v10727
  %10761 = vmatpush.msra.mxu0 %v10726
  %10762 = vmatpush.msra.mxu0 %v10725
  %10763 = vmatpush.msra.mxu0 %v10724
  %10764 = vmatpush.msra.mxu0 %v10723
  %10765 = vmatpush.msra.mxu0 %v10722
  %10766 = vmatpush.msra.mxu0 %v10721
  %10767 = vmatpush.msra.mxu0 %v10720
  %10768 = vmatmul.f32.gmra.mxu0 %v10464
  %v10769 = vpop.f32.mrf.mxu0
  %v10770 = vadd.f32 0.0, %v10769
  %10771 = vmatmul.f32.gmra.mxu0 %v10466
  %v10772 = vpop.f32.mrf.mxu0
  %v10773 = vadd.f32 0.0, %v10772
  %10774 = vmatmul.f32.gmra.mxu0 %v10468
  %v10775 = vpop.f32.mrf.mxu0
  %v10776 = vadd.f32 0.0, %v10775
  %10777 = vmatmul.f32.gmra.mxu0 %v10470
  %v10778 = vpop.f32.mrf.mxu0
  %v10779 = vadd.f32 0.0, %v10778
  %10780 = vmatmul.f32.gmra.mxu0 %v10472
  %v10781 = vpop.f32.mrf.mxu0
  %v10782 = vadd.f32 0.0, %v10781
  %10783 = vmatmul.f32.gmra.mxu0 %v10474
  %v10784 = vpop.f32.mrf.mxu0
  %v10785 = vadd.f32 0.0, %v10784
  %10786 = vmatmul.f32.gmra.mxu0 %v10476
  %v10787 = vpop.f32.mrf.mxu0
  %v10788 = vadd.f32 0.0, %v10787
  %10789 = vmatmul.f32.gmra.mxu0 %v10478
  %v10790 = vpop.f32.mrf.mxu0
  %v10791 = vadd.f32 0.0, %v10790
  %10792 = vmatmul.f32.gmra.mxu0 %v10480
  %v10793 = vpop.f32.mrf.mxu0
  %v10794 = vadd.f32 0.0, %v10793
  %10795 = vmatmul.f32.gmra.mxu0 %v10482
  %v10796 = vpop.f32.mrf.mxu0
  %v10797 = vadd.f32 0.0, %v10796
  %10798 = vmatmul.f32.gmra.mxu0 %v10484
  %v10799 = vpop.f32.mrf.mxu0
  %v10800 = vadd.f32 0.0, %v10799
  %10801 = vmatmul.f32.gmra.mxu0 %v10486
  %v10802 = vpop.f32.mrf.mxu0
  %v10803 = vadd.f32 0.0, %v10802
  %10804 = vmatmul.f32.gmra.mxu0 %v10488
  %v10805 = vpop.f32.mrf.mxu0
  %v10806 = vadd.f32 0.0, %v10805
  %10807 = vmatmul.f32.gmra.mxu0 %v10490
  %v10808 = vpop.f32.mrf.mxu0
  %v10809 = vadd.f32 0.0, %v10808
  %10810 = vmatmul.f32.gmra.mxu0 %v10492
  %v10811 = vpop.f32.mrf.mxu0
  %v10812 = vadd.f32 0.0, %v10811
  %10813 = vmatmul.f32.gmra.mxu0 %v10494
  %v10814 = vpop.f32.mrf.mxu0
  %v10815 = vadd.f32 0.0, %v10814
  %10816 = vmatmul.f32.gmra.mxu0 %v10496
  %v10817 = vpop.f32.mrf.mxu0
  %v10818 = vadd.f32 0.0, %v10817
  %10819 = vmatmul.f32.gmra.mxu0 %v10498
  %v10820 = vpop.f32.mrf.mxu0
  %v10821 = vadd.f32 0.0, %v10820
  %10822 = vmatmul.f32.gmra.mxu0 %v10500
  %v10823 = vpop.f32.mrf.mxu0
  %v10824 = vadd.f32 0.0, %v10823
  %10825 = vmatmul.f32.gmra.mxu0 %v10502
  %v10826 = vpop.f32.mrf.mxu0
  %v10827 = vadd.f32 0.0, %v10826
  %10828 = vmatmul.f32.gmra.mxu0 %v10504
  %v10829 = vpop.f32.mrf.mxu0
  %v10830 = vadd.f32 0.0, %v10829
  %10831 = vmatmul.f32.gmra.mxu0 %v10506
  %v10832 = vpop.f32.mrf.mxu0
  %v10833 = vadd.f32 0.0, %v10832
  %10834 = vmatmul.f32.gmra.mxu0 %v10508
  %v10835 = vpop.f32.mrf.mxu0
  %v10836 = vadd.f32 0.0, %v10835
  %10837 = vmatmul.f32.gmra.mxu0 %v10510
  %v10838 = vpop.f32.mrf.mxu0
  %v10839 = vadd.f32 0.0, %v10838
  %10840 = vmatmul.f32.gmra.mxu0 %v10512
  %v10841 = vpop.f32.mrf.mxu0
  %v10842 = vadd.f32 0.0, %v10841
  %10843 = vmatmul.f32.gmra.mxu0 %v10514
  %v10844 = vpop.f32.mrf.mxu0
  %v10845 = vadd.f32 0.0, %v10844
  %10846 = vmatmul.f32.gmra.mxu0 %v10516
  %v10847 = vpop.f32.mrf.mxu0
  %v10848 = vadd.f32 0.0, %v10847
  %10849 = vmatmul.f32.gmra.mxu0 %v10518
  %v10850 = vpop.f32.mrf.mxu0
  %v10851 = vadd.f32 0.0, %v10850
  %10852 = vmatmul.f32.gmra.mxu0 %v10520
  %v10853 = vpop.f32.mrf.mxu0
  %v10854 = vadd.f32 0.0, %v10853
  %10855 = vmatmul.f32.gmra.mxu0 %v10522
  %v10856 = vpop.f32.mrf.mxu0
  %v10857 = vadd.f32 0.0, %v10856
  %10858 = vmatmul.f32.gmra.mxu0 %v10524
  %v10859 = vpop.f32.mrf.mxu0
  %v10860 = vadd.f32 0.0, %v10859
  %10861 = vmatmul.f32.gmra.mxu0 %v10526
  %v10862 = vpop.f32.mrf.mxu0
  %v10863 = vadd.f32 0.0, %v10862
  %10864 = vmatmul.f32.gmra.mxu0 %v10528
  %v10865 = vpop.f32.mrf.mxu0
  %v10866 = vadd.f32 0.0, %v10865
  %10867 = vmatmul.f32.gmra.mxu0 %v10530
  %v10868 = vpop.f32.mrf.mxu0
  %v10869 = vadd.f32 0.0, %v10868
  %10870 = vmatmul.f32.gmra.mxu0 %v10532
  %v10871 = vpop.f32.mrf.mxu0
  %v10872 = vadd.f32 0.0, %v10871
  %10873 = vmatmul.f32.gmra.mxu0 %v10534
  %v10874 = vpop.f32.mrf.mxu0
  %v10875 = vadd.f32 0.0, %v10874
  %10876 = vmatmul.f32.gmra.mxu0 %v10536
  %v10877 = vpop.f32.mrf.mxu0
  %v10878 = vadd.f32 0.0, %v10877
  %10879 = vmatmul.f32.gmra.mxu0 %v10538
  %v10880 = vpop.f32.mrf.mxu0
  %v10881 = vadd.f32 0.0, %v10880
  %10882 = vmatmul.f32.gmra.mxu0 %v10540
  %v10883 = vpop.f32.mrf.mxu0
  %v10884 = vadd.f32 0.0, %v10883
  %10885 = vmatmul.f32.gmra.mxu0 %v10542
  %v10886 = vpop.f32.mrf.mxu0
  %v10887 = vadd.f32 0.0, %v10886
  %10888 = vmatmul.f32.gmra.mxu0 %v10544
  %v10889 = vpop.f32.mrf.mxu0
  %v10890 = vadd.f32 0.0, %v10889
  %10891 = vmatmul.f32.gmra.mxu0 %v10546
  %v10892 = vpop.f32.mrf.mxu0
  %v10893 = vadd.f32 0.0, %v10892
  %10894 = vmatmul.f32.gmra.mxu0 %v10548
  %v10895 = vpop.f32.mrf.mxu0
  %v10896 = vadd.f32 0.0, %v10895
  %10897 = vmatmul.f32.gmra.mxu0 %v10550
  %v10898 = vpop.f32.mrf.mxu0
  %v10899 = vadd.f32 0.0, %v10898
  %10900 = vmatmul.f32.gmra.mxu0 %v10552
  %v10901 = vpop.f32.mrf.mxu0
  %v10902 = vadd.f32 0.0, %v10901
  %10903 = vmatmul.f32.gmra.mxu0 %v10554
  %v10904 = vpop.f32.mrf.mxu0
  %v10905 = vadd.f32 0.0, %v10904
  %10906 = vmatmul.f32.gmra.mxu0 %v10556
  %v10907 = vpop.f32.mrf.mxu0
  %v10908 = vadd.f32 0.0, %v10907
  %10909 = vmatmul.f32.gmra.mxu0 %v10558
  %v10910 = vpop.f32.mrf.mxu0
  %v10911 = vadd.f32 0.0, %v10910
  %10912 = vmatmul.f32.gmra.mxu0 %v10560
  %v10913 = vpop.f32.mrf.mxu0
  %v10914 = vadd.f32 0.0, %v10913
  %10915 = vmatmul.f32.gmra.mxu0 %v10562
  %v10916 = vpop.f32.mrf.mxu0
  %v10917 = vadd.f32 0.0, %v10916
  %10918 = vmatmul.f32.gmra.mxu0 %v10564
  %v10919 = vpop.f32.mrf.mxu0
  %v10920 = vadd.f32 0.0, %v10919
  %10921 = vmatmul.f32.gmra.mxu0 %v10566
  %v10922 = vpop.f32.mrf.mxu0
  %v10923 = vadd.f32 0.0, %v10922
  %10924 = vmatmul.f32.gmra.mxu0 %v10568
  %v10925 = vpop.f32.mrf.mxu0
  %v10926 = vadd.f32 0.0, %v10925
  %10927 = vmatmul.f32.gmra.mxu0 %v10570
  %v10928 = vpop.f32.mrf.mxu0
  %v10929 = vadd.f32 0.0, %v10928
  %10930 = vmatmul.f32.gmra.mxu0 %v10572
  %v10931 = vpop.f32.mrf.mxu0
  %v10932 = vadd.f32 0.0, %v10931
  %10933 = vmatmul.f32.gmra.mxu0 %v10574
  %v10934 = vpop.f32.mrf.mxu0
  %v10935 = vadd.f32 0.0, %v10934
  %10936 = vmatmul.f32.gmra.mxu0 %v10576
  %v10937 = vpop.f32.mrf.mxu0
  %v10938 = vadd.f32 0.0, %v10937
  %10939 = vmatmul.f32.gmra.mxu0 %v10578
  %v10940 = vpop.f32.mrf.mxu0
  %v10941 = vadd.f32 0.0, %v10940
  %10942 = vmatmul.f32.gmra.mxu0 %v10580
  %v10943 = vpop.f32.mrf.mxu0
  %v10944 = vadd.f32 0.0, %v10943
  %10945 = vmatmul.f32.gmra.mxu0 %v10582
  %v10946 = vpop.f32.mrf.mxu0
  %v10947 = vadd.f32 0.0, %v10946
  %10948 = vmatmul.f32.gmra.mxu0 %v10584
  %v10949 = vpop.f32.mrf.mxu0
  %v10950 = vadd.f32 0.0, %v10949
  %10951 = vmatmul.f32.gmra.mxu0 %v10586
  %v10952 = vpop.f32.mrf.mxu0
  %v10953 = vadd.f32 0.0, %v10952
  %10954 = vmatmul.f32.gmra.mxu0 %v10588
  %v10955 = vpop.f32.mrf.mxu0
  %v10956 = vadd.f32 0.0, %v10955
  %10957 = vmatmul.f32.gmra.mxu0 %v10590
  %v10958 = vpop.f32.mrf.mxu0
  %v10959 = vadd.f32 0.0, %v10958
  %10960 = vmatmul.f32.gmra.mxu0 %v10592
  %v10961 = vpop.f32.mrf.mxu0
  %v10962 = vadd.f32 0.0, %v10961
  %10963 = vmatmul.f32.gmra.mxu0 %v10594
  %v10964 = vpop.f32.mrf.mxu0
  %v10965 = vadd.f32 0.0, %v10964
  %10966 = vmatmul.f32.gmra.mxu0 %v10596
  %v10967 = vpop.f32.mrf.mxu0
  %v10968 = vadd.f32 0.0, %v10967
  %10969 = vmatmul.f32.gmra.mxu0 %v10598
  %v10970 = vpop.f32.mrf.mxu0
  %v10971 = vadd.f32 0.0, %v10970
  %10972 = vmatmul.f32.gmra.mxu0 %v10600
  %v10973 = vpop.f32.mrf.mxu0
  %v10974 = vadd.f32 0.0, %v10973
  %10975 = vmatmul.f32.gmra.mxu0 %v10602
  %v10976 = vpop.f32.mrf.mxu0
  %v10977 = vadd.f32 0.0, %v10976
  %10978 = vmatmul.f32.gmra.mxu0 %v10604
  %v10979 = vpop.f32.mrf.mxu0
  %v10980 = vadd.f32 0.0, %v10979
  %10981 = vmatmul.f32.gmra.mxu0 %v10606
  %v10982 = vpop.f32.mrf.mxu0
  %v10983 = vadd.f32 0.0, %v10982
  %10984 = vmatmul.f32.gmra.mxu0 %v10608
  %v10985 = vpop.f32.mrf.mxu0
  %v10986 = vadd.f32 0.0, %v10985
  %10987 = vmatmul.f32.gmra.mxu0 %v10610
  %v10988 = vpop.f32.mrf.mxu0
  %v10989 = vadd.f32 0.0, %v10988
  %10990 = vmatmul.f32.gmra.mxu0 %v10612
  %v10991 = vpop.f32.mrf.mxu0
  %v10992 = vadd.f32 0.0, %v10991
  %10993 = vmatmul.f32.gmra.mxu0 %v10614
  %v10994 = vpop.f32.mrf.mxu0
  %v10995 = vadd.f32 0.0, %v10994
  %10996 = vmatmul.f32.gmra.mxu0 %v10616
  %v10997 = vpop.f32.mrf.mxu0
  %v10998 = vadd.f32 0.0, %v10997
  %10999 = vmatmul.f32.gmra.mxu0 %v10618
  %v11000 = vpop.f32.mrf.mxu0
  %v11001 = vadd.f32 0.0, %v11000
  %11002 = vmatmul.f32.gmra.mxu0 %v10620
  %v11003 = vpop.f32.mrf.mxu0
  %v11004 = vadd.f32 0.0, %v11003
  %11005 = vmatmul.f32.gmra.mxu0 %v10622
  %v11006 = vpop.f32.mrf.mxu0
  %v11007 = vadd.f32 0.0, %v11006
  %11008 = vmatmul.f32.gmra.mxu0 %v10624
  %v11009 = vpop.f32.mrf.mxu0
  %v11010 = vadd.f32 0.0, %v11009
  %11011 = vmatmul.f32.gmra.mxu0 %v10626
  %v11012 = vpop.f32.mrf.mxu0
  %v11013 = vadd.f32 0.0, %v11012
  %11014 = vmatmul.f32.gmra.mxu0 %v10628
  %v11015 = vpop.f32.mrf.mxu0
  %v11016 = vadd.f32 0.0, %v11015
  %11017 = vmatmul.f32.gmra.mxu0 %v10630
  %v11018 = vpop.f32.mrf.mxu0
  %v11019 = vadd.f32 0.0, %v11018
  %11020 = vmatmul.f32.gmra.mxu0 %v10632
  %v11021 = vpop.f32.mrf.mxu0
  %v11022 = vadd.f32 0.0, %v11021
  %11023 = vmatmul.f32.gmra.mxu0 %v10634
  %v11024 = vpop.f32.mrf.mxu0
  %v11025 = vadd.f32 0.0, %v11024
  %11026 = vmatmul.f32.gmra.mxu0 %v10636
  %v11027 = vpop.f32.mrf.mxu0
  %v11028 = vadd.f32 0.0, %v11027
  %11029 = vmatmul.f32.gmra.mxu0 %v10638
  %v11030 = vpop.f32.mrf.mxu0
  %v11031 = vadd.f32 0.0, %v11030
  %11032 = vmatmul.f32.gmra.mxu0 %v10640
  %v11033 = vpop.f32.mrf.mxu0
  %v11034 = vadd.f32 0.0, %v11033
  %11035 = vmatmul.f32.gmra.mxu0 %v10642
  %v11036 = vpop.f32.mrf.mxu0
  %v11037 = vadd.f32 0.0, %v11036
  %11038 = vmatmul.f32.gmra.mxu0 %v10644
  %v11039 = vpop.f32.mrf.mxu0
  %v11040 = vadd.f32 0.0, %v11039
  %11041 = vmatmul.f32.gmra.mxu0 %v10646
  %v11042 = vpop.f32.mrf.mxu0
  %v11043 = vadd.f32 0.0, %v11042
  %11044 = vmatmul.f32.gmra.mxu0 %v10648
  %v11045 = vpop.f32.mrf.mxu0
  %v11046 = vadd.f32 0.0, %v11045
  %11047 = vmatmul.f32.gmra.mxu0 %v10650
  %v11048 = vpop.f32.mrf.mxu0
  %v11049 = vadd.f32 0.0, %v11048
  %11050 = vmatmul.f32.gmra.mxu0 %v10652
  %v11051 = vpop.f32.mrf.mxu0
  %v11052 = vadd.f32 0.0, %v11051
  %11053 = vmatmul.f32.gmra.mxu0 %v10654
  %v11054 = vpop.f32.mrf.mxu0
  %v11055 = vadd.f32 0.0, %v11054
  %11056 = vmatmul.f32.gmra.mxu0 %v10656
  %v11057 = vpop.f32.mrf.mxu0
  %v11058 = vadd.f32 0.0, %v11057
  %11059 = vmatmul.f32.gmra.mxu0 %v10658
  %v11060 = vpop.f32.mrf.mxu0
  %v11061 = vadd.f32 0.0, %v11060
  %11062 = vmatmul.f32.gmra.mxu0 %v10660
  %v11063 = vpop.f32.mrf.mxu0
  %v11064 = vadd.f32 0.0, %v11063
  %11065 = vmatmul.f32.gmra.mxu0 %v10662
  %v11066 = vpop.f32.mrf.mxu0
  %v11067 = vadd.f32 0.0, %v11066
  %11068 = vmatmul.f32.gmra.mxu0 %v10664
  %v11069 = vpop.f32.mrf.mxu0
  %v11070 = vadd.f32 0.0, %v11069
  %11071 = vmatmul.f32.gmra.mxu0 %v10666
  %v11072 = vpop.f32.mrf.mxu0
  %v11073 = vadd.f32 0.0, %v11072
  %11074 = vmatmul.f32.gmra.mxu0 %v10668
  %v11075 = vpop.f32.mrf.mxu0
  %v11076 = vadd.f32 0.0, %v11075
  %11077 = vmatmul.f32.gmra.mxu0 %v10670
  %v11078 = vpop.f32.mrf.mxu0
  %v11079 = vadd.f32 0.0, %v11078
  %11080 = vmatmul.f32.gmra.mxu0 %v10672
  %v11081 = vpop.f32.mrf.mxu0
  %v11082 = vadd.f32 0.0, %v11081
  %11083 = vmatmul.f32.gmra.mxu0 %v10674
  %v11084 = vpop.f32.mrf.mxu0
  %v11085 = vadd.f32 0.0, %v11084
  %11086 = vmatmul.f32.gmra.mxu0 %v10676
  %v11087 = vpop.f32.mrf.mxu0
  %v11088 = vadd.f32 0.0, %v11087
  %11089 = vmatmul.f32.gmra.mxu0 %v10678
  %v11090 = vpop.f32.mrf.mxu0
  %v11091 = vadd.f32 0.0, %v11090
  %11092 = vmatmul.f32.gmra.mxu0 %v10680
  %v11093 = vpop.f32.mrf.mxu0
  %v11094 = vadd.f32 0.0, %v11093
  %11095 = vmatmul.f32.gmra.mxu0 %v10682
  %v11096 = vpop.f32.mrf.mxu0
  %v11097 = vadd.f32 0.0, %v11096
  %11098 = vmatmul.f32.gmra.mxu0 %v10684
  %v11099 = vpop.f32.mrf.mxu0
  %v11100 = vadd.f32 0.0, %v11099
  %11101 = vmatmul.f32.gmra.mxu0 %v10686
  %v11102 = vpop.f32.mrf.mxu0
  %v11103 = vadd.f32 0.0, %v11102
  %11104 = vmatmul.f32.gmra.mxu0 %v10688
  %v11105 = vpop.f32.mrf.mxu0
  %v11106 = vadd.f32 0.0, %v11105
  %11107 = vmatmul.f32.gmra.mxu0 %v10690
  %v11108 = vpop.f32.mrf.mxu0
  %v11109 = vadd.f32 0.0, %v11108
  %11110 = vmatmul.f32.gmra.mxu0 %v10692
  %v11111 = vpop.f32.mrf.mxu0
  %v11112 = vadd.f32 0.0, %v11111
  %11113 = vmatmul.f32.gmra.mxu0 %v10694
  %v11114 = vpop.f32.mrf.mxu0
  %v11115 = vadd.f32 0.0, %v11114
  %11116 = vmatmul.f32.gmra.mxu0 %v10696
  %v11117 = vpop.f32.mrf.mxu0
  %v11118 = vadd.f32 0.0, %v11117
  %11119 = vmatmul.f32.gmra.mxu0 %v10698
  %v11120 = vpop.f32.mrf.mxu0
  %v11121 = vadd.f32 0.0, %v11120
  %11122 = vmatmul.f32.gmra.mxu0 %v10700
  %v11123 = vpop.f32.mrf.mxu0
  %v11124 = vadd.f32 0.0, %v11123
  %11125 = vmatmul.f32.gmra.mxu0 %v10702
  %v11126 = vpop.f32.mrf.mxu0
  %v11127 = vadd.f32 0.0, %v11126
  %11128 = vmatmul.f32.gmra.mxu0 %v10704
  %v11129 = vpop.f32.mrf.mxu0
  %v11130 = vadd.f32 0.0, %v11129
  %11131 = vmatmul.f32.gmra.mxu0 %v10706
  %v11132 = vpop.f32.mrf.mxu0
  %v11133 = vadd.f32 0.0, %v11132
  %11134 = vmatmul.f32.gmra.mxu0 %v10708
  %v11135 = vpop.f32.mrf.mxu0
  %v11136 = vadd.f32 0.0, %v11135
  %11137 = vmatmul.f32.gmra.mxu0 %v10710
  %v11138 = vpop.f32.mrf.mxu0
  %v11139 = vadd.f32 0.0, %v11138
  %11140 = vmatmul.f32.gmra.mxu0 %v10712
  %v11141 = vpop.f32.mrf.mxu0
  %v11142 = vadd.f32 0.0, %v11141
  %11143 = vmatmul.f32.gmra.mxu0 %v10714
  %v11144 = vpop.f32.mrf.mxu0
  %v11145 = vadd.f32 0.0, %v11144
  %11146 = vmatmul.f32.gmra.mxu0 %v10716
  %v11147 = vpop.f32.mrf.mxu0
  %v11148 = vadd.f32 0.0, %v11147
  %11149 = vmatmul.f32.gmra.mxu0 %v10718
  %v11150 = vpop.f32.mrf.mxu0
  %v11151 = vadd.f32 0.0, %v11150
  %11152 = vdwg.mxu0
  %11153 = vmatpush.msra.mxu0 %v10751
  %11154 = vmatpush.msra.mxu0 %v10750
  %11155 = vmatpush.msra.mxu0 %v10749
  %11156 = vmatpush.msra.mxu0 %v10748
  %11157 = vmatpush.msra.mxu0 %v10747
  %11158 = vmatpush.msra.mxu0 %v10746
  %11159 = vmatpush.msra.mxu0 %v10745
  %11160 = vmatpush.msra.mxu0 %v10744
  %11161 = vmatpush.msra.mxu0 %v10743
  %11162 = vmatpush.msra.mxu0 %v10742
  %11163 = vmatpush.msra.mxu0 %v10741
  %11164 = vmatpush.msra.mxu0 %v10740
  %11165 = vmatpush.msra.mxu0 %v10739
  %11166 = vmatpush.msra.mxu0 %v10738
  %11167 = vmatpush.msra.mxu0 %v10737
  %11168 = vmatpush.msra.mxu0 %v10736
  %11169 = vmatmul.f32.gmra.mxu0 %v10465
  %v11170 = vpop.f32.mrf.mxu0
  %v11171 = vadd.f32 %v10770, %v11170
  %11172 = vmatmul.f32.gmra.mxu0 %v10467
  %v11173 = vpop.f32.mrf.mxu0
  %v11174 = vadd.f32 %v10773, %v11173
  %11175 = vmatmul.f32.gmra.mxu0 %v10469
  %v11176 = vpop.f32.mrf.mxu0
  %v11177 = vadd.f32 %v10776, %v11176
  %11178 = vmatmul.f32.gmra.mxu0 %v10471
  %v11179 = vpop.f32.mrf.mxu0
  %v11180 = vadd.f32 %v10779, %v11179
  %11181 = vmatmul.f32.gmra.mxu0 %v10473
  %v11182 = vpop.f32.mrf.mxu0
  %v11183 = vadd.f32 %v10782, %v11182
  %11184 = vmatmul.f32.gmra.mxu0 %v10475
  %v11185 = vpop.f32.mrf.mxu0
  %v11186 = vadd.f32 %v10785, %v11185
  %11187 = vmatmul.f32.gmra.mxu0 %v10477
  %v11188 = vpop.f32.mrf.mxu0
  %v11189 = vadd.f32 %v10788, %v11188
  %11190 = vmatmul.f32.gmra.mxu0 %v10479
  %v11191 = vpop.f32.mrf.mxu0
  %v11192 = vadd.f32 %v10791, %v11191
  %11193 = vmatmul.f32.gmra.mxu0 %v10481
  %v11194 = vpop.f32.mrf.mxu0
  %v11195 = vadd.f32 %v10794, %v11194
  %11196 = vmatmul.f32.gmra.mxu0 %v10483
  %v11197 = vpop.f32.mrf.mxu0
  %v11198 = vadd.f32 %v10797, %v11197
  %11199 = vmatmul.f32.gmra.mxu0 %v10485
  %v11200 = vpop.f32.mrf.mxu0
  %v11201 = vadd.f32 %v10800, %v11200
  %11202 = vmatmul.f32.gmra.mxu0 %v10487
  %v11203 = vpop.f32.mrf.mxu0
  %v11204 = vadd.f32 %v10803, %v11203
  %11205 = vmatmul.f32.gmra.mxu0 %v10489
  %v11206 = vpop.f32.mrf.mxu0
  %v11207 = vadd.f32 %v10806, %v11206
  %11208 = vmatmul.f32.gmra.mxu0 %v10491
  %v11209 = vpop.f32.mrf.mxu0
  %v11210 = vadd.f32 %v10809, %v11209
  %11211 = vmatmul.f32.gmra.mxu0 %v10493
  %v11212 = vpop.f32.mrf.mxu0
  %v11213 = vadd.f32 %v10812, %v11212
  %11214 = vmatmul.f32.gmra.mxu0 %v10495
  %v11215 = vpop.f32.mrf.mxu0
  %v11216 = vadd.f32 %v10815, %v11215
  %11217 = vmatmul.f32.gmra.mxu0 %v10497
  %v11218 = vpop.f32.mrf.mxu0
  %v11219 = vadd.f32 %v10818, %v11218
  %11220 = vmatmul.f32.gmra.mxu0 %v10499
  %v11221 = vpop.f32.mrf.mxu0
  %v11222 = vadd.f32 %v10821, %v11221
  %11223 = vmatmul.f32.gmra.mxu0 %v10501
  %v11224 = vpop.f32.mrf.mxu0
  %v11225 = vadd.f32 %v10824, %v11224
  %11226 = vmatmul.f32.gmra.mxu0 %v10503
  %v11227 = vpop.f32.mrf.mxu0
  %v11228 = vadd.f32 %v10827, %v11227
  %11229 = vmatmul.f32.gmra.mxu0 %v10505
  %v11230 = vpop.f32.mrf.mxu0
  %v11231 = vadd.f32 %v10830, %v11230
  %11232 = vmatmul.f32.gmra.mxu0 %v10507
  %v11233 = vpop.f32.mrf.mxu0
  %v11234 = vadd.f32 %v10833, %v11233
  %11235 = vmatmul.f32.gmra.mxu0 %v10509
  %v11236 = vpop.f32.mrf.mxu0
  %v11237 = vadd.f32 %v10836, %v11236
  %11238 = vmatmul.f32.gmra.mxu0 %v10511
  %v11239 = vpop.f32.mrf.mxu0
  %v11240 = vadd.f32 %v10839, %v11239
  %11241 = vmatmul.f32.gmra.mxu0 %v10513
  %v11242 = vpop.f32.mrf.mxu0
  %v11243 = vadd.f32 %v10842, %v11242
  %11244 = vmatmul.f32.gmra.mxu0 %v10515
  %v11245 = vpop.f32.mrf.mxu0
  %v11246 = vadd.f32 %v10845, %v11245
  %11247 = vmatmul.f32.gmra.mxu0 %v10517
  %v11248 = vpop.f32.mrf.mxu0
  %v11249 = vadd.f32 %v10848, %v11248
  %11250 = vmatmul.f32.gmra.mxu0 %v10519
  %v11251 = vpop.f32.mrf.mxu0
  %v11252 = vadd.f32 %v10851, %v11251
  %11253 = vmatmul.f32.gmra.mxu0 %v10521
  %v11254 = vpop.f32.mrf.mxu0
  %v11255 = vadd.f32 %v10854, %v11254
  %11256 = vmatmul.f32.gmra.mxu0 %v10523
  %v11257 = vpop.f32.mrf.mxu0
  %v11258 = vadd.f32 %v10857, %v11257
  %11259 = vmatmul.f32.gmra.mxu0 %v10525
  %v11260 = vpop.f32.mrf.mxu0
  %v11261 = vadd.f32 %v10860, %v11260
  %11262 = vmatmul.f32.gmra.mxu0 %v10527
  %v11263 = vpop.f32.mrf.mxu0
  %v11264 = vadd.f32 %v10863, %v11263
  %11265 = vmatmul.f32.gmra.mxu0 %v10529
  %v11266 = vpop.f32.mrf.mxu0
  %v11267 = vadd.f32 %v10866, %v11266
  %11268 = vmatmul.f32.gmra.mxu0 %v10531
  %v11269 = vpop.f32.mrf.mxu0
  %v11270 = vadd.f32 %v10869, %v11269
  %11271 = vmatmul.f32.gmra.mxu0 %v10533
  %v11272 = vpop.f32.mrf.mxu0
  %v11273 = vadd.f32 %v10872, %v11272
  %11274 = vmatmul.f32.gmra.mxu0 %v10535
  %v11275 = vpop.f32.mrf.mxu0
  %v11276 = vadd.f32 %v10875, %v11275
  %11277 = vmatmul.f32.gmra.mxu0 %v10537
  %v11278 = vpop.f32.mrf.mxu0
  %v11279 = vadd.f32 %v10878, %v11278
  %11280 = vmatmul.f32.gmra.mxu0 %v10539
  %v11281 = vpop.f32.mrf.mxu0
  %v11282 = vadd.f32 %v10881, %v11281
  %11283 = vmatmul.f32.gmra.mxu0 %v10541
  %v11284 = vpop.f32.mrf.mxu0
  %v11285 = vadd.f32 %v10884, %v11284
  %11286 = vmatmul.f32.gmra.mxu0 %v10543
  %v11287 = vpop.f32.mrf.mxu0
  %v11288 = vadd.f32 %v10887, %v11287
  %11289 = vmatmul.f32.gmra.mxu0 %v10545
  %v11290 = vpop.f32.mrf.mxu0
  %v11291 = vadd.f32 %v10890, %v11290
  %11292 = vmatmul.f32.gmra.mxu0 %v10547
  %v11293 = vpop.f32.mrf.mxu0
  %v11294 = vadd.f32 %v10893, %v11293
  %11295 = vmatmul.f32.gmra.mxu0 %v10549
  %v11296 = vpop.f32.mrf.mxu0
  %v11297 = vadd.f32 %v10896, %v11296
  %11298 = vmatmul.f32.gmra.mxu0 %v10551
  %v11299 = vpop.f32.mrf.mxu0
  %v11300 = vadd.f32 %v10899, %v11299
  %11301 = vmatmul.f32.gmra.mxu0 %v10553
  %v11302 = vpop.f32.mrf.mxu0
  %v11303 = vadd.f32 %v10902, %v11302
  %11304 = vmatmul.f32.gmra.mxu0 %v10555
  %v11305 = vpop.f32.mrf.mxu0
  %v11306 = vadd.f32 %v10905, %v11305
  %11307 = vmatmul.f32.gmra.mxu0 %v10557
  %v11308 = vpop.f32.mrf.mxu0
  %v11309 = vadd.f32 %v10908, %v11308
  %11310 = vmatmul.f32.gmra.mxu0 %v10559
  %v11311 = vpop.f32.mrf.mxu0
  %v11312 = vadd.f32 %v10911, %v11311
  %11313 = vmatmul.f32.gmra.mxu0 %v10561
  %v11314 = vpop.f32.mrf.mxu0
  %v11315 = vadd.f32 %v10914, %v11314
  %11316 = vmatmul.f32.gmra.mxu0 %v10563
  %v11317 = vpop.f32.mrf.mxu0
  %v11318 = vadd.f32 %v10917, %v11317
  %11319 = vmatmul.f32.gmra.mxu0 %v10565
  %v11320 = vpop.f32.mrf.mxu0
  %v11321 = vadd.f32 %v10920, %v11320
  %11322 = vmatmul.f32.gmra.mxu0 %v10567
  %v11323 = vpop.f32.mrf.mxu0
  %v11324 = vadd.f32 %v10923, %v11323
  %11325 = vmatmul.f32.gmra.mxu0 %v10569
  %v11326 = vpop.f32.mrf.mxu0
  %v11327 = vadd.f32 %v10926, %v11326
  %11328 = vmatmul.f32.gmra.mxu0 %v10571
  %v11329 = vpop.f32.mrf.mxu0
  %v11330 = vadd.f32 %v10929, %v11329
  %11331 = vmatmul.f32.gmra.mxu0 %v10573
  %v11332 = vpop.f32.mrf.mxu0
  %v11333 = vadd.f32 %v10932, %v11332
  %11334 = vmatmul.f32.gmra.mxu0 %v10575
  %v11335 = vpop.f32.mrf.mxu0
  %v11336 = vadd.f32 %v10935, %v11335
  %11337 = vmatmul.f32.gmra.mxu0 %v10577
  %v11338 = vpop.f32.mrf.mxu0
  %v11339 = vadd.f32 %v10938, %v11338
  %11340 = vmatmul.f32.gmra.mxu0 %v10579
  %v11341 = vpop.f32.mrf.mxu0
  %v11342 = vadd.f32 %v10941, %v11341
  %11343 = vmatmul.f32.gmra.mxu0 %v10581
  %v11344 = vpop.f32.mrf.mxu0
  %v11345 = vadd.f32 %v10944, %v11344
  %11346 = vmatmul.f32.gmra.mxu0 %v10583
  %v11347 = vpop.f32.mrf.mxu0
  %v11348 = vadd.f32 %v10947, %v11347
  %11349 = vmatmul.f32.gmra.mxu0 %v10585
  %v11350 = vpop.f32.mrf.mxu0
  %v11351 = vadd.f32 %v10950, %v11350
  %11352 = vmatmul.f32.gmra.mxu0 %v10587
  %v11353 = vpop.f32.mrf.mxu0
  %v11354 = vadd.f32 %v10953, %v11353
  %11355 = vmatmul.f32.gmra.mxu0 %v10589
  %v11356 = vpop.f32.mrf.mxu0
  %v11357 = vadd.f32 %v10956, %v11356
  %11358 = vmatmul.f32.gmra.mxu0 %v10591
  %v11359 = vpop.f32.mrf.mxu0
  %v11360 = vadd.f32 %v10959, %v11359
  %11361 = vmatmul.f32.gmra.mxu0 %v10593
  %v11362 = vpop.f32.mrf.mxu0
  %v11363 = vadd.f32 %v10962, %v11362
  %11364 = vmatmul.f32.gmra.mxu0 %v10595
  %v11365 = vpop.f32.mrf.mxu0
  %v11366 = vadd.f32 %v10965, %v11365
  %11367 = vmatmul.f32.gmra.mxu0 %v10597
  %v11368 = vpop.f32.mrf.mxu0
  %v11369 = vadd.f32 %v10968, %v11368
  %11370 = vmatmul.f32.gmra.mxu0 %v10599
  %v11371 = vpop.f32.mrf.mxu0
  %v11372 = vadd.f32 %v10971, %v11371
  %11373 = vmatmul.f32.gmra.mxu0 %v10601
  %v11374 = vpop.f32.mrf.mxu0
  %v11375 = vadd.f32 %v10974, %v11374
  %11376 = vmatmul.f32.gmra.mxu0 %v10603
  %v11377 = vpop.f32.mrf.mxu0
  %v11378 = vadd.f32 %v10977, %v11377
  %11379 = vmatmul.f32.gmra.mxu0 %v10605
  %v11380 = vpop.f32.mrf.mxu0
  %v11381 = vadd.f32 %v10980, %v11380
  %11382 = vmatmul.f32.gmra.mxu0 %v10607
  %v11383 = vpop.f32.mrf.mxu0
  %v11384 = vadd.f32 %v10983, %v11383
  %11385 = vmatmul.f32.gmra.mxu0 %v10609
  %v11386 = vpop.f32.mrf.mxu0
  %v11387 = vadd.f32 %v10986, %v11386
  %11388 = vmatmul.f32.gmra.mxu0 %v10611
  %v11389 = vpop.f32.mrf.mxu0
  %v11390 = vadd.f32 %v10989, %v11389
  %11391 = vmatmul.f32.gmra.mxu0 %v10613
  %v11392 = vpop.f32.mrf.mxu0
  %v11393 = vadd.f32 %v10992, %v11392
  %11394 = vmatmul.f32.gmra.mxu0 %v10615
  %v11395 = vpop.f32.mrf.mxu0
  %v11396 = vadd.f32 %v10995, %v11395
  %11397 = vmatmul.f32.gmra.mxu0 %v10617
  %v11398 = vpop.f32.mrf.mxu0
  %v11399 = vadd.f32 %v10998, %v11398
  %11400 = vmatmul.f32.gmra.mxu0 %v10619
  %v11401 = vpop.f32.mrf.mxu0
  %v11402 = vadd.f32 %v11001, %v11401
  %11403 = vmatmul.f32.gmra.mxu0 %v10621
  %v11404 = vpop.f32.mrf.mxu0
  %v11405 = vadd.f32 %v11004, %v11404
  %11406 = vmatmul.f32.gmra.mxu0 %v10623
  %v11407 = vpop.f32.mrf.mxu0
  %v11408 = vadd.f32 %v11007, %v11407
  %11409 = vmatmul.f32.gmra.mxu0 %v10625
  %v11410 = vpop.f32.mrf.mxu0
  %v11411 = vadd.f32 %v11010, %v11410
  %11412 = vmatmul.f32.gmra.mxu0 %v10627
  %v11413 = vpop.f32.mrf.mxu0
  %v11414 = vadd.f32 %v11013, %v11413
  %11415 = vmatmul.f32.gmra.mxu0 %v10629
  %v11416 = vpop.f32.mrf.mxu0
  %v11417 = vadd.f32 %v11016, %v11416
  %11418 = vmatmul.f32.gmra.mxu0 %v10631
  %v11419 = vpop.f32.mrf.mxu0
  %v11420 = vadd.f32 %v11019, %v11419
  %11421 = vmatmul.f32.gmra.mxu0 %v10633
  %v11422 = vpop.f32.mrf.mxu0
  %v11423 = vadd.f32 %v11022, %v11422
  %11424 = vmatmul.f32.gmra.mxu0 %v10635
  %v11425 = vpop.f32.mrf.mxu0
  %v11426 = vadd.f32 %v11025, %v11425
  %11427 = vmatmul.f32.gmra.mxu0 %v10637
  %v11428 = vpop.f32.mrf.mxu0
  %v11429 = vadd.f32 %v11028, %v11428
  %11430 = vmatmul.f32.gmra.mxu0 %v10639
  %v11431 = vpop.f32.mrf.mxu0
  %v11432 = vadd.f32 %v11031, %v11431
  %11433 = vmatmul.f32.gmra.mxu0 %v10641
  %v11434 = vpop.f32.mrf.mxu0
  %v11435 = vadd.f32 %v11034, %v11434
  %11436 = vmatmul.f32.gmra.mxu0 %v10643
  %v11437 = vpop.f32.mrf.mxu0
  %v11438 = vadd.f32 %v11037, %v11437
  %11439 = vmatmul.f32.gmra.mxu0 %v10645
  %v11440 = vpop.f32.mrf.mxu0
  %v11441 = vadd.f32 %v11040, %v11440
  %11442 = vmatmul.f32.gmra.mxu0 %v10647
  %v11443 = vpop.f32.mrf.mxu0
  %v11444 = vadd.f32 %v11043, %v11443
  %11445 = vmatmul.f32.gmra.mxu0 %v10649
  %v11446 = vpop.f32.mrf.mxu0
  %v11447 = vadd.f32 %v11046, %v11446
  %11448 = vmatmul.f32.gmra.mxu0 %v10651
  %v11449 = vpop.f32.mrf.mxu0
  %v11450 = vadd.f32 %v11049, %v11449
  %11451 = vmatmul.f32.gmra.mxu0 %v10653
  %v11452 = vpop.f32.mrf.mxu0
  %v11453 = vadd.f32 %v11052, %v11452
  %11454 = vmatmul.f32.gmra.mxu0 %v10655
  %v11455 = vpop.f32.mrf.mxu0
  %v11456 = vadd.f32 %v11055, %v11455
  %11457 = vmatmul.f32.gmra.mxu0 %v10657
  %v11458 = vpop.f32.mrf.mxu0
  %v11459 = vadd.f32 %v11058, %v11458
  %11460 = vmatmul.f32.gmra.mxu0 %v10659
  %v11461 = vpop.f32.mrf.mxu0
  %v11462 = vadd.f32 %v11061, %v11461
  %11463 = vmatmul.f32.gmra.mxu0 %v10661
  %v11464 = vpop.f32.mrf.mxu0
  %v11465 = vadd.f32 %v11064, %v11464
  %11466 = vmatmul.f32.gmra.mxu0 %v10663
  %v11467 = vpop.f32.mrf.mxu0
  %v11468 = vadd.f32 %v11067, %v11467
  %11469 = vmatmul.f32.gmra.mxu0 %v10665
  %v11470 = vpop.f32.mrf.mxu0
  %v11471 = vadd.f32 %v11070, %v11470
  %11472 = vmatmul.f32.gmra.mxu0 %v10667
  %v11473 = vpop.f32.mrf.mxu0
  %v11474 = vadd.f32 %v11073, %v11473
  %11475 = vmatmul.f32.gmra.mxu0 %v10669
  %v11476 = vpop.f32.mrf.mxu0
  %v11477 = vadd.f32 %v11076, %v11476
  %11478 = vmatmul.f32.gmra.mxu0 %v10671
  %v11479 = vpop.f32.mrf.mxu0
  %v11480 = vadd.f32 %v11079, %v11479
  %11481 = vmatmul.f32.gmra.mxu0 %v10673
  %v11482 = vpop.f32.mrf.mxu0
  %v11483 = vadd.f32 %v11082, %v11482
  %11484 = vmatmul.f32.gmra.mxu0 %v10675
  %v11485 = vpop.f32.mrf.mxu0
  %v11486 = vadd.f32 %v11085, %v11485
  %11487 = vmatmul.f32.gmra.mxu0 %v10677
  %v11488 = vpop.f32.mrf.mxu0
  %v11489 = vadd.f32 %v11088, %v11488
  %11490 = vmatmul.f32.gmra.mxu0 %v10679
  %v11491 = vpop.f32.mrf.mxu0
  %v11492 = vadd.f32 %v11091, %v11491
  %11493 = vmatmul.f32.gmra.mxu0 %v10681
  %v11494 = vpop.f32.mrf.mxu0
  %v11495 = vadd.f32 %v11094, %v11494
  %11496 = vmatmul.f32.gmra.mxu0 %v10683
  %v11497 = vpop.f32.mrf.mxu0
  %v11498 = vadd.f32 %v11097, %v11497
  %11499 = vmatmul.f32.gmra.mxu0 %v10685
  %v11500 = vpop.f32.mrf.mxu0
  %v11501 = vadd.f32 %v11100, %v11500
  %11502 = vmatmul.f32.gmra.mxu0 %v10687
  %v11503 = vpop.f32.mrf.mxu0
  %v11504 = vadd.f32 %v11103, %v11503
  %11505 = vmatmul.f32.gmra.mxu0 %v10689
  %v11506 = vpop.f32.mrf.mxu0
  %v11507 = vadd.f32 %v11106, %v11506
  %11508 = vmatmul.f32.gmra.mxu0 %v10691
  %v11509 = vpop.f32.mrf.mxu0
  %v11510 = vadd.f32 %v11109, %v11509
  %11511 = vmatmul.f32.gmra.mxu0 %v10693
  %v11512 = vpop.f32.mrf.mxu0
  %v11513 = vadd.f32 %v11112, %v11512
  %11514 = vmatmul.f32.gmra.mxu0 %v10695
  %v11515 = vpop.f32.mrf.mxu0
  %v11516 = vadd.f32 %v11115, %v11515
  %11517 = vmatmul.f32.gmra.mxu0 %v10697
  %v11518 = vpop.f32.mrf.mxu0
  %v11519 = vadd.f32 %v11118, %v11518
  %11520 = vmatmul.f32.gmra.mxu0 %v10699
  %v11521 = vpop.f32.mrf.mxu0
  %v11522 = vadd.f32 %v11121, %v11521
  %11523 = vmatmul.f32.gmra.mxu0 %v10701
  %v11524 = vpop.f32.mrf.mxu0
  %v11525 = vadd.f32 %v11124, %v11524
  %11526 = vmatmul.f32.gmra.mxu0 %v10703
  %v11527 = vpop.f32.mrf.mxu0
  %v11528 = vadd.f32 %v11127, %v11527
  %11529 = vmatmul.f32.gmra.mxu0 %v10705
  %v11530 = vpop.f32.mrf.mxu0
  %v11531 = vadd.f32 %v11130, %v11530
  %11532 = vmatmul.f32.gmra.mxu0 %v10707
  %v11533 = vpop.f32.mrf.mxu0
  %v11534 = vadd.f32 %v11133, %v11533
  %11535 = vmatmul.f32.gmra.mxu0 %v10709
  %v11536 = vpop.f32.mrf.mxu0
  %v11537 = vadd.f32 %v11136, %v11536
  %11538 = vmatmul.f32.gmra.mxu0 %v10711
  %v11539 = vpop.f32.mrf.mxu0
  %v11540 = vadd.f32 %v11139, %v11539
  %11541 = vmatmul.f32.gmra.mxu0 %v10713
  %v11542 = vpop.f32.mrf.mxu0
  %v11543 = vadd.f32 %v11142, %v11542
  %11544 = vmatmul.f32.gmra.mxu0 %v10715
  %v11545 = vpop.f32.mrf.mxu0
  %v11546 = vadd.f32 %v11145, %v11545
  %11547 = vmatmul.f32.gmra.mxu0 %v10717
  %v11548 = vpop.f32.mrf.mxu0
  %v11549 = vadd.f32 %v11148, %v11548
  %11550 = vmatmul.f32.gmra.mxu0 %v10719
  %v11551 = vpop.f32.mrf.mxu0
  %v11552 = vadd.f32 %v11151, %v11551
  %11553 = vdwg.mxu0
  %v11554 = vld [vmem:[%s5] sm:$0x1]
  %v11556 = vperm.slane %v11554, 0
  %v11558 = vmul.f32 %v11171, %v11556
  %v11559 = vmul.f32 %v11174, %v11556
  %v11560 = vmul.f32 %v11177, %v11556
  %v11561 = vmul.f32 %v11180, %v11556
  %v11562 = vmul.f32 %v11183, %v11556
  %v11563 = vmul.f32 %v11186, %v11556
  %v11564 = vmul.f32 %v11189, %v11556
  %v11565 = vmul.f32 %v11192, %v11556
  %v11566 = vmul.f32 %v11195, %v11556
  %v11567 = vmul.f32 %v11198, %v11556
  %v11568 = vmul.f32 %v11201, %v11556
  %v11569 = vmul.f32 %v11204, %v11556
  %v11570 = vmul.f32 %v11207, %v11556
  %v11571 = vmul.f32 %v11210, %v11556
  %v11572 = vmul.f32 %v11213, %v11556
  %v11573 = vmul.f32 %v11216, %v11556
  %v11574 = vmul.f32 %v11219, %v11556
  %v11575 = vmul.f32 %v11222, %v11556
  %v11576 = vmul.f32 %v11225, %v11556
  %v11577 = vmul.f32 %v11228, %v11556
  %v11578 = vmul.f32 %v11231, %v11556
  %v11579 = vmul.f32 %v11234, %v11556
  %v11580 = vmul.f32 %v11237, %v11556
  %v11581 = vmul.f32 %v11240, %v11556
  %v11582 = vmul.f32 %v11243, %v11556
  %v11583 = vmul.f32 %v11246, %v11556
  %v11584 = vmul.f32 %v11249, %v11556
  %v11585 = vmul.f32 %v11252, %v11556
  %v11586 = vmul.f32 %v11255, %v11556
  %v11587 = vmul.f32 %v11258, %v11556
  %v11588 = vmul.f32 %v11261, %v11556
  %v11589 = vmul.f32 %v11264, %v11556
  %v11590 = vmul.f32 %v11267, %v11556
  %v11591 = vmul.f32 %v11270, %v11556
  %v11592 = vmul.f32 %v11273, %v11556
  %v11593 = vmul.f32 %v11276, %v11556
  %v11594 = vmul.f32 %v11279, %v11556
  %v11595 = vmul.f32 %v11282, %v11556
  %v11596 = vmul.f32 %v11285, %v11556
  %v11597 = vmul.f32 %v11288, %v11556
  %v11598 = vmul.f32 %v11291, %v11556
  %v11599 = vmul.f32 %v11294, %v11556
  %v11600 = vmul.f32 %v11297, %v11556
  %v11601 = vmul.f32 %v11300, %v11556
  %v11602 = vmul.f32 %v11303, %v11556
  %v11603 = vmul.f32 %v11306, %v11556
  %v11604 = vmul.f32 %v11309, %v11556
  %v11605 = vmul.f32 %v11312, %v11556
  %v11606 = vmul.f32 %v11315, %v11556
  %v11607 = vmul.f32 %v11318, %v11556
  %v11608 = vmul.f32 %v11321, %v11556
  %v11609 = vmul.f32 %v11324, %v11556
  %v11610 = vmul.f32 %v11327, %v11556
  %v11611 = vmul.f32 %v11330, %v11556
  %v11612 = vmul.f32 %v11333, %v11556
  %v11613 = vmul.f32 %v11336, %v11556
  %v11614 = vmul.f32 %v11339, %v11556
  %v11615 = vmul.f32 %v11342, %v11556
  %v11616 = vmul.f32 %v11345, %v11556
  %v11617 = vmul.f32 %v11348, %v11556
  %v11618 = vmul.f32 %v11351, %v11556
  %v11619 = vmul.f32 %v11354, %v11556
  %v11620 = vmul.f32 %v11357, %v11556
  %v11621 = vmul.f32 %v11360, %v11556
  %v11622 = vmul.f32 %v11363, %v11556
  %v11623 = vmul.f32 %v11366, %v11556
  %v11624 = vmul.f32 %v11369, %v11556
  %v11625 = vmul.f32 %v11372, %v11556
  %v11626 = vmul.f32 %v11375, %v11556
  %v11627 = vmul.f32 %v11378, %v11556
  %v11628 = vmul.f32 %v11381, %v11556
  %v11629 = vmul.f32 %v11384, %v11556
  %v11630 = vmul.f32 %v11387, %v11556
  %v11631 = vmul.f32 %v11390, %v11556
  %v11632 = vmul.f32 %v11393, %v11556
  %v11633 = vmul.f32 %v11396, %v11556
  %v11634 = vmul.f32 %v11399, %v11556
  %v11635 = vmul.f32 %v11402, %v11556
  %v11636 = vmul.f32 %v11405, %v11556
  %v11637 = vmul.f32 %v11408, %v11556
  %v11638 = vmul.f32 %v11411, %v11556
  %v11639 = vmul.f32 %v11414, %v11556
  %v11640 = vmul.f32 %v11417, %v11556
  %v11641 = vmul.f32 %v11420, %v11556
  %v11642 = vmul.f32 %v11423, %v11556
  %v11643 = vmul.f32 %v11426, %v11556
  %v11644 = vmul.f32 %v11429, %v11556
  %v11645 = vmul.f32 %v11432, %v11556
  %v11646 = vmul.f32 %v11435, %v11556
  %v11647 = vmul.f32 %v11438, %v11556
  %v11648 = vmul.f32 %v11441, %v11556
  %v11649 = vmul.f32 %v11444, %v11556
  %v11650 = vmul.f32 %v11447, %v11556
  %v11651 = vmul.f32 %v11450, %v11556
  %v11652 = vmul.f32 %v11453, %v11556
  %v11653 = vmul.f32 %v11456, %v11556
  %v11654 = vmul.f32 %v11459, %v11556
  %v11655 = vmul.f32 %v11462, %v11556
  %v11656 = vmul.f32 %v11465, %v11556
  %v11657 = vmul.f32 %v11468, %v11556
  %v11658 = vmul.f32 %v11471, %v11556
  %v11659 = vmul.f32 %v11474, %v11556
  %v11660 = vmul.f32 %v11477, %v11556
  %v11661 = vmul.f32 %v11480, %v11556
  %v11662 = vmul.f32 %v11483, %v11556
  %v11663 = vmul.f32 %v11486, %v11556
  %v11664 = vmul.f32 %v11489, %v11556
  %v11665 = vmul.f32 %v11492, %v11556
  %v11666 = vmul.f32 %v11495, %v11556
  %v11667 = vmul.f32 %v11498, %v11556
  %v11668 = vmul.f32 %v11501, %v11556
  %v11669 = vmul.f32 %v11504, %v11556
  %v11670 = vmul.f32 %v11507, %v11556
  %v11671 = vmul.f32 %v11510, %v11556
  %v11672 = vmul.f32 %v11513, %v11556
  %v11673 = vmul.f32 %v11516, %v11556
  %v11674 = vmul.f32 %v11519, %v11556
  %v11675 = vmul.f32 %v11522, %v11556
  %v11676 = vmul.f32 %v11525, %v11556
  %v11677 = vmul.f32 %v11528, %v11556
  %v11678 = vmul.f32 %v11531, %v11556
  %v11679 = vmul.f32 %v11534, %v11556
  %v11680 = vmul.f32 %v11537, %v11556
  %v11681 = vmul.f32 %v11540, %v11556
  %v11682 = vmul.f32 %v11543, %v11556
  %v11683 = vmul.f32 %v11546, %v11556
  %v11684 = vmul.f32 %v11549, %v11556
  %v11685 = vmul.f32 %v11552, %v11556
  %v11686 = vld [vmem:[%s6] sm:$0x1]
  %v11688 = vperm.slane %v11686, 0
  %v11690 = vadd.f32 %v11558, %v11688
  %v11691 = vadd.f32 %v11559, %v11688
  %v11692 = vadd.f32 %v11560, %v11688
  %v11693 = vadd.f32 %v11561, %v11688
  %v11694 = vadd.f32 %v11562, %v11688
  %v11695 = vadd.f32 %v11563, %v11688
  %v11696 = vadd.f32 %v11564, %v11688
  %v11697 = vadd.f32 %v11565, %v11688
  %v11698 = vadd.f32 %v11566, %v11688
  %v11699 = vadd.f32 %v11567, %v11688
  %v11700 = vadd.f32 %v11568, %v11688
  %v11701 = vadd.f32 %v11569, %v11688
  %v11702 = vadd.f32 %v11570, %v11688
  %v11703 = vadd.f32 %v11571, %v11688
  %v11704 = vadd.f32 %v11572, %v11688
  %v11705 = vadd.f32 %v11573, %v11688
  %v11706 = vadd.f32 %v11574, %v11688
  %v11707 = vadd.f32 %v11575, %v11688
  %v11708 = vadd.f32 %v11576, %v11688
  %v11709 = vadd.f32 %v11577, %v11688
  %v11710 = vadd.f32 %v11578, %v11688
  %v11711 = vadd.f32 %v11579, %v11688
  %v11712 = vadd.f32 %v11580, %v11688
  %v11713 = vadd.f32 %v11581, %v11688
  %v11714 = vadd.f32 %v11582, %v11688
  %v11715 = vadd.f32 %v11583, %v11688
  %v11716 = vadd.f32 %v11584, %v11688
  %v11717 = vadd.f32 %v11585, %v11688
  %v11718 = vadd.f32 %v11586, %v11688
  %v11719 = vadd.f32 %v11587, %v11688
  %v11720 = vadd.f32 %v11588, %v11688
  %v11721 = vadd.f32 %v11589, %v11688
  %v11722 = vadd.f32 %v11590, %v11688
  %v11723 = vadd.f32 %v11591, %v11688
  %v11724 = vadd.f32 %v11592, %v11688
  %v11725 = vadd.f32 %v11593, %v11688
  %v11726 = vadd.f32 %v11594, %v11688
  %v11727 = vadd.f32 %v11595, %v11688
  %v11728 = vadd.f32 %v11596, %v11688
  %v11729 = vadd.f32 %v11597, %v11688
  %v11730 = vadd.f32 %v11598, %v11688
  %v11731 = vadd.f32 %v11599, %v11688
  %v11732 = vadd.f32 %v11600, %v11688
  %v11733 = vadd.f32 %v11601, %v11688
  %v11734 = vadd.f32 %v11602, %v11688
  %v11735 = vadd.f32 %v11603, %v11688
  %v11736 = vadd.f32 %v11604, %v11688
  %v11737 = vadd.f32 %v11605, %v11688
  %v11738 = vadd.f32 %v11606, %v11688
  %v11739 = vadd.f32 %v11607, %v11688
  %v11740 = vadd.f32 %v11608, %v11688
  %v11741 = vadd.f32 %v11609, %v11688
  %v11742 = vadd.f32 %v11610, %v11688
  %v11743 = vadd.f32 %v11611, %v11688
  %v11744 = vadd.f32 %v11612, %v11688
  %v11745 = vadd.f32 %v11613, %v11688
  %v11746 = vadd.f32 %v11614, %v11688
  %v11747 = vadd.f32 %v11615, %v11688
  %v11748 = vadd.f32 %v11616, %v11688
  %v11749 = vadd.f32 %v11617, %v11688
  %v11750 = vadd.f32 %v11618, %v11688
  %v11751 = vadd.f32 %v11619, %v11688
  %v11752 = vadd.f32 %v11620, %v11688
  %v11753 = vadd.f32 %v11621, %v11688
  %v11754 = vadd.f32 %v11622, %v11688
  %v11755 = vadd.f32 %v11623, %v11688
  %v11756 = vadd.f32 %v11624, %v11688
  %v11757 = vadd.f32 %v11625, %v11688
  %v11758 = vadd.f32 %v11626, %v11688
  %v11759 = vadd.f32 %v11627, %v11688
  %v11760 = vadd.f32 %v11628, %v11688
  %v11761 = vadd.f32 %v11629, %v11688
  %v11762 = vadd.f32 %v11630, %v11688
  %v11763 = vadd.f32 %v11631, %v11688
  %v11764 = vadd.f32 %v11632, %v11688
  %v11765 = vadd.f32 %v11633, %v11688
  %v11766 = vadd.f32 %v11634, %v11688
  %v11767 = vadd.f32 %v11635, %v11688
  %v11768 = vadd.f32 %v11636, %v11688
  %v11769 = vadd.f32 %v11637, %v11688
  %v11770 = vadd.f32 %v11638, %v11688
  %v11771 = vadd.f32 %v11639, %v11688
  %v11772 = vadd.f32 %v11640, %v11688
  %v11773 = vadd.f32 %v11641, %v11688
  %v11774 = vadd.f32 %v11642, %v11688
  %v11775 = vadd.f32 %v11643, %v11688
  %v11776 = vadd.f32 %v11644, %v11688
  %v11777 = vadd.f32 %v11645, %v11688
  %v11778 = vadd.f32 %v11646, %v11688
  %v11779 = vadd.f32 %v11647, %v11688
  %v11780 = vadd.f32 %v11648, %v11688
  %v11781 = vadd.f32 %v11649, %v11688
  %v11782 = vadd.f32 %v11650, %v11688
  %v11783 = vadd.f32 %v11651, %v11688
  %v11784 = vadd.f32 %v11652, %v11688
  %v11785 = vadd.f32 %v11653, %v11688
  %v11786 = vadd.f32 %v11654, %v11688
  %v11787 = vadd.f32 %v11655, %v11688
  %v11788 = vadd.f32 %v11656, %v11688
  %v11789 = vadd.f32 %v11657, %v11688
  %v11790 = vadd.f32 %v11658, %v11688
  %v11791 = vadd.f32 %v11659, %v11688
  %v11792 = vadd.f32 %v11660, %v11688
  %v11793 = vadd.f32 %v11661, %v11688
  %v11794 = vadd.f32 %v11662, %v11688
  %v11795 = vadd.f32 %v11663, %v11688
  %v11796 = vadd.f32 %v11664, %v11688
  %v11797 = vadd.f32 %v11665, %v11688
  %v11798 = vadd.f32 %v11666, %v11688
  %v11799 = vadd.f32 %v11667, %v11688
  %v11800 = vadd.f32 %v11668, %v11688
  %v11801 = vadd.f32 %v11669, %v11688
  %v11802 = vadd.f32 %v11670, %v11688
  %v11803 = vadd.f32 %v11671, %v11688
  %v11804 = vadd.f32 %v11672, %v11688
  %v11805 = vadd.f32 %v11673, %v11688
  %v11806 = vadd.f32 %v11674, %v11688
  %v11807 = vadd.f32 %v11675, %v11688
  %v11808 = vadd.f32 %v11676, %v11688
  %v11809 = vadd.f32 %v11677, %v11688
  %v11810 = vadd.f32 %v11678, %v11688
  %v11811 = vadd.f32 %v11679, %v11688
  %v11812 = vadd.f32 %v11680, %v11688
  %v11813 = vadd.f32 %v11681, %v11688
  %v11814 = vadd.f32 %v11682, %v11688
  %v11815 = vadd.f32 %v11683, %v11688
  %v11816 = vadd.f32 %v11684, %v11688
  %v11817 = vadd.f32 %v11685, %v11688
  %v11818 = vmax.f32 %v11690, 0.0
  %v11819 = vmax.f32 %v11691, 0.0
  %v11820 = vmax.f32 %v11692, 0.0
  %v11821 = vmax.f32 %v11693, 0.0
  %v11822 = vmax.f32 %v11694, 0.0
  %v11823 = vmax.f32 %v11695, 0.0
  %v11824 = vmax.f32 %v11696, 0.0
  %v11825 = vmax.f32 %v11697, 0.0
  %v11826 = vmax.f32 %v11698, 0.0
  %v11827 = vmax.f32 %v11699, 0.0
  %v11828 = vmax.f32 %v11700, 0.0
  %v11829 = vmax.f32 %v11701, 0.0
  %v11830 = vmax.f32 %v11702, 0.0
  %v11831 = vmax.f32 %v11703, 0.0
  %v11832 = vmax.f32 %v11704, 0.0
  %v11833 = vmax.f32 %v11705, 0.0
  %v11834 = vmax.f32 %v11706, 0.0
  %v11835 = vmax.f32 %v11707, 0.0
  %v11836 = vmax.f32 %v11708, 0.0
  %v11837 = vmax.f32 %v11709, 0.0
  %v11838 = vmax.f32 %v11710, 0.0
  %v11839 = vmax.f32 %v11711, 0.0
  %v11840 = vmax.f32 %v11712, 0.0
  %v11841 = vmax.f32 %v11713, 0.0
  %v11842 = vmax.f32 %v11714, 0.0
  %v11843 = vmax.f32 %v11715, 0.0
  %v11844 = vmax.f32 %v11716, 0.0
  %v11845 = vmax.f32 %v11717, 0.0
  %v11846 = vmax.f32 %v11718, 0.0
  %v11847 = vmax.f32 %v11719, 0.0
  %v11848 = vmax.f32 %v11720, 0.0
  %v11849 = vmax.f32 %v11721, 0.0
  %v11850 = vmax.f32 %v11722, 0.0
  %v11851 = vmax.f32 %v11723, 0.0
  %v11852 = vmax.f32 %v11724, 0.0
  %v11853 = vmax.f32 %v11725, 0.0
  %v11854 = vmax.f32 %v11726, 0.0
  %v11855 = vmax.f32 %v11727, 0.0
  %v11856 = vmax.f32 %v11728, 0.0
  %v11857 = vmax.f32 %v11729, 0.0
  %v11858 = vmax.f32 %v11730, 0.0
  %v11859 = vmax.f32 %v11731, 0.0
  %v11860 = vmax.f32 %v11732, 0.0
  %v11861 = vmax.f32 %v11733, 0.0
  %v11862 = vmax.f32 %v11734, 0.0
  %v11863 = vmax.f32 %v11735, 0.0
  %v11864 = vmax.f32 %v11736, 0.0
  %v11865 = vmax.f32 %v11737, 0.0
  %v11866 = vmax.f32 %v11738, 0.0
  %v11867 = vmax.f32 %v11739, 0.0
  %v11868 = vmax.f32 %v11740, 0.0
  %v11869 = vmax.f32 %v11741, 0.0
  %v11870 = vmax.f32 %v11742, 0.0
  %v11871 = vmax.f32 %v11743, 0.0
  %v11872 = vmax.f32 %v11744, 0.0
  %v11873 = vmax.f32 %v11745, 0.0
  %v11874 = vmax.f32 %v11746, 0.0
  %v11875 = vmax.f32 %v11747, 0.0
  %v11876 = vmax.f32 %v11748, 0.0
  %v11877 = vmax.f32 %v11749, 0.0
  %v11878 = vmax.f32 %v11750, 0.0
  %v11879 = vmax.f32 %v11751, 0.0
  %v11880 = vmax.f32 %v11752, 0.0
  %v11881 = vmax.f32 %v11753, 0.0
  %v11882 = vmax.f32 %v11754, 0.0
  %v11883 = vmax.f32 %v11755, 0.0
  %v11884 = vmax.f32 %v11756, 0.0
  %v11885 = vmax.f32 %v11757, 0.0
  %v11886 = vmax.f32 %v11758, 0.0
  %v11887 = vmax.f32 %v11759, 0.0
  %v11888 = vmax.f32 %v11760, 0.0
  %v11889 = vmax.f32 %v11761, 0.0
  %v11890 = vmax.f32 %v11762, 0.0
  %v11891 = vmax.f32 %v11763, 0.0
  %v11892 = vmax.f32 %v11764, 0.0
  %v11893 = vmax.f32 %v11765, 0.0
  %v11894 = vmax.f32 %v11766, 0.0
  %v11895 = vmax.f32 %v11767, 0.0
  %v11896 = vmax.f32 %v11768, 0.0
  %v11897 = vmax.f32 %v11769, 0.0
  %v11898 = vmax.f32 %v11770, 0.0
  %v11899 = vmax.f32 %v11771, 0.0
  %v11900 = vmax.f32 %v11772, 0.0
  %v11901 = vmax.f32 %v11773, 0.0
  %v11902 = vmax.f32 %v11774, 0.0
  %v11903 = vmax.f32 %v11775, 0.0
  %v11904 = vmax.f32 %v11776, 0.0
  %v11905 = vmax.f32 %v11777, 0.0
  %v11906 = vmax.f32 %v11778, 0.0
  %v11907 = vmax.f32 %v11779, 0.0
  %v11908 = vmax.f32 %v11780, 0.0
  %v11909 = vmax.f32 %v11781, 0.0
  %v11910 = vmax.f32 %v11782, 0.0
  %v11911 = vmax.f32 %v11783, 0.0
  %v11912 = vmax.f32 %v11784, 0.0
  %v11913 = vmax.f32 %v11785, 0.0
  %v11914 = vmax.f32 %v11786, 0.0
  %v11915 = vmax.f32 %v11787, 0.0
  %v11916 = vmax.f32 %v11788, 0.0
  %v11917 = vmax.f32 %v11789, 0.0
  %v11918 = vmax.f32 %v11790, 0.0
  %v11919 = vmax.f32 %v11791, 0.0
  %v11920 = vmax.f32 %v11792, 0.0
  %v11921 = vmax.f32 %v11793, 0.0
  %v11922 = vmax.f32 %v11794, 0.0
  %v11923 = vmax.f32 %v11795, 0.0
  %v11924 = vmax.f32 %v11796, 0.0
  %v11925 = vmax.f32 %v11797, 0.0
  %v11926 = vmax.f32 %v11798, 0.0
  %v11927 = vmax.f32 %v11799, 0.0
  %v11928 = vmax.f32 %v11800, 0.0
  %v11929 = vmax.f32 %v11801, 0.0
  %v11930 = vmax.f32 %v11802, 0.0
  %v11931 = vmax.f32 %v11803, 0.0
  %v11932 = vmax.f32 %v11804, 0.0
  %v11933 = vmax.f32 %v11805, 0.0
  %v11934 = vmax.f32 %v11806, 0.0
  %v11935 = vmax.f32 %v11807, 0.0
  %v11936 = vmax.f32 %v11808, 0.0
  %v11937 = vmax.f32 %v11809, 0.0
  %v11938 = vmax.f32 %v11810, 0.0
  %v11939 = vmax.f32 %v11811, 0.0
  %v11940 = vmax.f32 %v11812, 0.0
  %v11941 = vmax.f32 %v11813, 0.0
  %v11942 = vmax.f32 %v11814, 0.0
  %v11943 = vmax.f32 %v11815, 0.0
  %v11944 = vmax.f32 %v11816, 0.0
  %v11945 = vmax.f32 %v11817, 0.0
  %v11946 = vmax.f32 %v11818, %v11850
  %v11947 = vmax.f32 %v11819, %v11851
  %v11948 = vmax.f32 %v11820, %v11852
  %v11949 = vmax.f32 %v11821, %v11853
  %v11950 = vmax.f32 %v11822, %v11854
  %v11951 = vmax.f32 %v11823, %v11855
  %v11952 = vmax.f32 %v11824, %v11856
  %v11953 = vmax.f32 %v11825, %v11857
  %v11954 = vmax.f32 %v11826, %v11858
  %v11955 = vmax.f32 %v11827, %v11859
  %v11956 = vmax.f32 %v11828, %v11860
  %v11957 = vmax.f32 %v11829, %v11861
  %v11958 = vmax.f32 %v11830, %v11862
  %v11959 = vmax.f32 %v11831, %v11863
  %v11960 = vmax.f32 %v11832, %v11864
  %v11961 = vmax.f32 %v11833, %v11865
  %v11962 = vmax.f32 %v11834, %v11866
  %v11963 = vmax.f32 %v11835, %v11867
  %v11964 = vmax.f32 %v11836, %v11868
  %v11965 = vmax.f32 %v11837, %v11869
  %v11966 = vmax.f32 %v11838, %v11870
  %v11967 = vmax.f32 %v11839, %v11871
  %v11968 = vmax.f32 %v11840, %v11872
  %v11969 = vmax.f32 %v11841, %v11873
  %v11970 = vmax.f32 %v11842, %v11874
  %v11971 = vmax.f32 %v11843, %v11875
  %v11972 = vmax.f32 %v11844, %v11876
  %v11973 = vmax.f32 %v11845, %v11877
  %v11974 = vmax.f32 %v11846, %v11878
  %v11975 = vmax.f32 %v11847, %v11879
  %v11976 = vmax.f32 %v11848, %v11880
  %v11977 = vmax.f32 %v11849, %v11881
  %v11978 = vmax.f32 %v11882, %v11914
  %v11979 = vmax.f32 %v11883, %v11915
  %v11980 = vmax.f32 %v11884, %v11916
  %v11981 = vmax.f32 %v11885, %v11917
  %v11982 = vmax.f32 %v11886, %v11918
  %v11983 = vmax.f32 %v11887, %v11919
  %v11984 = vmax.f32 %v11888, %v11920
  %v11985 = vmax.f32 %v11889, %v11921
  %v11986 = vmax.f32 %v11890, %v11922
  %v11987 = vmax.f32 %v11891, %v11923
  %v11988 = vmax.f32 %v11892, %v11924
  %v11989 = vmax.f32 %v11893, %v11925
  %v11990 = vmax.f32 %v11894, %v11926
  %v11991 = vmax.f32 %v11895, %v11927
  %v11992 = vmax.f32 %v11896, %v11928
  %v11993 = vmax.f32 %v11897, %v11929
  %v11994 = vmax.f32 %v11898, %v11930
  %v11995 = vmax.f32 %v11899, %v11931
  %v11996 = vmax.f32 %v11900, %v11932
  %v11997 = vmax.f32 %v11901, %v11933
  %v11998 = vmax.f32 %v11902, %v11934
  %v11999 = vmax.f32 %v11903, %v11935
  %v12000 = vmax.f32 %v11904, %v11936
  %v12001 = vmax.f32 %v11905, %v11937
  %v12002 = vmax.f32 %v11906, %v11938
  %v12003 = vmax.f32 %v11907, %v11939
  %v12004 = vmax.f32 %v11908, %v11940
  %v12005 = vmax.f32 %v11909, %v11941
  %v12006 = vmax.f32 %v11910, %v11942
  %v12007 = vmax.f32 %v11911, %v11943
  %v12008 = vmax.f32 %v11912, %v11944
  %v12009 = vmax.f32 %v11913, %v11945
  %v12010 = vmax.f32 %v11946, %v11978
  %v12011 = vmax.f32 %v11947, %v11979
  %v12012 = vmax.f32 %v11948, %v11980
  %v12013 = vmax.f32 %v11949, %v11981
  %v12014 = vmax.f32 %v11950, %v11982
  %v12015 = vmax.f32 %v11951, %v11983
  %v12016 = vmax.f32 %v11952, %v11984
  %v12017 = vmax.f32 %v11953, %v11985
  %v12018 = vmax.f32 %v11954, %v11986
  %v12019 = vmax.f32 %v11955, %v11987
  %v12020 = vmax.f32 %v11956, %v11988
  %v12021 = vmax.f32 %v11957, %v11989
  %v12022 = vmax.f32 %v11958, %v11990
  %v12023 = vmax.f32 %v11959, %v11991
  %v12024 = vmax.f32 %v11960, %v11992
  %v12025 = vmax.f32 %v11961, %v11993
  %v12026 = vmax.f32 %v11962, %v11994
  %v12027 = vmax.f32 %v11963, %v11995
  %v12028 = vmax.f32 %v11964, %v11996
  %v12029 = vmax.f32 %v11965, %v11997
  %v12030 = vmax.f32 %v11966, %v11998
  %v12031 = vmax.f32 %v11967, %v11999
  %v12032 = vmax.f32 %v11968, %v12000
  %v12033 = vmax.f32 %v11969, %v12001
  %v12034 = vmax.f32 %v11970, %v12002
  %v12035 = vmax.f32 %v11971, %v12003
  %v12036 = vmax.f32 %v11972, %v12004
  %v12037 = vmax.f32 %v11973, %v12005
  %v12038 = vmax.f32 %v11974, %v12006
  %v12039 = vmax.f32 %v11975, %v12007
  %v12040 = vmax.f32 %v11976, %v12008
  %v12041 = vmax.f32 %v11977, %v12009
  %v12042 = vld [vmem:[%s7] sm:$0xff]
  %v12043 = vld [vmem:[%s7 + $0x8] sm:$0xff]
  %v12044 = vld [vmem:[%s7 + $0x10] sm:$0xff]
  %v12045 = vld [vmem:[%s7 + $0x18] sm:$0xff]
  %v12046 = vld [vmem:[%s7 + $0x20] sm:$0xff]
  %v12047 = vld [vmem:[%s7 + $0x28] sm:$0xff]
  %v12048 = vld [vmem:[%s7 + $0x30] sm:$0xff]
  %v12049 = vld [vmem:[%s7 + $0x38] sm:$0xff]
  %v12050 = vld [vmem:[%s7 + $0x40] sm:$0xff]
  %v12051 = vld [vmem:[%s7 + $0x48] sm:$0xff]
  %v12052 = vld [vmem:[%s7 + $0x50] sm:$0xff]
  %v12053 = vld [vmem:[%s7 + $0x58] sm:$0xff]
  %v12054 = vld [vmem:[%s7 + $0x60] sm:$0xff]
  %v12055 = vld [vmem:[%s7 + $0x68] sm:$0xff]
  %v12056 = vld [vmem:[%s7 + $0x70] sm:$0xff]
  %v12057 = vld [vmem:[%s7 + $0x78] sm:$0xff]
  %v12058 = vld [vmem:[%s7 + $0x80] sm:$0xff]
  %v12059 = vld [vmem:[%s7 + $0x88] sm:$0xff]
  %v12060 = vld [vmem:[%s7 + $0x90] sm:$0xff]
  %v12061 = vld [vmem:[%s7 + $0x98] sm:$0xff]
  %v12062 = vld [vmem:[%s7 + $0xa0] sm:$0xff]
  %v12063 = vld [vmem:[%s7 + $0xa8] sm:$0xff]
  %v12064 = vld [vmem:[%s7 + $0xb0] sm:$0xff]
  %v12065 = vld [vmem:[%s7 + $0xb8] sm:$0xff]
  %v12066 = vld [vmem:[%s7 + $0xc0] sm:$0xff]
  %v12067 = vld [vmem:[%s7 + $0xc8] sm:$0xff]
  %v12068 = vld [vmem:[%s7 + $0xd0] sm:$0xff]
  %v12069 = vld [vmem:[%s7 + $0xd8] sm:$0xff]
  %v12070 = vld [vmem:[%s7 + $0xe0] sm:$0xff]
  %v12071 = vld [vmem:[%s7 + $0xe8] sm:$0xff]
  %v12072 = vld [vmem:[%s7 + $0xf0] sm:$0xff]
  %v12073 = vld [vmem:[%s7 + $0xf8] sm:$0xff]
  %v12074 = vld [vmem:[%s7 + $0x100] sm:$0xff]
  %v12075 = vld [vmem:[%s7 + $0x108] sm:$0xff]
  %v12076 = vld [vmem:[%s7 + $0x110] sm:$0xff]
  %v12077 = vld [vmem:[%s7 + $0x118] sm:$0xff]
  %v12078 = vld [vmem:[%s7 + $0x120] sm:$0xff]
  %v12079 = vld [vmem:[%s7 + $0x128] sm:$0xff]
  %v12080 = vld [vmem:[%s7 + $0x130] sm:$0xff]
  %v12081 = vld [vmem:[%s7 + $0x138] sm:$0xff]
  %v12082 = vld [vmem:[%s7 + $0x140] sm:$0xff]
  %v12083 = vld [vmem:[%s7 + $0x148] sm:$0xff]
  %v12084 = vld [vmem:[%s7 + $0x150] sm:$0xff]
  %v12085 = vld [vmem:[%s7 + $0x158] sm:$0xff]
  %v12086 = vld [vmem:[%s7 + $0x160] sm:$0xff]
  %v12087 = vld [vmem:[%s7 + $0x168] sm:$0xff]
  %v12088 = vld [vmem:[%s7 + $0x170] sm:$0xff]
  %v12089 = vld [vmem:[%s7 + $0x178] sm:$0xff]
  %v12090 = vld [vmem:[%s7 + $0x180] sm:$0xff]
  %v12091 = vld [vmem:[%s7 + $0x188] sm:$0xff]
  %v12092 = vld [vmem:[%s7 + $0x190] sm:$0xff]
  %v12093 = vld [vmem:[%s7 + $0x198] sm:$0xff]
  %v12094 = vld [vmem:[%s7 + $0x1a0] sm:$0xff]
  %v12095 = vld [vmem:[%s7 + $0x1a8] sm:$0xff]
  %v12096 = vld [vmem:[%s7 + $0x1b0] sm:$0xff]
  %v12097 = vld [vmem:[%s7 + $0x1b8] sm:$0xff]
  %v12098 = vld [vmem:[%s7 + $0x1c0] sm:$0xff]
  %v12099 = vld [vmem:[%s7 + $0x1c8] sm:$0xff]
  %v12100 = vld [vmem:[%s7 + $0x1d0] sm:$0xff]
  %v12101 = vld [vmem:[%s7 + $0x1d8] sm:$0xff]
  %v12102 = vld [vmem:[%s7 + $0x1e0] sm:$0xff]
  %v12103 = vld [vmem:[%s7 + $0x1e8] sm:$0xff]
  %v12104 = vld [vmem:[%s7 + $0x1f0] sm:$0xff]
  %v12105 = vld [vmem:[%s7 + $0x1f8] sm:$0xff]
  %v12106 = vld [vmem:[%s7 + $0x200] sm:$0xff]
  %v12107 = vld [vmem:[%s7 + $0x208] sm:$0xff]
  %v12108 = vld [vmem:[%s7 + $0x210] sm:$0xff]
  %v12109 = vld [vmem:[%s7 + $0x218] sm:$0xff]
  %v12110 = vld [vmem:[%s7 + $0x220] sm:$0xff]
  %v12111 = vld [vmem:[%s7 + $0x228] sm:$0xff]
  %v12112 = vld [vmem:[%s7 + $0x230] sm:$0xff]
  %v12113 = vld [vmem:[%s7 + $0x238] sm:$0xff]
  %v12114 = vld [vmem:[%s7 + $0x240] sm:$0xff]
  %v12115 = vld [vmem:[%s7 + $0x248] sm:$0xff]
  %v12116 = vld [vmem:[%s7 + $0x250] sm:$0xff]
  %v12117 = vld [vmem:[%s7 + $0x258] sm:$0xff]
  %v12118 = vld [vmem:[%s7 + $0x260] sm:$0xff]
  %v12119 = vld [vmem:[%s7 + $0x268] sm:$0xff]
  %v12120 = vld [vmem:[%s7 + $0x270] sm:$0xff]
  %v12121 = vld [vmem:[%s7 + $0x278] sm:$0xff]
  %v12122 = vld [vmem:[%s7 + $0x280] sm:$0xff]
  %v12123 = vld [vmem:[%s7 + $0x288] sm:$0xff]
  %v12124 = vld [vmem:[%s7 + $0x290] sm:$0xff]
  %v12125 = vld [vmem:[%s7 + $0x298] sm:$0xff]
  %v12126 = vld [vmem:[%s7 + $0x2a0] sm:$0xff]
  %v12127 = vld [vmem:[%s7 + $0x2a8] sm:$0xff]
  %v12128 = vld [vmem:[%s7 + $0x2b0] sm:$0xff]
  %v12129 = vld [vmem:[%s7 + $0x2b8] sm:$0xff]
  %v12130 = vld [vmem:[%s7 + $0x2c0] sm:$0xff]
  %v12131 = vld [vmem:[%s7 + $0x2c8] sm:$0xff]
  %v12132 = vld [vmem:[%s7 + $0x2d0] sm:$0xff]
  %v12133 = vld [vmem:[%s7 + $0x2d8] sm:$0xff]
  %v12134 = vld [vmem:[%s7 + $0x2e0] sm:$0xff]
  %v12135 = vld [vmem:[%s7 + $0x2e8] sm:$0xff]
  %v12136 = vld [vmem:[%s7 + $0x2f0] sm:$0xff]
  %v12137 = vld [vmem:[%s7 + $0x2f8] sm:$0xff]
  %v12138 = vld [vmem:[%s7 + $0x300] sm:$0xff]
  %v12139 = vld [vmem:[%s7 + $0x308] sm:$0xff]
  %v12140 = vld [vmem:[%s7 + $0x310] sm:$0xff]
  %v12141 = vld [vmem:[%s7 + $0x318] sm:$0xff]
  %v12142 = vld [vmem:[%s7 + $0x320] sm:$0xff]
  %v12143 = vld [vmem:[%s7 + $0x328] sm:$0xff]
  %v12144 = vld [vmem:[%s7 + $0x330] sm:$0xff]
  %v12145 = vld [vmem:[%s7 + $0x338] sm:$0xff]
  %v12146 = vld [vmem:[%s7 + $0x340] sm:$0xff]
  %v12147 = vld [vmem:[%s7 + $0x348] sm:$0xff]
  %v12148 = vld [vmem:[%s7 + $0x350] sm:$0xff]
  %v12149 = vld [vmem:[%s7 + $0x358] sm:$0xff]
  %v12150 = vld [vmem:[%s7 + $0x360] sm:$0xff]
  %v12151 = vld [vmem:[%s7 + $0x368] sm:$0xff]
  %v12152 = vld [vmem:[%s7 + $0x370] sm:$0xff]
  %v12153 = vld [vmem:[%s7 + $0x378] sm:$0xff]
  %v12154 = vld [vmem:[%s7 + $0x380] sm:$0xff]
  %v12155 = vld [vmem:[%s7 + $0x388] sm:$0xff]
  %v12156 = vld [vmem:[%s7 + $0x390] sm:$0xff]
  %v12157 = vld [vmem:[%s7 + $0x398] sm:$0xff]
  %v12158 = vld [vmem:[%s7 + $0x3a0] sm:$0xff]
  %v12159 = vld [vmem:[%s7 + $0x3a8] sm:$0xff]
  %v12160 = vld [vmem:[%s7 + $0x3b0] sm:$0xff]
  %v12161 = vld [vmem:[%s7 + $0x3b8] sm:$0xff]
  %v12162 = vld [vmem:[%s7 + $0x3c0] sm:$0xff]
  %v12163 = vld [vmem:[%s7 + $0x3c8] sm:$0xff]
  %v12164 = vld [vmem:[%s7 + $0x3d0] sm:$0xff]
  %v12165 = vld [vmem:[%s7 + $0x3d8] sm:$0xff]
  %v12166 = vld [vmem:[%s7 + $0x3e0] sm:$0xff]
  %v12167 = vld [vmem:[%s7 + $0x3e8] sm:$0xff]
  %v12168 = vld [vmem:[%s7 + $0x3f0] sm:$0xff]
  %v12169 = vld [vmem:[%s7 + $0x3f8] sm:$0xff]
  %12170 = vmatpush.msra.mxu0 %v12072
  %12171 = vmatpush.msra.mxu0 %v12070
  %12172 = vmatpush.msra.mxu0 %v12068
  %12173 = vmatpush.msra.mxu0 %v12066
  %12174 = vmatpush.msra.mxu0 %v12064
  %12175 = vmatpush.msra.mxu0 %v12062
  %12176 = vmatpush.msra.mxu0 %v12060
  %12177 = vmatpush.msra.mxu0 %v12058
  %12178 = vmatpush.msra.mxu0 %v12056
  %12179 = vmatpush.msra.mxu0 %v12054
  %12180 = vmatpush.msra.mxu0 %v12052
  %12181 = vmatpush.msra.mxu0 %v12050
  %12182 = vmatpush.msra.mxu0 %v12048
  %12183 = vmatpush.msra.mxu0 %v12046
  %12184 = vmatpush.msra.mxu0 %v12044
  %12185 = vmatpush.msra.mxu0 %v12042
  %12186 = vmatmul.f32.gmra.mxu0 %v12010
  %v12187 = vpop.f32.mrf.mxu0
  %v12188 = vadd.f32 0.0, %v12187
  %12189 = vmatmul.f32.gmra.mxu0 %v12011
  %v12190 = vpop.f32.mrf.mxu0
  %v12191 = vadd.f32 0.0, %v12190
  %12192 = vmatmul.f32.gmra.mxu0 %v12012
  %v12193 = vpop.f32.mrf.mxu0
  %v12194 = vadd.f32 0.0, %v12193
  %12195 = vmatmul.f32.gmra.mxu0 %v12013
  %v12196 = vpop.f32.mrf.mxu0
  %v12197 = vadd.f32 0.0, %v12196
  %12198 = vmatmul.f32.gmra.mxu0 %v12014
  %v12199 = vpop.f32.mrf.mxu0
  %v12200 = vadd.f32 0.0, %v12199
  %12201 = vmatmul.f32.gmra.mxu0 %v12015
  %v12202 = vpop.f32.mrf.mxu0
  %v12203 = vadd.f32 0.0, %v12202
  %12204 = vmatmul.f32.gmra.mxu0 %v12016
  %v12205 = vpop.f32.mrf.mxu0
  %v12206 = vadd.f32 0.0, %v12205
  %12207 = vmatmul.f32.gmra.mxu0 %v12017
  %v12208 = vpop.f32.mrf.mxu0
  %v12209 = vadd.f32 0.0, %v12208
  %12210 = vdwg.mxu0
  %12211 = vmatpush.msra.mxu0 %v12104
  %12212 = vmatpush.msra.mxu0 %v12102
  %12213 = vmatpush.msra.mxu0 %v12100
  %12214 = vmatpush.msra.mxu0 %v12098
  %12215 = vmatpush.msra.mxu0 %v12096
  %12216 = vmatpush.msra.mxu0 %v12094
  %12217 = vmatpush.msra.mxu0 %v12092
  %12218 = vmatpush.msra.mxu0 %v12090
  %12219 = vmatpush.msra.mxu0 %v12088
  %12220 = vmatpush.msra.mxu0 %v12086
  %12221 = vmatpush.msra.mxu0 %v12084
  %12222 = vmatpush.msra.mxu0 %v12082
  %12223 = vmatpush.msra.mxu0 %v12080
  %12224 = vmatpush.msra.mxu0 %v12078
  %12225 = vmatpush.msra.mxu0 %v12076
  %12226 = vmatpush.msra.mxu0 %v12074
  %12227 = vmatmul.f32.gmra.mxu0 %v12018
  %v12228 = vpop.f32.mrf.mxu0
  %v12229 = vadd.f32 %v12188, %v12228
  %12230 = vmatmul.f32.gmra.mxu0 %v12019
  %v12231 = vpop.f32.mrf.mxu0
  %v12232 = vadd.f32 %v12191, %v12231
  %12233 = vmatmul.f32.gmra.mxu0 %v12020
  %v12234 = vpop.f32.mrf.mxu0
  %v12235 = vadd.f32 %v12194, %v12234
  %12236 = vmatmul.f32.gmra.mxu0 %v12021
  %v12237 = vpop.f32.mrf.mxu0
  %v12238 = vadd.f32 %v12197, %v12237
  %12239 = vmatmul.f32.gmra.mxu0 %v12022
  %v12240 = vpop.f32.mrf.mxu0
  %v12241 = vadd.f32 %v12200, %v12240
  %12242 = vmatmul.f32.gmra.mxu0 %v12023
  %v12243 = vpop.f32.mrf.mxu0
  %v12244 = vadd.f32 %v12203, %v12243
  %12245 = vmatmul.f32.gmra.mxu0 %v12024
  %v12246 = vpop.f32.mrf.mxu0
  %v12247 = vadd.f32 %v12206, %v12246
  %12248 = vmatmul.f32.gmra.mxu0 %v12025
  %v12249 = vpop.f32.mrf.mxu0
  %v12250 = vadd.f32 %v12209, %v12249
  %12251 = vdwg.mxu0
  %12252 = vmatpush.msra.mxu0 %v12136
  %12253 = vmatpush.msra.mxu0 %v12134
  %12254 = vmatpush.msra.mxu0 %v12132
  %12255 = vmatpush.msra.mxu0 %v12130
  %12256 = vmatpush.msra.mxu0 %v12128
  %12257 = vmatpush.msra.mxu0 %v12126
  %12258 = vmatpush.msra.mxu0 %v12124
  %12259 = vmatpush.msra.mxu0 %v12122
  %12260 = vmatpush.msra.mxu0 %v12120
  %12261 = vmatpush.msra.mxu0 %v12118
  %12262 = vmatpush.msra.mxu0 %v12116
  %12263 = vmatpush.msra.mxu0 %v12114
  %12264 = vmatpush.msra.mxu0 %v12112
  %12265 = vmatpush.msra.mxu0 %v12110
  %12266 = vmatpush.msra.mxu0 %v12108
  %12267 = vmatpush.msra.mxu0 %v12106
  %12268 = vmatmul.f32.gmra.mxu0 %v12026
  %v12269 = vpop.f32.mrf.mxu0
  %v12270 = vadd.f32 %v12229, %v12269
  %12271 = vmatmul.f32.gmra.mxu0 %v12027
  %v12272 = vpop.f32.mrf.mxu0
  %v12273 = vadd.f32 %v12232, %v12272
  %12274 = vmatmul.f32.gmra.mxu0 %v12028
  %v12275 = vpop.f32.mrf.mxu0
  %v12276 = vadd.f32 %v12235, %v12275
  %12277 = vmatmul.f32.gmra.mxu0 %v12029
  %v12278 = vpop.f32.mrf.mxu0
  %v12279 = vadd.f32 %v12238, %v12278
  %12280 = vmatmul.f32.gmra.mxu0 %v12030
  %v12281 = vpop.f32.mrf.mxu0
  %v12282 = vadd.f32 %v12241, %v12281
  %12283 = vmatmul.f32.gmra.mxu0 %v12031
  %v12284 = vpop.f32.mrf.mxu0
  %v12285 = vadd.f32 %v12244, %v12284
  %12286 = vmatmul.f32.gmra.mxu0 %v12032
  %v12287 = vpop.f32.mrf.mxu0
  %v12288 = vadd.f32 %v12247, %v12287
  %12289 = vmatmul.f32.gmra.mxu0 %v12033
  %v12290 = vpop.f32.mrf.mxu0
  %v12291 = vadd.f32 %v12250, %v12290
  %12292 = vdwg.mxu0
  %12293 = vmatpush.msra.mxu0 %v12168
  %12294 = vmatpush.msra.mxu0 %v12166
  %12295 = vmatpush.msra.mxu0 %v12164
  %12296 = vmatpush.msra.mxu0 %v12162
  %12297 = vmatpush.msra.mxu0 %v12160
  %12298 = vmatpush.msra.mxu0 %v12158
  %12299 = vmatpush.msra.mxu0 %v12156
  %12300 = vmatpush.msra.mxu0 %v12154
  %12301 = vmatpush.msra.mxu0 %v12152
  %12302 = vmatpush.msra.mxu0 %v12150
  %12303 = vmatpush.msra.mxu0 %v12148
  %12304 = vmatpush.msra.mxu0 %v12146
  %12305 = vmatpush.msra.mxu0 %v12144
  %12306 = vmatpush.msra.mxu0 %v12142
  %12307 = vmatpush.msra.mxu0 %v12140
  %12308 = vmatpush.msra.mxu0 %v12138
  %12309 = vmatmul.f32.gmra.mxu0 %v12034
  %v12310 = vpop.f32.mrf.mxu0
  %v12311 = vadd.f32 %v12270, %v12310
  %12312 = vmatmul.f32.gmra.mxu0 %v12035
  %v12313 = vpop.f32.mrf.mxu0
  %v12314 = vadd.f32 %v12273, %v12313
  %12315 = vmatmul.f32.gmra.mxu0 %v12036
  %v12316 = vpop.f32.mrf.mxu0
  %v12317 = vadd.f32 %v12276, %v12316
  %12318 = vmatmul.f32.gmra.mxu0 %v12037
  %v12319 = vpop.f32.mrf.mxu0
  %v12320 = vadd.f32 %v12279, %v12319
  %12321 = vmatmul.f32.gmra.mxu0 %v12038
  %v12322 = vpop.f32.mrf.mxu0
  %v12323 = vadd.f32 %v12282, %v12322
  %12324 = vmatmul.f32.gmra.mxu0 %v12039
  %v12325 = vpop.f32.mrf.mxu0
  %v12326 = vadd.f32 %v12285, %v12325
  %12327 = vmatmul.f32.gmra.mxu0 %v12040
  %v12328 = vpop.f32.mrf.mxu0
  %v12329 = vadd.f32 %v12288, %v12328
  %12330 = vmatmul.f32.gmra.mxu0 %v12041
  %v12331 = vpop.f32.mrf.mxu0
  %v12332 = vadd.f32 %v12291, %v12331
  %12333 = vdwg.mxu0
  %12334 = vmatpush.msra.mxu0 %v12073
  %12335 = vmatpush.msra.mxu0 %v12071
  %12336 = vmatpush.msra.mxu0 %v12069
  %12337 = vmatpush.msra.mxu0 %v12067
  %12338 = vmatpush.msra.mxu0 %v12065
  %12339 = vmatpush.msra.mxu0 %v12063
  %12340 = vmatpush.msra.mxu0 %v12061
  %12341 = vmatpush.msra.mxu0 %v12059
  %12342 = vmatpush.msra.mxu0 %v12057
  %12343 = vmatpush.msra.mxu0 %v12055
  %12344 = vmatpush.msra.mxu0 %v12053
  %12345 = vmatpush.msra.mxu0 %v12051
  %12346 = vmatpush.msra.mxu0 %v12049
  %12347 = vmatpush.msra.mxu0 %v12047
  %12348 = vmatpush.msra.mxu0 %v12045
  %12349 = vmatpush.msra.mxu0 %v12043
  %12350 = vmatmul.f32.gmra.mxu0 %v12010
  %v12351 = vpop.f32.mrf.mxu0
  %v12352 = vadd.f32 0.0, %v12351
  %12353 = vmatmul.f32.gmra.mxu0 %v12011
  %v12354 = vpop.f32.mrf.mxu0
  %v12355 = vadd.f32 0.0, %v12354
  %12356 = vmatmul.f32.gmra.mxu0 %v12012
  %v12357 = vpop.f32.mrf.mxu0
  %v12358 = vadd.f32 0.0, %v12357
  %12359 = vmatmul.f32.gmra.mxu0 %v12013
  %v12360 = vpop.f32.mrf.mxu0
  %v12361 = vadd.f32 0.0, %v12360
  %12362 = vmatmul.f32.gmra.mxu0 %v12014
  %v12363 = vpop.f32.mrf.mxu0
  %v12364 = vadd.f32 0.0, %v12363
  %12365 = vmatmul.f32.gmra.mxu0 %v12015
  %v12366 = vpop.f32.mrf.mxu0
  %v12367 = vadd.f32 0.0, %v12366
  %12368 = vmatmul.f32.gmra.mxu0 %v12016
  %v12369 = vpop.f32.mrf.mxu0
  %v12370 = vadd.f32 0.0, %v12369
  %12371 = vmatmul.f32.gmra.mxu0 %v12017
  %v12372 = vpop.f32.mrf.mxu0
  %v12373 = vadd.f32 0.0, %v12372
  %12374 = vdwg.mxu0
  %12375 = vmatpush.msra.mxu0 %v12105
  %12376 = vmatpush.msra.mxu0 %v12103
  %12377 = vmatpush.msra.mxu0 %v12101
  %12378 = vmatpush.msra.mxu0 %v12099
  %12379 = vmatpush.msra.mxu0 %v12097
  %12380 = vmatpush.msra.mxu0 %v12095
  %12381 = vmatpush.msra.mxu0 %v12093
  %12382 = vmatpush.msra.mxu0 %v12091
  %12383 = vmatpush.msra.mxu0 %v12089
  %12384 = vmatpush.msra.mxu0 %v12087
  %12385 = vmatpush.msra.mxu0 %v12085
  %12386 = vmatpush.msra.mxu0 %v12083
  %12387 = vmatpush.msra.mxu0 %v12081
  %12388 = vmatpush.msra.mxu0 %v12079
  %12389 = vmatpush.msra.mxu0 %v12077
  %12390 = vmatpush.msra.mxu0 %v12075
  %12391 = vmatmul.f32.gmra.mxu0 %v12018
  %v12392 = vpop.f32.mrf.mxu0
  %v12393 = vadd.f32 %v12352, %v12392
  %12394 = vmatmul.f32.gmra.mxu0 %v12019
  %v12395 = vpop.f32.mrf.mxu0
  %v12396 = vadd.f32 %v12355, %v12395
  %12397 = vmatmul.f32.gmra.mxu0 %v12020
  %v12398 = vpop.f32.mrf.mxu0
  %v12399 = vadd.f32 %v12358, %v12398
  %12400 = vmatmul.f32.gmra.mxu0 %v12021
  %v12401 = vpop.f32.mrf.mxu0
  %v12402 = vadd.f32 %v12361, %v12401
  %12403 = vmatmul.f32.gmra.mxu0 %v12022
  %v12404 = vpop.f32.mrf.mxu0
  %v12405 = vadd.f32 %v12364, %v12404
  %12406 = vmatmul.f32.gmra.mxu0 %v12023
  %v12407 = vpop.f32.mrf.mxu0
  %v12408 = vadd.f32 %v12367, %v12407
  %12409 = vmatmul.f32.gmra.mxu0 %v12024
  %v12410 = vpop.f32.mrf.mxu0
  %v12411 = vadd.f32 %v12370, %v12410
  %12412 = vmatmul.f32.gmra.mxu0 %v12025
  %v12413 = vpop.f32.mrf.mxu0
  %v12414 = vadd.f32 %v12373, %v12413
  %12415 = vdwg.mxu0
  %12416 = vmatpush.msra.mxu0 %v12137
  %12417 = vmatpush.msra.mxu0 %v12135
  %12418 = vmatpush.msra.mxu0 %v12133
  %12419 = vmatpush.msra.mxu0 %v12131
  %12420 = vmatpush.msra.mxu0 %v12129
  %12421 = vmatpush.msra.mxu0 %v12127
  %12422 = vmatpush.msra.mxu0 %v12125
  %12423 = vmatpush.msra.mxu0 %v12123
  %12424 = vmatpush.msra.mxu0 %v12121
  %12425 = vmatpush.msra.mxu0 %v12119
  %12426 = vmatpush.msra.mxu0 %v12117
  %12427 = vmatpush.msra.mxu0 %v12115
  %12428 = vmatpush.msra.mxu0 %v12113
  %12429 = vmatpush.msra.mxu0 %v12111
  %12430 = vmatpush.msra.mxu0 %v12109
  %12431 = vmatpush.msra.mxu0 %v12107
  %12432 = vmatmul.f32.gmra.mxu0 %v12026
  %v12433 = vpop.f32.mrf.mxu0
  %v12434 = vadd.f32 %v12393, %v12433
  %12435 = vmatmul.f32.gmra.mxu0 %v12027
  %v12436 = vpop.f32.mrf.mxu0
  %v12437 = vadd.f32 %v12396, %v12436
  %12438 = vmatmul.f32.gmra.mxu0 %v12028
  %v12439 = vpop.f32.mrf.mxu0
  %v12440 = vadd.f32 %v12399, %v12439
  %12441 = vmatmul.f32.gmra.mxu0 %v12029
  %v12442 = vpop.f32.mrf.mxu0
  %v12443 = vadd.f32 %v12402, %v12442
  %12444 = vmatmul.f32.gmra.mxu0 %v12030
  %v12445 = vpop.f32.mrf.mxu0
  %v12446 = vadd.f32 %v12405, %v12445
  %12447 = vmatmul.f32.gmra.mxu0 %v12031
  %v12448 = vpop.f32.mrf.mxu0
  %v12449 = vadd.f32 %v12408, %v12448
  %12450 = vmatmul.f32.gmra.mxu0 %v12032
  %v12451 = vpop.f32.mrf.mxu0
  %v12452 = vadd.f32 %v12411, %v12451
  %12453 = vmatmul.f32.gmra.mxu0 %v12033
  %v12454 = vpop.f32.mrf.mxu0
  %v12455 = vadd.f32 %v12414, %v12454
  %12456 = vdwg.mxu0
  %12457 = vmatpush.msra.mxu0 %v12169
  %12458 = vmatpush.msra.mxu0 %v12167
  %12459 = vmatpush.msra.mxu0 %v12165
  %12460 = vmatpush.msra.mxu0 %v12163
  %12461 = vmatpush.msra.mxu0 %v12161
  %12462 = vmatpush.msra.mxu0 %v12159
  %12463 = vmatpush.msra.mxu0 %v12157
  %12464 = vmatpush.msra.mxu0 %v12155
  %12465 = vmatpush.msra.mxu0 %v12153
  %12466 = vmatpush.msra.mxu0 %v12151
  %12467 = vmatpush.msra.mxu0 %v12149
  %12468 = vmatpush.msra.mxu0 %v12147
  %12469 = vmatpush.msra.mxu0 %v12145
  %12470 = vmatpush.msra.mxu0 %v12143
  %12471 = vmatpush.msra.mxu0 %v12141
  %12472 = vmatpush.msra.mxu0 %v12139
  %12473 = vmatmul.f32.gmra.mxu0 %v12034
  %v12474 = vpop.f32.mrf.mxu0
  %v12475 = vadd.f32 %v12434, %v12474
  %12476 = vmatmul.f32.gmra.mxu0 %v12035
  %v12477 = vpop.f32.mrf.mxu0
  %v12478 = vadd.f32 %v12437, %v12477
  %12479 = vmatmul.f32.gmra.mxu0 %v12036
  %v12480 = vpop.f32.mrf.mxu0
  %v12481 = vadd.f32 %v12440, %v12480
  %12482 = vmatmul.f32.gmra.mxu0 %v12037
  %v12483 = vpop.f32.mrf.mxu0
  %v12484 = vadd.f32 %v12443, %v12483
  %12485 = vmatmul.f32.gmra.mxu0 %v12038
  %v12486 = vpop.f32.mrf.mxu0
  %v12487 = vadd.f32 %v12446, %v12486
  %12488 = vmatmul.f32.gmra.mxu0 %v12039
  %v12489 = vpop.f32.mrf.mxu0
  %v12490 = vadd.f32 %v12449, %v12489
  %12491 = vmatmul.f32.gmra.mxu0 %v12040
  %v12492 = vpop.f32.mrf.mxu0
  %v12493 = vadd.f32 %v12452, %v12492
  %12494 = vmatmul.f32.gmra.mxu0 %v12041
  %v12495 = vpop.f32.mrf.mxu0
  %v12496 = vadd.f32 %v12455, %v12495
  %12497 = vdwg.mxu0
  %v12498 = vld [vmem:[%s8] sm:$0x3]
  %v12500 = vperm.slane %v12498, 0
  %v12501 = vperm.slane %v12498, 1
  %v12504 = vmul.f32 %v12311, %v12500
  %v12505 = vmul.f32 %v12475, %v12501
  %v12506 = vmul.f32 %v12314, %v12500
  %v12507 = vmul.f32 %v12478, %v12501
  %v12508 = vmul.f32 %v12317, %v12500
  %v12509 = vmul.f32 %v12481, %v12501
  %v12510 = vmul.f32 %v12320, %v12500
  %v12511 = vmul.f32 %v12484, %v12501
  %v12512 = vmul.f32 %v12323, %v12500
  %v12513 = vmul.f32 %v12487, %v12501
  %v12514 = vmul.f32 %v12326, %v12500
  %v12515 = vmul.f32 %v12490, %v12501
  %v12516 = vmul.f32 %v12329, %v12500
  %v12517 = vmul.f32 %v12493, %v12501
  %v12518 = vmul.f32 %v12332, %v12500
  %v12519 = vmul.f32 %v12496, %v12501
  %v12520 = vld [vmem:[%s9] sm:$0x3]
  %v12522 = vperm.slane %v12520, 0
  %v12523 = vperm.slane %v12520, 1
  %v12526 = vadd.f32 %v12504, %v12522
  %v12527 = vadd.f32 %v12505, %v12523
  %v12528 = vadd.f32 %v12506, %v12522
  %v12529 = vadd.f32 %v12507, %v12523
  %v12530 = vadd.f32 %v12508, %v12522
  %v12531 = vadd.f32 %v12509, %v12523
  %v12532 = vadd.f32 %v12510, %v12522
  %v12533 = vadd.f32 %v12511, %v12523
  %v12534 = vadd.f32 %v12512, %v12522
  %v12535 = vadd.f32 %v12513, %v12523
  %v12536 = vadd.f32 %v12514, %v12522
  %v12537 = vadd.f32 %v12515, %v12523
  %v12538 = vadd.f32 %v12516, %v12522
  %v12539 = vadd.f32 %v12517, %v12523
  %v12540 = vadd.f32 %v12518, %v12522
  %v12541 = vadd.f32 %v12519, %v12523
  %v12542 = vmax.f32 %v12526, 0.0
  %v12543 = vmax.f32 %v12527, 0.0
  %v12544 = vmax.f32 %v12528, 0.0
  %v12545 = vmax.f32 %v12529, 0.0
  %v12546 = vmax.f32 %v12530, 0.0
  %v12547 = vmax.f32 %v12531, 0.0
  %v12548 = vmax.f32 %v12532, 0.0
  %v12549 = vmax.f32 %v12533, 0.0
  %v12550 = vmax.f32 %v12534, 0.0
  %v12551 = vmax.f32 %v12535, 0.0
  %v12552 = vmax.f32 %v12536, 0.0
  %v12553 = vmax.f32 %v12537, 0.0
  %v12554 = vmax.f32 %v12538, 0.0
  %v12555 = vmax.f32 %v12539, 0.0
  %v12556 = vmax.f32 %v12540, 0.0
  %v12557 = vmax.f32 %v12541, 0.0
  %v12558 = vld [vmem:[%s10] sm:$0xff]
  %v12559 = vld [vmem:[%s10 + $0x8] sm:$0xff]
  %v12560 = vld [vmem:[%s10 + $0x10] sm:$0xff]
  %v12561 = vld [vmem:[%s10 + $0x18] sm:$0xff]
  %v12562 = vld [vmem:[%s10 + $0x20] sm:$0xff]
  %v12563 = vld [vmem:[%s10 + $0x28] sm:$0xff]
  %v12564 = vld [vmem:[%s10 + $0x30] sm:$0xff]
  %v12565 = vld [vmem:[%s10 + $0x38] sm:$0xff]
  %v12566 = vld [vmem:[%s10 + $0x40] sm:$0xff]
  %v12567 = vld [vmem:[%s10 + $0x48] sm:$0xff]
  %v12568 = vld [vmem:[%s10 + $0x50] sm:$0xff]
  %v12569 = vld [vmem:[%s10 + $0x58] sm:$0xff]
  %v12570 = vld [vmem:[%s10 + $0x60] sm:$0xff]
  %v12571 = vld [vmem:[%s10 + $0x68] sm:$0xff]
  %v12572 = vld [vmem:[%s10 + $0x70] sm:$0xff]
  %v12573 = vld [vmem:[%s10 + $0x78] sm:$0xff]
  %v12574 = vld [vmem:[%s10 + $0x80] sm:$0xff]
  %v12575 = vld [vmem:[%s10 + $0x88] sm:$0xff]
  %v12576 = vld [vmem:[%s10 + $0x90] sm:$0xff]
  %v12577 = vld [vmem:[%s10 + $0x98] sm:$0xff]
  %v12578 = vld [vmem:[%s10 + $0xa0] sm:$0xff]
  %v12579 = vld [vmem:[%s10 + $0xa8] sm:$0xff]
  %v12580 = vld [vmem:[%s10 + $0xb0] sm:$0xff]
  %v12581 = vld [vmem:[%s10 + $0xb8] sm:$0xff]
  %v12582 = vld [vmem:[%s10 + $0xc0] sm:$0xff]
  %v12583 = vld [vmem:[%s10 + $0xc8] sm:$0xff]
  %v12584 = vld [vmem:[%s10 + $0xd0] sm:$0xff]
  %v12585 = vld [vmem:[%s10 + $0xd8] sm:$0xff]
  %v12586 = vld [vmem:[%s10 + $0xe0] sm:$0xff]
  %v12587 = vld [vmem:[%s10 + $0xe8] sm:$0xff]
  %v12588 = vld [vmem:[%s10 + $0xf0] sm:$0xff]
  %v12589 = vld [vmem:[%s10 + $0xf8] sm:$0xff]
  %12590 = vmatpush.msra.mxu0 %v12573
  %12591 = vmatpush.msra.mxu0 %v12572
  %12592 = vmatpush.msra.mxu0 %v12571
  %12593 = vmatpush.msra.mxu0 %v12570
  %12594 = vmatpush.msra.mxu0 %v12569
  %12595 = vmatpush.msra.mxu0 %v12568
  %12596 = vmatpush.msra.mxu0 %v12567
  %12597 = vmatpush.msra.mxu0 %v12566
  %12598 = vmatpush.msra.mxu0 %v12565
  %12599 = vmatpush.msra.mxu0 %v12564
  %12600 = vmatpush.msra.mxu0 %v12563
  %12601 = vmatpush.msra.mxu0 %v12562
  %12602 = vmatpush.msra.mxu0 %v12561
  %12603 = vmatpush.msra.mxu0 %v12560
  %12604 = vmatpush.msra.mxu0 %v12559
  %12605 = vmatpush.msra.mxu0 %v12558
  %12606 = vmatmul.f32.gmra.mxu0 %v12542
  %v12607 = vpop.f32.mrf.mxu0
  %v12608 = vadd.f32 0.0, %v12607
  %12609 = vmatmul.f32.gmra.mxu0 %v12544
  %v12610 = vpop.f32.mrf.mxu0
  %v12611 = vadd.f32 0.0, %v12610
  %12612 = vmatmul.f32.gmra.mxu0 %v12546
  %v12613 = vpop.f32.mrf.mxu0
  %v12614 = vadd.f32 0.0, %v12613
  %12615 = vmatmul.f32.gmra.mxu0 %v12548
  %v12616 = vpop.f32.mrf.mxu0
  %v12617 = vadd.f32 0.0, %v12616
  %12618 = vmatmul.f32.gmra.mxu0 %v12550
  %v12619 = vpop.f32.mrf.mxu0
  %v12620 = vadd.f32 0.0, %v12619
  %12621 = vmatmul.f32.gmra.mxu0 %v12552
  %v12622 = vpop.f32.mrf.mxu0
  %v12623 = vadd.f32 0.0, %v12622
  %12624 = vmatmul.f32.gmra.mxu0 %v12554
  %v12625 = vpop.f32.mrf.mxu0
  %v12626 = vadd.f32 0.0, %v12625
  %12627 = vmatmul.f32.gmra.mxu0 %v12556
  %v12628 = vpop.f32.mrf.mxu0
  %v12629 = vadd.f32 0.0, %v12628
  %12630 = vdwg.mxu0
  %12631 = vmatpush.msra.mxu0 %v12589
  %12632 = vmatpush.msra.mxu0 %v12588
  %12633 = vmatpush.msra.mxu0 %v12587
  %12634 = vmatpush.msra.mxu0 %v12586
  %12635 = vmatpush.msra.mxu0 %v12585
  %12636 = vmatpush.msra.mxu0 %v12584
  %12637 = vmatpush.msra.mxu0 %v12583
  %12638 = vmatpush.msra.mxu0 %v12582
  %12639 = vmatpush.msra.mxu0 %v12581
  %12640 = vmatpush.msra.mxu0 %v12580
  %12641 = vmatpush.msra.mxu0 %v12579
  %12642 = vmatpush.msra.mxu0 %v12578
  %12643 = vmatpush.msra.mxu0 %v12577
  %12644 = vmatpush.msra.mxu0 %v12576
  %12645 = vmatpush.msra.mxu0 %v12575
  %12646 = vmatpush.msra.mxu0 %v12574
  %12647 = vmatmul.f32.gmra.mxu0 %v12543
  %v12648 = vpop.f32.mrf.mxu0
  %v12649 = vadd.f32 %v12608, %v12648
  %12650 = vmatmul.f32.gmra.mxu0 %v12545
  %v12651 = vpop.f32.mrf.mxu0
  %v12652 = vadd.f32 %v12611, %v12651
  %12653 = vmatmul.f32.gmra.mxu0 %v12547
  %v12654 = vpop.f32.mrf.mxu0
  %v12655 = vadd.f32 %v12614, %v12654
  %12656 = vmatmul.f32.gmra.mxu0 %v12549
  %v12657 = vpop.f32.mrf.mxu0
  %v12658 = vadd.f32 %v12617, %v12657
  %12659 = vmatmul.f32.gmra.mxu0 %v12551
  %v12660 = vpop.f32.mrf.mxu0
  %v12661 = vadd.f32 %v12620, %v12660
  %12662 = vmatmul.f32.gmra.mxu0 %v12553
  %v12663 = vpop.f32.mrf.mxu0
  %v12664 = vadd.f32 %v12623, %v12663
  %12665 = vmatmul.f32.gmra.mxu0 %v12555
  %v12666 = vpop.f32.mrf.mxu0
  %v12667 = vadd.f32 %v12626, %v12666
  %12668 = vmatmul.f32.gmra.mxu0 %v12557
  %v12669 = vpop.f32.mrf.mxu0
  %v12670 = vadd.f32 %v12629, %v12669
  %12671 = vdwg.mxu0
  %v12672 = vld [vmem:[%s11] sm:$0x1]
  %v12674 = vperm.slane %v12672, 0
  %v12676 = vmul.f32 %v12649, %v12674
  %v12677 = vmul.f32 %v12652, %v12674
  %v12678 = vmul.f32 %v12655, %v12674
  %v12679 = vmul.f32 %v12658, %v12674
  %v12680 = vmul.f32 %v12661, %v12674
  %v12681 = vmul.f32 %v12664, %v12674
  %v12682 = vmul.f32 %v12667, %v12674
  %v12683 = vmul.f32 %v12670, %v12674
  %v12684 = vld [vmem:[%s12] sm:$0x1]
  %v12686 = vperm.slane %v12684, 0
  %v12688 = vadd.f32 %v12676, %v12686
  %v12689 = vadd.f32 %v12677, %v12686
  %v12690 = vadd.f32 %v12678, %v12686
  %v12691 = vadd.f32 %v12679, %v12686
  %v12692 = vadd.f32 %v12680, %v12686
  %v12693 = vadd.f32 %v12681, %v12686
  %v12694 = vadd.f32 %v12682, %v12686
  %v12695 = vadd.f32 %v12683, %v12686
  %v12696 = vmax.f32 %v12688, 0.0
  %v12697 = vmax.f32 %v12689, 0.0
  %v12698 = vmax.f32 %v12690, 0.0
  %v12699 = vmax.f32 %v12691, 0.0
  %v12700 = vmax.f32 %v12692, 0.0
  %v12701 = vmax.f32 %v12693, 0.0
  %v12702 = vmax.f32 %v12694, 0.0
  %v12703 = vmax.f32 %v12695, 0.0
  %12704 = vst [vmem:[%s13] sm:$0xff] %v12696
  %12705 = vst [vmem:[%s13 + $0x8] sm:$0xff] %v12697
  %12706 = vst [vmem:[%s13 + $0x10] sm:$0xff] %v12698
  %12707 = vst [vmem:[%s13 + $0x18] sm:$0xff] %v12699
  %12708 = vst [vmem:[%s13 + $0x20] sm:$0xff] %v12700
  %12709 = vst [vmem:[%s13 + $0x28] sm:$0xff] %v12701
  %12710 = vst [vmem:[%s13 + $0x30] sm:$0xff] %v12702
  %12711 = vst [vmem:[%s13 + $0x38] sm:$0xff] %v12703
  // Predicated region
  $region54: #{conv_nn_forward.1} parent=0 // pred_check
    _
  $region55: #{conv_nn_forward.1} parent=0 // pred_check_branch
    %12713 = sbr.rel (0) target = $region57
  $region56: #{conv_nn_forward.1} parent=0 // pred_region
    _
  $region57: #{conv_nn_forward.1} parent=0 // pred_fallthru
    _
  // Predicated region
  $region58: #{conv_nn_forward.1} parent=0 // pred_check
    _
  $region59: #{conv_nn_forward.1} parent=0 // pred_check_branch
    %12715 = sbr.rel (0) target = $region61
  $region60: #{conv_nn_forward.1} parent=0 // pred_region
    _
  $region61: #{conv_nn_forward.1} parent=0 // pred_fallthru
    _

</llo_original>
